<compile_context>
chip_gen: v7x
topology: tpu7x:2x2x1
jax: 0.10.0
libtpu: 0.0.40
codegen_flags: <defaults>
</compile_context>

<pallas_src>
import functools
import math

import jax
import jax.numpy as jnp
from jax.experimental import pallas as pl
from jax.experimental.pallas import tpu as pltpu

# ---------------- scaled-down hyperparameters (module used 768 dim / 8 heads / 12 ViT layers) ----
E = 32                  # dim_embedding
HEADS = 4               # transformer_heads
DH = E // HEADS
C_IN = 3
IMG = 16
PATCH = 8
PDIM = C_IN * PATCH * PATCH
NP_ = (IMG // PATCH) ** 2          # 4 patches per image
S_IMG = NP_ + 1                    # +1 class token => 5 image tokens
VIT_LAYERS = 2
VIT_MLP = 64
DEC_LAYERS = 2          # transformer_layers
DEC_FF = 64             # dim_feedforward (scaled down from 2048)
NUM_WORDS = 16
TOTAL_MAX_WORDS = 6     # text_max_len
NSTEPS = TOTAL_MAX_WORDS - 1       # teacher-forced decode steps
T = NSTEPS                         # decoder sequence length used per step
WORD2IDX = {'<SOS>': 0, '<EOS>': 1, '<PAD>': 2}
NEG_INF = -1e9
LANES = 128


# ---------------------------------------------------------------------------
# Parameter slab packing (one contiguous lane-padded input per kernel)
# ---------------------------------------------------------------------------
def _round_up(n, m):
    return (n + m - 1) // m * m


class _SlabBuilder:
    """Packs many small 2-D params into one (rows, 128) f32 slab (8-row aligned)."""

    def __init__(self):
        self._parts = []
        self._layout = []
        self._row = 0

    def add(self, a):
        a = jnp.asarray(a, jnp.float32)
        if a.ndim == 1:
            a = a.reshape(1, -1)
        r, c = a.shape
        assert c <= LANES, a.shape
        rp = _round_up(r, 8)
        self._layout.append((self._row, r, c))
        self._parts.append(jnp.pad(a, ((0, rp - r), (0, LANES - c))))
        self._row += rp

    def finish(self):
        return jnp.concatenate(self._parts, axis=0), tuple(self._layout)


class _SlabReader:
    """Reads params back out of the slab ref, in the same order they were added."""

    def __init__(self, ref, layout):
        self._ref = ref
        self._layout = layout
        self._pos = 0

    def next(self):
        r0, r, c = self._layout[self._pos]
        self._pos += 1
        return self._ref[r0:r0 + r, 0:c]


# ---------------------------------------------------------------------------
# In-kernel building blocks
# ---------------------------------------------------------------------------
def _ln(x, g, b, eps=1e-5):
    mu = jnp.mean(x, axis=-1, keepdims=True)
    xc = x - mu
    var = jnp.mean(xc * xc, axis=-1, keepdims=True)
    return xc * jax.lax.rsqrt(var + eps) * g + b


def _softmax(s):
    s = s - jnp.max(s, axis=-1, keepdims=True)
    p = jnp.exp(s)
    return p * pl.reciprocal(jnp.sum(p, axis=-1, keepdims=True), approx=True)


def _attend(q, k, v, w_out, b_out, mask):
    """q:(Nq,E) k,v:(Nk,E) already projected; per-head scores, head concat, one out-proj."""
    scale = 1.0 / math.sqrt(DH)
    heads = []
    for h in range(HEADS):
        sl = slice(h * DH, (h + 1) * DH)
        s = jnp.einsum('qd,kd->qk', q[:, sl], k[:, sl],
                       preferred_element_type=jnp.float32) * scale
        if mask is not None:
            s = s + mask
        heads.append(jnp.dot(_softmax(s), v[:, sl],
                             preferred_element_type=jnp.float32))
    ctx = jnp.concatenate(heads, axis=-1)                                    # (Nq, E)
    return jnp.dot(ctx, w_out, preferred_element_type=jnp.float32) + b_out


def _self_attn(x, w_in, b_in, w_out, b_out, mask):
    qkv = jnp.dot(x, w_in, preferred_element_type=jnp.float32) + b_in        # (N, 3E)
    return _attend(qkv[:, 0:E], qkv[:, E:2 * E], qkv[:, 2 * E:3 * E],
                   w_out, b_out, mask)


def _cross_attn(x, mem, w_q, b_q, w_kv, b_kv, w_out, b_out):
    q = jnp.dot(x, w_q, preferred_element_type=jnp.float32) + b_q            # (Nq, E)
    kv = jnp.dot(mem, w_kv, preferred_element_type=jnp.float32) + b_kv       # (Nk, 2E)
    return _attend(q, kv[:, 0:E], kv[:, E:2 * E], w_out, b_out, None)


# ---------------------------------------------------------------------------
# ViT encoder kernel: one grid step per image
# ---------------------------------------------------------------------------
def _vit_kernel(layout, patches_ref, slab_ref, o_ref):
    rd = _SlabReader(slab_ref, layout)
    patch_w = rd.next()                      # (PDIM, E)
    base = rd.next()                         # (S_IMG, E): cls/patch-bias + pos embedding
    lnf_g = rd.next()
    lnf_b = rd.next()
    # Row 0 of patches is zero (class-token slot), so one matmul builds all token rows.
    x = jnp.dot(patches_ref[...], patch_w, preferred_element_type=jnp.float32) + base
    for _ in range(VIT_LAYERS):
        ln1g = rd.next(); ln1b = rd.next()
        w_in = rd.next(); b_in = rd.next(); w_o = rd.next(); b_o = rd.next()
        ln2g = rd.next(); ln2b = rd.next()
        w1 = rd.next(); b1 = rd.next(); w2 = rd.next(); b2 = rd.next()
        y = _ln(x, ln1g, ln1b)
        x = x + _self_attn(y, w_in, b_in, w_o, b_o, None)
        y = _ln(x, ln2g, ln2b)
        # TODO(synk): torchvision ViT uses exact erf GELU; tanh approximation used here.
        h = jax.nn.gelu(jnp.dot(y, w1, preferred_element_type=jnp.float32) + b1)
        x = x + jnp.dot(h, w2, preferred_element_type=jnp.float32) + b2
    o_ref[...] = _ln(x, lnf_g, lnf_b)


# ---------------------------------------------------------------------------
# Decoder kernel: one grid step per (batch, teacher-forcing step)
# ---------------------------------------------------------------------------
def _dec_kernel(layout, emb_ref, mem_ref, pad_ref, slab_ref, o_ref):
    rd = _SlabReader(slab_ref, layout)
    pe = rd.next()                           # (T, E)
    proj_w = rd.next()                       # (E, 128), zero-padded past NUM_WORDS
    proj_b = rd.next()                       # (1, 128)

    i = pl.program_id(1)                     # prefix length = i + 1
    s = math.sqrt(E)
    # PositionalEncoder applied twice in the reference: ((x*s)+pe)*s + pe
    x = emb_ref[...] * (s * s) + pe * (s + 1.0)                              # (T, E)
    mem = mem_ref[...]                                                       # (S_IMG, E)

    # Key mask built in-kernel: hide keys beyond the prefix and <PAD> keys.
    t_iota = jax.lax.broadcasted_iota(jnp.int32, (1, T), 1)
    key_mask = jnp.where(t_iota <= i, 0.0, NEG_INF) + pad_ref[...]           # (1, T)

    for _ in range(DEC_LAYERS):
        w_in = rd.next(); b_in = rd.next(); wo_s = rd.next(); bo_s = rd.next()
        ln1g = rd.next(); ln1b = rd.next()
        wq_c = rd.next(); bq_c = rd.next(); wkv_c = rd.next(); bkv_c = rd.next()
        wo_c = rd.next(); bo_c = rd.next()
        ln2g = rd.next(); ln2b = rd.next()
        fw1 = rd.next(); fb1 = rd.next(); fw2 = rd.next(); fb2 = rd.next()
        ln3g = rd.next(); ln3b = rd.next()
        a = _self_attn(x, w_in, b_in, wo_s, bo_s, key_mask)
        x = _ln(x + a, ln1g, ln1b)
        a = _cross_attn(x, mem, wq_c, bq_c, wkv_c, bkv_c, wo_c, bo_c)
        x = _ln(x + a, ln2g, ln2b)
        h = jnp.maximum(jnp.dot(x, fw1, preferred_element_type=jnp.float32) + fb1, 0.0)
        h = jnp.dot(h, fw2, preferred_element_type=jnp.float32) + fb2
        x = _ln(x + h, ln3g, ln3b)

    # "Last token of the prefix" = row i; iota-select masked sum (no one-hot matmul).
    row_sel = jax.lax.broadcasted_iota(jnp.int32, (T, 1), 0) == i
    x_last = jnp.sum(jnp.where(row_sel, x, 0.0), axis=0, keepdims=True)      # (1, E)
    logits = jnp.dot(x_last, proj_w, preferred_element_type=jnp.float32) + proj_b
    o_ref[...] = logits                                                      # lane-dense (1, 128)


# ---------------------------------------------------------------------------
# Wrapper: ViT encoder (patchify glue + fused kernel over a batch grid)
# ---------------------------------------------------------------------------
def vit_encoder(img, p):
    """Fused stand-in for create_feature_extractor(vit_b_16)['encoder'] (scaled down)."""
    B = img.shape[0]
    nh = nw = IMG // PATCH
    patches = img.reshape(B, C_IN, nh, PATCH, nw, PATCH).transpose(0, 2, 4, 1, 3, 5)
    patches = patches.reshape(B, NP_, PDIM)
    # Zero row in the class-token slot so a single matmul produces all S_IMG token rows.
    patches = jnp.concatenate(
        [jnp.zeros((B, 1, PDIM), jnp.float32), patches], axis=1)             # (B, S_IMG, PDIM)

    cls_row = p['cls'].reshape(1, E)
    bias_rows = jnp.concatenate(
        [cls_row, jnp.broadcast_to(p['patch_b'].reshape(1, E), (NP_, E))], axis=0)
    base = bias_rows + p['pos_emb'].reshape(S_IMG, E)                        # (S_IMG, E)

    sb = _SlabBuilder()
    sb.add(p['patch_w'])
    sb.add(base)
    sb.add(p['ln_g'])
    sb.add(p['ln_b'])
    for lp in p['layers']:
        a = lp['attn']
        sb.add(lp['ln1_g']); sb.add(lp['ln1_b'])
        sb.add(jnp.concatenate([a['wq'], a['wk'], a['wv']], axis=1))         # (E, 3E)
        sb.add(jnp.concatenate([a['bq'], a['bk'], a['bv']]).reshape(1, 3 * E))
        sb.add(a['wo']); sb.add(a['bo'])
        sb.add(lp['ln2_g']); sb.add(lp['ln2_b'])
        sb.add(lp['mlp_w1']); sb.add(lp['mlp_b1'])
        sb.add(lp['mlp_w2']); sb.add(lp['mlp_b2'])
    slab, layout = sb.finish()

    flops = B * (2 * S_IMG * PDIM * E + VIT_LAYERS * (
        2 * S_IMG * E * 3 * E + 4 * S_IMG * S_IMG * E + 2 * S_IMG * E * E
        + 4 * S_IMG * E * VIT_MLP))
    trans = B * VIT_LAYERS * (HEADS * S_IMG * S_IMG + S_IMG * VIT_MLP)
    bytes_acc = 4 * (B * S_IMG * PDIM + slab.size + B * S_IMG * E)

    return pl.pallas_call(
        functools.partial(_vit_kernel, layout),
        out_shape=jax.ShapeDtypeStruct((B, S_IMG, E), jnp.float32),
        grid=(B,),
        in_specs=[pl.BlockSpec((None, S_IMG, PDIM), lambda b: (b, 0, 0)),
                  pl.BlockSpec(slab.shape, lambda b: (0, 0))],
        out_specs=pl.BlockSpec((None, S_IMG, E), lambda b: (b, 0, 0)),
        compiler_params=pltpu.CompilerParams(
            dimension_semantics=("parallel",),
            vmem_limit_bytes=32 * 1024 * 1024),
        cost_estimate=pl.CostEstimate(flops=int(flops), transcendentals=int(trans),
                                      bytes_accessed=int(bytes_acc)),
    )(patches, slab)


# ---------------------------------------------------------------------------
# Wrapper: all teacher-forced decode steps on a (batch, step) grid
# ---------------------------------------------------------------------------
def decode_all_steps(img_enc, ground_truth, dec_layers, params):
    """All TOTAL_MAX_WORDS-1 teacher-forced decoder reruns in one gridded kernel.

    Grid cell (b, i) evaluates the decoder on prefix ground_truth[b, :i+1] by masking
    keys > i (and <PAD> keys), which reproduces the reference's rerun-on-prefix loop."""
    B = ground_truth.shape[0]
    gt_prefix = ground_truth[:, :T]                                          # (B, T)
    emb = params['embed'][gt_prefix]                                         # (B, T, E)
    pad_add = jnp.where(gt_prefix == WORD2IDX['<PAD>'], NEG_INF, 0.0)
    pad_add = pad_add.astype(jnp.float32).reshape(B, 1, T)                   # additive key-pad mask

    sb = _SlabBuilder()
    sb.add(params['pe'][:T])
    sb.add(jnp.pad(params['proj_w'], ((0, 0), (0, LANES - NUM_WORDS))))      # lane-dense output
    sb.add(jnp.pad(params['proj_b'].reshape(1, NUM_WORDS), ((0, 0), (0, LANES - NUM_WORDS))))
    for lp in dec_layers:
        sa, ca = lp['self_attn'], lp['cross_attn']
        sb.add(jnp.concatenate([sa['wq'], sa['wk'], sa['wv']], axis=1))      # (E, 3E)
        sb.add(jnp.concatenate([sa['bq'], sa['bk'], sa['bv']]).reshape(1, 3 * E))
        sb.add(sa['wo']); sb.add(sa['bo'])
        sb.add(lp['ln1_g']); sb.add(lp['ln1_b'])
        sb.add(ca['wq']); sb.add(ca['bq'])
        sb.add(jnp.concatenate([ca['wk'], ca['wv']], axis=1))                # (E, 2E)
        sb.add(jnp.concatenate([ca['bk'], ca['bv']]).reshape(1, 2 * E))
        sb.add(ca['wo']); sb.add(ca['bo'])
        sb.add(lp['ln2_g']); sb.add(lp['ln2_b'])
        sb.add(lp['ff_w1']); sb.add(lp['ff_b1'])
        sb.add(lp['ff_w2']); sb.add(lp['ff_b2'])
        sb.add(lp['ln3_g']); sb.add(lp['ln3_b'])
    slab, layout = sb.finish()

    flops = B * NSTEPS * (DEC_LAYERS * (
        2 * T * E * 3 * E + 4 * T * T * E + 4 * T * E * E
        + 2 * S_IMG * E * 2 * E + 4 * T * S_IMG * E + 4 * T * E * DEC_FF)
        + 2 * E * LANES)
    trans = B * NSTEPS * DEC_LAYERS * HEADS * (T * T + T * S_IMG)
    bytes_acc = 4 * (B * NSTEPS * (T * E + S_IMG * E + T + LANES) + slab.size)

    out = pl.pallas_call(
        functools.partial(_dec_kernel, layout),
        out_shape=jax.ShapeDtypeStruct((B, NSTEPS, 1, LANES), jnp.float32),
        grid=(B, NSTEPS),
        in_specs=[pl.BlockSpec((None, T, E), lambda b, i: (b, 0, 0)),
                  pl.BlockSpec((None, S_IMG, E), lambda b, i: (b, 0, 0)),
                  pl.BlockSpec((None, 1, T), lambda b, i: (b, 0, 0)),
                  pl.BlockSpec(slab.shape, lambda b, i: (0, 0))],
        out_specs=pl.BlockSpec((None, None, 1, LANES), lambda b, i: (b, i, 0, 0)),
        compiler_params=pltpu.CompilerParams(
            dimension_semantics=("parallel", "parallel"),
            vmem_limit_bytes=32 * 1024 * 1024),
        cost_estimate=pl.CostEstimate(flops=int(flops), transcendentals=int(trans),
                                      bytes_accessed=int(bytes_acc)),
    )(emb, img_enc, pad_add, slab)
    return out[:, :, 0, :NUM_WORDS]                                          # (B, NSTEPS, NUM_WORDS)


# ---------------------------------------------------------------------------
# Full forward (teacher forcing ratio = 1)
# ---------------------------------------------------------------------------
def vit_transformer_maria_forward(img, ground_truth, params):
    """Teacher-forcing (ratio=1) forward path of VIT_transformer_maria."""
    B = img.shape[0]
    img_enc = vit_encoder(img, params['vit'])                                # (B, S_IMG, E)
    step_logits = decode_all_steps(img_enc, ground_truth, params['decoder'], params)
    # First output column = proj(raw <SOS> embedding), exactly as in the reference
    # (pred is seeded with start_embeds before the decode loop; no decoder applied).
    sos = params['embed'][WORD2IDX['<SOS>']].reshape(1, E)
    start_logits = sos @ params['proj_w'] + params['proj_b'].reshape(1, NUM_WORDS)
    start_block = jnp.broadcast_to(start_logits[None], (B, 1, NUM_WORDS))
    # TODO(synk): data-dependent <EOS> early break uses .item() host control flow
    # (valid only for batch=1) in the reference; all steps are always computed here.
    pred = jnp.concatenate([start_block, step_logits], axis=1)               # (B, T_total, V)
    return jnp.transpose(pred, (0, 2, 1))                                    # (B, V, T_total)


forward_jit = jax.jit(vit_transformer_maria_forward)


# ---------------------------------------------------------------------------
# Deterministic synthetic parameters
# ---------------------------------------------------------------------------
def make_positional_table(d_model, max_seq_len):
    pe = [[0.0] * d_model for _ in range(max_seq_len)]
    for pos in range(max_seq_len):
        for i in range(0, d_model, 2):
            pe[pos][i] = math.sin(pos / 10000 ** (2 * i / d_model))
            pe[pos][i + 1] = math.cos(pos / 10000 ** (2 * (i + 1) / d_model))
    return jnp.array(pe, dtype=jnp.float32)


def init_params(key):
    keys = list(jax.random.split(key, 512))
    it = iter(keys)

    def nxt():
        return next(it)

    def dense(fan_in, fan_out):
        return (jax.random.normal(nxt(), (fan_in, fan_out), jnp.float32) * 0.02,
                jax.random.normal(nxt(), (fan_out,), jnp.float32) * 0.02)

    def attn_params():
        wq, bq = dense(E, E); wk, bk = dense(E, E)
        wv, bv = dense(E, E); wo, bo = dense(E, E)
        return dict(wq=wq, bq=bq, wk=wk, bk=bk, wv=wv, bv=bv, wo=wo, bo=bo)

    def ln():
        return jnp.ones((E,), jnp.float32), jnp.zeros((E,), jnp.float32)

    # ViT encoder
    patch_w, patch_b = dense(PDIM, E)
    vit_layers = []
    for _ in range(VIT_LAYERS):
        g1, b1 = ln(); g2, b2 = ln()
        w1, bb1 = dense(E, VIT_MLP); w2, bb2 = dense(VIT_MLP, E)
        vit_layers.append(dict(ln1_g=g1, ln1_b=b1, attn=attn_params(),
                               ln2_g=g2, ln2_b=b2,
                               mlp_w1=w1, mlp_b1=bb1, mlp_w2=w2, mlp_b2=bb2))
    gf, bf = ln()
    vit = dict(patch_w=patch_w, patch_b=patch_b,
               cls=jax.random.normal(nxt(), (1, 1, E), jnp.float32) * 0.02,
               pos_emb=jax.random.normal(nxt(), (1, S_IMG, E), jnp.float32) * 0.02,
               layers=vit_layers, ln_g=gf, ln_b=bf)

    # transformer decoder layers
    dec_layers = []
    for _ in range(DEC_LAYERS):
        g1, b1 = ln(); g2, b2 = ln(); g3, b3 = ln()
        w1, bb1 = dense(E, DEC_FF); w2, bb2 = dense(DEC_FF, E)
        dec_layers.append(dict(self_attn=attn_params(), cross_attn=attn_params(),
                               ln1_g=g1, ln1_b=b1, ln2_g=g2, ln2_b=b2, ln3_g=g3, ln3_b=b3,
                               ff_w1=w1, ff_b1=bb1, ff_w2=w2, ff_b2=bb2))

    embed = jax.random.normal(nxt(), (NUM_WORDS, E), jnp.float32) * 0.02
    proj_w, proj_b = dense(E, NUM_WORDS)
    return dict(vit=vit, decoder=dec_layers, embed=embed,
                proj_w=proj_w, proj_b=proj_b,
                pe=make_positional_table(E, TOTAL_MAX_WORDS))


# ---------------------------------------------------------------------------
if __name__ == "__main__":
    key = jax.random.PRNGKey(0)
    k_img, k_params = jax.random.split(key)

    img = jax.random.normal(k_img, (2, C_IN, IMG, IMG), jnp.float32)         # NCHW
    ground_truth = jnp.array([[0, 5, 7, 3, 1, 2],
                              [0, 4, 9, 2, 2, 2]], dtype=jnp.int32)          # (B, text_max_len)

    params = init_params(k_params)
    res = forward_jit(img, ground_truth, params)
    res = jax.block_until_ready(res)

    assert res.shape == (2, NUM_WORDS, TOTAL_MAX_WORDS), res.shape
    assert bool(jnp.all(jnp.isfinite(res)))
    print("KERNEL_OK")
</pallas_src>

<mosaic_0001>
module attributes {stable_mosaic.version = 11 : i64} {
  func.func @_vit_kernel(%arg0: i32, %arg1: memref<1x5x192xf32, #tpu.memory_space<vmem>>, %arg2: memref<664x128xf32, #tpu.memory_space<vmem>>, %arg3: memref<1x5x32xf32, #tpu.memory_space<vmem>>) attributes {dimension_semantics = [#tpu.dimension_semantics<parallel>], iteration_bounds = array<i64: 2>, scalar_prefetch = 0 : i64, scratch_operands = 0 : i64, tpu.core_type = #tpu.core_type<tc>, window_params = [{transform_indices = @transform_0, window_bounds = array<i64: 1, 5, 192>}, {pipeline_mode = #tpu.pipeline_mode<synchronous>, transform_indices = @transform_1, window_bounds = array<i64: 664, 128>}, {transform_indices = @transform_2, window_bounds = array<i64: 1, 5, 32>}]} {
    %c0 = arith.constant 0 : index
    %c0_0 = arith.constant 0 : index
    %0 = vector.load %arg2[%c0, %c0_0] : memref<664x128xf32, #tpu.memory_space<vmem>>, vector<192x32xf32>
    %c192 = arith.constant 192 : index
    %c0_1 = arith.constant 0 : index
    %1 = vector.load %arg2[%c192, %c0_1] : memref<664x128xf32, #tpu.memory_space<vmem>>, vector<5x32xf32>
    %c200 = arith.constant 200 : index
    %c0_2 = arith.constant 0 : index
    %2 = vector.load %arg2[%c200, %c0_2] : memref<664x128xf32, #tpu.memory_space<vmem>>, vector<1x32xf32>
    %c208 = arith.constant 208 : index
    %c0_3 = arith.constant 0 : index
    %3 = vector.load %arg2[%c208, %c0_3] : memref<664x128xf32, #tpu.memory_space<vmem>>, vector<1x32xf32>
    %c0_4 = arith.constant 0 : index
    %c0_5 = arith.constant 0 : index
    %c0_6 = arith.constant 0 : index
    %4 = vector.load %arg1[%c0_4, %c0_5, %c0_6] : memref<1x5x192xf32, #tpu.memory_space<vmem>>, vector<1x5x192xf32>
    %5 = vector.shape_cast %4 : vector<1x5x192xf32> to vector<5x192xf32>
    %cst = arith.constant dense<0.000000e+00> : vector<5x32xf32>
    %6 = tpu.matmul %5, %0, %cst {dimension_numbers = #tpu.dot_dimension_numbers<[1], [0], [0], [1], [0, 0, 1, 1], [], []>} : vector<5x192xf32>, vector<192x32xf32>, vector<5x32xf32> -> vector<5x32xf32>
    %7 = arith.addf %6, %1 : vector<5x32xf32>
    %c216 = arith.constant 216 : index
    %c0_7 = arith.constant 0 : index
    %8 = vector.load %arg2[%c216, %c0_7] : memref<664x128xf32, #tpu.memory_space<vmem>>, vector<1x32xf32>
    %c224 = arith.constant 224 : index
    %c0_8 = arith.constant 0 : index
    %9 = vector.load %arg2[%c224, %c0_8] : memref<664x128xf32, #tpu.memory_space<vmem>>, vector<1x32xf32>
    %c232 = arith.constant 232 : index
    %c0_9 = arith.constant 0 : index
    %10 = vector.load %arg2[%c232, %c0_9] : memref<664x128xf32, #tpu.memory_space<vmem>>, vector<32x96xf32>
    %c264 = arith.constant 264 : index
    %c0_10 = arith.constant 0 : index
    %11 = vector.load %arg2[%c264, %c0_10] : memref<664x128xf32, #tpu.memory_space<vmem>>, vector<1x96xf32>
    %c272 = arith.constant 272 : index
    %c0_11 = arith.constant 0 : index
    %12 = vector.load %arg2[%c272, %c0_11] : memref<664x128xf32, #tpu.memory_space<vmem>>, vector<32x32xf32>
    %c304 = arith.constant 304 : index
    %c0_12 = arith.constant 0 : index
    %13 = vector.load %arg2[%c304, %c0_12] : memref<664x128xf32, #tpu.memory_space<vmem>>, vector<1x32xf32>
    %c312 = arith.constant 312 : index
    %c0_13 = arith.constant 0 : index
    %14 = vector.load %arg2[%c312, %c0_13] : memref<664x128xf32, #tpu.memory_space<vmem>>, vector<1x32xf32>
    %c320 = arith.constant 320 : index
    %c0_14 = arith.constant 0 : index
    %15 = vector.load %arg2[%c320, %c0_14] : memref<664x128xf32, #tpu.memory_space<vmem>>, vector<1x32xf32>
    %c328 = arith.constant 328 : index
    %c0_15 = arith.constant 0 : index
    %16 = vector.load %arg2[%c328, %c0_15] : memref<664x128xf32, #tpu.memory_space<vmem>>, vector<32x64xf32>
    %c360 = arith.constant 360 : index
    %c0_16 = arith.constant 0 : index
    %17 = vector.load %arg2[%c360, %c0_16] : memref<664x128xf32, #tpu.memory_space<vmem>>, vector<1x64xf32>
    %c368 = arith.constant 368 : index
    %c0_17 = arith.constant 0 : index
    %18 = vector.load %arg2[%c368, %c0_17] : memref<664x128xf32, #tpu.memory_space<vmem>>, vector<64x32xf32>
    %c432 = arith.constant 432 : index
    %c0_18 = arith.constant 0 : index
    %19 = vector.load %arg2[%c432, %c0_18] : memref<664x128xf32, #tpu.memory_space<vmem>>, vector<1x32xf32>
    %cst_19 = arith.constant dense<0.000000e+00> : vector<5xf32>
    %20 = vector.multi_reduction <add>, %7, %cst_19 [1] : vector<5x32xf32> to vector<5xf32>
    %21 = vector.shape_cast %20 : vector<5xf32> to vector<5x1xf32>
    %cst_20 = arith.constant 3.200000e+01 : f32
    %22 = vector.broadcast %cst_20 : f32 to vector<5x1xf32>
    %23 = arith.divf %21, %22 : vector<5x1xf32>
    %24 = vector.broadcast %23 : vector<5x1xf32> to vector<5x32xf32>
    %25 = arith.subf %7, %24 : vector<5x32xf32>
    %26 = arith.mulf %25, %25 : vector<5x32xf32>
    %cst_21 = arith.constant dense<0.000000e+00> : vector<5xf32>
    %27 = vector.multi_reduction <add>, %26, %cst_21 [1] : vector<5x32xf32> to vector<5xf32>
    %28 = vector.shape_cast %27 : vector<5xf32> to vector<5x1xf32>
    %cst_22 = arith.constant 3.200000e+01 : f32
    %29 = vector.broadcast %cst_22 : f32 to vector<5x1xf32>
    %30 = arith.divf %28, %29 : vector<5x1xf32>
    %cst_23 = arith.constant 9.99999974E-6 : f32
    %31 = vector.broadcast %cst_23 : f32 to vector<5x1xf32>
    %32 = arith.addf %30, %31 : vector<5x1xf32>
    %33 = math.rsqrt %32 : vector<5x1xf32>
    %34 = vector.broadcast %33 : vector<5x1xf32> to vector<5x32xf32>
    %35 = arith.mulf %25, %34 : vector<5x32xf32>
    %36 = vector.broadcast %8 : vector<1x32xf32> to vector<5x32xf32>
    %37 = arith.mulf %35, %36 : vector<5x32xf32>
    %38 = vector.broadcast %9 : vector<1x32xf32> to vector<5x32xf32>
    %39 = arith.addf %37, %38 : vector<5x32xf32>
    %cst_24 = arith.constant dense<0.000000e+00> : vector<5x96xf32>
    %40 = tpu.matmul %39, %10, %cst_24 {dimension_numbers = #tpu.dot_dimension_numbers<[1], [0], [0], [1], [0, 0, 1, 1], [], []>} : vector<5x32xf32>, vector<32x96xf32>, vector<5x96xf32> -> vector<5x96xf32>
    %41 = vector.broadcast %11 : vector<1x96xf32> to vector<5x96xf32>
    %42 = arith.addf %40, %41 : vector<5x96xf32>
    %43 = vector.extract_strided_slice %42 {offsets = [0, 0], sizes = [5, 32], strides = [1, 1]} : vector<5x96xf32> to vector<5x32xf32>
    %44 = vector.extract_strided_slice %42 {offsets = [0, 32], sizes = [5, 32], strides = [1, 1]} : vector<5x96xf32> to vector<5x32xf32>
    %45 = vector.extract_strided_slice %42 {offsets = [0, 64], sizes = [5, 32], strides = [1, 1]} : vector<5x96xf32> to vector<5x32xf32>
    %46 = vector.extract_strided_slice %43 {offsets = [0, 0], sizes = [5, 8], strides = [1, 1]} : vector<5x32xf32> to vector<5x8xf32>
    %47 = vector.extract_strided_slice %44 {offsets = [0, 0], sizes = [5, 8], strides = [1, 1]} : vector<5x32xf32> to vector<5x8xf32>
    "tpu.trace_start"() <{level = 10 : i32, message = "qd,kd->qk"}> : () -> ()
    %cst_25 = arith.constant dense<0.000000e+00> : vector<5x5xf32>
    %48 = tpu.matmul %46, %47, %cst_25 {dimension_numbers = #tpu.dot_dimension_numbers<[1], [1], [0], [0], [0, 0, 1, 0], [], []>} : vector<5x8xf32>, vector<5x8xf32>, vector<5x5xf32> -> vector<5x5xf32>
    "tpu.trace_stop"() : () -> ()
    %cst_26 = arith.constant 0.353553385 : f32
    %49 = vector.broadcast %cst_26 : f32 to vector<5x5xf32>
    %50 = arith.mulf %48, %49 : vector<5x5xf32>
    %cst_27 = arith.constant dense<0xFF800000> : vector<5xf32>
    %51 = vector.multi_reduction <maximumf>, %50, %cst_27 [1] : vector<5x5xf32> to vector<5xf32>
    %52 = vector.shape_cast %51 : vector<5xf32> to vector<5x1xf32>
    %53 = vector.broadcast %52 : vector<5x1xf32> to vector<5x5xf32>
    %54 = arith.subf %50, %53 : vector<5x5xf32>
    %55 = math.exp %54 : vector<5x5xf32>
    %cst_28 = arith.constant dense<0.000000e+00> : vector<5xf32>
    %56 = vector.multi_reduction <add>, %55, %cst_28 [1] : vector<5x5xf32> to vector<5xf32>
    %57 = vector.shape_cast %56 : vector<5xf32> to vector<5x1xf32>
    %58 = tpu.reciprocal %57 {approx = true} : vector<5x1xf32> -> vector<5x1xf32>
    %59 = vector.broadcast %58 : vector<5x1xf32> to vector<5x5xf32>
    %60 = arith.mulf %55, %59 : vector<5x5xf32>
    %61 = vector.extract_strided_slice %45 {offsets = [0, 0], sizes = [5, 8], strides = [1, 1]} : vector<5x32xf32> to vector<5x8xf32>
    %cst_29 = arith.constant dense<0.000000e+00> : vector<5x8xf32>
    %62 = tpu.matmul %60, %61, %cst_29 {dimension_numbers = #tpu.dot_dimension_numbers<[1], [0], [0], [1], [0, 0, 1, 1], [], []>} : vector<5x5xf32>, vector<5x8xf32>, vector<5x8xf32> -> vector<5x8xf32>
    %63 = vector.extract_strided_slice %43 {offsets = [0, 8], sizes = [5, 8], strides = [1, 1]} : vector<5x32xf32> to vector<5x8xf32>
    %64 = vector.extract_strided_slice %44 {offsets = [0, 8], sizes = [5, 8], strides = [1, 1]} : vector<5x32xf32> to vector<5x8xf32>
    "tpu.trace_start"() <{level = 10 : i32, message = "qd,kd->qk"}> : () -> ()
    %cst_30 = arith.constant dense<0.000000e+00> : vector<5x5xf32>
    %65 = tpu.matmul %63, %64, %cst_30 {dimension_numbers = #tpu.dot_dimension_numbers<[1], [1], [0], [0], [0, 0, 1, 0], [], []>} : vector<5x8xf32>, vector<5x8xf32>, vector<5x5xf32> -> vector<5x5xf32>
    "tpu.trace_stop"() : () -> ()
    %cst_31 = arith.constant 0.353553385 : f32
    %66 = vector.broadcast %cst_31 : f32 to vector<5x5xf32>
    %67 = arith.mulf %65, %66 : vector<5x5xf32>
    %cst_32 = arith.constant dense<0xFF800000> : vector<5xf32>
    %68 = vector.multi_reduction <maximumf>, %67, %cst_32 [1] : vector<5x5xf32> to vector<5xf32>
    %69 = vector.shape_cast %68 : vector<5xf32> to vector<5x1xf32>
    %70 = vector.broadcast %69 : vector<5x1xf32> to vector<5x5xf32>
    %71 = arith.subf %67, %70 : vector<5x5xf32>
    %72 = math.exp %71 : vector<5x5xf32>
    %cst_33 = arith.constant dense<0.000000e+00> : vector<5xf32>
    %73 = vector.multi_reduction <add>, %72, %cst_33 [1] : vector<5x5xf32> to vector<5xf32>
    %74 = vector.shape_cast %73 : vector<5xf32> to vector<5x1xf32>
    %75 = tpu.reciprocal %74 {approx = true} : vector<5x1xf32> -> vector<5x1xf32>
    %76 = vector.broadcast %75 : vector<5x1xf32> to vector<5x5xf32>
    %77 = arith.mulf %72, %76 : vector<5x5xf32>
    %78 = vector.extract_strided_slice %45 {offsets = [0, 8], sizes = [5, 8], strides = [1, 1]} : vector<5x32xf32> to vector<5x8xf32>
    %cst_34 = arith.constant dense<0.000000e+00> : vector<5x8xf32>
    %79 = tpu.matmul %77, %78, %cst_34 {dimension_numbers = #tpu.dot_dimension_numbers<[1], [0], [0], [1], [0, 0, 1, 1], [], []>} : vector<5x5xf32>, vector<5x8xf32>, vector<5x8xf32> -> vector<5x8xf32>
    %80 = vector.extract_strided_slice %43 {offsets = [0, 16], sizes = [5, 8], strides = [1, 1]} : vector<5x32xf32> to vector<5x8xf32>
    %81 = vector.extract_strided_slice %44 {offsets = [0, 16], sizes = [5, 8], strides = [1, 1]} : vector<5x32xf32> to vector<5x8xf32>
    "tpu.trace_start"() <{level = 10 : i32, message = "qd,kd->qk"}> : () -> ()
    %cst_35 = arith.constant dense<0.000000e+00> : vector<5x5xf32>
    %82 = tpu.matmul %80, %81, %cst_35 {dimension_numbers = #tpu.dot_dimension_numbers<[1], [1], [0], [0], [0, 0, 1, 0], [], []>} : vector<5x8xf32>, vector<5x8xf32>, vector<5x5xf32> -> vector<5x5xf32>
    "tpu.trace_stop"() : () -> ()
    %cst_36 = arith.constant 0.353553385 : f32
    %83 = vector.broadcast %cst_36 : f32 to vector<5x5xf32>
    %84 = arith.mulf %82, %83 : vector<5x5xf32>
    %cst_37 = arith.constant dense<0xFF800000> : vector<5xf32>
    %85 = vector.multi_reduction <maximumf>, %84, %cst_37 [1] : vector<5x5xf32> to vector<5xf32>
    %86 = vector.shape_cast %85 : vector<5xf32> to vector<5x1xf32>
    %87 = vector.broadcast %86 : vector<5x1xf32> to vector<5x5xf32>
    %88 = arith.subf %84, %87 : vector<5x5xf32>
    %89 = math.exp %88 : vector<5x5xf32>
    %cst_38 = arith.constant dense<0.000000e+00> : vector<5xf32>
    %90 = vector.multi_reduction <add>, %89, %cst_38 [1] : vector<5x5xf32> to vector<5xf32>
    %91 = vector.shape_cast %90 : vector<5xf32> to vector<5x1xf32>
    %92 = tpu.reciprocal %91 {approx = true} : vector<5x1xf32> -> vector<5x1xf32>
    %93 = vector.broadcast %92 : vector<5x1xf32> to vector<5x5xf32>
    %94 = arith.mulf %89, %93 : vector<5x5xf32>
    %95 = vector.extract_strided_slice %45 {offsets = [0, 16], sizes = [5, 8], strides = [1, 1]} : vector<5x32xf32> to vector<5x8xf32>
    %cst_39 = arith.constant dense<0.000000e+00> : vector<5x8xf32>
    %96 = tpu.matmul %94, %95, %cst_39 {dimension_numbers = #tpu.dot_dimension_numbers<[1], [0], [0], [1], [0, 0, 1, 1], [], []>} : vector<5x5xf32>, vector<5x8xf32>, vector<5x8xf32> -> vector<5x8xf32>
    %97 = vector.extract_strided_slice %43 {offsets = [0, 24], sizes = [5, 8], strides = [1, 1]} : vector<5x32xf32> to vector<5x8xf32>
    %98 = vector.extract_strided_slice %44 {offsets = [0, 24], sizes = [5, 8], strides = [1, 1]} : vector<5x32xf32> to vector<5x8xf32>
    "tpu.trace_start"() <{level = 10 : i32, message = "qd,kd->qk"}> : () -> ()
    %cst_40 = arith.constant dense<0.000000e+00> : vector<5x5xf32>
    %99 = tpu.matmul %97, %98, %cst_40 {dimension_numbers = #tpu.dot_dimension_numbers<[1], [1], [0], [0], [0, 0, 1, 0], [], []>} : vector<5x8xf32>, vector<5x8xf32>, vector<5x5xf32> -> vector<5x5xf32>
    "tpu.trace_stop"() : () -> ()
    %cst_41 = arith.constant 0.353553385 : f32
    %100 = vector.broadcast %cst_41 : f32 to vector<5x5xf32>
    %101 = arith.mulf %99, %100 : vector<5x5xf32>
    %cst_42 = arith.constant dense<0xFF800000> : vector<5xf32>
    %102 = vector.multi_reduction <maximumf>, %101, %cst_42 [1] : vector<5x5xf32> to vector<5xf32>
    %103 = vector.shape_cast %102 : vector<5xf32> to vector<5x1xf32>
    %104 = vector.broadcast %103 : vector<5x1xf32> to vector<5x5xf32>
    %105 = arith.subf %101, %104 : vector<5x5xf32>
    %106 = math.exp %105 : vector<5x5xf32>
    %cst_43 = arith.constant dense<0.000000e+00> : vector<5xf32>
    %107 = vector.multi_reduction <add>, %106, %cst_43 [1] : vector<5x5xf32> to vector<5xf32>
    %108 = vector.shape_cast %107 : vector<5xf32> to vector<5x1xf32>
    %109 = tpu.reciprocal %108 {approx = true} : vector<5x1xf32> -> vector<5x1xf32>
    %110 = vector.broadcast %109 : vector<5x1xf32> to vector<5x5xf32>
    %111 = arith.mulf %106, %110 : vector<5x5xf32>
    %112 = vector.extract_strided_slice %45 {offsets = [0, 24], sizes = [5, 8], strides = [1, 1]} : vector<5x32xf32> to vector<5x8xf32>
    %cst_44 = arith.constant dense<0.000000e+00> : vector<5x8xf32>
    %113 = tpu.matmul %111, %112, %cst_44 {dimension_numbers = #tpu.dot_dimension_numbers<[1], [0], [0], [1], [0, 0, 1, 1], [], []>} : vector<5x5xf32>, vector<5x8xf32>, vector<5x8xf32> -> vector<5x8xf32>
    %114 = tpu.concatenate %62, %79, %96, %113 in 1 : vector<5x8xf32>, vector<5x8xf32>, vector<5x8xf32>, vector<5x8xf32> -> vector<5x32xf32>
    %cst_45 = arith.constant dense<0.000000e+00> : vector<5x32xf32>
    %115 = tpu.matmul %114, %12, %cst_45 {dimension_numbers = #tpu.dot_dimension_numbers<[1], [0], [0], [1], [0, 0, 1, 1], [], []>} : vector<5x32xf32>, vector<32x32xf32>, vector<5x32xf32> -> vector<5x32xf32>
    %116 = vector.broadcast %13 : vector<1x32xf32> to vector<5x32xf32>
    %117 = arith.addf %115, %116 : vector<5x32xf32>
    %118 = arith.addf %7, %117 : vector<5x32xf32>
    %cst_46 = arith.constant dense<0.000000e+00> : vector<5xf32>
    %119 = vector.multi_reduction <add>, %118, %cst_46 [1] : vector<5x32xf32> to vector<5xf32>
    %120 = vector.shape_cast %119 : vector<5xf32> to vector<5x1xf32>
    %cst_47 = arith.constant 3.200000e+01 : f32
    %121 = vector.broadcast %cst_47 : f32 to vector<5x1xf32>
    %122 = arith.divf %120, %121 : vector<5x1xf32>
    %123 = vector.broadcast %122 : vector<5x1xf32> to vector<5x32xf32>
    %124 = arith.subf %118, %123 : vector<5x32xf32>
    %125 = arith.mulf %124, %124 : vector<5x32xf32>
    %cst_48 = arith.constant dense<0.000000e+00> : vector<5xf32>
    %126 = vector.multi_reduction <add>, %125, %cst_48 [1] : vector<5x32xf32> to vector<5xf32>
    %127 = vector.shape_cast %126 : vector<5xf32> to vector<5x1xf32>
    %cst_49 = arith.constant 3.200000e+01 : f32
    %128 = vector.broadcast %cst_49 : f32 to vector<5x1xf32>
    %129 = arith.divf %127, %128 : vector<5x1xf32>
    %cst_50 = arith.constant 9.99999974E-6 : f32
    %130 = vector.broadcast %cst_50 : f32 to vector<5x1xf32>
    %131 = arith.addf %129, %130 : vector<5x1xf32>
    %132 = math.rsqrt %131 : vector<5x1xf32>
    %133 = vector.broadcast %132 : vector<5x1xf32> to vector<5x32xf32>
    %134 = arith.mulf %124, %133 : vector<5x32xf32>
    %135 = vector.broadcast %14 : vector<1x32xf32> to vector<5x32xf32>
    %136 = arith.mulf %134, %135 : vector<5x32xf32>
    %137 = vector.broadcast %15 : vector<1x32xf32> to vector<5x32xf32>
    %138 = arith.addf %136, %137 : vector<5x32xf32>
    %cst_51 = arith.constant dense<0.000000e+00> : vector<5x64xf32>
    %139 = tpu.matmul %138, %16, %cst_51 {dimension_numbers = #tpu.dot_dimension_numbers<[1], [0], [0], [1], [0, 0, 1, 1], [], []>} : vector<5x32xf32>, vector<32x64xf32>, vector<5x64xf32> -> vector<5x64xf32>
    %140 = vector.broadcast %17 : vector<1x64xf32> to vector<5x64xf32>
    %141 = arith.addf %139, %140 : vector<5x64xf32>
    %142 = arith.mulf %141, %141 : vector<5x64xf32>
    %143 = arith.mulf %141, %142 : vector<5x64xf32>
    %cst_52 = arith.constant 4.471500e-02 : f32
    %144 = vector.broadcast %cst_52 : f32 to vector<5x64xf32>
    %145 = arith.mulf %144, %143 : vector<5x64xf32>
    %146 = arith.addf %141, %145 : vector<5x64xf32>
    %cst_53 = arith.constant 0.797884583 : f32
    %147 = vector.broadcast %cst_53 : f32 to vector<5x64xf32>
    %148 = arith.mulf %147, %146 : vector<5x64xf32>
    %149 = math.tanh %148 : vector<5x64xf32>
    %cst_54 = arith.constant 1.000000e+00 : f32
    %150 = vector.broadcast %cst_54 : f32 to vector<5x64xf32>
    %151 = arith.addf %150, %149 : vector<5x64xf32>
    %cst_55 = arith.constant 5.000000e-01 : f32
    %152 = vector.broadcast %cst_55 : f32 to vector<5x64xf32>
    %153 = arith.mulf %152, %151 : vector<5x64xf32>
    %154 = arith.mulf %141, %153 : vector<5x64xf32>
    %cst_56 = arith.constant dense<0.000000e+00> : vector<5x32xf32>
    %155 = tpu.matmul %154, %18, %cst_56 {dimension_numbers = #tpu.dot_dimension_numbers<[1], [0], [0], [1], [0, 0, 1, 1], [], []>} : vector<5x64xf32>, vector<64x32xf32>, vector<5x32xf32> -> vector<5x32xf32>
    %156 = arith.addf %118, %155 : vector<5x32xf32>
    %157 = vector.broadcast %19 : vector<1x32xf32> to vector<5x32xf32>
    %158 = arith.addf %156, %157 : vector<5x32xf32>
    %c440 = arith.constant 440 : index
    %c0_57 = arith.constant 0 : index
    %159 = vector.load %arg2[%c440, %c0_57] : memref<664x128xf32, #tpu.memory_space<vmem>>, vector<1x32xf32>
    %c448 = arith.constant 448 : index
    %c0_58 = arith.constant 0 : index
    %160 = vector.load %arg2[%c448, %c0_58] : memref<664x128xf32, #tpu.memory_space<vmem>>, vector<1x32xf32>
    %c456 = arith.constant 456 : index
    %c0_59 = arith.constant 0 : index
    %161 = vector.load %arg2[%c456, %c0_59] : memref<664x128xf32, #tpu.memory_space<vmem>>, vector<32x96xf32>
    %c488 = arith.constant 488 : index
    %c0_60 = arith.constant 0 : index
    %162 = vector.load %arg2[%c488, %c0_60] : memref<664x128xf32, #tpu.memory_space<vmem>>, vector<1x96xf32>
    %c496 = arith.constant 496 : index
    %c0_61 = arith.constant 0 : index
    %163 = vector.load %arg2[%c496, %c0_61] : memref<664x128xf32, #tpu.memory_space<vmem>>, vector<32x32xf32>
    %c528 = arith.constant 528 : index
    %c0_62 = arith.constant 0 : index
    %164 = vector.load %arg2[%c528, %c0_62] : memref<664x128xf32, #tpu.memory_space<vmem>>, vector<1x32xf32>
    %c536 = arith.constant 536 : index
    %c0_63 = arith.constant 0 : index
    %165 = vector.load %arg2[%c536, %c0_63] : memref<664x128xf32, #tpu.memory_space<vmem>>, vector<1x32xf32>
    %c544 = arith.constant 544 : index
    %c0_64 = arith.constant 0 : index
    %166 = vector.load %arg2[%c544, %c0_64] : memref<664x128xf32, #tpu.memory_space<vmem>>, vector<1x32xf32>
    %c552 = arith.constant 552 : index
    %c0_65 = arith.constant 0 : index
    %167 = vector.load %arg2[%c552, %c0_65] : memref<664x128xf32, #tpu.memory_space<vmem>>, vector<32x64xf32>
    %c584 = arith.constant 584 : index
    %c0_66 = arith.constant 0 : index
    %168 = vector.load %arg2[%c584, %c0_66] : memref<664x128xf32, #tpu.memory_space<vmem>>, vector<1x64xf32>
    %c592 = arith.constant 592 : index
    %c0_67 = arith.constant 0 : index
    %169 = vector.load %arg2[%c592, %c0_67] : memref<664x128xf32, #tpu.memory_space<vmem>>, vector<64x32xf32>
    %c656 = arith.constant 656 : index
    %c0_68 = arith.constant 0 : index
    %170 = vector.load %arg2[%c656, %c0_68] : memref<664x128xf32, #tpu.memory_space<vmem>>, vector<1x32xf32>
    %cst_69 = arith.constant dense<0.000000e+00> : vector<5xf32>
    %171 = vector.multi_reduction <add>, %158, %cst_69 [1] : vector<5x32xf32> to vector<5xf32>
    %172 = vector.shape_cast %171 : vector<5xf32> to vector<5x1xf32>
    %cst_70 = arith.constant 3.200000e+01 : f32
    %173 = vector.broadcast %cst_70 : f32 to vector<5x1xf32>
    %174 = arith.divf %172, %173 : vector<5x1xf32>
    %175 = vector.broadcast %174 : vector<5x1xf32> to vector<5x32xf32>
    %176 = arith.subf %158, %175 : vector<5x32xf32>
    %177 = arith.mulf %176, %176 : vector<5x32xf32>
    %cst_71 = arith.constant dense<0.000000e+00> : vector<5xf32>
    %178 = vector.multi_reduction <add>, %177, %cst_71 [1] : vector<5x32xf32> to vector<5xf32>
    %179 = vector.shape_cast %178 : vector<5xf32> to vector<5x1xf32>
    %cst_72 = arith.constant 3.200000e+01 : f32
    %180 = vector.broadcast %cst_72 : f32 to vector<5x1xf32>
    %181 = arith.divf %179, %180 : vector<5x1xf32>
    %cst_73 = arith.constant 9.99999974E-6 : f32
    %182 = vector.broadcast %cst_73 : f32 to vector<5x1xf32>
    %183 = arith.addf %181, %182 : vector<5x1xf32>
    %184 = math.rsqrt %183 : vector<5x1xf32>
    %185 = vector.broadcast %184 : vector<5x1xf32> to vector<5x32xf32>
    %186 = arith.mulf %176, %185 : vector<5x32xf32>
    %187 = vector.broadcast %159 : vector<1x32xf32> to vector<5x32xf32>
    %188 = arith.mulf %186, %187 : vector<5x32xf32>
    %189 = vector.broadcast %160 : vector<1x32xf32> to vector<5x32xf32>
    %190 = arith.addf %188, %189 : vector<5x32xf32>
    %cst_74 = arith.constant dense<0.000000e+00> : vector<5x96xf32>
    %191 = tpu.matmul %190, %161, %cst_74 {dimension_numbers = #tpu.dot_dimension_numbers<[1], [0], [0], [1], [0, 0, 1, 1], [], []>} : vector<5x32xf32>, vector<32x96xf32>, vector<5x96xf32> -> vector<5x96xf32>
    %192 = vector.broadcast %162 : vector<1x96xf32> to vector<5x96xf32>
    %193 = arith.addf %191, %192 : vector<5x96xf32>
    %194 = vector.extract_strided_slice %193 {offsets = [0, 0], sizes = [5, 32], strides = [1, 1]} : vector<5x96xf32> to vector<5x32xf32>
    %195 = vector.extract_strided_slice %193 {offsets = [0, 32], sizes = [5, 32], strides = [1, 1]} : vector<5x96xf32> to vector<5x32xf32>
    %196 = vector.extract_strided_slice %193 {offsets = [0, 64], sizes = [5, 32], strides = [1, 1]} : vector<5x96xf32> to vector<5x32xf32>
    %197 = vector.extract_strided_slice %194 {offsets = [0, 0], sizes = [5, 8], strides = [1, 1]} : vector<5x32xf32> to vector<5x8xf32>
    %198 = vector.extract_strided_slice %195 {offsets = [0, 0], sizes = [5, 8], strides = [1, 1]} : vector<5x32xf32> to vector<5x8xf32>
    "tpu.trace_start"() <{level = 10 : i32, message = "qd,kd->qk"}> : () -> ()
    %cst_75 = arith.constant dense<0.000000e+00> : vector<5x5xf32>
    %199 = tpu.matmul %197, %198, %cst_75 {dimension_numbers = #tpu.dot_dimension_numbers<[1], [1], [0], [0], [0, 0, 1, 0], [], []>} : vector<5x8xf32>, vector<5x8xf32>, vector<5x5xf32> -> vector<5x5xf32>
    "tpu.trace_stop"() : () -> ()
    %cst_76 = arith.constant 0.353553385 : f32
    %200 = vector.broadcast %cst_76 : f32 to vector<5x5xf32>
    %201 = arith.mulf %199, %200 : vector<5x5xf32>
    %cst_77 = arith.constant dense<0xFF800000> : vector<5xf32>
    %202 = vector.multi_reduction <maximumf>, %201, %cst_77 [1] : vector<5x5xf32> to vector<5xf32>
    %203 = vector.shape_cast %202 : vector<5xf32> to vector<5x1xf32>
    %204 = vector.broadcast %203 : vector<5x1xf32> to vector<5x5xf32>
    %205 = arith.subf %201, %204 : vector<5x5xf32>
    %206 = math.exp %205 : vector<5x5xf32>
    %cst_78 = arith.constant dense<0.000000e+00> : vector<5xf32>
    %207 = vector.multi_reduction <add>, %206, %cst_78 [1] : vector<5x5xf32> to vector<5xf32>
    %208 = vector.shape_cast %207 : vector<5xf32> to vector<5x1xf32>
    %209 = tpu.reciprocal %208 {approx = true} : vector<5x1xf32> -> vector<5x1xf32>
    %210 = vector.broadcast %209 : vector<5x1xf32> to vector<5x5xf32>
    %211 = arith.mulf %206, %210 : vector<5x5xf32>
    %212 = vector.extract_strided_slice %196 {offsets = [0, 0], sizes = [5, 8], strides = [1, 1]} : vector<5x32xf32> to vector<5x8xf32>
    %cst_79 = arith.constant dense<0.000000e+00> : vector<5x8xf32>
    %213 = tpu.matmul %211, %212, %cst_79 {dimension_numbers = #tpu.dot_dimension_numbers<[1], [0], [0], [1], [0, 0, 1, 1], [], []>} : vector<5x5xf32>, vector<5x8xf32>, vector<5x8xf32> -> vector<5x8xf32>
    %214 = vector.extract_strided_slice %194 {offsets = [0, 8], sizes = [5, 8], strides = [1, 1]} : vector<5x32xf32> to vector<5x8xf32>
    %215 = vector.extract_strided_slice %195 {offsets = [0, 8], sizes = [5, 8], strides = [1, 1]} : vector<5x32xf32> to vector<5x8xf32>
    "tpu.trace_start"() <{level = 10 : i32, message = "qd,kd->qk"}> : () -> ()
    %cst_80 = arith.constant dense<0.000000e+00> : vector<5x5xf32>
    %216 = tpu.matmul %214, %215, %cst_80 {dimension_numbers = #tpu.dot_dimension_numbers<[1], [1], [0], [0], [0, 0, 1, 0], [], []>} : vector<5x8xf32>, vector<5x8xf32>, vector<5x5xf32> -> vector<5x5xf32>
    "tpu.trace_stop"() : () -> ()
    %cst_81 = arith.constant 0.353553385 : f32
    %217 = vector.broadcast %cst_81 : f32 to vector<5x5xf32>
    %218 = arith.mulf %216, %217 : vector<5x5xf32>
    %cst_82 = arith.constant dense<0xFF800000> : vector<5xf32>
    %219 = vector.multi_reduction <maximumf>, %218, %cst_82 [1] : vector<5x5xf32> to vector<5xf32>
    %220 = vector.shape_cast %219 : vector<5xf32> to vector<5x1xf32>
    %221 = vector.broadcast %220 : vector<5x1xf32> to vector<5x5xf32>
    %222 = arith.subf %218, %221 : vector<5x5xf32>
    %223 = math.exp %222 : vector<5x5xf32>
    %cst_83 = arith.constant dense<0.000000e+00> : vector<5xf32>
    %224 = vector.multi_reduction <add>, %223, %cst_83 [1] : vector<5x5xf32> to vector<5xf32>
    %225 = vector.shape_cast %224 : vector<5xf32> to vector<5x1xf32>
    %226 = tpu.reciprocal %225 {approx = true} : vector<5x1xf32> -> vector<5x1xf32>
    %227 = vector.broadcast %226 : vector<5x1xf32> to vector<5x5xf32>
    %228 = arith.mulf %223, %227 : vector<5x5xf32>
    %229 = vector.extract_strided_slice %196 {offsets = [0, 8], sizes = [5, 8], strides = [1, 1]} : vector<5x32xf32> to vector<5x8xf32>
    %cst_84 = arith.constant dense<0.000000e+00> : vector<5x8xf32>
    %230 = tpu.matmul %228, %229, %cst_84 {dimension_numbers = #tpu.dot_dimension_numbers<[1], [0], [0], [1], [0, 0, 1, 1], [], []>} : vector<5x5xf32>, vector<5x8xf32>, vector<5x8xf32> -> vector<5x8xf32>
    %231 = vector.extract_strided_slice %194 {offsets = [0, 16], sizes = [5, 8], strides = [1, 1]} : vector<5x32xf32> to vector<5x8xf32>
    %232 = vector.extract_strided_slice %195 {offsets = [0, 16], sizes = [5, 8], strides = [1, 1]} : vector<5x32xf32> to vector<5x8xf32>
    "tpu.trace_start"() <{level = 10 : i32, message = "qd,kd->qk"}> : () -> ()
    %cst_85 = arith.constant dense<0.000000e+00> : vector<5x5xf32>
    %233 = tpu.matmul %231, %232, %cst_85 {dimension_numbers = #tpu.dot_dimension_numbers<[1], [1], [0], [0], [0, 0, 1, 0], [], []>} : vector<5x8xf32>, vector<5x8xf32>, vector<5x5xf32> -> vector<5x5xf32>
    "tpu.trace_stop"() : () -> ()
    %cst_86 = arith.constant 0.353553385 : f32
    %234 = vector.broadcast %cst_86 : f32 to vector<5x5xf32>
    %235 = arith.mulf %233, %234 : vector<5x5xf32>
    %cst_87 = arith.constant dense<0xFF800000> : vector<5xf32>
    %236 = vector.multi_reduction <maximumf>, %235, %cst_87 [1] : vector<5x5xf32> to vector<5xf32>
    %237 = vector.shape_cast %236 : vector<5xf32> to vector<5x1xf32>
    %238 = vector.broadcast %237 : vector<5x1xf32> to vector<5x5xf32>
    %239 = arith.subf %235, %238 : vector<5x5xf32>
    %240 = math.exp %239 : vector<5x5xf32>
    %cst_88 = arith.constant dense<0.000000e+00> : vector<5xf32>
    %241 = vector.multi_reduction <add>, %240, %cst_88 [1] : vector<5x5xf32> to vector<5xf32>
    %242 = vector.shape_cast %241 : vector<5xf32> to vector<5x1xf32>
    %243 = tpu.reciprocal %242 {approx = true} : vector<5x1xf32> -> vector<5x1xf32>
    %244 = vector.broadcast %243 : vector<5x1xf32> to vector<5x5xf32>
    %245 = arith.mulf %240, %244 : vector<5x5xf32>
    %246 = vector.extract_strided_slice %196 {offsets = [0, 16], sizes = [5, 8], strides = [1, 1]} : vector<5x32xf32> to vector<5x8xf32>
    %cst_89 = arith.constant dense<0.000000e+00> : vector<5x8xf32>
    %247 = tpu.matmul %245, %246, %cst_89 {dimension_numbers = #tpu.dot_dimension_numbers<[1], [0], [0], [1], [0, 0, 1, 1], [], []>} : vector<5x5xf32>, vector<5x8xf32>, vector<5x8xf32> -> vector<5x8xf32>
    %248 = vector.extract_strided_slice %194 {offsets = [0, 24], sizes = [5, 8], strides = [1, 1]} : vector<5x32xf32> to vector<5x8xf32>
    %249 = vector.extract_strided_slice %195 {offsets = [0, 24], sizes = [5, 8], strides = [1, 1]} : vector<5x32xf32> to vector<5x8xf32>
    "tpu.trace_start"() <{level = 10 : i32, message = "qd,kd->qk"}> : () -> ()
    %cst_90 = arith.constant dense<0.000000e+00> : vector<5x5xf32>
    %250 = tpu.matmul %248, %249, %cst_90 {dimension_numbers = #tpu.dot_dimension_numbers<[1], [1], [0], [0], [0, 0, 1, 0], [], []>} : vector<5x8xf32>, vector<5x8xf32>, vector<5x5xf32> -> vector<5x5xf32>
    "tpu.trace_stop"() : () -> ()
    %cst_91 = arith.constant 0.353553385 : f32
    %251 = vector.broadcast %cst_91 : f32 to vector<5x5xf32>
    %252 = arith.mulf %250, %251 : vector<5x5xf32>
    %cst_92 = arith.constant dense<0xFF800000> : vector<5xf32>
    %253 = vector.multi_reduction <maximumf>, %252, %cst_92 [1] : vector<5x5xf32> to vector<5xf32>
    %254 = vector.shape_cast %253 : vector<5xf32> to vector<5x1xf32>
    %255 = vector.broadcast %254 : vector<5x1xf32> to vector<5x5xf32>
    %256 = arith.subf %252, %255 : vector<5x5xf32>
    %257 = math.exp %256 : vector<5x5xf32>
    %cst_93 = arith.constant dense<0.000000e+00> : vector<5xf32>
    %258 = vector.multi_reduction <add>, %257, %cst_93 [1] : vector<5x5xf32> to vector<5xf32>
    %259 = vector.shape_cast %258 : vector<5xf32> to vector<5x1xf32>
    %260 = tpu.reciprocal %259 {approx = true} : vector<5x1xf32> -> vector<5x1xf32>
    %261 = vector.broadcast %260 : vector<5x1xf32> to vector<5x5xf32>
    %262 = arith.mulf %257, %261 : vector<5x5xf32>
    %263 = vector.extract_strided_slice %196 {offsets = [0, 24], sizes = [5, 8], strides = [1, 1]} : vector<5x32xf32> to vector<5x8xf32>
    %cst_94 = arith.constant dense<0.000000e+00> : vector<5x8xf32>
    %264 = tpu.matmul %262, %263, %cst_94 {dimension_numbers = #tpu.dot_dimension_numbers<[1], [0], [0], [1], [0, 0, 1, 1], [], []>} : vector<5x5xf32>, vector<5x8xf32>, vector<5x8xf32> -> vector<5x8xf32>
    %265 = tpu.concatenate %213, %230, %247, %264 in 1 : vector<5x8xf32>, vector<5x8xf32>, vector<5x8xf32>, vector<5x8xf32> -> vector<5x32xf32>
    %cst_95 = arith.constant dense<0.000000e+00> : vector<5x32xf32>
    %266 = tpu.matmul %265, %163, %cst_95 {dimension_numbers = #tpu.dot_dimension_numbers<[1], [0], [0], [1], [0, 0, 1, 1], [], []>} : vector<5x32xf32>, vector<32x32xf32>, vector<5x32xf32> -> vector<5x32xf32>
    %267 = vector.broadcast %164 : vector<1x32xf32> to vector<5x32xf32>
    %268 = arith.addf %266, %267 : vector<5x32xf32>
    %269 = arith.addf %158, %268 : vector<5x32xf32>
    %cst_96 = arith.constant dense<0.000000e+00> : vector<5xf32>
    %270 = vector.multi_reduction <add>, %269, %cst_96 [1] : vector<5x32xf32> to vector<5xf32>
    %271 = vector.shape_cast %270 : vector<5xf32> to vector<5x1xf32>
    %cst_97 = arith.constant 3.200000e+01 : f32
    %272 = vector.broadcast %cst_97 : f32 to vector<5x1xf32>
    %273 = arith.divf %271, %272 : vector<5x1xf32>
    %274 = vector.broadcast %273 : vector<5x1xf32> to vector<5x32xf32>
    %275 = arith.subf %269, %274 : vector<5x32xf32>
    %276 = arith.mulf %275, %275 : vector<5x32xf32>
    %cst_98 = arith.constant dense<0.000000e+00> : vector<5xf32>
    %277 = vector.multi_reduction <add>, %276, %cst_98 [1] : vector<5x32xf32> to vector<5xf32>
    %278 = vector.shape_cast %277 : vector<5xf32> to vector<5x1xf32>
    %cst_99 = arith.constant 3.200000e+01 : f32
    %279 = vector.broadcast %cst_99 : f32 to vector<5x1xf32>
    %280 = arith.divf %278, %279 : vector<5x1xf32>
    %cst_100 = arith.constant 9.99999974E-6 : f32
    %281 = vector.broadcast %cst_100 : f32 to vector<5x1xf32>
    %282 = arith.addf %280, %281 : vector<5x1xf32>
    %283 = math.rsqrt %282 : vector<5x1xf32>
    %284 = vector.broadcast %283 : vector<5x1xf32> to vector<5x32xf32>
    %285 = arith.mulf %275, %284 : vector<5x32xf32>
    %286 = vector.broadcast %165 : vector<1x32xf32> to vector<5x32xf32>
    %287 = arith.mulf %285, %286 : vector<5x32xf32>
    %288 = vector.broadcast %166 : vector<1x32xf32> to vector<5x32xf32>
    %289 = arith.addf %287, %288 : vector<5x32xf32>
    %cst_101 = arith.constant dense<0.000000e+00> : vector<5x64xf32>
    %290 = tpu.matmul %289, %167, %cst_101 {dimension_numbers = #tpu.dot_dimension_numbers<[1], [0], [0], [1], [0, 0, 1, 1], [], []>} : vector<5x32xf32>, vector<32x64xf32>, vector<5x64xf32> -> vector<5x64xf32>
    %291 = vector.broadcast %168 : vector<1x64xf32> to vector<5x64xf32>
    %292 = arith.addf %290, %291 : vector<5x64xf32>
    %293 = arith.mulf %292, %292 : vector<5x64xf32>
    %294 = arith.mulf %292, %293 : vector<5x64xf32>
    %cst_102 = arith.constant 4.471500e-02 : f32
    %295 = vector.broadcast %cst_102 : f32 to vector<5x64xf32>
    %296 = arith.mulf %295, %294 : vector<5x64xf32>
    %297 = arith.addf %292, %296 : vector<5x64xf32>
    %cst_103 = arith.constant 0.797884583 : f32
    %298 = vector.broadcast %cst_103 : f32 to vector<5x64xf32>
    %299 = arith.mulf %298, %297 : vector<5x64xf32>
    %300 = math.tanh %299 : vector<5x64xf32>
    %cst_104 = arith.constant 1.000000e+00 : f32
    %301 = vector.broadcast %cst_104 : f32 to vector<5x64xf32>
    %302 = arith.addf %301, %300 : vector<5x64xf32>
    %cst_105 = arith.constant 5.000000e-01 : f32
    %303 = vector.broadcast %cst_105 : f32 to vector<5x64xf32>
    %304 = arith.mulf %303, %302 : vector<5x64xf32>
    %305 = arith.mulf %292, %304 : vector<5x64xf32>
    %cst_106 = arith.constant dense<0.000000e+00> : vector<5x32xf32>
    %306 = tpu.matmul %305, %169, %cst_106 {dimension_numbers = #tpu.dot_dimension_numbers<[1], [0], [0], [1], [0, 0, 1, 1], [], []>} : vector<5x64xf32>, vector<64x32xf32>, vector<5x32xf32> -> vector<5x32xf32>
    %307 = arith.addf %269, %306 : vector<5x32xf32>
    %308 = vector.broadcast %170 : vector<1x32xf32> to vector<5x32xf32>
    %309 = arith.addf %307, %308 : vector<5x32xf32>
    %cst_107 = arith.constant dense<0.000000e+00> : vector<5xf32>
    %310 = vector.multi_reduction <add>, %309, %cst_107 [1] : vector<5x32xf32> to vector<5xf32>
    %311 = vector.shape_cast %310 : vector<5xf32> to vector<5x1xf32>
    %cst_108 = arith.constant 3.200000e+01 : f32
    %312 = vector.broadcast %cst_108 : f32 to vector<5x1xf32>
    %313 = arith.divf %311, %312 : vector<5x1xf32>
    %314 = vector.broadcast %313 : vector<5x1xf32> to vector<5x32xf32>
    %315 = arith.subf %309, %314 : vector<5x32xf32>
    %316 = arith.mulf %315, %315 : vector<5x32xf32>
    %cst_109 = arith.constant dense<0.000000e+00> : vector<5xf32>
    %317 = vector.multi_reduction <add>, %316, %cst_109 [1] : vector<5x32xf32> to vector<5xf32>
    %318 = vector.shape_cast %317 : vector<5xf32> to vector<5x1xf32>
    %cst_110 = arith.constant 3.200000e+01 : f32
    %319 = vector.broadcast %cst_110 : f32 to vector<5x1xf32>
    %320 = arith.divf %318, %319 : vector<5x1xf32>
    %cst_111 = arith.constant 9.99999974E-6 : f32
    %321 = vector.broadcast %cst_111 : f32 to vector<5x1xf32>
    %322 = arith.addf %320, %321 : vector<5x1xf32>
    %323 = math.rsqrt %322 : vector<5x1xf32>
    %324 = vector.broadcast %323 : vector<5x1xf32> to vector<5x32xf32>
    %325 = arith.mulf %315, %324 : vector<5x32xf32>
    %326 = vector.broadcast %2 : vector<1x32xf32> to vector<5x32xf32>
    %327 = arith.mulf %325, %326 : vector<5x32xf32>
    %328 = vector.broadcast %3 : vector<1x32xf32> to vector<5x32xf32>
    %329 = arith.addf %327, %328 : vector<5x32xf32>
    %c0_112 = arith.constant 0 : index
    %c0_113 = arith.constant 0 : index
    %c0_114 = arith.constant 0 : index
    %330 = vector.load %arg3[%c0_112, %c0_113, %c0_114] : memref<1x5x32xf32, #tpu.memory_space<vmem>>, vector<1x5x32xf32>
    %331 = vector.shape_cast %330 : vector<1x5x32xf32> to vector<5x32xf32>
    %332 = vector.shape_cast %329 : vector<5x32xf32> to vector<1x5x32xf32>
    tpu.vector_store %arg3[%c0_112, %c0_113, %c0_114], %332 {strides = array<i32>} : memref<1x5x32xf32, #tpu.memory_space<vmem>>, vector<1x5x32xf32>,
    return
  }
  func.func @transform_0(%arg0: i32) -> (i32, i32, i32) {
    %c0_i32 = arith.constant 0 : i32
    %c0_i32_0 = arith.constant 0 : i32
    %c0_i32_1 = arith.constant 0 : i32
    return %arg0, %c0_i32, %c0_i32_0 : i32, i32, i32
  }
  func.func @transform_1(%arg0: i32) -> (i32, i32) {
    %c0_i32 = arith.constant 0 : i32
    %c0_i32_0 = arith.constant 0 : i32
    %c0_i32_1 = arith.constant 0 : i32
    return %c0_i32, %c0_i32_0 : i32, i32
  }
  func.func @transform_2(%arg0: i32) -> (i32, i32, i32) {
    %c0_i32 = arith.constant 0 : i32
    %c0_i32_0 = arith.constant 0 : i32
    %c0_i32_1 = arith.constant 0 : i32
    return %arg0, %c0_i32, %c0_i32_0 : i32, i32, i32
  }
}

module attributes {stable_mosaic.version = 11 : i64} {
  func.func @_dec_kernel(%arg0: i32, %arg1: i32, %arg2: memref<1x5x32xf32, #tpu.memory_space<vmem>>, %arg3: memref<1x5x32xf32, #tpu.memory_space<vmem>>, %arg4: memref<1x1x5xf32, #tpu.memory_space<vmem>>, %arg5: memref<768x128xf32, #tpu.memory_space<vmem>>, %arg6: memref<1x1x1x128xf32, #tpu.memory_space<vmem>>) attributes {dimension_semantics = [#tpu.dimension_semantics<parallel>, #tpu.dimension_semantics<parallel>], iteration_bounds = array<i64: 2, 5>, scalar_prefetch = 0 : i64, scratch_operands = 0 : i64, tpu.core_type = #tpu.core_type<tc>, window_params = [{transform_indices = @transform_0, window_bounds = array<i64: 1, 5, 32>}, {transform_indices = @transform_1, window_bounds = array<i64: 1, 5, 32>}, {transform_indices = @transform_2, window_bounds = array<i64: 1, 1, 5>}, {pipeline_mode = #tpu.pipeline_mode<synchronous>, transform_indices = @transform_3, window_bounds = array<i64: 768, 128>}, {transform_indices = @transform_4, window_bounds = array<i64: 1, 1, 1, 128>}]} {
    %c0 = arith.constant 0 : index
    %c0_0 = arith.constant 0 : index
    %0 = vector.load %arg5[%c0, %c0_0] : memref<768x128xf32, #tpu.memory_space<vmem>>, vector<5x32xf32>
    %c8 = arith.constant 8 : index
    %c0_1 = arith.constant 0 : index
    %1 = vector.load %arg5[%c8, %c0_1] : memref<768x128xf32, #tpu.memory_space<vmem>>, vector<32x128xf32>
    %c40 = arith.constant 40 : index
    %c0_2 = arith.constant 0 : index
    %2 = vector.load %arg5[%c40, %c0_2] : memref<768x128xf32, #tpu.memory_space<vmem>>, vector<1x128xf32>
    %c0_3 = arith.constant 0 : index
    %c0_4 = arith.constant 0 : index
    %c0_5 = arith.constant 0 : index
    %3 = vector.load %arg2[%c0_3, %c0_4, %c0_5] : memref<1x5x32xf32, #tpu.memory_space<vmem>>, vector<1x5x32xf32>
    %4 = vector.shape_cast %3 : vector<1x5x32xf32> to vector<5x32xf32>
    %cst = arith.constant 3.200000e+01 : f32
    %5 = vector.broadcast %cst : f32 to vector<5x32xf32>
    %6 = arith.mulf %4, %5 : vector<5x32xf32>
    %cst_6 = arith.constant 6.65685415 : f32
    %7 = vector.broadcast %cst_6 : f32 to vector<5x32xf32>
    %8 = arith.mulf %0, %7 : vector<5x32xf32>
    %9 = arith.addf %6, %8 : vector<5x32xf32>
    %c0_7 = arith.constant 0 : index
    %c0_8 = arith.constant 0 : index
    %c0_9 = arith.constant 0 : index
    %10 = vector.load %arg3[%c0_7, %c0_8, %c0_9] : memref<1x5x32xf32, #tpu.memory_space<vmem>>, vector<1x5x32xf32>
    %11 = vector.shape_cast %10 : vector<1x5x32xf32> to vector<5x32xf32>
    %12 = tpu.iota {dimensions = array<i32: 1>} : vector<1x5xi32>
    %13 = vector.broadcast %arg1 : i32 to vector<1x5xi32>
    %14 = arith.cmpi sle, %12, %13 : vector<1x5xi32>
    %cst_10 = arith.constant 0.000000e+00 : f32
    %cst_11 = arith.constant -1.000000e+09 : f32
    %15 = vector.broadcast %cst_10 : f32 to vector<1x5xf32>
    %16 = vector.broadcast %cst_11 : f32 to vector<1x5xf32>
    %17 = arith.select %14, %15, %16 : vector<1x5xi1>, vector<1x5xf32>
    %c0_12 = arith.constant 0 : index
    %c0_13 = arith.constant 0 : index
    %c0_14 = arith.constant 0 : index
    %18 = vector.load %arg4[%c0_12, %c0_13, %c0_14] : memref<1x1x5xf32, #tpu.memory_space<vmem>>, vector<1x1x5xf32>
    %19 = vector.shape_cast %18 : vector<1x1x5xf32> to vector<1x5xf32>
    %20 = arith.addf %17, %19 : vector<1x5xf32>
    %c48 = arith.constant 48 : index
    %c0_15 = arith.constant 0 : index
    %21 = vector.load %arg5[%c48, %c0_15] : memref<768x128xf32, #tpu.memory_space<vmem>>, vector<32x96xf32>
    %c80 = arith.constant 80 : index
    %c0_16 = arith.constant 0 : index
    %22 = vector.load %arg5[%c80, %c0_16] : memref<768x128xf32, #tpu.memory_space<vmem>>, vector<1x96xf32>
    %c88 = arith.constant 88 : index
    %c0_17 = arith.constant 0 : index
    %23 = vector.load %arg5[%c88, %c0_17] : memref<768x128xf32, #tpu.memory_space<vmem>>, vector<32x32xf32>
    %c120 = arith.constant 120 : index
    %c0_18 = arith.constant 0 : index
    %24 = vector.load %arg5[%c120, %c0_18] : memref<768x128xf32, #tpu.memory_space<vmem>>, vector<1x32xf32>
    %c128 = arith.constant 128 : index
    %c0_19 = arith.constant 0 : index
    %25 = vector.load %arg5[%c128, %c0_19] : memref<768x128xf32, #tpu.memory_space<vmem>>, vector<1x32xf32>
    %c136 = arith.constant 136 : index
    %c0_20 = arith.constant 0 : index
    %26 = vector.load %arg5[%c136, %c0_20] : memref<768x128xf32, #tpu.memory_space<vmem>>, vector<1x32xf32>
    %c144 = arith.constant 144 : index
    %c0_21 = arith.constant 0 : index
    %27 = vector.load %arg5[%c144, %c0_21] : memref<768x128xf32, #tpu.memory_space<vmem>>, vector<32x32xf32>
    %c176 = arith.constant 176 : index
    %c0_22 = arith.constant 0 : index
    %28 = vector.load %arg5[%c176, %c0_22] : memref<768x128xf32, #tpu.memory_space<vmem>>, vector<1x32xf32>
    %c184 = arith.constant 184 : index
    %c0_23 = arith.constant 0 : index
    %29 = vector.load %arg5[%c184, %c0_23] : memref<768x128xf32, #tpu.memory_space<vmem>>, vector<32x64xf32>
    %c216 = arith.constant 216 : index
    %c0_24 = arith.constant 0 : index
    %30 = vector.load %arg5[%c216, %c0_24] : memref<768x128xf32, #tpu.memory_space<vmem>>, vector<1x64xf32>
    %c224 = arith.constant 224 : index
    %c0_25 = arith.constant 0 : index
    %31 = vector.load %arg5[%c224, %c0_25] : memref<768x128xf32, #tpu.memory_space<vmem>>, vector<32x32xf32>
    %c256 = arith.constant 256 : index
    %c0_26 = arith.constant 0 : index
    %32 = vector.load %arg5[%c256, %c0_26] : memref<768x128xf32, #tpu.memory_space<vmem>>, vector<1x32xf32>
    %c264 = arith.constant 264 : index
    %c0_27 = arith.constant 0 : index
    %33 = vector.load %arg5[%c264, %c0_27] : memref<768x128xf32, #tpu.memory_space<vmem>>, vector<1x32xf32>
    %c272 = arith.constant 272 : index
    %c0_28 = arith.constant 0 : index
    %34 = vector.load %arg5[%c272, %c0_28] : memref<768x128xf32, #tpu.memory_space<vmem>>, vector<1x32xf32>
    %c280 = arith.constant 280 : index
    %c0_29 = arith.constant 0 : index
    %35 = vector.load %arg5[%c280, %c0_29] : memref<768x128xf32, #tpu.memory_space<vmem>>, vector<32x64xf32>
    %c312 = arith.constant 312 : index
    %c0_30 = arith.constant 0 : index
    %36 = vector.load %arg5[%c312, %c0_30] : memref<768x128xf32, #tpu.memory_space<vmem>>, vector<1x64xf32>
    %c320 = arith.constant 320 : index
    %c0_31 = arith.constant 0 : index
    %37 = vector.load %arg5[%c320, %c0_31] : memref<768x128xf32, #tpu.memory_space<vmem>>, vector<64x32xf32>
    %c384 = arith.constant 384 : index
    %c0_32 = arith.constant 0 : index
    %38 = vector.load %arg5[%c384, %c0_32] : memref<768x128xf32, #tpu.memory_space<vmem>>, vector<1x32xf32>
    %c392 = arith.constant 392 : index
    %c0_33 = arith.constant 0 : index
    %39 = vector.load %arg5[%c392, %c0_33] : memref<768x128xf32, #tpu.memory_space<vmem>>, vector<1x32xf32>
    %c400 = arith.constant 400 : index
    %c0_34 = arith.constant 0 : index
    %40 = vector.load %arg5[%c400, %c0_34] : memref<768x128xf32, #tpu.memory_space<vmem>>, vector<1x32xf32>
    %cst_35 = arith.constant dense<0.000000e+00> : vector<5x96xf32>
    %41 = tpu.matmul %9, %21, %cst_35 {dimension_numbers = #tpu.dot_dimension_numbers<[1], [0], [0], [1], [0, 0, 1, 1], [], []>} : vector<5x32xf32>, vector<32x96xf32>, vector<5x96xf32> -> vector<5x96xf32>
    %42 = vector.broadcast %22 : vector<1x96xf32> to vector<5x96xf32>
    %43 = arith.addf %41, %42 : vector<5x96xf32>
    %44 = vector.extract_strided_slice %43 {offsets = [0, 0], sizes = [5, 32], strides = [1, 1]} : vector<5x96xf32> to vector<5x32xf32>
    %45 = vector.extract_strided_slice %43 {offsets = [0, 32], sizes = [5, 32], strides = [1, 1]} : vector<5x96xf32> to vector<5x32xf32>
    %46 = vector.extract_strided_slice %43 {offsets = [0, 64], sizes = [5, 32], strides = [1, 1]} : vector<5x96xf32> to vector<5x32xf32>
    %47 = vector.extract_strided_slice %44 {offsets = [0, 0], sizes = [5, 8], strides = [1, 1]} : vector<5x32xf32> to vector<5x8xf32>
    %48 = vector.extract_strided_slice %45 {offsets = [0, 0], sizes = [5, 8], strides = [1, 1]} : vector<5x32xf32> to vector<5x8xf32>
    "tpu.trace_start"() <{level = 10 : i32, message = "qd,kd->qk"}> : () -> ()
    %cst_36 = arith.constant dense<0.000000e+00> : vector<5x5xf32>
    %49 = tpu.matmul %47, %48, %cst_36 {dimension_numbers = #tpu.dot_dimension_numbers<[1], [1], [0], [0], [0, 0, 1, 0], [], []>} : vector<5x8xf32>, vector<5x8xf32>, vector<5x5xf32> -> vector<5x5xf32>
    "tpu.trace_stop"() : () -> ()
    %cst_37 = arith.constant 0.353553385 : f32
    %50 = vector.broadcast %cst_37 : f32 to vector<5x5xf32>
    %51 = arith.mulf %49, %50 : vector<5x5xf32>
    %52 = vector.broadcast %20 : vector<1x5xf32> to vector<5x5xf32>
    %53 = arith.addf %51, %52 : vector<5x5xf32>
    %cst_38 = arith.constant dense<0xFF800000> : vector<5xf32>
    %54 = vector.multi_reduction <maximumf>, %53, %cst_38 [1] : vector<5x5xf32> to vector<5xf32>
    %55 = vector.shape_cast %54 : vector<5xf32> to vector<5x1xf32>
    %56 = vector.broadcast %55 : vector<5x1xf32> to vector<5x5xf32>
    %57 = arith.subf %53, %56 : vector<5x5xf32>
    %58 = math.exp %57 : vector<5x5xf32>
    %cst_39 = arith.constant dense<0.000000e+00> : vector<5xf32>
    %59 = vector.multi_reduction <add>, %58, %cst_39 [1] : vector<5x5xf32> to vector<5xf32>
    %60 = vector.shape_cast %59 : vector<5xf32> to vector<5x1xf32>
    %61 = tpu.reciprocal %60 {approx = true} : vector<5x1xf32> -> vector<5x1xf32>
    %62 = vector.broadcast %61 : vector<5x1xf32> to vector<5x5xf32>
    %63 = arith.mulf %58, %62 : vector<5x5xf32>
    %64 = vector.extract_strided_slice %46 {offsets = [0, 0], sizes = [5, 8], strides = [1, 1]} : vector<5x32xf32> to vector<5x8xf32>
    %cst_40 = arith.constant dense<0.000000e+00> : vector<5x8xf32>
    %65 = tpu.matmul %63, %64, %cst_40 {dimension_numbers = #tpu.dot_dimension_numbers<[1], [0], [0], [1], [0, 0, 1, 1], [], []>} : vector<5x5xf32>, vector<5x8xf32>, vector<5x8xf32> -> vector<5x8xf32>
    %66 = vector.extract_strided_slice %44 {offsets = [0, 8], sizes = [5, 8], strides = [1, 1]} : vector<5x32xf32> to vector<5x8xf32>
    %67 = vector.extract_strided_slice %45 {offsets = [0, 8], sizes = [5, 8], strides = [1, 1]} : vector<5x32xf32> to vector<5x8xf32>
    "tpu.trace_start"() <{level = 10 : i32, message = "qd,kd->qk"}> : () -> ()
    %cst_41 = arith.constant dense<0.000000e+00> : vector<5x5xf32>
    %68 = tpu.matmul %66, %67, %cst_41 {dimension_numbers = #tpu.dot_dimension_numbers<[1], [1], [0], [0], [0, 0, 1, 0], [], []>} : vector<5x8xf32>, vector<5x8xf32>, vector<5x5xf32> -> vector<5x5xf32>
    "tpu.trace_stop"() : () -> ()
    %cst_42 = arith.constant 0.353553385 : f32
    %69 = vector.broadcast %cst_42 : f32 to vector<5x5xf32>
    %70 = arith.mulf %68, %69 : vector<5x5xf32>
    %71 = vector.broadcast %20 : vector<1x5xf32> to vector<5x5xf32>
    %72 = arith.addf %70, %71 : vector<5x5xf32>
    %cst_43 = arith.constant dense<0xFF800000> : vector<5xf32>
    %73 = vector.multi_reduction <maximumf>, %72, %cst_43 [1] : vector<5x5xf32> to vector<5xf32>
    %74 = vector.shape_cast %73 : vector<5xf32> to vector<5x1xf32>
    %75 = vector.broadcast %74 : vector<5x1xf32> to vector<5x5xf32>
    %76 = arith.subf %72, %75 : vector<5x5xf32>
    %77 = math.exp %76 : vector<5x5xf32>
    %cst_44 = arith.constant dense<0.000000e+00> : vector<5xf32>
    %78 = vector.multi_reduction <add>, %77, %cst_44 [1] : vector<5x5xf32> to vector<5xf32>
    %79 = vector.shape_cast %78 : vector<5xf32> to vector<5x1xf32>
    %80 = tpu.reciprocal %79 {approx = true} : vector<5x1xf32> -> vector<5x1xf32>
    %81 = vector.broadcast %80 : vector<5x1xf32> to vector<5x5xf32>
    %82 = arith.mulf %77, %81 : vector<5x5xf32>
    %83 = vector.extract_strided_slice %46 {offsets = [0, 8], sizes = [5, 8], strides = [1, 1]} : vector<5x32xf32> to vector<5x8xf32>
    %cst_45 = arith.constant dense<0.000000e+00> : vector<5x8xf32>
    %84 = tpu.matmul %82, %83, %cst_45 {dimension_numbers = #tpu.dot_dimension_numbers<[1], [0], [0], [1], [0, 0, 1, 1], [], []>} : vector<5x5xf32>, vector<5x8xf32>, vector<5x8xf32> -> vector<5x8xf32>
    %85 = vector.extract_strided_slice %44 {offsets = [0, 16], sizes = [5, 8], strides = [1, 1]} : vector<5x32xf32> to vector<5x8xf32>
    %86 = vector.extract_strided_slice %45 {offsets = [0, 16], sizes = [5, 8], strides = [1, 1]} : vector<5x32xf32> to vector<5x8xf32>
    "tpu.trace_start"() <{level = 10 : i32, message = "qd,kd->qk"}> : () -> ()
    %cst_46 = arith.constant dense<0.000000e+00> : vector<5x5xf32>
    %87 = tpu.matmul %85, %86, %cst_46 {dimension_numbers = #tpu.dot_dimension_numbers<[1], [1], [0], [0], [0, 0, 1, 0], [], []>} : vector<5x8xf32>, vector<5x8xf32>, vector<5x5xf32> -> vector<5x5xf32>
    "tpu.trace_stop"() : () -> ()
    %cst_47 = arith.constant 0.353553385 : f32
    %88 = vector.broadcast %cst_47 : f32 to vector<5x5xf32>
    %89 = arith.mulf %87, %88 : vector<5x5xf32>
    %90 = vector.broadcast %20 : vector<1x5xf32> to vector<5x5xf32>
    %91 = arith.addf %89, %90 : vector<5x5xf32>
    %cst_48 = arith.constant dense<0xFF800000> : vector<5xf32>
    %92 = vector.multi_reduction <maximumf>, %91, %cst_48 [1] : vector<5x5xf32> to vector<5xf32>
    %93 = vector.shape_cast %92 : vector<5xf32> to vector<5x1xf32>
    %94 = vector.broadcast %93 : vector<5x1xf32> to vector<5x5xf32>
    %95 = arith.subf %91, %94 : vector<5x5xf32>
    %96 = math.exp %95 : vector<5x5xf32>
    %cst_49 = arith.constant dense<0.000000e+00> : vector<5xf32>
    %97 = vector.multi_reduction <add>, %96, %cst_49 [1] : vector<5x5xf32> to vector<5xf32>
    %98 = vector.shape_cast %97 : vector<5xf32> to vector<5x1xf32>
    %99 = tpu.reciprocal %98 {approx = true} : vector<5x1xf32> -> vector<5x1xf32>
    %100 = vector.broadcast %99 : vector<5x1xf32> to vector<5x5xf32>
    %101 = arith.mulf %96, %100 : vector<5x5xf32>
    %102 = vector.extract_strided_slice %46 {offsets = [0, 16], sizes = [5, 8], strides = [1, 1]} : vector<5x32xf32> to vector<5x8xf32>
    %cst_50 = arith.constant dense<0.000000e+00> : vector<5x8xf32>
    %103 = tpu.matmul %101, %102, %cst_50 {dimension_numbers = #tpu.dot_dimension_numbers<[1], [0], [0], [1], [0, 0, 1, 1], [], []>} : vector<5x5xf32>, vector<5x8xf32>, vector<5x8xf32> -> vector<5x8xf32>
    %104 = vector.extract_strided_slice %44 {offsets = [0, 24], sizes = [5, 8], strides = [1, 1]} : vector<5x32xf32> to vector<5x8xf32>
    %105 = vector.extract_strided_slice %45 {offsets = [0, 24], sizes = [5, 8], strides = [1, 1]} : vector<5x32xf32> to vector<5x8xf32>
    "tpu.trace_start"() <{level = 10 : i32, message = "qd,kd->qk"}> : () -> ()
    %cst_51 = arith.constant dense<0.000000e+00> : vector<5x5xf32>
    %106 = tpu.matmul %104, %105, %cst_51 {dimension_numbers = #tpu.dot_dimension_numbers<[1], [1], [0], [0], [0, 0, 1, 0], [], []>} : vector<5x8xf32>, vector<5x8xf32>, vector<5x5xf32> -> vector<5x5xf32>
    "tpu.trace_stop"() : () -> ()
    %cst_52 = arith.constant 0.353553385 : f32
    %107 = vector.broadcast %cst_52 : f32 to vector<5x5xf32>
    %108 = arith.mulf %106, %107 : vector<5x5xf32>
    %109 = vector.broadcast %20 : vector<1x5xf32> to vector<5x5xf32>
    %110 = arith.addf %108, %109 : vector<5x5xf32>
    %cst_53 = arith.constant dense<0xFF800000> : vector<5xf32>
    %111 = vector.multi_reduction <maximumf>, %110, %cst_53 [1] : vector<5x5xf32> to vector<5xf32>
    %112 = vector.shape_cast %111 : vector<5xf32> to vector<5x1xf32>
    %113 = vector.broadcast %112 : vector<5x1xf32> to vector<5x5xf32>
    %114 = arith.subf %110, %113 : vector<5x5xf32>
    %115 = math.exp %114 : vector<5x5xf32>
    %cst_54 = arith.constant dense<0.000000e+00> : vector<5xf32>
    %116 = vector.multi_reduction <add>, %115, %cst_54 [1] : vector<5x5xf32> to vector<5xf32>
    %117 = vector.shape_cast %116 : vector<5xf32> to vector<5x1xf32>
    %118 = tpu.reciprocal %117 {approx = true} : vector<5x1xf32> -> vector<5x1xf32>
    %119 = vector.broadcast %118 : vector<5x1xf32> to vector<5x5xf32>
    %120 = arith.mulf %115, %119 : vector<5x5xf32>
    %121 = vector.extract_strided_slice %46 {offsets = [0, 24], sizes = [5, 8], strides = [1, 1]} : vector<5x32xf32> to vector<5x8xf32>
    %cst_55 = arith.constant dense<0.000000e+00> : vector<5x8xf32>
    %122 = tpu.matmul %120, %121, %cst_55 {dimension_numbers = #tpu.dot_dimension_numbers<[1], [0], [0], [1], [0, 0, 1, 1], [], []>} : vector<5x5xf32>, vector<5x8xf32>, vector<5x8xf32> -> vector<5x8xf32>
    %123 = tpu.concatenate %65, %84, %103, %122 in 1 : vector<5x8xf32>, vector<5x8xf32>, vector<5x8xf32>, vector<5x8xf32> -> vector<5x32xf32>
    %cst_56 = arith.constant dense<0.000000e+00> : vector<5x32xf32>
    %124 = tpu.matmul %123, %23, %cst_56 {dimension_numbers = #tpu.dot_dimension_numbers<[1], [0], [0], [1], [0, 0, 1, 1], [], []>} : vector<5x32xf32>, vector<32x32xf32>, vector<5x32xf32> -> vector<5x32xf32>
    %125 = vector.broadcast %24 : vector<1x32xf32> to vector<5x32xf32>
    %126 = arith.addf %124, %125 : vector<5x32xf32>
    %127 = arith.addf %9, %126 : vector<5x32xf32>
    %cst_57 = arith.constant dense<0.000000e+00> : vector<5xf32>
    %128 = vector.multi_reduction <add>, %127, %cst_57 [1] : vector<5x32xf32> to vector<5xf32>
    %129 = vector.shape_cast %128 : vector<5xf32> to vector<5x1xf32>
    %cst_58 = arith.constant 3.200000e+01 : f32
    %130 = vector.broadcast %cst_58 : f32 to vector<5x1xf32>
    %131 = arith.divf %129, %130 : vector<5x1xf32>
    %132 = vector.broadcast %131 : vector<5x1xf32> to vector<5x32xf32>
    %133 = arith.subf %127, %132 : vector<5x32xf32>
    %134 = arith.mulf %133, %133 : vector<5x32xf32>
    %cst_59 = arith.constant dense<0.000000e+00> : vector<5xf32>
    %135 = vector.multi_reduction <add>, %134, %cst_59 [1] : vector<5x32xf32> to vector<5xf32>
    %136 = vector.shape_cast %135 : vector<5xf32> to vector<5x1xf32>
    %cst_60 = arith.constant 3.200000e+01 : f32
    %137 = vector.broadcast %cst_60 : f32 to vector<5x1xf32>
    %138 = arith.divf %136, %137 : vector<5x1xf32>
    %cst_61 = arith.constant 9.99999974E-6 : f32
    %139 = vector.broadcast %cst_61 : f32 to vector<5x1xf32>
    %140 = arith.addf %138, %139 : vector<5x1xf32>
    %141 = math.rsqrt %140 : vector<5x1xf32>
    %142 = vector.broadcast %141 : vector<5x1xf32> to vector<5x32xf32>
    %143 = arith.mulf %133, %142 : vector<5x32xf32>
    %144 = vector.broadcast %25 : vector<1x32xf32> to vector<5x32xf32>
    %145 = arith.mulf %143, %144 : vector<5x32xf32>
    %146 = vector.broadcast %26 : vector<1x32xf32> to vector<5x32xf32>
    %147 = arith.addf %145, %146 : vector<5x32xf32>
    %cst_62 = arith.constant dense<0.000000e+00> : vector<5x32xf32>
    %148 = tpu.matmul %147, %27, %cst_62 {dimension_numbers = #tpu.dot_dimension_numbers<[1], [0], [0], [1], [0, 0, 1, 1], [], []>} : vector<5x32xf32>, vector<32x32xf32>, vector<5x32xf32> -> vector<5x32xf32>
    %149 = vector.broadcast %28 : vector<1x32xf32> to vector<5x32xf32>
    %150 = arith.addf %148, %149 : vector<5x32xf32>
    %cst_63 = arith.constant dense<0.000000e+00> : vector<5x64xf32>
    %151 = tpu.matmul %11, %29, %cst_63 {dimension_numbers = #tpu.dot_dimension_numbers<[1], [0], [0], [1], [0, 0, 1, 1], [], []>} : vector<5x32xf32>, vector<32x64xf32>, vector<5x64xf32> -> vector<5x64xf32>
    %152 = vector.broadcast %30 : vector<1x64xf32> to vector<5x64xf32>
    %153 = arith.addf %151, %152 : vector<5x64xf32>
    %154 = vector.extract_strided_slice %153 {offsets = [0, 0], sizes = [5, 32], strides = [1, 1]} : vector<5x64xf32> to vector<5x32xf32>
    %155 = vector.extract_strided_slice %153 {offsets = [0, 32], sizes = [5, 32], strides = [1, 1]} : vector<5x64xf32> to vector<5x32xf32>
    %156 = vector.extract_strided_slice %150 {offsets = [0, 0], sizes = [5, 8], strides = [1, 1]} : vector<5x32xf32> to vector<5x8xf32>
    %157 = vector.extract_strided_slice %154 {offsets = [0, 0], sizes = [5, 8], strides = [1, 1]} : vector<5x32xf32> to vector<5x8xf32>
    "tpu.trace_start"() <{level = 10 : i32, message = "qd,kd->qk"}> : () -> ()
    %cst_64 = arith.constant dense<0.000000e+00> : vector<5x5xf32>
    %158 = tpu.matmul %156, %157, %cst_64 {dimension_numbers = #tpu.dot_dimension_numbers<[1], [1], [0], [0], [0, 0, 1, 0], [], []>} : vector<5x8xf32>, vector<5x8xf32>, vector<5x5xf32> -> vector<5x5xf32>
    "tpu.trace_stop"() : () -> ()
    %cst_65 = arith.constant 0.353553385 : f32
    %159 = vector.broadcast %cst_65 : f32 to vector<5x5xf32>
    %160 = arith.mulf %158, %159 : vector<5x5xf32>
    %cst_66 = arith.constant dense<0xFF800000> : vector<5xf32>
    %161 = vector.multi_reduction <maximumf>, %160, %cst_66 [1] : vector<5x5xf32> to vector<5xf32>
    %162 = vector.shape_cast %161 : vector<5xf32> to vector<5x1xf32>
    %163 = vector.broadcast %162 : vector<5x1xf32> to vector<5x5xf32>
    %164 = arith.subf %160, %163 : vector<5x5xf32>
    %165 = math.exp %164 : vector<5x5xf32>
    %cst_67 = arith.constant dense<0.000000e+00> : vector<5xf32>
    %166 = vector.multi_reduction <add>, %165, %cst_67 [1] : vector<5x5xf32> to vector<5xf32>
    %167 = vector.shape_cast %166 : vector<5xf32> to vector<5x1xf32>
    %168 = tpu.reciprocal %167 {approx = true} : vector<5x1xf32> -> vector<5x1xf32>
    %169 = vector.broadcast %168 : vector<5x1xf32> to vector<5x5xf32>
    %170 = arith.mulf %165, %169 : vector<5x5xf32>
    %171 = vector.extract_strided_slice %155 {offsets = [0, 0], sizes = [5, 8], strides = [1, 1]} : vector<5x32xf32> to vector<5x8xf32>
    %cst_68 = arith.constant dense<0.000000e+00> : vector<5x8xf32>
    %172 = tpu.matmul %170, %171, %cst_68 {dimension_numbers = #tpu.dot_dimension_numbers<[1], [0], [0], [1], [0, 0, 1, 1], [], []>} : vector<5x5xf32>, vector<5x8xf32>, vector<5x8xf32> -> vector<5x8xf32>
    %173 = vector.extract_strided_slice %150 {offsets = [0, 8], sizes = [5, 8], strides = [1, 1]} : vector<5x32xf32> to vector<5x8xf32>
    %174 = vector.extract_strided_slice %154 {offsets = [0, 8], sizes = [5, 8], strides = [1, 1]} : vector<5x32xf32> to vector<5x8xf32>
    "tpu.trace_start"() <{level = 10 : i32, message = "qd,kd->qk"}> : () -> ()
    %cst_69 = arith.constant dense<0.000000e+00> : vector<5x5xf32>
    %175 = tpu.matmul %173, %174, %cst_69 {dimension_numbers = #tpu.dot_dimension_numbers<[1], [1], [0], [0], [0, 0, 1, 0], [], []>} : vector<5x8xf32>, vector<5x8xf32>, vector<5x5xf32> -> vector<5x5xf32>
    "tpu.trace_stop"() : () -> ()
    %cst_70 = arith.constant 0.353553385 : f32
    %176 = vector.broadcast %cst_70 : f32 to vector<5x5xf32>
    %177 = arith.mulf %175, %176 : vector<5x5xf32>
    %cst_71 = arith.constant dense<0xFF800000> : vector<5xf32>
    %178 = vector.multi_reduction <maximumf>, %177, %cst_71 [1] : vector<5x5xf32> to vector<5xf32>
    %179 = vector.shape_cast %178 : vector<5xf32> to vector<5x1xf32>
    %180 = vector.broadcast %179 : vector<5x1xf32> to vector<5x5xf32>
    %181 = arith.subf %177, %180 : vector<5x5xf32>
    %182 = math.exp %181 : vector<5x5xf32>
    %cst_72 = arith.constant dense<0.000000e+00> : vector<5xf32>
    %183 = vector.multi_reduction <add>, %182, %cst_72 [1] : vector<5x5xf32> to vector<5xf32>
    %184 = vector.shape_cast %183 : vector<5xf32> to vector<5x1xf32>
    %185 = tpu.reciprocal %184 {approx = true} : vector<5x1xf32> -> vector<5x1xf32>
    %186 = vector.broadcast %185 : vector<5x1xf32> to vector<5x5xf32>
    %187 = arith.mulf %182, %186 : vector<5x5xf32>
    %188 = vector.extract_strided_slice %155 {offsets = [0, 8], sizes = [5, 8], strides = [1, 1]} : vector<5x32xf32> to vector<5x8xf32>
    %cst_73 = arith.constant dense<0.000000e+00> : vector<5x8xf32>
    %189 = tpu.matmul %187, %188, %cst_73 {dimension_numbers = #tpu.dot_dimension_numbers<[1], [0], [0], [1], [0, 0, 1, 1], [], []>} : vector<5x5xf32>, vector<5x8xf32>, vector<5x8xf32> -> vector<5x8xf32>
    %190 = vector.extract_strided_slice %150 {offsets = [0, 16], sizes = [5, 8], strides = [1, 1]} : vector<5x32xf32> to vector<5x8xf32>
    %191 = vector.extract_strided_slice %154 {offsets = [0, 16], sizes = [5, 8], strides = [1, 1]} : vector<5x32xf32> to vector<5x8xf32>
    "tpu.trace_start"() <{level = 10 : i32, message = "qd,kd->qk"}> : () -> ()
    %cst_74 = arith.constant dense<0.000000e+00> : vector<5x5xf32>
    %192 = tpu.matmul %190, %191, %cst_74 {dimension_numbers = #tpu.dot_dimension_numbers<[1], [1], [0], [0], [0, 0, 1, 0], [], []>} : vector<5x8xf32>, vector<5x8xf32>, vector<5x5xf32> -> vector<5x5xf32>
    "tpu.trace_stop"() : () -> ()
    %cst_75 = arith.constant 0.353553385 : f32
    %193 = vector.broadcast %cst_75 : f32 to vector<5x5xf32>
    %194 = arith.mulf %192, %193 : vector<5x5xf32>
    %cst_76 = arith.constant dense<0xFF800000> : vector<5xf32>
    %195 = vector.multi_reduction <maximumf>, %194, %cst_76 [1] : vector<5x5xf32> to vector<5xf32>
    %196 = vector.shape_cast %195 : vector<5xf32> to vector<5x1xf32>
    %197 = vector.broadcast %196 : vector<5x1xf32> to vector<5x5xf32>
    %198 = arith.subf %194, %197 : vector<5x5xf32>
    %199 = math.exp %198 : vector<5x5xf32>
    %cst_77 = arith.constant dense<0.000000e+00> : vector<5xf32>
    %200 = vector.multi_reduction <add>, %199, %cst_77 [1] : vector<5x5xf32> to vector<5xf32>
    %201 = vector.shape_cast %200 : vector<5xf32> to vector<5x1xf32>
    %202 = tpu.reciprocal %201 {approx = true} : vector<5x1xf32> -> vector<5x1xf32>
    %203 = vector.broadcast %202 : vector<5x1xf32> to vector<5x5xf32>
    %204 = arith.mulf %199, %203 : vector<5x5xf32>
    %205 = vector.extract_strided_slice %155 {offsets = [0, 16], sizes = [5, 8], strides = [1, 1]} : vector<5x32xf32> to vector<5x8xf32>
    %cst_78 = arith.constant dense<0.000000e+00> : vector<5x8xf32>
    %206 = tpu.matmul %204, %205, %cst_78 {dimension_numbers = #tpu.dot_dimension_numbers<[1], [0], [0], [1], [0, 0, 1, 1], [], []>} : vector<5x5xf32>, vector<5x8xf32>, vector<5x8xf32> -> vector<5x8xf32>
    %207 = vector.extract_strided_slice %150 {offsets = [0, 24], sizes = [5, 8], strides = [1, 1]} : vector<5x32xf32> to vector<5x8xf32>
    %208 = vector.extract_strided_slice %154 {offsets = [0, 24], sizes = [5, 8], strides = [1, 1]} : vector<5x32xf32> to vector<5x8xf32>
    "tpu.trace_start"() <{level = 10 : i32, message = "qd,kd->qk"}> : () -> ()
    %cst_79 = arith.constant dense<0.000000e+00> : vector<5x5xf32>
    %209 = tpu.matmul %207, %208, %cst_79 {dimension_numbers = #tpu.dot_dimension_numbers<[1], [1], [0], [0], [0, 0, 1, 0], [], []>} : vector<5x8xf32>, vector<5x8xf32>, vector<5x5xf32> -> vector<5x5xf32>
    "tpu.trace_stop"() : () -> ()
    %cst_80 = arith.constant 0.353553385 : f32
    %210 = vector.broadcast %cst_80 : f32 to vector<5x5xf32>
    %211 = arith.mulf %209, %210 : vector<5x5xf32>
    %cst_81 = arith.constant dense<0xFF800000> : vector<5xf32>
    %212 = vector.multi_reduction <maximumf>, %211, %cst_81 [1] : vector<5x5xf32> to vector<5xf32>
    %213 = vector.shape_cast %212 : vector<5xf32> to vector<5x1xf32>
    %214 = vector.broadcast %213 : vector<5x1xf32> to vector<5x5xf32>
    %215 = arith.subf %211, %214 : vector<5x5xf32>
    %216 = math.exp %215 : vector<5x5xf32>
    %cst_82 = arith.constant dense<0.000000e+00> : vector<5xf32>
    %217 = vector.multi_reduction <add>, %216, %cst_82 [1] : vector<5x5xf32> to vector<5xf32>
    %218 = vector.shape_cast %217 : vector<5xf32> to vector<5x1xf32>
    %219 = tpu.reciprocal %218 {approx = true} : vector<5x1xf32> -> vector<5x1xf32>
    %220 = vector.broadcast %219 : vector<5x1xf32> to vector<5x5xf32>
    %221 = arith.mulf %216, %220 : vector<5x5xf32>
    %222 = vector.extract_strided_slice %155 {offsets = [0, 24], sizes = [5, 8], strides = [1, 1]} : vector<5x32xf32> to vector<5x8xf32>
    %cst_83 = arith.constant dense<0.000000e+00> : vector<5x8xf32>
    %223 = tpu.matmul %221, %222, %cst_83 {dimension_numbers = #tpu.dot_dimension_numbers<[1], [0], [0], [1], [0, 0, 1, 1], [], []>} : vector<5x5xf32>, vector<5x8xf32>, vector<5x8xf32> -> vector<5x8xf32>
    %224 = tpu.concatenate %172, %189, %206, %223 in 1 : vector<5x8xf32>, vector<5x8xf32>, vector<5x8xf32>, vector<5x8xf32> -> vector<5x32xf32>
    %cst_84 = arith.constant dense<0.000000e+00> : vector<5x32xf32>
    %225 = tpu.matmul %224, %31, %cst_84 {dimension_numbers = #tpu.dot_dimension_numbers<[1], [0], [0], [1], [0, 0, 1, 1], [], []>} : vector<5x32xf32>, vector<32x32xf32>, vector<5x32xf32> -> vector<5x32xf32>
    %226 = vector.broadcast %32 : vector<1x32xf32> to vector<5x32xf32>
    %227 = arith.addf %225, %226 : vector<5x32xf32>
    %228 = arith.addf %147, %227 : vector<5x32xf32>
    %cst_85 = arith.constant dense<0.000000e+00> : vector<5xf32>
    %229 = vector.multi_reduction <add>, %228, %cst_85 [1] : vector<5x32xf32> to vector<5xf32>
    %230 = vector.shape_cast %229 : vector<5xf32> to vector<5x1xf32>
    %cst_86 = arith.constant 3.200000e+01 : f32
    %231 = vector.broadcast %cst_86 : f32 to vector<5x1xf32>
    %232 = arith.divf %230, %231 : vector<5x1xf32>
    %233 = vector.broadcast %232 : vector<5x1xf32> to vector<5x32xf32>
    %234 = arith.subf %228, %233 : vector<5x32xf32>
    %235 = arith.mulf %234, %234 : vector<5x32xf32>
    %cst_87 = arith.constant dense<0.000000e+00> : vector<5xf32>
    %236 = vector.multi_reduction <add>, %235, %cst_87 [1] : vector<5x32xf32> to vector<5xf32>
    %237 = vector.shape_cast %236 : vector<5xf32> to vector<5x1xf32>
    %cst_88 = arith.constant 3.200000e+01 : f32
    %238 = vector.broadcast %cst_88 : f32 to vector<5x1xf32>
    %239 = arith.divf %237, %238 : vector<5x1xf32>
    %cst_89 = arith.constant 9.99999974E-6 : f32
    %240 = vector.broadcast %cst_89 : f32 to vector<5x1xf32>
    %241 = arith.addf %239, %240 : vector<5x1xf32>
    %242 = math.rsqrt %241 : vector<5x1xf32>
    %243 = vector.broadcast %242 : vector<5x1xf32> to vector<5x32xf32>
    %244 = arith.mulf %234, %243 : vector<5x32xf32>
    %245 = vector.broadcast %33 : vector<1x32xf32> to vector<5x32xf32>
    %246 = arith.mulf %244, %245 : vector<5x32xf32>
    %247 = vector.broadcast %34 : vector<1x32xf32> to vector<5x32xf32>
    %248 = arith.addf %246, %247 : vector<5x32xf32>
    %cst_90 = arith.constant dense<0.000000e+00> : vector<5x64xf32>
    %249 = tpu.matmul %248, %35, %cst_90 {dimension_numbers = #tpu.dot_dimension_numbers<[1], [0], [0], [1], [0, 0, 1, 1], [], []>} : vector<5x32xf32>, vector<32x64xf32>, vector<5x64xf32> -> vector<5x64xf32>
    %250 = vector.broadcast %36 : vector<1x64xf32> to vector<5x64xf32>
    %251 = arith.addf %249, %250 : vector<5x64xf32>
    %cst_91 = arith.constant 0.000000e+00 : f32
    %252 = vector.broadcast %cst_91 : f32 to vector<5x64xf32>
    %253 = arith.maximumf %251, %252 : vector<5x64xf32>
    %cst_92 = arith.constant dense<0.000000e+00> : vector<5x32xf32>
    %254 = tpu.matmul %253, %37, %cst_92 {dimension_numbers = #tpu.dot_dimension_numbers<[1], [0], [0], [1], [0, 0, 1, 1], [], []>} : vector<5x64xf32>, vector<64x32xf32>, vector<5x32xf32> -> vector<5x32xf32>
    %255 = vector.broadcast %38 : vector<1x32xf32> to vector<5x32xf32>
    %256 = arith.addf %254, %255 : vector<5x32xf32>
    %257 = arith.addf %248, %256 : vector<5x32xf32>
    %cst_93 = arith.constant dense<0.000000e+00> : vector<5xf32>
    %258 = vector.multi_reduction <add>, %257, %cst_93 [1] : vector<5x32xf32> to vector<5xf32>
    %259 = vector.shape_cast %258 : vector<5xf32> to vector<5x1xf32>
    %cst_94 = arith.constant 3.200000e+01 : f32
    %260 = vector.broadcast %cst_94 : f32 to vector<5x1xf32>
    %261 = arith.divf %259, %260 : vector<5x1xf32>
    %262 = vector.broadcast %261 : vector<5x1xf32> to vector<5x32xf32>
    %263 = arith.subf %257, %262 : vector<5x32xf32>
    %264 = arith.mulf %263, %263 : vector<5x32xf32>
    %cst_95 = arith.constant dense<0.000000e+00> : vector<5xf32>
    %265 = vector.multi_reduction <add>, %264, %cst_95 [1] : vector<5x32xf32> to vector<5xf32>
    %266 = vector.shape_cast %265 : vector<5xf32> to vector<5x1xf32>
    %cst_96 = arith.constant 3.200000e+01 : f32
    %267 = vector.broadcast %cst_96 : f32 to vector<5x1xf32>
    %268 = arith.divf %266, %267 : vector<5x1xf32>
    %cst_97 = arith.constant 9.99999974E-6 : f32
    %269 = vector.broadcast %cst_97 : f32 to vector<5x1xf32>
    %270 = arith.addf %268, %269 : vector<5x1xf32>
    %271 = math.rsqrt %270 : vector<5x1xf32>
    %272 = vector.broadcast %271 : vector<5x1xf32> to vector<5x32xf32>
    %273 = arith.mulf %263, %272 : vector<5x32xf32>
    %274 = vector.broadcast %39 : vector<1x32xf32> to vector<5x32xf32>
    %275 = arith.mulf %273, %274 : vector<5x32xf32>
    %276 = vector.broadcast %40 : vector<1x32xf32> to vector<5x32xf32>
    %277 = arith.addf %275, %276 : vector<5x32xf32>
    %c408 = arith.constant 408 : index
    %c0_98 = arith.constant 0 : index
    %278 = vector.load %arg5[%c408, %c0_98] : memref<768x128xf32, #tpu.memory_space<vmem>>, vector<32x96xf32>
    %c440 = arith.constant 440 : index
    %c0_99 = arith.constant 0 : index
    %279 = vector.load %arg5[%c440, %c0_99] : memref<768x128xf32, #tpu.memory_space<vmem>>, vector<1x96xf32>
    %c448 = arith.constant 448 : index
    %c0_100 = arith.constant 0 : index
    %280 = vector.load %arg5[%c448, %c0_100] : memref<768x128xf32, #tpu.memory_space<vmem>>, vector<32x32xf32>
    %c480 = arith.constant 480 : index
    %c0_101 = arith.constant 0 : index
    %281 = vector.load %arg5[%c480, %c0_101] : memref<768x128xf32, #tpu.memory_space<vmem>>, vector<1x32xf32>
    %c488 = arith.constant 488 : index
    %c0_102 = arith.constant 0 : index
    %282 = vector.load %arg5[%c488, %c0_102] : memref<768x128xf32, #tpu.memory_space<vmem>>, vector<1x32xf32>
    %c496 = arith.constant 496 : index
    %c0_103 = arith.constant 0 : index
    %283 = vector.load %arg5[%c496, %c0_103] : memref<768x128xf32, #tpu.memory_space<vmem>>, vector<1x32xf32>
    %c504 = arith.constant 504 : index
    %c0_104 = arith.constant 0 : index
    %284 = vector.load %arg5[%c504, %c0_104] : memref<768x128xf32, #tpu.memory_space<vmem>>, vector<32x32xf32>
    %c536 = arith.constant 536 : index
    %c0_105 = arith.constant 0 : index
    %285 = vector.load %arg5[%c536, %c0_105] : memref<768x128xf32, #tpu.memory_space<vmem>>, vector<1x32xf32>
    %c544 = arith.constant 544 : index
    %c0_106 = arith.constant 0 : index
    %286 = vector.load %arg5[%c544, %c0_106] : memref<768x128xf32, #tpu.memory_space<vmem>>, vector<32x64xf32>
    %c576 = arith.constant 576 : index
    %c0_107 = arith.constant 0 : index
    %287 = vector.load %arg5[%c576, %c0_107] : memref<768x128xf32, #tpu.memory_space<vmem>>, vector<1x64xf32>
    %c584 = arith.constant 584 : index
    %c0_108 = arith.constant 0 : index
    %288 = vector.load %arg5[%c584, %c0_108] : memref<768x128xf32, #tpu.memory_space<vmem>>, vector<32x32xf32>
    %c616 = arith.constant 616 : index
    %c0_109 = arith.constant 0 : index
    %289 = vector.load %arg5[%c616, %c0_109] : memref<768x128xf32, #tpu.memory_space<vmem>>, vector<1x32xf32>
    %c624 = arith.constant 624 : index
    %c0_110 = arith.constant 0 : index
    %290 = vector.load %arg5[%c624, %c0_110] : memref<768x128xf32, #tpu.memory_space<vmem>>, vector<1x32xf32>
    %c632 = arith.constant 632 : index
    %c0_111 = arith.constant 0 : index
    %291 = vector.load %arg5[%c632, %c0_111] : memref<768x128xf32, #tpu.memory_space<vmem>>, vector<1x32xf32>
    %c640 = arith.constant 640 : index
    %c0_112 = arith.constant 0 : index
    %292 = vector.load %arg5[%c640, %c0_112] : memref<768x128xf32, #tpu.memory_space<vmem>>, vector<32x64xf32>
    %c672 = arith.constant 672 : index
    %c0_113 = arith.constant 0 : index
    %293 = vector.load %arg5[%c672, %c0_113] : memref<768x128xf32, #tpu.memory_space<vmem>>, vector<1x64xf32>
    %c680 = arith.constant 680 : index
    %c0_114 = arith.constant 0 : index
    %294 = vector.load %arg5[%c680, %c0_114] : memref<768x128xf32, #tpu.memory_space<vmem>>, vector<64x32xf32>
    %c744 = arith.constant 744 : index
    %c0_115 = arith.constant 0 : index
    %295 = vector.load %arg5[%c744, %c0_115] : memref<768x128xf32, #tpu.memory_space<vmem>>, vector<1x32xf32>
    %c752 = arith.constant 752 : index
    %c0_116 = arith.constant 0 : index
    %296 = vector.load %arg5[%c752, %c0_116] : memref<768x128xf32, #tpu.memory_space<vmem>>, vector<1x32xf32>
    %c760 = arith.constant 760 : index
    %c0_117 = arith.constant 0 : index
    %297 = vector.load %arg5[%c760, %c0_117] : memref<768x128xf32, #tpu.memory_space<vmem>>, vector<1x32xf32>
    %cst_118 = arith.constant dense<0.000000e+00> : vector<5x96xf32>
    %298 = tpu.matmul %277, %278, %cst_118 {dimension_numbers = #tpu.dot_dimension_numbers<[1], [0], [0], [1], [0, 0, 1, 1], [], []>} : vector<5x32xf32>, vector<32x96xf32>, vector<5x96xf32> -> vector<5x96xf32>
    %299 = vector.broadcast %279 : vector<1x96xf32> to vector<5x96xf32>
    %300 = arith.addf %298, %299 : vector<5x96xf32>
    %301 = vector.extract_strided_slice %300 {offsets = [0, 0], sizes = [5, 32], strides = [1, 1]} : vector<5x96xf32> to vector<5x32xf32>
    %302 = vector.extract_strided_slice %300 {offsets = [0, 32], sizes = [5, 32], strides = [1, 1]} : vector<5x96xf32> to vector<5x32xf32>
    %303 = vector.extract_strided_slice %300 {offsets = [0, 64], sizes = [5, 32], strides = [1, 1]} : vector<5x96xf32> to vector<5x32xf32>
    %304 = vector.extract_strided_slice %301 {offsets = [0, 0], sizes = [5, 8], strides = [1, 1]} : vector<5x32xf32> to vector<5x8xf32>
    %305 = vector.extract_strided_slice %302 {offsets = [0, 0], sizes = [5, 8], strides = [1, 1]} : vector<5x32xf32> to vector<5x8xf32>
    "tpu.trace_start"() <{level = 10 : i32, message = "qd,kd->qk"}> : () -> ()
    %cst_119 = arith.constant dense<0.000000e+00> : vector<5x5xf32>
    %306 = tpu.matmul %304, %305, %cst_119 {dimension_numbers = #tpu.dot_dimension_numbers<[1], [1], [0], [0], [0, 0, 1, 0], [], []>} : vector<5x8xf32>, vector<5x8xf32>, vector<5x5xf32> -> vector<5x5xf32>
    "tpu.trace_stop"() : () -> ()
    %cst_120 = arith.constant 0.353553385 : f32
    %307 = vector.broadcast %cst_120 : f32 to vector<5x5xf32>
    %308 = arith.mulf %306, %307 : vector<5x5xf32>
    %309 = vector.broadcast %20 : vector<1x5xf32> to vector<5x5xf32>
    %310 = arith.addf %308, %309 : vector<5x5xf32>
    %cst_121 = arith.constant dense<0xFF800000> : vector<5xf32>
    %311 = vector.multi_reduction <maximumf>, %310, %cst_121 [1] : vector<5x5xf32> to vector<5xf32>
    %312 = vector.shape_cast %311 : vector<5xf32> to vector<5x1xf32>
    %313 = vector.broadcast %312 : vector<5x1xf32> to vector<5x5xf32>
    %314 = arith.subf %310, %313 : vector<5x5xf32>
    %315 = math.exp %314 : vector<5x5xf32>
    %cst_122 = arith.constant dense<0.000000e+00> : vector<5xf32>
    %316 = vector.multi_reduction <add>, %315, %cst_122 [1] : vector<5x5xf32> to vector<5xf32>
    %317 = vector.shape_cast %316 : vector<5xf32> to vector<5x1xf32>
    %318 = tpu.reciprocal %317 {approx = true} : vector<5x1xf32> -> vector<5x1xf32>
    %319 = vector.broadcast %318 : vector<5x1xf32> to vector<5x5xf32>
    %320 = arith.mulf %315, %319 : vector<5x5xf32>
    %321 = vector.extract_strided_slice %303 {offsets = [0, 0], sizes = [5, 8], strides = [1, 1]} : vector<5x32xf32> to vector<5x8xf32>
    %cst_123 = arith.constant dense<0.000000e+00> : vector<5x8xf32>
    %322 = tpu.matmul %320, %321, %cst_123 {dimension_numbers = #tpu.dot_dimension_numbers<[1], [0], [0], [1], [0, 0, 1, 1], [], []>} : vector<5x5xf32>, vector<5x8xf32>, vector<5x8xf32> -> vector<5x8xf32>
    %323 = vector.extract_strided_slice %301 {offsets = [0, 8], sizes = [5, 8], strides = [1, 1]} : vector<5x32xf32> to vector<5x8xf32>
    %324 = vector.extract_strided_slice %302 {offsets = [0, 8], sizes = [5, 8], strides = [1, 1]} : vector<5x32xf32> to vector<5x8xf32>
    "tpu.trace_start"() <{level = 10 : i32, message = "qd,kd->qk"}> : () -> ()
    %cst_124 = arith.constant dense<0.000000e+00> : vector<5x5xf32>
    %325 = tpu.matmul %323, %324, %cst_124 {dimension_numbers = #tpu.dot_dimension_numbers<[1], [1], [0], [0], [0, 0, 1, 0], [], []>} : vector<5x8xf32>, vector<5x8xf32>, vector<5x5xf32> -> vector<5x5xf32>
    "tpu.trace_stop"() : () -> ()
    %cst_125 = arith.constant 0.353553385 : f32
    %326 = vector.broadcast %cst_125 : f32 to vector<5x5xf32>
    %327 = arith.mulf %325, %326 : vector<5x5xf32>
    %328 = vector.broadcast %20 : vector<1x5xf32> to vector<5x5xf32>
    %329 = arith.addf %327, %328 : vector<5x5xf32>
    %cst_126 = arith.constant dense<0xFF800000> : vector<5xf32>
    %330 = vector.multi_reduction <maximumf>, %329, %cst_126 [1] : vector<5x5xf32> to vector<5xf32>
    %331 = vector.shape_cast %330 : vector<5xf32> to vector<5x1xf32>
    %332 = vector.broadcast %331 : vector<5x1xf32> to vector<5x5xf32>
    %333 = arith.subf %329, %332 : vector<5x5xf32>
    %334 = math.exp %333 : vector<5x5xf32>
    %cst_127 = arith.constant dense<0.000000e+00> : vector<5xf32>
    %335 = vector.multi_reduction <add>, %334, %cst_127 [1] : vector<5x5xf32> to vector<5xf32>
    %336 = vector.shape_cast %335 : vector<5xf32> to vector<5x1xf32>
    %337 = tpu.reciprocal %336 {approx = true} : vector<5x1xf32> -> vector<5x1xf32>
    %338 = vector.broadcast %337 : vector<5x1xf32> to vector<5x5xf32>
    %339 = arith.mulf %334, %338 : vector<5x5xf32>
    %340 = vector.extract_strided_slice %303 {offsets = [0, 8], sizes = [5, 8], strides = [1, 1]} : vector<5x32xf32> to vector<5x8xf32>
    %cst_128 = arith.constant dense<0.000000e+00> : vector<5x8xf32>
    %341 = tpu.matmul %339, %340, %cst_128 {dimension_numbers = #tpu.dot_dimension_numbers<[1], [0], [0], [1], [0, 0, 1, 1], [], []>} : vector<5x5xf32>, vector<5x8xf32>, vector<5x8xf32> -> vector<5x8xf32>
    %342 = vector.extract_strided_slice %301 {offsets = [0, 16], sizes = [5, 8], strides = [1, 1]} : vector<5x32xf32> to vector<5x8xf32>
    %343 = vector.extract_strided_slice %302 {offsets = [0, 16], sizes = [5, 8], strides = [1, 1]} : vector<5x32xf32> to vector<5x8xf32>
    "tpu.trace_start"() <{level = 10 : i32, message = "qd,kd->qk"}> : () -> ()
    %cst_129 = arith.constant dense<0.000000e+00> : vector<5x5xf32>
    %344 = tpu.matmul %342, %343, %cst_129 {dimension_numbers = #tpu.dot_dimension_numbers<[1], [1], [0], [0], [0, 0, 1, 0], [], []>} : vector<5x8xf32>, vector<5x8xf32>, vector<5x5xf32> -> vector<5x5xf32>
    "tpu.trace_stop"() : () -> ()
    %cst_130 = arith.constant 0.353553385 : f32
    %345 = vector.broadcast %cst_130 : f32 to vector<5x5xf32>
    %346 = arith.mulf %344, %345 : vector<5x5xf32>
    %347 = vector.broadcast %20 : vector<1x5xf32> to vector<5x5xf32>
    %348 = arith.addf %346, %347 : vector<5x5xf32>
    %cst_131 = arith.constant dense<0xFF800000> : vector<5xf32>
    %349 = vector.multi_reduction <maximumf>, %348, %cst_131 [1] : vector<5x5xf32> to vector<5xf32>
    %350 = vector.shape_cast %349 : vector<5xf32> to vector<5x1xf32>
    %351 = vector.broadcast %350 : vector<5x1xf32> to vector<5x5xf32>
    %352 = arith.subf %348, %351 : vector<5x5xf32>
    %353 = math.exp %352 : vector<5x5xf32>
    %cst_132 = arith.constant dense<0.000000e+00> : vector<5xf32>
    %354 = vector.multi_reduction <add>, %353, %cst_132 [1] : vector<5x5xf32> to vector<5xf32>
    %355 = vector.shape_cast %354 : vector<5xf32> to vector<5x1xf32>
    %356 = tpu.reciprocal %355 {approx = true} : vector<5x1xf32> -> vector<5x1xf32>
    %357 = vector.broadcast %356 : vector<5x1xf32> to vector<5x5xf32>
    %358 = arith.mulf %353, %357 : vector<5x5xf32>
    %359 = vector.extract_strided_slice %303 {offsets = [0, 16], sizes = [5, 8], strides = [1, 1]} : vector<5x32xf32> to vector<5x8xf32>
    %cst_133 = arith.constant dense<0.000000e+00> : vector<5x8xf32>
    %360 = tpu.matmul %358, %359, %cst_133 {dimension_numbers = #tpu.dot_dimension_numbers<[1], [0], [0], [1], [0, 0, 1, 1], [], []>} : vector<5x5xf32>, vector<5x8xf32>, vector<5x8xf32> -> vector<5x8xf32>
    %361 = vector.extract_strided_slice %301 {offsets = [0, 24], sizes = [5, 8], strides = [1, 1]} : vector<5x32xf32> to vector<5x8xf32>
    %362 = vector.extract_strided_slice %302 {offsets = [0, 24], sizes = [5, 8], strides = [1, 1]} : vector<5x32xf32> to vector<5x8xf32>
    "tpu.trace_start"() <{level = 10 : i32, message = "qd,kd->qk"}> : () -> ()
    %cst_134 = arith.constant dense<0.000000e+00> : vector<5x5xf32>
    %363 = tpu.matmul %361, %362, %cst_134 {dimension_numbers = #tpu.dot_dimension_numbers<[1], [1], [0], [0], [0, 0, 1, 0], [], []>} : vector<5x8xf32>, vector<5x8xf32>, vector<5x5xf32> -> vector<5x5xf32>
    "tpu.trace_stop"() : () -> ()
    %cst_135 = arith.constant 0.353553385 : f32
    %364 = vector.broadcast %cst_135 : f32 to vector<5x5xf32>
    %365 = arith.mulf %363, %364 : vector<5x5xf32>
    %366 = vector.broadcast %20 : vector<1x5xf32> to vector<5x5xf32>
    %367 = arith.addf %365, %366 : vector<5x5xf32>
    %cst_136 = arith.constant dense<0xFF800000> : vector<5xf32>
    %368 = vector.multi_reduction <maximumf>, %367, %cst_136 [1] : vector<5x5xf32> to vector<5xf32>
    %369 = vector.shape_cast %368 : vector<5xf32> to vector<5x1xf32>
    %370 = vector.broadcast %369 : vector<5x1xf32> to vector<5x5xf32>
    %371 = arith.subf %367, %370 : vector<5x5xf32>
    %372 = math.exp %371 : vector<5x5xf32>
    %cst_137 = arith.constant dense<0.000000e+00> : vector<5xf32>
    %373 = vector.multi_reduction <add>, %372, %cst_137 [1] : vector<5x5xf32> to vector<5xf32>
    %374 = vector.shape_cast %373 : vector<5xf32> to vector<5x1xf32>
    %375 = tpu.reciprocal %374 {approx = true} : vector<5x1xf32> -> vector<5x1xf32>
    %376 = vector.broadcast %375 : vector<5x1xf32> to vector<5x5xf32>
    %377 = arith.mulf %372, %376 : vector<5x5xf32>
    %378 = vector.extract_strided_slice %303 {offsets = [0, 24], sizes = [5, 8], strides = [1, 1]} : vector<5x32xf32> to vector<5x8xf32>
    %cst_138 = arith.constant dense<0.000000e+00> : vector<5x8xf32>
    %379 = tpu.matmul %377, %378, %cst_138 {dimension_numbers = #tpu.dot_dimension_numbers<[1], [0], [0], [1], [0, 0, 1, 1], [], []>} : vector<5x5xf32>, vector<5x8xf32>, vector<5x8xf32> -> vector<5x8xf32>
    %380 = tpu.concatenate %322, %341, %360, %379 in 1 : vector<5x8xf32>, vector<5x8xf32>, vector<5x8xf32>, vector<5x8xf32> -> vector<5x32xf32>
    %cst_139 = arith.constant dense<0.000000e+00> : vector<5x32xf32>
    %381 = tpu.matmul %380, %280, %cst_139 {dimension_numbers = #tpu.dot_dimension_numbers<[1], [0], [0], [1], [0, 0, 1, 1], [], []>} : vector<5x32xf32>, vector<32x32xf32>, vector<5x32xf32> -> vector<5x32xf32>
    %382 = vector.broadcast %281 : vector<1x32xf32> to vector<5x32xf32>
    %383 = arith.addf %381, %382 : vector<5x32xf32>
    %384 = arith.addf %277, %383 : vector<5x32xf32>
    %cst_140 = arith.constant dense<0.000000e+00> : vector<5xf32>
    %385 = vector.multi_reduction <add>, %384, %cst_140 [1] : vector<5x32xf32> to vector<5xf32>
    %386 = vector.shape_cast %385 : vector<5xf32> to vector<5x1xf32>
    %cst_141 = arith.constant 3.200000e+01 : f32
    %387 = vector.broadcast %cst_141 : f32 to vector<5x1xf32>
    %388 = arith.divf %386, %387 : vector<5x1xf32>
    %389 = vector.broadcast %388 : vector<5x1xf32> to vector<5x32xf32>
    %390 = arith.subf %384, %389 : vector<5x32xf32>
    %391 = arith.mulf %390, %390 : vector<5x32xf32>
    %cst_142 = arith.constant dense<0.000000e+00> : vector<5xf32>
    %392 = vector.multi_reduction <add>, %391, %cst_142 [1] : vector<5x32xf32> to vector<5xf32>
    %393 = vector.shape_cast %392 : vector<5xf32> to vector<5x1xf32>
    %cst_143 = arith.constant 3.200000e+01 : f32
    %394 = vector.broadcast %cst_143 : f32 to vector<5x1xf32>
    %395 = arith.divf %393, %394 : vector<5x1xf32>
    %cst_144 = arith.constant 9.99999974E-6 : f32
    %396 = vector.broadcast %cst_144 : f32 to vector<5x1xf32>
    %397 = arith.addf %395, %396 : vector<5x1xf32>
    %398 = math.rsqrt %397 : vector<5x1xf32>
    %399 = vector.broadcast %398 : vector<5x1xf32> to vector<5x32xf32>
    %400 = arith.mulf %390, %399 : vector<5x32xf32>
    %401 = vector.broadcast %282 : vector<1x32xf32> to vector<5x32xf32>
    %402 = arith.mulf %400, %401 : vector<5x32xf32>
    %403 = vector.broadcast %283 : vector<1x32xf32> to vector<5x32xf32>
    %404 = arith.addf %402, %403 : vector<5x32xf32>
    %cst_145 = arith.constant dense<0.000000e+00> : vector<5x32xf32>
    %405 = tpu.matmul %404, %284, %cst_145 {dimension_numbers = #tpu.dot_dimension_numbers<[1], [0], [0], [1], [0, 0, 1, 1], [], []>} : vector<5x32xf32>, vector<32x32xf32>, vector<5x32xf32> -> vector<5x32xf32>
    %406 = vector.broadcast %285 : vector<1x32xf32> to vector<5x32xf32>
    %407 = arith.addf %405, %406 : vector<5x32xf32>
    %cst_146 = arith.constant dense<0.000000e+00> : vector<5x64xf32>
    %408 = tpu.matmul %11, %286, %cst_146 {dimension_numbers = #tpu.dot_dimension_numbers<[1], [0], [0], [1], [0, 0, 1, 1], [], []>} : vector<5x32xf32>, vector<32x64xf32>, vector<5x64xf32> -> vector<5x64xf32>
    %409 = vector.broadcast %287 : vector<1x64xf32> to vector<5x64xf32>
    %410 = arith.addf %408, %409 : vector<5x64xf32>
    %411 = vector.extract_strided_slice %410 {offsets = [0, 0], sizes = [5, 32], strides = [1, 1]} : vector<5x64xf32> to vector<5x32xf32>
    %412 = vector.extract_strided_slice %410 {offsets = [0, 32], sizes = [5, 32], strides = [1, 1]} : vector<5x64xf32> to vector<5x32xf32>
    %413 = vector.extract_strided_slice %407 {offsets = [0, 0], sizes = [5, 8], strides = [1, 1]} : vector<5x32xf32> to vector<5x8xf32>
    %414 = vector.extract_strided_slice %411 {offsets = [0, 0], sizes = [5, 8], strides = [1, 1]} : vector<5x32xf32> to vector<5x8xf32>
    "tpu.trace_start"() <{level = 10 : i32, message = "qd,kd->qk"}> : () -> ()
    %cst_147 = arith.constant dense<0.000000e+00> : vector<5x5xf32>
    %415 = tpu.matmul %413, %414, %cst_147 {dimension_numbers = #tpu.dot_dimension_numbers<[1], [1], [0], [0], [0, 0, 1, 0], [], []>} : vector<5x8xf32>, vector<5x8xf32>, vector<5x5xf32> -> vector<5x5xf32>
    "tpu.trace_stop"() : () -> ()
    %cst_148 = arith.constant 0.353553385 : f32
    %416 = vector.broadcast %cst_148 : f32 to vector<5x5xf32>
    %417 = arith.mulf %415, %416 : vector<5x5xf32>
    %cst_149 = arith.constant dense<0xFF800000> : vector<5xf32>
    %418 = vector.multi_reduction <maximumf>, %417, %cst_149 [1] : vector<5x5xf32> to vector<5xf32>
    %419 = vector.shape_cast %418 : vector<5xf32> to vector<5x1xf32>
    %420 = vector.broadcast %419 : vector<5x1xf32> to vector<5x5xf32>
    %421 = arith.subf %417, %420 : vector<5x5xf32>
    %422 = math.exp %421 : vector<5x5xf32>
    %cst_150 = arith.constant dense<0.000000e+00> : vector<5xf32>
    %423 = vector.multi_reduction <add>, %422, %cst_150 [1] : vector<5x5xf32> to vector<5xf32>
    %424 = vector.shape_cast %423 : vector<5xf32> to vector<5x1xf32>
    %425 = tpu.reciprocal %424 {approx = true} : vector<5x1xf32> -> vector<5x1xf32>
    %426 = vector.broadcast %425 : vector<5x1xf32> to vector<5x5xf32>
    %427 = arith.mulf %422, %426 : vector<5x5xf32>
    %428 = vector.extract_strided_slice %412 {offsets = [0, 0], sizes = [5, 8], strides = [1, 1]} : vector<5x32xf32> to vector<5x8xf32>
    %cst_151 = arith.constant dense<0.000000e+00> : vector<5x8xf32>
    %429 = tpu.matmul %427, %428, %cst_151 {dimension_numbers = #tpu.dot_dimension_numbers<[1], [0], [0], [1], [0, 0, 1, 1], [], []>} : vector<5x5xf32>, vector<5x8xf32>, vector<5x8xf32> -> vector<5x8xf32>
    %430 = vector.extract_strided_slice %407 {offsets = [0, 8], sizes = [5, 8], strides = [1, 1]} : vector<5x32xf32> to vector<5x8xf32>
    %431 = vector.extract_strided_slice %411 {offsets = [0, 8], sizes = [5, 8], strides = [1, 1]} : vector<5x32xf32> to vector<5x8xf32>
    "tpu.trace_start"() <{level = 10 : i32, message = "qd,kd->qk"}> : () -> ()
    %cst_152 = arith.constant dense<0.000000e+00> : vector<5x5xf32>
    %432 = tpu.matmul %430, %431, %cst_152 {dimension_numbers = #tpu.dot_dimension_numbers<[1], [1], [0], [0], [0, 0, 1, 0], [], []>} : vector<5x8xf32>, vector<5x8xf32>, vector<5x5xf32> -> vector<5x5xf32>
    "tpu.trace_stop"() : () -> ()
    %cst_153 = arith.constant 0.353553385 : f32
    %433 = vector.broadcast %cst_153 : f32 to vector<5x5xf32>
    %434 = arith.mulf %432, %433 : vector<5x5xf32>
    %cst_154 = arith.constant dense<0xFF800000> : vector<5xf32>
    %435 = vector.multi_reduction <maximumf>, %434, %cst_154 [1] : vector<5x5xf32> to vector<5xf32>
    %436 = vector.shape_cast %435 : vector<5xf32> to vector<5x1xf32>
    %437 = vector.broadcast %436 : vector<5x1xf32> to vector<5x5xf32>
    %438 = arith.subf %434, %437 : vector<5x5xf32>
    %439 = math.exp %438 : vector<5x5xf32>
    %cst_155 = arith.constant dense<0.000000e+00> : vector<5xf32>
    %440 = vector.multi_reduction <add>, %439, %cst_155 [1] : vector<5x5xf32> to vector<5xf32>
    %441 = vector.shape_cast %440 : vector<5xf32> to vector<5x1xf32>
    %442 = tpu.reciprocal %441 {approx = true} : vector<5x1xf32> -> vector<5x1xf32>
    %443 = vector.broadcast %442 : vector<5x1xf32> to vector<5x5xf32>
    %444 = arith.mulf %439, %443 : vector<5x5xf32>
    %445 = vector.extract_strided_slice %412 {offsets = [0, 8], sizes = [5, 8], strides = [1, 1]} : vector<5x32xf32> to vector<5x8xf32>
    %cst_156 = arith.constant dense<0.000000e+00> : vector<5x8xf32>
    %446 = tpu.matmul %444, %445, %cst_156 {dimension_numbers = #tpu.dot_dimension_numbers<[1], [0], [0], [1], [0, 0, 1, 1], [], []>} : vector<5x5xf32>, vector<5x8xf32>, vector<5x8xf32> -> vector<5x8xf32>
    %447 = vector.extract_strided_slice %407 {offsets = [0, 16], sizes = [5, 8], strides = [1, 1]} : vector<5x32xf32> to vector<5x8xf32>
    %448 = vector.extract_strided_slice %411 {offsets = [0, 16], sizes = [5, 8], strides = [1, 1]} : vector<5x32xf32> to vector<5x8xf32>
    "tpu.trace_start"() <{level = 10 : i32, message = "qd,kd->qk"}> : () -> ()
    %cst_157 = arith.constant dense<0.000000e+00> : vector<5x5xf32>
    %449 = tpu.matmul %447, %448, %cst_157 {dimension_numbers = #tpu.dot_dimension_numbers<[1], [1], [0], [0], [0, 0, 1, 0], [], []>} : vector<5x8xf32>, vector<5x8xf32>, vector<5x5xf32> -> vector<5x5xf32>
    "tpu.trace_stop"() : () -> ()
    %cst_158 = arith.constant 0.353553385 : f32
    %450 = vector.broadcast %cst_158 : f32 to vector<5x5xf32>
    %451 = arith.mulf %449, %450 : vector<5x5xf32>
    %cst_159 = arith.constant dense<0xFF800000> : vector<5xf32>
    %452 = vector.multi_reduction <maximumf>, %451, %cst_159 [1] : vector<5x5xf32> to vector<5xf32>
    %453 = vector.shape_cast %452 : vector<5xf32> to vector<5x1xf32>
    %454 = vector.broadcast %453 : vector<5x1xf32> to vector<5x5xf32>
    %455 = arith.subf %451, %454 : vector<5x5xf32>
    %456 = math.exp %455 : vector<5x5xf32>
    %cst_160 = arith.constant dense<0.000000e+00> : vector<5xf32>
    %457 = vector.multi_reduction <add>, %456, %cst_160 [1] : vector<5x5xf32> to vector<5xf32>
    %458 = vector.shape_cast %457 : vector<5xf32> to vector<5x1xf32>
    %459 = tpu.reciprocal %458 {approx = true} : vector<5x1xf32> -> vector<5x1xf32>
    %460 = vector.broadcast %459 : vector<5x1xf32> to vector<5x5xf32>
    %461 = arith.mulf %456, %460 : vector<5x5xf32>
    %462 = vector.extract_strided_slice %412 {offsets = [0, 16], sizes = [5, 8], strides = [1, 1]} : vector<5x32xf32> to vector<5x8xf32>
    %cst_161 = arith.constant dense<0.000000e+00> : vector<5x8xf32>
    %463 = tpu.matmul %461, %462, %cst_161 {dimension_numbers = #tpu.dot_dimension_numbers<[1], [0], [0], [1], [0, 0, 1, 1], [], []>} : vector<5x5xf32>, vector<5x8xf32>, vector<5x8xf32> -> vector<5x8xf32>
    %464 = vector.extract_strided_slice %407 {offsets = [0, 24], sizes = [5, 8], strides = [1, 1]} : vector<5x32xf32> to vector<5x8xf32>
    %465 = vector.extract_strided_slice %411 {offsets = [0, 24], sizes = [5, 8], strides = [1, 1]} : vector<5x32xf32> to vector<5x8xf32>
    "tpu.trace_start"() <{level = 10 : i32, message = "qd,kd->qk"}> : () -> ()
    %cst_162 = arith.constant dense<0.000000e+00> : vector<5x5xf32>
    %466 = tpu.matmul %464, %465, %cst_162 {dimension_numbers = #tpu.dot_dimension_numbers<[1], [1], [0], [0], [0, 0, 1, 0], [], []>} : vector<5x8xf32>, vector<5x8xf32>, vector<5x5xf32> -> vector<5x5xf32>
    "tpu.trace_stop"() : () -> ()
    %cst_163 = arith.constant 0.353553385 : f32
    %467 = vector.broadcast %cst_163 : f32 to vector<5x5xf32>
    %468 = arith.mulf %466, %467 : vector<5x5xf32>
    %cst_164 = arith.constant dense<0xFF800000> : vector<5xf32>
    %469 = vector.multi_reduction <maximumf>, %468, %cst_164 [1] : vector<5x5xf32> to vector<5xf32>
    %470 = vector.shape_cast %469 : vector<5xf32> to vector<5x1xf32>
    %471 = vector.broadcast %470 : vector<5x1xf32> to vector<5x5xf32>
    %472 = arith.subf %468, %471 : vector<5x5xf32>
    %473 = math.exp %472 : vector<5x5xf32>
    %cst_165 = arith.constant dense<0.000000e+00> : vector<5xf32>
    %474 = vector.multi_reduction <add>, %473, %cst_165 [1] : vector<5x5xf32> to vector<5xf32>
    %475 = vector.shape_cast %474 : vector<5xf32> to vector<5x1xf32>
    %476 = tpu.reciprocal %475 {approx = true} : vector<5x1xf32> -> vector<5x1xf32>
    %477 = vector.broadcast %476 : vector<5x1xf32> to vector<5x5xf32>
    %478 = arith.mulf %473, %477 : vector<5x5xf32>
    %479 = vector.extract_strided_slice %412 {offsets = [0, 24], sizes = [5, 8], strides = [1, 1]} : vector<5x32xf32> to vector<5x8xf32>
    %cst_166 = arith.constant dense<0.000000e+00> : vector<5x8xf32>
    %480 = tpu.matmul %478, %479, %cst_166 {dimension_numbers = #tpu.dot_dimension_numbers<[1], [0], [0], [1], [0, 0, 1, 1], [], []>} : vector<5x5xf32>, vector<5x8xf32>, vector<5x8xf32> -> vector<5x8xf32>
    %481 = tpu.concatenate %429, %446, %463, %480 in 1 : vector<5x8xf32>, vector<5x8xf32>, vector<5x8xf32>, vector<5x8xf32> -> vector<5x32xf32>
    %cst_167 = arith.constant dense<0.000000e+00> : vector<5x32xf32>
    %482 = tpu.matmul %481, %288, %cst_167 {dimension_numbers = #tpu.dot_dimension_numbers<[1], [0], [0], [1], [0, 0, 1, 1], [], []>} : vector<5x32xf32>, vector<32x32xf32>, vector<5x32xf32> -> vector<5x32xf32>
    %483 = vector.broadcast %289 : vector<1x32xf32> to vector<5x32xf32>
    %484 = arith.addf %482, %483 : vector<5x32xf32>
    %485 = arith.addf %404, %484 : vector<5x32xf32>
    %cst_168 = arith.constant dense<0.000000e+00> : vector<5xf32>
    %486 = vector.multi_reduction <add>, %485, %cst_168 [1] : vector<5x32xf32> to vector<5xf32>
    %487 = vector.shape_cast %486 : vector<5xf32> to vector<5x1xf32>
    %cst_169 = arith.constant 3.200000e+01 : f32
    %488 = vector.broadcast %cst_169 : f32 to vector<5x1xf32>
    %489 = arith.divf %487, %488 : vector<5x1xf32>
    %490 = vector.broadcast %489 : vector<5x1xf32> to vector<5x32xf32>
    %491 = arith.subf %485, %490 : vector<5x32xf32>
    %492 = arith.mulf %491, %491 : vector<5x32xf32>
    %cst_170 = arith.constant dense<0.000000e+00> : vector<5xf32>
    %493 = vector.multi_reduction <add>, %492, %cst_170 [1] : vector<5x32xf32> to vector<5xf32>
    %494 = vector.shape_cast %493 : vector<5xf32> to vector<5x1xf32>
    %cst_171 = arith.constant 3.200000e+01 : f32
    %495 = vector.broadcast %cst_171 : f32 to vector<5x1xf32>
    %496 = arith.divf %494, %495 : vector<5x1xf32>
    %cst_172 = arith.constant 9.99999974E-6 : f32
    %497 = vector.broadcast %cst_172 : f32 to vector<5x1xf32>
    %498 = arith.addf %496, %497 : vector<5x1xf32>
    %499 = math.rsqrt %498 : vector<5x1xf32>
    %500 = vector.broadcast %499 : vector<5x1xf32> to vector<5x32xf32>
    %501 = arith.mulf %491, %500 : vector<5x32xf32>
    %502 = vector.broadcast %290 : vector<1x32xf32> to vector<5x32xf32>
    %503 = arith.mulf %501, %502 : vector<5x32xf32>
    %504 = vector.broadcast %291 : vector<1x32xf32> to vector<5x32xf32>
    %505 = arith.addf %503, %504 : vector<5x32xf32>
    %cst_173 = arith.constant dense<0.000000e+00> : vector<5x64xf32>
    %506 = tpu.matmul %505, %292, %cst_173 {dimension_numbers = #tpu.dot_dimension_numbers<[1], [0], [0], [1], [0, 0, 1, 1], [], []>} : vector<5x32xf32>, vector<32x64xf32>, vector<5x64xf32> -> vector<5x64xf32>
    %507 = vector.broadcast %293 : vector<1x64xf32> to vector<5x64xf32>
    %508 = arith.addf %506, %507 : vector<5x64xf32>
    %cst_174 = arith.constant 0.000000e+00 : f32
    %509 = vector.broadcast %cst_174 : f32 to vector<5x64xf32>
    %510 = arith.maximumf %508, %509 : vector<5x64xf32>
    %cst_175 = arith.constant dense<0.000000e+00> : vector<5x32xf32>
    %511 = tpu.matmul %510, %294, %cst_175 {dimension_numbers = #tpu.dot_dimension_numbers<[1], [0], [0], [1], [0, 0, 1, 1], [], []>} : vector<5x64xf32>, vector<64x32xf32>, vector<5x32xf32> -> vector<5x32xf32>
    %512 = vector.broadcast %295 : vector<1x32xf32> to vector<5x32xf32>
    %513 = arith.addf %511, %512 : vector<5x32xf32>
    %514 = arith.addf %505, %513 : vector<5x32xf32>
    %cst_176 = arith.constant dense<0.000000e+00> : vector<5xf32>
    %515 = vector.multi_reduction <add>, %514, %cst_176 [1] : vector<5x32xf32> to vector<5xf32>
    %516 = vector.shape_cast %515 : vector<5xf32> to vector<5x1xf32>
    %cst_177 = arith.constant 3.200000e+01 : f32
    %517 = vector.broadcast %cst_177 : f32 to vector<5x1xf32>
    %518 = arith.divf %516, %517 : vector<5x1xf32>
    %519 = vector.broadcast %518 : vector<5x1xf32> to vector<5x32xf32>
    %520 = arith.subf %514, %519 : vector<5x32xf32>
    %521 = arith.mulf %520, %520 : vector<5x32xf32>
    %cst_178 = arith.constant dense<0.000000e+00> : vector<5xf32>
    %522 = vector.multi_reduction <add>, %521, %cst_178 [1] : vector<5x32xf32> to vector<5xf32>
    %523 = vector.shape_cast %522 : vector<5xf32> to vector<5x1xf32>
    %cst_179 = arith.constant 3.200000e+01 : f32
    %524 = vector.broadcast %cst_179 : f32 to vector<5x1xf32>
    %525 = arith.divf %523, %524 : vector<5x1xf32>
    %cst_180 = arith.constant 9.99999974E-6 : f32
    %526 = vector.broadcast %cst_180 : f32 to vector<5x1xf32>
    %527 = arith.addf %525, %526 : vector<5x1xf32>
    %528 = math.rsqrt %527 : vector<5x1xf32>
    %529 = vector.broadcast %528 : vector<5x1xf32> to vector<5x32xf32>
    %530 = arith.mulf %520, %529 : vector<5x32xf32>
    %531 = vector.broadcast %296 : vector<1x32xf32> to vector<5x32xf32>
    %532 = arith.mulf %530, %531 : vector<5x32xf32>
    %533 = vector.broadcast %297 : vector<1x32xf32> to vector<5x32xf32>
    %534 = arith.addf %532, %533 : vector<5x32xf32>
    %535 = tpu.iota {dimensions = array<i32: 0>} : vector<5x1xi32>
    %536 = vector.broadcast %arg1 : i32 to vector<5x1xi32>
    %537 = arith.cmpi eq, %535, %536 : vector<5x1xi32>
    %cst_181 = arith.constant 0.000000e+00 : f32
    %538 = vector.shape_cast %537 : vector<5x1xi1> to vector<5x1xi1>
    %539 = vector.broadcast %538 : vector<5x1xi1> to vector<5x32xi1>
    %540 = vector.broadcast %cst_181 : f32 to vector<5x32xf32>
    %541 = arith.select %539, %534, %540 : vector<5x32xi1>, vector<5x32xf32>
    %cst_182 = arith.constant dense<0.000000e+00> : vector<32xf32>
    %542 = vector.multi_reduction <add>, %541, %cst_182 [0] : vector<5x32xf32> to vector<32xf32>
    %543 = vector.shape_cast %542 : vector<32xf32> to vector<1x32xf32>
    %cst_183 = arith.constant dense<0.000000e+00> : vector<1x128xf32>
    %544 = tpu.matmul %543, %1, %cst_183 {dimension_numbers = #tpu.dot_dimension_numbers<[1], [0], [0], [1], [0, 0, 1, 1], [], []>} : vector<1x32xf32>, vector<32x128xf32>, vector<1x128xf32> -> vector<1x128xf32>
    %545 = arith.addf %544, %2 : vector<1x128xf32>
    %c0_184 = arith.constant 0 : index
    %c0_185 = arith.constant 0 : index
    %c0_186 = arith.constant 0 : index
    %c0_187 = arith.constant 0 : index
    %546 = vector.load %arg6[%c0_184, %c0_185, %c0_186, %c0_187] : memref<1x1x1x128xf32, #tpu.memory_space<vmem>>, vector<1x1x1x128xf32>
    %547 = vector.shape_cast %546 : vector<1x1x1x128xf32> to vector<1x128xf32>
    %548 = vector.shape_cast %545 : vector<1x128xf32> to vector<1x1x1x128xf32>
    tpu.vector_store %arg6[%c0_184, %c0_185, %c0_186, %c0_187], %548 {strides = array<i32>} : memref<1x1x1x128xf32, #tpu.memory_space<vmem>>, vector<1x1x1x128xf32>,
    return
  }
  func.func @transform_0(%arg0: i32, %arg1: i32) -> (i32, i32, i32) {
    %c0_i32 = arith.constant 0 : i32
    %c0_i32_0 = arith.constant 0 : i32
    %c0_i32_1 = arith.constant 0 : i32
    return %arg0, %c0_i32, %c0_i32_0 : i32, i32, i32
  }
  func.func @transform_1(%arg0: i32, %arg1: i32) -> (i32, i32, i32) {
    %c0_i32 = arith.constant 0 : i32
    %c0_i32_0 = arith.constant 0 : i32
    %c0_i32_1 = arith.constant 0 : i32
    return %arg0, %c0_i32, %c0_i32_0 : i32, i32, i32
  }
  func.func @transform_2(%arg0: i32, %arg1: i32) -> (i32, i32, i32) {
    %c0_i32 = arith.constant 0 : i32
    %c0_i32_0 = arith.constant 0 : i32
    %c0_i32_1 = arith.constant 0 : i32
    return %arg0, %c0_i32, %c0_i32_0 : i32, i32, i32
  }
  func.func @transform_3(%arg0: i32, %arg1: i32) -> (i32, i32) {
    %c0_i32 = arith.constant 0 : i32
    %c0_i32_0 = arith.constant 0 : i32
    %c0_i32_1 = arith.constant 0 : i32
    return %c0_i32, %c0_i32_0 : i32, i32
  }
  func.func @transform_4(%arg0: i32, %arg1: i32) -> (i32, i32, i32, i32) {
    %c0_i32 = arith.constant 0 : i32
    %c0_i32_0 = arith.constant 0 : i32
    %c0_i32_1 = arith.constant 0 : i32
    return %arg0, %arg1, %c0_i32, %c0_i32_0 : i32, i32, i32, i32
  }
}

</mosaic_0001>

<llo_original>
// kernel: vit_transformer_maria_forward.2
$region0: #{vit_transformer_maria_forward.2}
  #allocation0 [shape = 'u32[]', space=smem, size = 0x4, offset = 0x4, fixed_abs, tag = 'smem constant byte address 0x4 - core index']
  #allocation1 [shape = 'u32[144,128]{1,0:T(1,128)}', space=vmem, size = 0x12000, scoped, tag = 'internal scratch']
  %s0 = inlined_call_operand.vmem [shape: f32[2,5,192], index: 0, kind: input, shape index: {}]
  %s1 = inlined_call_operand.vmem [shape: f32[664,128], index: 1, kind: input, shape index: {}]
  %s2 = inlined_call_operand.vmem [shape: f32[2,5,32], index: 2, kind: output, shape index: {}]
  %s3 = sld [smem:[#allocation0]]
  $region41: #{vit_transformer_maria_forward.2} parent=0
    _
  %s5 = ssub.s32 1, %s3
  %s6 = scalar_select 0, %s5, %s3
  loop: start=0, step=1, limit=4
  $region2: #{vit_transformer_maria_forward.2} parent=0 // loop_pre_header
    _
  $region3: #{vit_transformer_maria_forward.2} parent=0 // loop_header
    %s8 = sphi 0, %s12
    %p9 = scmp.ge.s32.totalorder %s8, 4
    %s18 = sphi 0, %s20
    %s21 = sphi 0, %s18
    %s22 = sphi 0, %s21
    %s38 = sphi 0, %s22
    %s42 = sphi 0, %s42
    %s44 = sphi 0, %s42
    %s45 = sphi 0, %s44
    %s59 = sphi 0, %s45
    %s65 = sphi 0, %s67
    %s68 = sphi 0, %s65
    %s69 = sphi 0, %s68
    %s85 = sphi 0, %s69
  $region4: #{vit_transformer_maria_forward.2} parent=0 // loop_header_branch
    %11 = sbr.rel (%p9) target = $region8
  $region5: #{vit_transformer_maria_forward.2} parent=0 // loop_body
    %s13 = ssub.s32 %s8, 1
    %s14 = ssub.s32 %s8, 2
    %s15 = sadd.s32 %s8, 1
    %s16 = ssub.s32 %s8, %s15
    %p17 = scmp.eq.s32.totalorder %s16, 0
    %s19 = sadd.s32 %s18, 1
    %s20 = scalar_select %p17, %s18, %s19
    %p23 = pneg %p17
    %p24 = scmp.eq.s32.totalorder %s8, 1
    %p25 = por %p23, %p24
    %p26 = scmp.ne.s32.totalorder %s18, %s21
    %p27 = scmp.eq.s32.totalorder %s8, 0
    %p28 = por %p26, %p27
    %p29 = scmp.ne.s32.totalorder %s18, %s21
    %p30 = scmp.eq.s32.totalorder %s13, 1
    %p31 = por %p29, %p30
    %p32 = scmp.ne.s32.totalorder %s21, %s22
    %p33 = scmp.eq.s32.totalorder %s13, 0
    %p34 = por %p32, %p33
    %p35 = scmp.ne.s32.totalorder %s21, %s22
    %p36 = scmp.eq.s32.totalorder %s14, 1
    %p37 = por %p35, %p36
    %p39 = scmp.ne.s32.totalorder %s22, %s38
    %p40 = scmp.eq.s32.totalorder %s14, 0
    %p41 = por %p39, %p40
    %s43 = sadd.s32 %s42, 1
    %p46 = scmp.eq.s32.totalorder %s8, 1
    %p47 = scmp.ne.s32.totalorder %s42, %s44
    %p48 = scmp.eq.s32.totalorder %s8, 0
    %p49 = por %p47, %p48
    %p50 = scmp.ne.s32.totalorder %s42, %s44
    %p51 = scmp.eq.s32.totalorder %s13, 1
    %p52 = por %p50, %p51
    %p53 = scmp.ne.s32.totalorder %s44, %s45
    %p54 = scmp.eq.s32.totalorder %s13, 0
    %p55 = por %p53, %p54
    %p56 = scmp.ne.s32.totalorder %s44, %s45
    %p57 = scmp.eq.s32.totalorder %s14, 1
    %p58 = por %p56, %p57
    %p60 = scmp.ne.s32.totalorder %s45, %s59
    %p61 = scmp.eq.s32.totalorder %s14, 0
    %p62 = por %p60, %p61
    %s63 = ssub.s32 %s8, %s15
    %p64 = scmp.eq.s32.totalorder %s63, 0
    %s66 = sadd.s32 %s65, 1
    %s67 = scalar_select %p64, %s65, %s66
    %p70 = pneg %p64
    %p71 = scmp.eq.s32.totalorder %s8, 1
    %p72 = por %p70, %p71
    %p73 = scmp.ne.s32.totalorder %s65, %s68
    %p74 = scmp.eq.s32.totalorder %s8, 0
    %p75 = por %p73, %p74
    %p76 = scmp.ne.s32.totalorder %s65, %s68
    %p77 = scmp.eq.s32.totalorder %s13, 1
    %p78 = por %p76, %p77
    %p79 = scmp.ne.s32.totalorder %s68, %s69
    %p80 = scmp.eq.s32.totalorder %s13, 0
    %p81 = por %p79, %p80
    %p82 = scmp.ne.s32.totalorder %s68, %s69
    %p83 = scmp.eq.s32.totalorder %s14, 1
    %p84 = por %p82, %p83
    %p86 = scmp.ne.s32.totalorder %s69, %s85
    %p87 = scmp.eq.s32.totalorder %s14, 0
    %p88 = por %p86, %p87
    %p89 = scmp.le.s32.totalorder 1, %s8
    %p90 = scmp.lt.s32.totalorder %s8, 3
    %p91 = pnand %p89, %p90
    %p92 = pneg %p91
    // Predicated region
    $region9: #{vit_transformer_maria_forward.2} parent=5 // pred_check
      _
    $region10: #{vit_transformer_maria_forward.2} parent=5 // pred_check_branch
      %94 = sbr.rel (%p91) target = $region12
    $region11: #{vit_transformer_maria_forward.2} parent=5 // pred_region
      %s95 = ssub.s32 %s8, 1
      // Predicated region
      $region13: #{vit_transformer_maria_forward.2} parent=11 // pred_check
        %p96 = pneg %p55
      $region14: #{vit_transformer_maria_forward.2} parent=11 // pred_check_branch
        %98 = sbr.rel (%p96) target = $region16
      $region15: #{vit_transformer_maria_forward.2} parent=11 // pred_region
        _
      $region16: #{vit_transformer_maria_forward.2} parent=11 // pred_fallthru
        _
    $region12: #{vit_transformer_maria_forward.2} parent=5 // pred_fallthru
      _
    %p99 = scmp.lt.s32.totalorder %s8, 2
    // Predicated region
    $region17: #{vit_transformer_maria_forward.2} parent=5 // pred_check
      %p100 = pneg %p99
    $region18: #{vit_transformer_maria_forward.2} parent=5 // pred_check_branch
      %102 = sbr.rel (%p100) target = $region20
    $region19: #{vit_transformer_maria_forward.2} parent=5 // pred_region
      // Predicated region
      $region21: #{vit_transformer_maria_forward.2} parent=19 // pred_check
        %p103 = pneg %p28
      $region22: #{vit_transformer_maria_forward.2} parent=19 // pred_check_branch
        %105 = sbr.rel (%p103) target = $region24
      $region23: #{vit_transformer_maria_forward.2} parent=19 // pred_region
        %p106 = scmp.lt.s32.totalorder %s8, 1
        %s107 = scalar_select %p106, %s8, 1
        %s108 = smul.addr %s107, 2
        %s109 = smul.addr %s108, 8
        %s110 = scalar_lea.vmem %s0, %s109
      $region24: #{vit_transformer_maria_forward.2} parent=19 // pred_fallthru
        _
    $region20: #{vit_transformer_maria_forward.2} parent=5 // pred_fallthru
      _
    %p111 = scmp.le.s32.totalorder 1, %s8
    %p112 = scmp.lt.s32.totalorder %s8, 3
    %p113 = pnand %p111, %p112
    %p114 = pneg %p113
    // Predicated region
    $region25: #{vit_transformer_maria_forward.2} parent=5 // pred_check
      _
    $region26: #{vit_transformer_maria_forward.2} parent=5 // pred_check_branch
      %116 = sbr.rel (%p113) target = $region28
    $region27: #{vit_transformer_maria_forward.2} parent=5 // pred_region
      %s117 = ssub.s32 %s8, 1
      %p118 = scmp.lt.s32.totalorder %s13, 1
      %s119 = scalar_select %p118, %s13, 1
      %s120 = smul.addr %s119, 2
      %s121 = smul.addr %s120, 8
      %s122 = scalar_lea.vmem %s0, %s121
      %p123 = pneg %p34
      %p124 = pneg %p31
      %p125 = pneg %p55
      %p126 = pneg %p52
      %p127 = pneg %p81
      %p128 = pneg %p78
      %p129 = scmp.lt.s32.totalorder %s13, 1
      %s130 = scalar_select %p129, %s13, 1
      %s131 = smul.addr %s130, 8
      %s132 = scalar_lea.vmem %s2, %s131
      %p133 = scmp.lt.s32.totalorder %s13, 1
      %s134 = scalar_select %p133, %s13, 1
      %s135 = smul.addr %s134, 2
      %s136 = smul.addr %s135, 8
      %s137 = scalar_lea.vmem %s0, %s136
      %p138 = scmp.lt.s32.totalorder %s13, 1
      %s139 = scalar_select %p138, %s13, 1
      %s140 = smul.addr %s139, 8
      %s141 = scalar_lea.vmem %s2, %s140
      %v142 = vld [vmem:[%s1] sm:$0xff]
      %v143 = vld [vmem:[%s1 + $0x8] sm:$0xff]
      %v144 = vld [vmem:[%s1 + $0x10] sm:$0xff]
      %v145 = vld [vmem:[%s1 + $0x18] sm:$0xff]
      %v146 = vld [vmem:[%s1 + $0x20] sm:$0xff]
      %v147 = vld [vmem:[%s1 + $0x28] sm:$0xff]
      %v148 = vld [vmem:[%s1 + $0x30] sm:$0xff]
      %v149 = vld [vmem:[%s1 + $0x38] sm:$0xff]
      %v150 = vld [vmem:[%s1 + $0x40] sm:$0xff]
      %v151 = vld [vmem:[%s1 + $0x48] sm:$0xff]
      %v152 = vld [vmem:[%s1 + $0x50] sm:$0xff]
      %v153 = vld [vmem:[%s1 + $0x58] sm:$0xff]
      %v154 = vld [vmem:[%s1 + $0x60] sm:$0xff]
      %v155 = vld [vmem:[%s1 + $0x68] sm:$0xff]
      %v156 = vld [vmem:[%s1 + $0x70] sm:$0xff]
      %v157 = vld [vmem:[%s1 + $0x78] sm:$0xff]
      %v158 = vld [vmem:[%s1 + $0x80] sm:$0xff]
      %v159 = vld [vmem:[%s1 + $0x88] sm:$0xff]
      %v160 = vld [vmem:[%s1 + $0x90] sm:$0xff]
      %v161 = vld [vmem:[%s1 + $0x98] sm:$0xff]
      %v162 = vld [vmem:[%s1 + $0xa0] sm:$0xff]
      %v163 = vld [vmem:[%s1 + $0xa8] sm:$0xff]
      %v164 = vld [vmem:[%s1 + $0xb0] sm:$0xff]
      %v165 = vld [vmem:[%s1 + $0xb8] sm:$0xff]
      %v166 = vld [vmem:[%s1 + $0xc0] sm:$0x1f]
      %v167 = vld [vmem:[%s1 + $0xc8] sm:$0x1]
      %v168 = vld [vmem:[%s1 + $0xd0] sm:$0x1]
      %v169 = vld [vmem:[%s137] sm:$0x1f]
      %v170 = vld [vmem:[%s137 + $0x8] sm:$0x1f]
      %vm171 = vcmask 523264
      %v173 = vsel %vm171, %v170, 0
      %175 = vmatprep.subr.mxu0 0.0
      %176 = vmatpush1.msra.mxu0 %v142
      %177 = vmatprep.subr.mxu0 0.0
      %178 = vmatpush1.msra.mxu0 %v143
      %179 = vmatprep.subr.mxu0 0.0
      %180 = vmatpush1.msra.mxu0 %v144
      %181 = vmatprep.subr.mxu0 0.0
      %182 = vmatpush1.msra.mxu0 %v145
      %183 = vmatprep.subr.mxu0 0.0
      %184 = vmatpush1.msra.mxu0 %v146
      %185 = vmatprep.subr.mxu0 0.0
      %186 = vmatpush1.msra.mxu0 %v147
      %187 = vmatprep.subr.mxu0 0.0
      %188 = vmatpush1.msra.mxu0 %v148
      %189 = vmatprep.subr.mxu0 0.0
      %190 = vmatpush1.msra.mxu0 %v149
      %191 = vmatprep.subr.mxu0 0.0
      %192 = vmatpush1.msra.mxu0 %v150
      %193 = vmatprep.subr.mxu0 0.0
      %194 = vmatpush1.msra.mxu0 %v151
      %195 = vmatprep.subr.mxu0 0.0
      %196 = vmatpush1.msra.mxu0 %v152
      %197 = vmatprep.subr.mxu0 0.0
      %198 = vmatpush1.msra.mxu0 %v153
      %199 = vmatprep.subr.mxu0 0.0
      %200 = vmatpush1.msra.mxu0 %v154
      %201 = vmatprep.subr.mxu0 0.0
      %202 = vmatpush1.msra.mxu0 %v155
      %203 = vmatprep.subr.mxu0 0.0
      %204 = vmatpush1.msra.mxu0 %v156
      %205 = vmatprep.subr.mxu0 0.0
      %206 = vmatpush1.msra.mxu0 %v157
      %207 = vmatprep.subr.mxu0 0.0
      %208 = vmatpush1.msra.mxu0 %v158
      %209 = vmatprep.subr.mxu0 0.0
      %210 = vmatpush1.msra.mxu0 %v159
      %211 = vmatprep.subr.mxu0 0.0
      %212 = vmatpush1.msra.mxu0 %v160
      %213 = vmatprep.subr.mxu0 0.0
      %214 = vmatpush1.msra.mxu0 %v161
      %215 = vmatprep.subr.mxu0 0.0
      %216 = vmatpush1.msra.mxu0 %v162
      %217 = vmatprep.subr.mxu0 0.0
      %218 = vmatpush1.msra.mxu0 %v163
      %219 = vmatprep.subr.mxu0 0.0
      %220 = vmatpush1.msra.mxu0 %v164
      %221 = vmatprep.subr.mxu0 0.0
      %222 = vmatpush1.msra.mxu0 %v165
      %223 = vmatprep.subr.mxu0 0.0
      %224 = vmatpush1.msra.mxu0 0.0
      %225 = vmatprep.subr.mxu0 0.0
      %226 = vmatpush1.msra.mxu0 0.0
      %227 = vmatprep.subr.mxu0 0.0
      %228 = vmatpush1.msra.mxu0 0.0
      %229 = vmatprep.subr.mxu0 0.0
      %230 = vmatpush1.msra.mxu0 0.0
      %231 = vmatprep.subr.mxu0 0.0
      %232 = vmatpush1.msra.mxu0 0.0
      %233 = vmatprep.subr.mxu0 0.0
      %234 = vmatpush1.msra.mxu0 0.0
      %235 = vmatprep.subr.mxu0 0.0
      %236 = vmatpush1.msra.mxu0 0.0
      %237 = vmatprep.subr.mxu0 0.0
      %238 = vmatpush1.msra.mxu0 0.0
      %239 = vmatprep.mubr.f32.mxu0 %v173
      %240 = vmatmul.mubr.f32.gmra.mrb[0].mxu0 %v169
      %v241 = vpop.f32.mrb[0].mxu0
      %v242 = vadd.f32 %v166, %v241
      %v243 = vpop.f32.mrb[0].mxu0
      %244 = vdwg.mxu0
      %v245 = vld [vmem:[%s1 + $0xd8] sm:$0x1]
      %v246 = vld [vmem:[%s1 + $0xe0] sm:$0x1]
      %v247 = vld [vmem:[%s1 + $0xe8] sm:$0xff]
      %v248 = vld [vmem:[%s1 + $0xf0] sm:$0xff]
      %v249 = vld [vmem:[%s1 + $0xf8] sm:$0xff]
      %v250 = vld [vmem:[%s1 + $0x100] sm:$0xff]
      %v251 = vld [vmem:[%s1 + $0x108] sm:$0x1]
      %v252 = vld [vmem:[%s1 + $0x110] sm:$0xff]
      %v253 = vld [vmem:[%s1 + $0x118] sm:$0xff]
      %v254 = vld [vmem:[%s1 + $0x120] sm:$0xff]
      %v255 = vld [vmem:[%s1 + $0x128] sm:$0xff]
      %v256 = vld [vmem:[%s1 + $0x130] sm:$0x1]
      %v257 = vld [vmem:[%s1 + $0x138] sm:$0x1]
      %v258 = vld [vmem:[%s1 + $0x140] sm:$0x1]
      %v259 = vld [vmem:[%s1 + $0x148] sm:$0xff]
      %v260 = vld [vmem:[%s1 + $0x150] sm:$0xff]
      %v261 = vld [vmem:[%s1 + $0x158] sm:$0xff]
      %v262 = vld [vmem:[%s1 + $0x160] sm:$0xff]
      %v263 = vld [vmem:[%s1 + $0x168] sm:$0x1]
      %v264 = vld [vmem:[%s1 + $0x170] sm:$0xff]
      %v265 = vld [vmem:[%s1 + $0x178] sm:$0xff]
      %v266 = vld [vmem:[%s1 + $0x180] sm:$0xff]
      %v267 = vld [vmem:[%s1 + $0x188] sm:$0xff]
      %v268 = vld [vmem:[%s1 + $0x190] sm:$0xff]
      %v269 = vld [vmem:[%s1 + $0x198] sm:$0xff]
      %v270 = vld [vmem:[%s1 + $0x1a0] sm:$0xff]
      %v271 = vld [vmem:[%s1 + $0x1a8] sm:$0xff]
      %v272 = vld [vmem:[%s1 + $0x1b0] sm:$0x1]
      %vm273 = vcmask 258048
      %v274 = vsel %vm273, %v242, 0.0
      %275 = vadd.xlane.f32.xlu0 %v274
      %v276 = vpop.xlane.xlu0 %275
      %v277 = vrcp.pop 32.0
      %v278 = vmul.f32 %v276, %v277
      %v279 = vsub.f32 %v242, %v278
      %v280 = vmul.f32 %v279, %v279
      %v281 = vsel %vm273, %v280, 0.0
      %282 = vadd.xlane.f32.xlu0 %v281
      %v283 = vpop.xlane.xlu0 %282
      %v284 = vmul.f32 %v283, %v277
      %v285 = vadd.f32 %v284, 1e-05
      %v286 = vrsqrt.pop %v285
      %v287 = vmul.f32 %v279, %v286
      %v288 = vlaneseq
      %v289 = vshrl.u32 %v288, 7
      %v290 = vsub.s32 0, %v289
      %v291 = vrot.slane %v245, %v290
      %v292 = vmul.f32 %v287, %v291
      %v293 = vlaneseq
      %v294 = vshrl.u32 %v293, 7
      %v295 = vsub.s32 0, %v294
      %v296 = vrot.slane %v246, %v295
      %v297 = vadd.f32 %v292, %v296
      %v298 = vlaneseq
      %v299 = vshrl.u32 %v298, 7
      %v300 = vsub.s32 0, %v299
      %v301 = vrot.slane %v251, %v300
      %vm302 = vcmask 261120
      %v304 = vsel %vm302, %v297, 0
      %306 = vmatprep.subr.mxu0 0.0
      %307 = vmatpush1.msra.mxu0 %v247
      %308 = vmatprep.subr.mxu0 0.0
      %309 = vmatpush1.msra.mxu0 %v248
      %310 = vmatprep.subr.mxu0 0.0
      %311 = vmatpush1.msra.mxu0 %v249
      %312 = vmatprep.subr.mxu0 0.0
      %313 = vmatpush1.msra.mxu0 %v250
      %314 = vmatprep.subr.mxu0 0.0
      %315 = vmatpush1.msra.mxu0 0.0
      %316 = vmatprep.subr.mxu0 0.0
      %317 = vmatpush1.msra.mxu0 0.0
      %318 = vmatprep.subr.mxu0 0.0
      %319 = vmatpush1.msra.mxu0 0.0
      %320 = vmatprep.subr.mxu0 0.0
      %321 = vmatpush1.msra.mxu0 0.0
      %322 = vmatprep.subr.mxu0 0.0
      %323 = vmatpush1.msra.mxu0 0.0
      %324 = vmatprep.subr.mxu0 0.0
      %325 = vmatpush1.msra.mxu0 0.0
      %326 = vmatprep.subr.mxu0 0.0
      %327 = vmatpush1.msra.mxu0 0.0
      %328 = vmatprep.subr.mxu0 0.0
      %329 = vmatpush1.msra.mxu0 0.0
      %330 = vmatprep.subr.mxu0 0.0
      %331 = vmatpush1.msra.mxu0 0.0
      %332 = vmatprep.subr.mxu0 0.0
      %333 = vmatpush1.msra.mxu0 0.0
      %334 = vmatprep.subr.mxu0 0.0
      %335 = vmatpush1.msra.mxu0 0.0
      %336 = vmatprep.subr.mxu0 0.0
      %337 = vmatpush1.msra.mxu0 0.0
      %338 = vmatprep.subr.mxu0 0.0
      %339 = vmatpush1.msra.mxu0 0.0
      %340 = vmatprep.subr.mxu0 0.0
      %341 = vmatpush1.msra.mxu0 0.0
      %342 = vmatprep.subr.mxu0 0.0
      %343 = vmatpush1.msra.mxu0 0.0
      %344 = vmatprep.subr.mxu0 0.0
      %345 = vmatpush1.msra.mxu0 0.0
      %346 = vmatprep.subr.mxu0 0.0
      %347 = vmatpush1.msra.mxu0 0.0
      %348 = vmatprep.subr.mxu0 0.0
      %349 = vmatpush1.msra.mxu0 0.0
      %350 = vmatprep.subr.mxu0 0.0
      %351 = vmatpush1.msra.mxu0 0.0
      %352 = vmatprep.subr.mxu0 0.0
      %353 = vmatpush1.msra.mxu0 0.0
      %354 = vmatprep.subr.mxu0 0.0
      %355 = vmatpush1.msra.mxu0 0.0
      %356 = vmatprep.subr.mxu0 0.0
      %357 = vmatpush1.msra.mxu0 0.0
      %358 = vmatprep.subr.mxu0 0.0
      %359 = vmatpush1.msra.mxu0 0.0
      %360 = vmatprep.subr.mxu0 0.0
      %361 = vmatpush1.msra.mxu0 0.0
      %362 = vmatprep.subr.mxu0 0.0
      %363 = vmatpush1.msra.mxu0 0.0
      %364 = vmatprep.subr.mxu0 0.0
      %365 = vmatpush1.msra.mxu0 0.0
      %366 = vmatprep.subr.mxu0 0.0
      %367 = vmatpush1.msra.mxu0 0.0
      %368 = vmatprep.subr.mxu0 0.0
      %369 = vmatpush1.msra.mxu0 0.0
      %370 = vmatprep.mubr.f32.mxu0 0.0
      %371 = vmatmul.mubr.f32.gmra.mrb[0].mxu0 %v304
      %v372 = vpop.f32.mrb[0].mxu0
      %v373 = vadd.f32 %v301, %v372
      %v374 = vpop.f32.mrb[0].mxu0
      %375 = vdwg.mxu0
      %377 = vrot.lane.b32.xlu0 %v373, 96
      %v378 = vpop.permute.xlu0 %377
      %vm379 = vcmask 64512
      %v380 = vsel %vm379, %v373, 0
      %v382 = vsel %vm379, %v378, 0
      %384 = vmatprep.subr.mxu0 0.0
      %385 = vmatpush1.xpose.msra.mxu0 %v382
      %386 = vmatprep.subr.mxu0 0.0
      %387 = vmatpush1.xpose.msra.mxu0 0.0
      %388 = vmatprep.subr.mxu0 0.0
      %389 = vmatpush1.xpose.msra.mxu0 0.0
      %390 = vmatprep.subr.mxu0 0.0
      %391 = vmatpush1.xpose.msra.mxu0 0.0
      %392 = vmatprep.subr.mxu0 0.0
      %393 = vmatpush1.xpose.msra.mxu0 0.0
      %394 = vmatprep.subr.mxu0 0.0
      %395 = vmatpush1.xpose.msra.mxu0 0.0
      %396 = vmatprep.subr.mxu0 0.0
      %397 = vmatpush1.xpose.msra.mxu0 0.0
      %398 = vmatprep.subr.mxu0 0.0
      %399 = vmatpush1.xpose.msra.mxu0 0.0
      %400 = vmatprep.subr.mxu0 0.0
      %401 = vmatpush1.xpose.msra.mxu0 0.0
      %402 = vmatprep.subr.mxu0 0.0
      %403 = vmatpush1.xpose.msra.mxu0 0.0
      %404 = vmatprep.subr.mxu0 0.0
      %405 = vmatpush1.xpose.msra.mxu0 0.0
      %406 = vmatprep.subr.mxu0 0.0
      %407 = vmatpush1.xpose.msra.mxu0 0.0
      %408 = vmatprep.subr.mxu0 0.0
      %409 = vmatpush1.xpose.msra.mxu0 0.0
      %410 = vmatprep.subr.mxu0 0.0
      %411 = vmatpush1.xpose.msra.mxu0 0.0
      %412 = vmatprep.subr.mxu0 0.0
      %413 = vmatpush1.xpose.msra.mxu0 0.0
      %414 = vmatprep.subr.mxu0 0.0
      %415 = vmatpush1.xpose.msra.mxu0 0.0
      %416 = vmatprep.subr.mxu0 0.0
      %417 = vmatpush1.xpose.msra.mxu0 0.0
      %418 = vmatprep.subr.mxu0 0.0
      %419 = vmatpush1.xpose.msra.mxu0 0.0
      %420 = vmatprep.subr.mxu0 0.0
      %421 = vmatpush1.xpose.msra.mxu0 0.0
      %422 = vmatprep.subr.mxu0 0.0
      %423 = vmatpush1.xpose.msra.mxu0 0.0
      %424 = vmatprep.subr.mxu0 0.0
      %425 = vmatpush1.xpose.msra.mxu0 0.0
      %426 = vmatprep.subr.mxu0 0.0
      %427 = vmatpush1.xpose.msra.mxu0 0.0
      %428 = vmatprep.subr.mxu0 0.0
      %429 = vmatpush1.xpose.msra.mxu0 0.0
      %430 = vmatprep.subr.mxu0 0.0
      %431 = vmatpush1.xpose.msra.mxu0 0.0
      %432 = vmatprep.subr.mxu0 0.0
      %433 = vmatpush1.xpose.msra.mxu0 0.0
      %434 = vmatprep.subr.mxu0 0.0
      %435 = vmatpush1.xpose.msra.mxu0 0.0
      %436 = vmatprep.subr.mxu0 0.0
      %437 = vmatpush1.xpose.msra.mxu0 0.0
      %438 = vmatprep.subr.mxu0 0.0
      %439 = vmatpush1.xpose.msra.mxu0 0.0
      %440 = vmatprep.subr.mxu0 0.0
      %441 = vmatpush1.xpose.msra.mxu0 0.0
      %442 = vmatprep.subr.mxu0 0.0
      %443 = vmatpush1.xpose.msra.mxu0 0.0
      %444 = vmatprep.subr.mxu0 0.0
      %445 = vmatpush1.xpose.msra.mxu0 0.0
      %446 = vmatprep.subr.mxu0 0.0
      %447 = vmatpush1.xpose.msra.mxu0 0.0
      %448 = vmatprep.mubr.f32.mxu0 0.0
      %449 = vmatmul.mubr.f32.gmra.mrb[0].mxu0 %v380
      %v450 = vpop.f32.mrb[0].mxu0
      %v451 = vadd.f32 0.0, %v450
      %v452 = vpop.f32.mrb[0].mxu0
      %453 = vdwg.mxu0
      %v454 = vmul.f32 %v451, 0.35355338
      %vm455 = vcmask 36864
      %v456 = vsel %vm455, %v454, -inf
      %457 = vmax.xlane.f32.xlu0 %v456
      %v458 = vpop.xlane.xlu0 %457
      %v459 = vsub.f32 %v454, %v458
      %v460 = vmul.f32 %v459, 1.442695
      %v461 = vpow.pop %v460
      %v462 = vsel %vm455, %v461, 0.0
      %463 = vadd.xlane.f32.xlu0 %v462
      %v464 = vpop.xlane.xlu0 %463
      %v465 = vrcp.pop %v464
      %v466 = vmul.f32 %v461, %v465
      %467 = vrot.lane.b32.xlu0 %v373, 64
      %v468 = vpop.permute.xlu0 %467
      %vm469 = vcmask 39936
      %v471 = vsel %vm469, %v466, 0
      %vm473 = vcmask 1044480
      %v474 = vsel %vm473, %v468, 0
      %476 = vmatprep.subr.mxu0 0.0
      %477 = vmatpush1.msra.mxu0 %v474
      %478 = vmatprep.subr.mxu0 0.0
      %479 = vmatpush1.msra.mxu0 0.0
      %480 = vmatprep.subr.mxu0 0.0
      %481 = vmatpush1.msra.mxu0 0.0
      %482 = vmatprep.subr.mxu0 0.0
      %483 = vmatpush1.msra.mxu0 0.0
      %484 = vmatprep.subr.mxu0 0.0
      %485 = vmatpush1.msra.mxu0 0.0
      %486 = vmatprep.subr.mxu0 0.0
      %487 = vmatpush1.msra.mxu0 0.0
      %488 = vmatprep.subr.mxu0 0.0
      %489 = vmatpush1.msra.mxu0 0.0
      %490 = vmatprep.subr.mxu0 0.0
      %491 = vmatpush1.msra.mxu0 0.0
      %492 = vmatprep.subr.mxu0 0.0
      %493 = vmatpush1.msra.mxu0 0.0
      %494 = vmatprep.subr.mxu0 0.0
      %495 = vmatpush1.msra.mxu0 0.0
      %496 = vmatprep.subr.mxu0 0.0
      %497 = vmatpush1.msra.mxu0 0.0
      %498 = vmatprep.subr.mxu0 0.0
      %499 = vmatpush1.msra.mxu0 0.0
      %500 = vmatprep.subr.mxu0 0.0
      %501 = vmatpush1.msra.mxu0 0.0
      %502 = vmatprep.subr.mxu0 0.0
      %503 = vmatpush1.msra.mxu0 0.0
      %504 = vmatprep.subr.mxu0 0.0
      %505 = vmatpush1.msra.mxu0 0.0
      %506 = vmatprep.subr.mxu0 0.0
      %507 = vmatpush1.msra.mxu0 0.0
      %508 = vmatprep.subr.mxu0 0.0
      %509 = vmatpush1.msra.mxu0 0.0
      %510 = vmatprep.subr.mxu0 0.0
      %511 = vmatpush1.msra.mxu0 0.0
      %512 = vmatprep.subr.mxu0 0.0
      %513 = vmatpush1.msra.mxu0 0.0
      %514 = vmatprep.subr.mxu0 0.0
      %515 = vmatpush1.msra.mxu0 0.0
      %516 = vmatprep.subr.mxu0 0.0
      %517 = vmatpush1.msra.mxu0 0.0
      %518 = vmatprep.subr.mxu0 0.0
      %519 = vmatpush1.msra.mxu0 0.0
      %520 = vmatprep.subr.mxu0 0.0
      %521 = vmatpush1.msra.mxu0 0.0
      %522 = vmatprep.subr.mxu0 0.0
      %523 = vmatpush1.msra.mxu0 0.0
      %524 = vmatprep.subr.mxu0 0.0
      %525 = vmatpush1.msra.mxu0 0.0
      %526 = vmatprep.subr.mxu0 0.0
      %527 = vmatpush1.msra.mxu0 0.0
      %528 = vmatprep.subr.mxu0 0.0
      %529 = vmatpush1.msra.mxu0 0.0
      %530 = vmatprep.subr.mxu0 0.0
      %531 = vmatpush1.msra.mxu0 0.0
      %532 = vmatprep.subr.mxu0 0.0
      %533 = vmatpush1.msra.mxu0 0.0
      %534 = vmatprep.subr.mxu0 0.0
      %535 = vmatpush1.msra.mxu0 0.0
      %536 = vmatprep.subr.mxu0 0.0
      %537 = vmatpush1.msra.mxu0 0.0
      %538 = vmatprep.subr.mxu0 0.0
      %539 = vmatpush1.msra.mxu0 0.0
      %540 = vmatprep.mubr.f32.mxu0 0.0
      %541 = vmatmul.mubr.f32.gmra.mrb[0].mxu0 %v471
      %v542 = vpop.f32.mrb[0].mxu0
      %v543 = vadd.f32 0.0, %v542
      %v544 = vpop.f32.mrb[0].mxu0
      %545 = vdwg.mxu0
      %546 = vrot.lane.b32.xlu0 %v373, 120
      %v547 = vpop.permute.xlu0 %546
      %548 = vrot.lane.b32.xlu0 %v373, 88
      %v549 = vpop.permute.xlu0 %548
      %v550 = vsel %vm379, %v547, 0
      %v552 = vsel %vm379, %v549, 0
      %554 = vmatprep.subr.mxu0 0.0
      %555 = vmatpush1.xpose.msra.mxu0 %v552
      %556 = vmatprep.subr.mxu0 0.0
      %557 = vmatpush1.xpose.msra.mxu0 0.0
      %558 = vmatprep.subr.mxu0 0.0
      %559 = vmatpush1.xpose.msra.mxu0 0.0
      %560 = vmatprep.subr.mxu0 0.0
      %561 = vmatpush1.xpose.msra.mxu0 0.0
      %562 = vmatprep.subr.mxu0 0.0
      %563 = vmatpush1.xpose.msra.mxu0 0.0
      %564 = vmatprep.subr.mxu0 0.0
      %565 = vmatpush1.xpose.msra.mxu0 0.0
      %566 = vmatprep.subr.mxu0 0.0
      %567 = vmatpush1.xpose.msra.mxu0 0.0
      %568 = vmatprep.subr.mxu0 0.0
      %569 = vmatpush1.xpose.msra.mxu0 0.0
      %570 = vmatprep.subr.mxu0 0.0
      %571 = vmatpush1.xpose.msra.mxu0 0.0
      %572 = vmatprep.subr.mxu0 0.0
      %573 = vmatpush1.xpose.msra.mxu0 0.0
      %574 = vmatprep.subr.mxu0 0.0
      %575 = vmatpush1.xpose.msra.mxu0 0.0
      %576 = vmatprep.subr.mxu0 0.0
      %577 = vmatpush1.xpose.msra.mxu0 0.0
      %578 = vmatprep.subr.mxu0 0.0
      %579 = vmatpush1.xpose.msra.mxu0 0.0
      %580 = vmatprep.subr.mxu0 0.0
      %581 = vmatpush1.xpose.msra.mxu0 0.0
      %582 = vmatprep.subr.mxu0 0.0
      %583 = vmatpush1.xpose.msra.mxu0 0.0
      %584 = vmatprep.subr.mxu0 0.0
      %585 = vmatpush1.xpose.msra.mxu0 0.0
      %586 = vmatprep.subr.mxu0 0.0
      %587 = vmatpush1.xpose.msra.mxu0 0.0
      %588 = vmatprep.subr.mxu0 0.0
      %589 = vmatpush1.xpose.msra.mxu0 0.0
      %590 = vmatprep.subr.mxu0 0.0
      %591 = vmatpush1.xpose.msra.mxu0 0.0
      %592 = vmatprep.subr.mxu0 0.0
      %593 = vmatpush1.xpose.msra.mxu0 0.0
      %594 = vmatprep.subr.mxu0 0.0
      %595 = vmatpush1.xpose.msra.mxu0 0.0
      %596 = vmatprep.subr.mxu0 0.0
      %597 = vmatpush1.xpose.msra.mxu0 0.0
      %598 = vmatprep.subr.mxu0 0.0
      %599 = vmatpush1.xpose.msra.mxu0 0.0
      %600 = vmatprep.subr.mxu0 0.0
      %601 = vmatpush1.xpose.msra.mxu0 0.0
      %602 = vmatprep.subr.mxu0 0.0
      %603 = vmatpush1.xpose.msra.mxu0 0.0
      %604 = vmatprep.subr.mxu0 0.0
      %605 = vmatpush1.xpose.msra.mxu0 0.0
      %606 = vmatprep.subr.mxu0 0.0
      %607 = vmatpush1.xpose.msra.mxu0 0.0
      %608 = vmatprep.subr.mxu0 0.0
      %609 = vmatpush1.xpose.msra.mxu0 0.0
      %610 = vmatprep.subr.mxu0 0.0
      %611 = vmatpush1.xpose.msra.mxu0 0.0
      %612 = vmatprep.subr.mxu0 0.0
      %613 = vmatpush1.xpose.msra.mxu0 0.0
      %614 = vmatprep.subr.mxu0 0.0
      %615 = vmatpush1.xpose.msra.mxu0 0.0
      %616 = vmatprep.subr.mxu0 0.0
      %617 = vmatpush1.xpose.msra.mxu0 0.0
      %618 = vmatprep.mubr.f32.mxu0 0.0
      %619 = vmatmul.mubr.f32.gmra.mrb[0].mxu0 %v550
      %v620 = vpop.f32.mrb[0].mxu0
      %v621 = vadd.f32 0.0, %v620
      %v622 = vpop.f32.mrb[0].mxu0
      %623 = vdwg.mxu0
      %v624 = vmul.f32 %v621, 0.35355338
      %v625 = vsel %vm455, %v624, -inf
      %626 = vmax.xlane.f32.xlu0 %v625
      %v627 = vpop.xlane.xlu0 %626
      %v628 = vsub.f32 %v624, %v627
      %v629 = vmul.f32 %v628, 1.442695
      %v630 = vpow.pop %v629
      %v631 = vsel %vm455, %v630, 0.0
      %632 = vadd.xlane.f32.xlu0 %v631
      %v633 = vpop.xlane.xlu0 %632
      %v634 = vrcp.pop %v633
      %v635 = vmul.f32 %v630, %v634
      %636 = vrot.lane.b32.xlu0 %v373, 56
      %v637 = vpop.permute.xlu0 %636
      %v639 = vsel %vm469, %v635, 0
      %v641 = vsel %vm473, %v637, 0
      %643 = vmatprep.subr.mxu0 0.0
      %644 = vmatpush1.msra.mxu0 %v641
      %645 = vmatprep.subr.mxu0 0.0
      %646 = vmatpush1.msra.mxu0 0.0
      %647 = vmatprep.subr.mxu0 0.0
      %648 = vmatpush1.msra.mxu0 0.0
      %649 = vmatprep.subr.mxu0 0.0
      %650 = vmatpush1.msra.mxu0 0.0
      %651 = vmatprep.subr.mxu0 0.0
      %652 = vmatpush1.msra.mxu0 0.0
      %653 = vmatprep.subr.mxu0 0.0
      %654 = vmatpush1.msra.mxu0 0.0
      %655 = vmatprep.subr.mxu0 0.0
      %656 = vmatpush1.msra.mxu0 0.0
      %657 = vmatprep.subr.mxu0 0.0
      %658 = vmatpush1.msra.mxu0 0.0
      %659 = vmatprep.subr.mxu0 0.0
      %660 = vmatpush1.msra.mxu0 0.0
      %661 = vmatprep.subr.mxu0 0.0
      %662 = vmatpush1.msra.mxu0 0.0
      %663 = vmatprep.subr.mxu0 0.0
      %664 = vmatpush1.msra.mxu0 0.0
      %665 = vmatprep.subr.mxu0 0.0
      %666 = vmatpush1.msra.mxu0 0.0
      %667 = vmatprep.subr.mxu0 0.0
      %668 = vmatpush1.msra.mxu0 0.0
      %669 = vmatprep.subr.mxu0 0.0
      %670 = vmatpush1.msra.mxu0 0.0
      %671 = vmatprep.subr.mxu0 0.0
      %672 = vmatpush1.msra.mxu0 0.0
      %673 = vmatprep.subr.mxu0 0.0
      %674 = vmatpush1.msra.mxu0 0.0
      %675 = vmatprep.subr.mxu0 0.0
      %676 = vmatpush1.msra.mxu0 0.0
      %677 = vmatprep.subr.mxu0 0.0
      %678 = vmatpush1.msra.mxu0 0.0
      %679 = vmatprep.subr.mxu0 0.0
      %680 = vmatpush1.msra.mxu0 0.0
      %681 = vmatprep.subr.mxu0 0.0
      %682 = vmatpush1.msra.mxu0 0.0
      %683 = vmatprep.subr.mxu0 0.0
      %684 = vmatpush1.msra.mxu0 0.0
      %685 = vmatprep.subr.mxu0 0.0
      %686 = vmatpush1.msra.mxu0 0.0
      %687 = vmatprep.subr.mxu0 0.0
      %688 = vmatpush1.msra.mxu0 0.0
      %689 = vmatprep.subr.mxu0 0.0
      %690 = vmatpush1.msra.mxu0 0.0
      %691 = vmatprep.subr.mxu0 0.0
      %692 = vmatpush1.msra.mxu0 0.0
      %693 = vmatprep.subr.mxu0 0.0
      %694 = vmatpush1.msra.mxu0 0.0
      %695 = vmatprep.subr.mxu0 0.0
      %696 = vmatpush1.msra.mxu0 0.0
      %697 = vmatprep.subr.mxu0 0.0
      %698 = vmatpush1.msra.mxu0 0.0
      %699 = vmatprep.subr.mxu0 0.0
      %700 = vmatpush1.msra.mxu0 0.0
      %701 = vmatprep.subr.mxu0 0.0
      %702 = vmatpush1.msra.mxu0 0.0
      %703 = vmatprep.subr.mxu0 0.0
      %704 = vmatpush1.msra.mxu0 0.0
      %705 = vmatprep.subr.mxu0 0.0
      %706 = vmatpush1.msra.mxu0 0.0
      %707 = vmatprep.mubr.f32.mxu0 0.0
      %708 = vmatmul.mubr.f32.gmra.mrb[0].mxu0 %v639
      %v709 = vpop.f32.mrb[0].mxu0
      %v710 = vadd.f32 0.0, %v709
      %v711 = vpop.f32.mrb[0].mxu0
      %712 = vdwg.mxu0
      %713 = vrot.lane.b32.xlu0 %v373, 112
      %v714 = vpop.permute.xlu0 %713
      %715 = vrot.lane.b32.xlu0 %v373, 80
      %v716 = vpop.permute.xlu0 %715
      %v717 = vsel %vm379, %v714, 0
      %v719 = vsel %vm379, %v716, 0
      %721 = vmatprep.subr.mxu0 0.0
      %722 = vmatpush1.xpose.msra.mxu0 %v719
      %723 = vmatprep.subr.mxu0 0.0
      %724 = vmatpush1.xpose.msra.mxu0 0.0
      %725 = vmatprep.subr.mxu0 0.0
      %726 = vmatpush1.xpose.msra.mxu0 0.0
      %727 = vmatprep.subr.mxu0 0.0
      %728 = vmatpush1.xpose.msra.mxu0 0.0
      %729 = vmatprep.subr.mxu0 0.0
      %730 = vmatpush1.xpose.msra.mxu0 0.0
      %731 = vmatprep.subr.mxu0 0.0
      %732 = vmatpush1.xpose.msra.mxu0 0.0
      %733 = vmatprep.subr.mxu0 0.0
      %734 = vmatpush1.xpose.msra.mxu0 0.0
      %735 = vmatprep.subr.mxu0 0.0
      %736 = vmatpush1.xpose.msra.mxu0 0.0
      %737 = vmatprep.subr.mxu0 0.0
      %738 = vmatpush1.xpose.msra.mxu0 0.0
      %739 = vmatprep.subr.mxu0 0.0
      %740 = vmatpush1.xpose.msra.mxu0 0.0
      %741 = vmatprep.subr.mxu0 0.0
      %742 = vmatpush1.xpose.msra.mxu0 0.0
      %743 = vmatprep.subr.mxu0 0.0
      %744 = vmatpush1.xpose.msra.mxu0 0.0
      %745 = vmatprep.subr.mxu0 0.0
      %746 = vmatpush1.xpose.msra.mxu0 0.0
      %747 = vmatprep.subr.mxu0 0.0
      %748 = vmatpush1.xpose.msra.mxu0 0.0
      %749 = vmatprep.subr.mxu0 0.0
      %750 = vmatpush1.xpose.msra.mxu0 0.0
      %751 = vmatprep.subr.mxu0 0.0
      %752 = vmatpush1.xpose.msra.mxu0 0.0
      %753 = vmatprep.subr.mxu0 0.0
      %754 = vmatpush1.xpose.msra.mxu0 0.0
      %755 = vmatprep.subr.mxu0 0.0
      %756 = vmatpush1.xpose.msra.mxu0 0.0
      %757 = vmatprep.subr.mxu0 0.0
      %758 = vmatpush1.xpose.msra.mxu0 0.0
      %759 = vmatprep.subr.mxu0 0.0
      %760 = vmatpush1.xpose.msra.mxu0 0.0
      %761 = vmatprep.subr.mxu0 0.0
      %762 = vmatpush1.xpose.msra.mxu0 0.0
      %763 = vmatprep.subr.mxu0 0.0
      %764 = vmatpush1.xpose.msra.mxu0 0.0
      %765 = vmatprep.subr.mxu0 0.0
      %766 = vmatpush1.xpose.msra.mxu0 0.0
      %767 = vmatprep.subr.mxu0 0.0
      %768 = vmatpush1.xpose.msra.mxu0 0.0
      %769 = vmatprep.subr.mxu0 0.0
      %770 = vmatpush1.xpose.msra.mxu0 0.0
      %771 = vmatprep.subr.mxu0 0.0
      %772 = vmatpush1.xpose.msra.mxu0 0.0
      %773 = vmatprep.subr.mxu0 0.0
      %774 = vmatpush1.xpose.msra.mxu0 0.0
      %775 = vmatprep.subr.mxu0 0.0
      %776 = vmatpush1.xpose.msra.mxu0 0.0
      %777 = vmatprep.subr.mxu0 0.0
      %778 = vmatpush1.xpose.msra.mxu0 0.0
      %779 = vmatprep.subr.mxu0 0.0
      %780 = vmatpush1.xpose.msra.mxu0 0.0
      %781 = vmatprep.subr.mxu0 0.0
      %782 = vmatpush1.xpose.msra.mxu0 0.0
      %783 = vmatprep.subr.mxu0 0.0
      %784 = vmatpush1.xpose.msra.mxu0 0.0
      %785 = vmatprep.mubr.f32.mxu0 0.0
      %786 = vmatmul.mubr.f32.gmra.mrb[0].mxu0 %v717
      %v787 = vpop.f32.mrb[0].mxu0
      %v788 = vadd.f32 0.0, %v787
      %v789 = vpop.f32.mrb[0].mxu0
      %790 = vdwg.mxu0
      %v791 = vmul.f32 %v788, 0.35355338
      %v792 = vsel %vm455, %v791, -inf
      %793 = vmax.xlane.f32.xlu0 %v792
      %v794 = vpop.xlane.xlu0 %793
      %v795 = vsub.f32 %v791, %v794
      %v796 = vmul.f32 %v795, 1.442695
      %v797 = vpow.pop %v796
      %v798 = vsel %vm455, %v797, 0.0
      %799 = vadd.xlane.f32.xlu0 %v798
      %v800 = vpop.xlane.xlu0 %799
      %v801 = vrcp.pop %v800
      %v802 = vmul.f32 %v797, %v801
      %803 = vrot.lane.b32.xlu0 %v373, 48
      %v804 = vpop.permute.xlu0 %803
      %v806 = vsel %vm469, %v802, 0
      %v808 = vsel %vm473, %v804, 0
      %810 = vmatprep.subr.mxu0 0.0
      %811 = vmatpush1.msra.mxu0 %v808
      %812 = vmatprep.subr.mxu0 0.0
      %813 = vmatpush1.msra.mxu0 0.0
      %814 = vmatprep.subr.mxu0 0.0
      %815 = vmatpush1.msra.mxu0 0.0
      %816 = vmatprep.subr.mxu0 0.0
      %817 = vmatpush1.msra.mxu0 0.0
      %818 = vmatprep.subr.mxu0 0.0
      %819 = vmatpush1.msra.mxu0 0.0
      %820 = vmatprep.subr.mxu0 0.0
      %821 = vmatpush1.msra.mxu0 0.0
      %822 = vmatprep.subr.mxu0 0.0
      %823 = vmatpush1.msra.mxu0 0.0
      %824 = vmatprep.subr.mxu0 0.0
      %825 = vmatpush1.msra.mxu0 0.0
      %826 = vmatprep.subr.mxu0 0.0
      %827 = vmatpush1.msra.mxu0 0.0
      %828 = vmatprep.subr.mxu0 0.0
      %829 = vmatpush1.msra.mxu0 0.0
      %830 = vmatprep.subr.mxu0 0.0
      %831 = vmatpush1.msra.mxu0 0.0
      %832 = vmatprep.subr.mxu0 0.0
      %833 = vmatpush1.msra.mxu0 0.0
      %834 = vmatprep.subr.mxu0 0.0
      %835 = vmatpush1.msra.mxu0 0.0
      %836 = vmatprep.subr.mxu0 0.0
      %837 = vmatpush1.msra.mxu0 0.0
      %838 = vmatprep.subr.mxu0 0.0
      %839 = vmatpush1.msra.mxu0 0.0
      %840 = vmatprep.subr.mxu0 0.0
      %841 = vmatpush1.msra.mxu0 0.0
      %842 = vmatprep.subr.mxu0 0.0
      %843 = vmatpush1.msra.mxu0 0.0
      %844 = vmatprep.subr.mxu0 0.0
      %845 = vmatpush1.msra.mxu0 0.0
      %846 = vmatprep.subr.mxu0 0.0
      %847 = vmatpush1.msra.mxu0 0.0
      %848 = vmatprep.subr.mxu0 0.0
      %849 = vmatpush1.msra.mxu0 0.0
      %850 = vmatprep.subr.mxu0 0.0
      %851 = vmatpush1.msra.mxu0 0.0
      %852 = vmatprep.subr.mxu0 0.0
      %853 = vmatpush1.msra.mxu0 0.0
      %854 = vmatprep.subr.mxu0 0.0
      %855 = vmatpush1.msra.mxu0 0.0
      %856 = vmatprep.subr.mxu0 0.0
      %857 = vmatpush1.msra.mxu0 0.0
      %858 = vmatprep.subr.mxu0 0.0
      %859 = vmatpush1.msra.mxu0 0.0
      %860 = vmatprep.subr.mxu0 0.0
      %861 = vmatpush1.msra.mxu0 0.0
      %862 = vmatprep.subr.mxu0 0.0
      %863 = vmatpush1.msra.mxu0 0.0
      %864 = vmatprep.subr.mxu0 0.0
      %865 = vmatpush1.msra.mxu0 0.0
      %866 = vmatprep.subr.mxu0 0.0
      %867 = vmatpush1.msra.mxu0 0.0
      %868 = vmatprep.subr.mxu0 0.0
      %869 = vmatpush1.msra.mxu0 0.0
      %870 = vmatprep.subr.mxu0 0.0
      %871 = vmatpush1.msra.mxu0 0.0
      %872 = vmatprep.subr.mxu0 0.0
      %873 = vmatpush1.msra.mxu0 0.0
      %874 = vmatprep.mubr.f32.mxu0 0.0
      %875 = vmatmul.mubr.f32.gmra.mrb[0].mxu0 %v806
      %v876 = vpop.f32.mrb[0].mxu0
      %v877 = vadd.f32 0.0, %v876
      %v878 = vpop.f32.mrb[0].mxu0
      %879 = vdwg.mxu0
      %880 = vrot.lane.b32.xlu0 %v373, 104
      %v881 = vpop.permute.xlu0 %880
      %882 = vrot.lane.b32.xlu0 %v373, 72
      %v883 = vpop.permute.xlu0 %882
      %v884 = vsel %vm379, %v881, 0
      %v886 = vsel %vm379, %v883, 0
      %888 = vmatprep.subr.mxu0 0.0
      %889 = vmatpush1.xpose.msra.mxu0 %v886
      %890 = vmatprep.subr.mxu0 0.0
      %891 = vmatpush1.xpose.msra.mxu0 0.0
      %892 = vmatprep.subr.mxu0 0.0
      %893 = vmatpush1.xpose.msra.mxu0 0.0
      %894 = vmatprep.subr.mxu0 0.0
      %895 = vmatpush1.xpose.msra.mxu0 0.0
      %896 = vmatprep.subr.mxu0 0.0
      %897 = vmatpush1.xpose.msra.mxu0 0.0
      %898 = vmatprep.subr.mxu0 0.0
      %899 = vmatpush1.xpose.msra.mxu0 0.0
      %900 = vmatprep.subr.mxu0 0.0
      %901 = vmatpush1.xpose.msra.mxu0 0.0
      %902 = vmatprep.subr.mxu0 0.0
      %903 = vmatpush1.xpose.msra.mxu0 0.0
      %904 = vmatprep.subr.mxu0 0.0
      %905 = vmatpush1.xpose.msra.mxu0 0.0
      %906 = vmatprep.subr.mxu0 0.0
      %907 = vmatpush1.xpose.msra.mxu0 0.0
      %908 = vmatprep.subr.mxu0 0.0
      %909 = vmatpush1.xpose.msra.mxu0 0.0
      %910 = vmatprep.subr.mxu0 0.0
      %911 = vmatpush1.xpose.msra.mxu0 0.0
      %912 = vmatprep.subr.mxu0 0.0
      %913 = vmatpush1.xpose.msra.mxu0 0.0
      %914 = vmatprep.subr.mxu0 0.0
      %915 = vmatpush1.xpose.msra.mxu0 0.0
      %916 = vmatprep.subr.mxu0 0.0
      %917 = vmatpush1.xpose.msra.mxu0 0.0
      %918 = vmatprep.subr.mxu0 0.0
      %919 = vmatpush1.xpose.msra.mxu0 0.0
      %920 = vmatprep.subr.mxu0 0.0
      %921 = vmatpush1.xpose.msra.mxu0 0.0
      %922 = vmatprep.subr.mxu0 0.0
      %923 = vmatpush1.xpose.msra.mxu0 0.0
      %924 = vmatprep.subr.mxu0 0.0
      %925 = vmatpush1.xpose.msra.mxu0 0.0
      %926 = vmatprep.subr.mxu0 0.0
      %927 = vmatpush1.xpose.msra.mxu0 0.0
      %928 = vmatprep.subr.mxu0 0.0
      %929 = vmatpush1.xpose.msra.mxu0 0.0
      %930 = vmatprep.subr.mxu0 0.0
      %931 = vmatpush1.xpose.msra.mxu0 0.0
      %932 = vmatprep.subr.mxu0 0.0
      %933 = vmatpush1.xpose.msra.mxu0 0.0
      %934 = vmatprep.subr.mxu0 0.0
      %935 = vmatpush1.xpose.msra.mxu0 0.0
      %936 = vmatprep.subr.mxu0 0.0
      %937 = vmatpush1.xpose.msra.mxu0 0.0
      %938 = vmatprep.subr.mxu0 0.0
      %939 = vmatpush1.xpose.msra.mxu0 0.0
      %940 = vmatprep.subr.mxu0 0.0
      %941 = vmatpush1.xpose.msra.mxu0 0.0
      %942 = vmatprep.subr.mxu0 0.0
      %943 = vmatpush1.xpose.msra.mxu0 0.0
      %944 = vmatprep.subr.mxu0 0.0
      %945 = vmatpush1.xpose.msra.mxu0 0.0
      %946 = vmatprep.subr.mxu0 0.0
      %947 = vmatpush1.xpose.msra.mxu0 0.0
      %948 = vmatprep.subr.mxu0 0.0
      %949 = vmatpush1.xpose.msra.mxu0 0.0
      %950 = vmatprep.subr.mxu0 0.0
      %951 = vmatpush1.xpose.msra.mxu0 0.0
      %952 = vmatprep.mubr.f32.mxu0 0.0
      %953 = vmatmul.mubr.f32.gmra.mrb[0].mxu0 %v884
      %v954 = vpop.f32.mrb[0].mxu0
      %v955 = vadd.f32 0.0, %v954
      %v956 = vpop.f32.mrb[0].mxu0
      %957 = vdwg.mxu0
      %v958 = vmul.f32 %v955, 0.35355338
      %v959 = vsel %vm455, %v958, -inf
      %960 = vmax.xlane.f32.xlu0 %v959
      %v961 = vpop.xlane.xlu0 %960
      %v962 = vsub.f32 %v958, %v961
      %v963 = vmul.f32 %v962, 1.442695
      %v964 = vpow.pop %v963
      %v965 = vsel %vm455, %v964, 0.0
      %966 = vadd.xlane.f32.xlu0 %v965
      %v967 = vpop.xlane.xlu0 %966
      %v968 = vrcp.pop %v967
      %v969 = vmul.f32 %v964, %v968
      %970 = vrot.lane.b32.xlu0 %v373, 40
      %v971 = vpop.permute.xlu0 %970
      %v973 = vsel %vm469, %v969, 0
      %v975 = vsel %vm473, %v971, 0
      %977 = vmatprep.subr.mxu0 0.0
      %978 = vmatpush1.msra.mxu0 %v975
      %979 = vmatprep.subr.mxu0 0.0
      %980 = vmatpush1.msra.mxu0 0.0
      %981 = vmatprep.subr.mxu0 0.0
      %982 = vmatpush1.msra.mxu0 0.0
      %983 = vmatprep.subr.mxu0 0.0
      %984 = vmatpush1.msra.mxu0 0.0
      %985 = vmatprep.subr.mxu0 0.0
      %986 = vmatpush1.msra.mxu0 0.0
      %987 = vmatprep.subr.mxu0 0.0
      %988 = vmatpush1.msra.mxu0 0.0
      %989 = vmatprep.subr.mxu0 0.0
      %990 = vmatpush1.msra.mxu0 0.0
      %991 = vmatprep.subr.mxu0 0.0
      %992 = vmatpush1.msra.mxu0 0.0
      %993 = vmatprep.subr.mxu0 0.0
      %994 = vmatpush1.msra.mxu0 0.0
      %995 = vmatprep.subr.mxu0 0.0
      %996 = vmatpush1.msra.mxu0 0.0
      %997 = vmatprep.subr.mxu0 0.0
      %998 = vmatpush1.msra.mxu0 0.0
      %999 = vmatprep.subr.mxu0 0.0
      %1000 = vmatpush1.msra.mxu0 0.0
      %1001 = vmatprep.subr.mxu0 0.0
      %1002 = vmatpush1.msra.mxu0 0.0
      %1003 = vmatprep.subr.mxu0 0.0
      %1004 = vmatpush1.msra.mxu0 0.0
      %1005 = vmatprep.subr.mxu0 0.0
      %1006 = vmatpush1.msra.mxu0 0.0
      %1007 = vmatprep.subr.mxu0 0.0
      %1008 = vmatpush1.msra.mxu0 0.0
      %1009 = vmatprep.subr.mxu0 0.0
      %1010 = vmatpush1.msra.mxu0 0.0
      %1011 = vmatprep.subr.mxu0 0.0
      %1012 = vmatpush1.msra.mxu0 0.0
      %1013 = vmatprep.subr.mxu0 0.0
      %1014 = vmatpush1.msra.mxu0 0.0
      %1015 = vmatprep.subr.mxu0 0.0
      %1016 = vmatpush1.msra.mxu0 0.0
      %1017 = vmatprep.subr.mxu0 0.0
      %1018 = vmatpush1.msra.mxu0 0.0
      %1019 = vmatprep.subr.mxu0 0.0
      %1020 = vmatpush1.msra.mxu0 0.0
      %1021 = vmatprep.subr.mxu0 0.0
      %1022 = vmatpush1.msra.mxu0 0.0
      %1023 = vmatprep.subr.mxu0 0.0
      %1024 = vmatpush1.msra.mxu0 0.0
      %1025 = vmatprep.subr.mxu0 0.0
      %1026 = vmatpush1.msra.mxu0 0.0
      %1027 = vmatprep.subr.mxu0 0.0
      %1028 = vmatpush1.msra.mxu0 0.0
      %1029 = vmatprep.subr.mxu0 0.0
      %1030 = vmatpush1.msra.mxu0 0.0
      %1031 = vmatprep.subr.mxu0 0.0
      %1032 = vmatpush1.msra.mxu0 0.0
      %1033 = vmatprep.subr.mxu0 0.0
      %1034 = vmatpush1.msra.mxu0 0.0
      %1035 = vmatprep.subr.mxu0 0.0
      %1036 = vmatpush1.msra.mxu0 0.0
      %1037 = vmatprep.subr.mxu0 0.0
      %1038 = vmatpush1.msra.mxu0 0.0
      %1039 = vmatprep.subr.mxu0 0.0
      %1040 = vmatpush1.msra.mxu0 0.0
      %1041 = vmatprep.mubr.f32.mxu0 0.0
      %1042 = vmatmul.mubr.f32.gmra.mrb[0].mxu0 %v973
      %v1043 = vpop.f32.mrb[0].mxu0
      %v1044 = vadd.f32 0.0, %v1043
      %v1045 = vpop.f32.mrb[0].mxu0
      %1046 = vdwg.mxu0
      %1048 = vrot.lane.b32.xlu0 %v710, 8
      %v1049 = vpop.permute.xlu0 %1048
      %1052 = vrot.lane.b32.xlu0 %v877, 16
      %v1053 = vpop.permute.xlu0 %1052
      %1056 = vrot.lane.b32.xlu0 %v1044, 24
      %v1057 = vpop.permute.xlu0 %1056
      %v1059 = vsel %vm379, %v543, %v1049
      %vm1060 = vcmask 130048
      %v1061 = vsel %vm1060, %v1059, %v1053
      %vm1062 = vcmask 195584
      %v1063 = vsel %vm1062, %v1061, %v1057
      %v1064 = vlaneseq
      %v1065 = vshrl.u32 %v1064, 7
      %v1066 = vsub.s32 0, %v1065
      %v1067 = vrot.slane %v256, %v1066
      %v1069 = vsel %vm302, %v1063, 0
      %1071 = vmatprep.subr.mxu0 0.0
      %1072 = vmatpush1.msra.mxu0 %v252
      %1073 = vmatprep.subr.mxu0 0.0
      %1074 = vmatpush1.msra.mxu0 %v253
      %1075 = vmatprep.subr.mxu0 0.0
      %1076 = vmatpush1.msra.mxu0 %v254
      %1077 = vmatprep.subr.mxu0 0.0
      %1078 = vmatpush1.msra.mxu0 %v255
      %1079 = vmatprep.subr.mxu0 0.0
      %1080 = vmatpush1.msra.mxu0 0.0
      %1081 = vmatprep.subr.mxu0 0.0
      %1082 = vmatpush1.msra.mxu0 0.0
      %1083 = vmatprep.subr.mxu0 0.0
      %1084 = vmatpush1.msra.mxu0 0.0
      %1085 = vmatprep.subr.mxu0 0.0
      %1086 = vmatpush1.msra.mxu0 0.0
      %1087 = vmatprep.subr.mxu0 0.0
      %1088 = vmatpush1.msra.mxu0 0.0
      %1089 = vmatprep.subr.mxu0 0.0
      %1090 = vmatpush1.msra.mxu0 0.0
      %1091 = vmatprep.subr.mxu0 0.0
      %1092 = vmatpush1.msra.mxu0 0.0
      %1093 = vmatprep.subr.mxu0 0.0
      %1094 = vmatpush1.msra.mxu0 0.0
      %1095 = vmatprep.subr.mxu0 0.0
      %1096 = vmatpush1.msra.mxu0 0.0
      %1097 = vmatprep.subr.mxu0 0.0
      %1098 = vmatpush1.msra.mxu0 0.0
      %1099 = vmatprep.subr.mxu0 0.0
      %1100 = vmatpush1.msra.mxu0 0.0
      %1101 = vmatprep.subr.mxu0 0.0
      %1102 = vmatpush1.msra.mxu0 0.0
      %1103 = vmatprep.subr.mxu0 0.0
      %1104 = vmatpush1.msra.mxu0 0.0
      %1105 = vmatprep.subr.mxu0 0.0
      %1106 = vmatpush1.msra.mxu0 0.0
      %1107 = vmatprep.subr.mxu0 0.0
      %1108 = vmatpush1.msra.mxu0 0.0
      %1109 = vmatprep.subr.mxu0 0.0
      %1110 = vmatpush1.msra.mxu0 0.0
      %1111 = vmatprep.subr.mxu0 0.0
      %1112 = vmatpush1.msra.mxu0 0.0
      %1113 = vmatprep.subr.mxu0 0.0
      %1114 = vmatpush1.msra.mxu0 0.0
      %1115 = vmatprep.subr.mxu0 0.0
      %1116 = vmatpush1.msra.mxu0 0.0
      %1117 = vmatprep.subr.mxu0 0.0
      %1118 = vmatpush1.msra.mxu0 0.0
      %1119 = vmatprep.subr.mxu0 0.0
      %1120 = vmatpush1.msra.mxu0 0.0
      %1121 = vmatprep.subr.mxu0 0.0
      %1122 = vmatpush1.msra.mxu0 0.0
      %1123 = vmatprep.subr.mxu0 0.0
      %1124 = vmatpush1.msra.mxu0 0.0
      %1125 = vmatprep.subr.mxu0 0.0
      %1126 = vmatpush1.msra.mxu0 0.0
      %1127 = vmatprep.subr.mxu0 0.0
      %1128 = vmatpush1.msra.mxu0 0.0
      %1129 = vmatprep.subr.mxu0 0.0
      %1130 = vmatpush1.msra.mxu0 0.0
      %1131 = vmatprep.subr.mxu0 0.0
      %1132 = vmatpush1.msra.mxu0 0.0
      %1133 = vmatprep.subr.mxu0 0.0
      %1134 = vmatpush1.msra.mxu0 0.0
      %1135 = vmatprep.mubr.f32.mxu0 0.0
      %1136 = vmatmul.mubr.f32.gmra.mrb[0].mxu0 %v1069
      %v1137 = vpop.f32.mrb[0].mxu0
      %v1138 = vadd.f32 %v1067, %v1137
      %v1139 = vpop.f32.mrb[0].mxu0
      %1140 = vdwg.mxu0
      %v1141 = vadd.f32 %v242, %v1138
      %v1142 = vsel %vm273, %v1141, 0.0
      %1143 = vadd.xlane.f32.xlu0 %v1142
      %v1144 = vpop.xlane.xlu0 %1143
      %v1145 = vmul.f32 %v1144, %v277
      %v1146 = vsub.f32 %v1141, %v1145
      %v1147 = vmul.f32 %v1146, %v1146
      %v1148 = vsel %vm273, %v1147, 0.0
      %1149 = vadd.xlane.f32.xlu0 %v1148
      %v1150 = vpop.xlane.xlu0 %1149
      %v1151 = vmul.f32 %v1150, %v277
      %v1152 = vadd.f32 %v1151, 1e-05
      %v1153 = vrsqrt.pop %v1152
      %v1154 = vmul.f32 %v1146, %v1153
      %v1155 = vlaneseq
      %v1156 = vshrl.u32 %v1155, 7
      %v1157 = vsub.s32 0, %v1156
      %v1158 = vrot.slane %v257, %v1157
      %v1159 = vmul.f32 %v1154, %v1158
      %v1160 = vlaneseq
      %v1161 = vshrl.u32 %v1160, 7
      %v1162 = vsub.s32 0, %v1161
      %v1163 = vrot.slane %v258, %v1162
      %v1164 = vadd.f32 %v1159, %v1163
      %v1165 = vlaneseq
      %v1166 = vshrl.u32 %v1165, 7
      %v1167 = vsub.s32 0, %v1166
      %v1168 = vrot.slane %v263, %v1167
      %v1170 = vsel %vm302, %v1164, 0
      %1172 = vmatprep.subr.mxu0 0.0
      %1173 = vmatpush1.msra.mxu0 %v259
      %1174 = vmatprep.subr.mxu0 0.0
      %1175 = vmatpush1.msra.mxu0 %v260
      %1176 = vmatprep.subr.mxu0 0.0
      %1177 = vmatpush1.msra.mxu0 %v261
      %1178 = vmatprep.subr.mxu0 0.0
      %1179 = vmatpush1.msra.mxu0 %v262
      %1180 = vmatprep.subr.mxu0 0.0
      %1181 = vmatpush1.msra.mxu0 0.0
      %1182 = vmatprep.subr.mxu0 0.0
      %1183 = vmatpush1.msra.mxu0 0.0
      %1184 = vmatprep.subr.mxu0 0.0
      %1185 = vmatpush1.msra.mxu0 0.0
      %1186 = vmatprep.subr.mxu0 0.0
      %1187 = vmatpush1.msra.mxu0 0.0
      %1188 = vmatprep.subr.mxu0 0.0
      %1189 = vmatpush1.msra.mxu0 0.0
      %1190 = vmatprep.subr.mxu0 0.0
      %1191 = vmatpush1.msra.mxu0 0.0
      %1192 = vmatprep.subr.mxu0 0.0
      %1193 = vmatpush1.msra.mxu0 0.0
      %1194 = vmatprep.subr.mxu0 0.0
      %1195 = vmatpush1.msra.mxu0 0.0
      %1196 = vmatprep.subr.mxu0 0.0
      %1197 = vmatpush1.msra.mxu0 0.0
      %1198 = vmatprep.subr.mxu0 0.0
      %1199 = vmatpush1.msra.mxu0 0.0
      %1200 = vmatprep.subr.mxu0 0.0
      %1201 = vmatpush1.msra.mxu0 0.0
      %1202 = vmatprep.subr.mxu0 0.0
      %1203 = vmatpush1.msra.mxu0 0.0
      %1204 = vmatprep.subr.mxu0 0.0
      %1205 = vmatpush1.msra.mxu0 0.0
      %1206 = vmatprep.subr.mxu0 0.0
      %1207 = vmatpush1.msra.mxu0 0.0
      %1208 = vmatprep.subr.mxu0 0.0
      %1209 = vmatpush1.msra.mxu0 0.0
      %1210 = vmatprep.subr.mxu0 0.0
      %1211 = vmatpush1.msra.mxu0 0.0
      %1212 = vmatprep.subr.mxu0 0.0
      %1213 = vmatpush1.msra.mxu0 0.0
      %1214 = vmatprep.subr.mxu0 0.0
      %1215 = vmatpush1.msra.mxu0 0.0
      %1216 = vmatprep.subr.mxu0 0.0
      %1217 = vmatpush1.msra.mxu0 0.0
      %1218 = vmatprep.subr.mxu0 0.0
      %1219 = vmatpush1.msra.mxu0 0.0
      %1220 = vmatprep.subr.mxu0 0.0
      %1221 = vmatpush1.msra.mxu0 0.0
      %1222 = vmatprep.subr.mxu0 0.0
      %1223 = vmatpush1.msra.mxu0 0.0
      %1224 = vmatprep.subr.mxu0 0.0
      %1225 = vmatpush1.msra.mxu0 0.0
      %1226 = vmatprep.subr.mxu0 0.0
      %1227 = vmatpush1.msra.mxu0 0.0
      %1228 = vmatprep.subr.mxu0 0.0
      %1229 = vmatpush1.msra.mxu0 0.0
      %1230 = vmatprep.subr.mxu0 0.0
      %1231 = vmatpush1.msra.mxu0 0.0
      %1232 = vmatprep.subr.mxu0 0.0
      %1233 = vmatpush1.msra.mxu0 0.0
      %1234 = vmatprep.subr.mxu0 0.0
      %1235 = vmatpush1.msra.mxu0 0.0
      %1236 = vmatprep.mubr.f32.mxu0 0.0
      %1237 = vmatmul.mubr.f32.gmra.mrb[0].mxu0 %v1170
      %v1238 = vpop.f32.mrb[0].mxu0
      %v1239 = vadd.f32 %v1168, %v1238
      %v1240 = vpop.f32.mrb[0].mxu0
      %1241 = vdwg.mxu0
      %v1242 = vmul.f32 %v1239, %v1239
      %v1243 = vmul.f32 %v1239, %v1242
      %v1244 = vmul.f32 %v1243, 0.044715
      %v1245 = vadd.f32 %v1239, %v1244
      %v1246 = vmul.f32 %v1245, 0.7978846
      %v1247 = vtanh.pop %v1246
      %v1248 = vadd.f32 %v1247, 1.0
      %v1249 = vmul.f32 %v1248, 0.5
      %v1250 = vmul.f32 %v1239, %v1249
      %v1252 = vsel %vm171, %v1250, 0
      %1254 = vmatprep.subr.mxu0 0.0
      %1255 = vmatpush1.msra.mxu0 %v264
      %1256 = vmatprep.subr.mxu0 0.0
      %1257 = vmatpush1.msra.mxu0 %v265
      %1258 = vmatprep.subr.mxu0 0.0
      %1259 = vmatpush1.msra.mxu0 %v266
      %1260 = vmatprep.subr.mxu0 0.0
      %1261 = vmatpush1.msra.mxu0 %v267
      %1262 = vmatprep.subr.mxu0 0.0
      %1263 = vmatpush1.msra.mxu0 %v268
      %1264 = vmatprep.subr.mxu0 0.0
      %1265 = vmatpush1.msra.mxu0 %v269
      %1266 = vmatprep.subr.mxu0 0.0
      %1267 = vmatpush1.msra.mxu0 %v270
      %1268 = vmatprep.subr.mxu0 0.0
      %1269 = vmatpush1.msra.mxu0 %v271
      %1270 = vmatprep.subr.mxu0 0.0
      %1271 = vmatpush1.msra.mxu0 0.0
      %1272 = vmatprep.subr.mxu0 0.0
      %1273 = vmatpush1.msra.mxu0 0.0
      %1274 = vmatprep.subr.mxu0 0.0
      %1275 = vmatpush1.msra.mxu0 0.0
      %1276 = vmatprep.subr.mxu0 0.0
      %1277 = vmatpush1.msra.mxu0 0.0
      %1278 = vmatprep.subr.mxu0 0.0
      %1279 = vmatpush1.msra.mxu0 0.0
      %1280 = vmatprep.subr.mxu0 0.0
      %1281 = vmatpush1.msra.mxu0 0.0
      %1282 = vmatprep.subr.mxu0 0.0
      %1283 = vmatpush1.msra.mxu0 0.0
      %1284 = vmatprep.subr.mxu0 0.0
      %1285 = vmatpush1.msra.mxu0 0.0
      %1286 = vmatprep.subr.mxu0 0.0
      %1287 = vmatpush1.msra.mxu0 0.0
      %1288 = vmatprep.subr.mxu0 0.0
      %1289 = vmatpush1.msra.mxu0 0.0
      %1290 = vmatprep.subr.mxu0 0.0
      %1291 = vmatpush1.msra.mxu0 0.0
      %1292 = vmatprep.subr.mxu0 0.0
      %1293 = vmatpush1.msra.mxu0 0.0
      %1294 = vmatprep.subr.mxu0 0.0
      %1295 = vmatpush1.msra.mxu0 0.0
      %1296 = vmatprep.subr.mxu0 0.0
      %1297 = vmatpush1.msra.mxu0 0.0
      %1298 = vmatprep.subr.mxu0 0.0
      %1299 = vmatpush1.msra.mxu0 0.0
      %1300 = vmatprep.subr.mxu0 0.0
      %1301 = vmatpush1.msra.mxu0 0.0
      %1302 = vmatprep.subr.mxu0 0.0
      %1303 = vmatpush1.msra.mxu0 0.0
      %1304 = vmatprep.subr.mxu0 0.0
      %1305 = vmatpush1.msra.mxu0 0.0
      %1306 = vmatprep.subr.mxu0 0.0
      %1307 = vmatpush1.msra.mxu0 0.0
      %1308 = vmatprep.subr.mxu0 0.0
      %1309 = vmatpush1.msra.mxu0 0.0
      %1310 = vmatprep.subr.mxu0 0.0
      %1311 = vmatpush1.msra.mxu0 0.0
      %1312 = vmatprep.subr.mxu0 0.0
      %1313 = vmatpush1.msra.mxu0 0.0
      %1314 = vmatprep.subr.mxu0 0.0
      %1315 = vmatpush1.msra.mxu0 0.0
      %1316 = vmatprep.subr.mxu0 0.0
      %1317 = vmatpush1.msra.mxu0 0.0
      %1318 = vmatprep.mubr.f32.mxu0 0.0
      %1319 = vmatmul.mubr.f32.gmra.mrb[0].mxu0 %v1252
      %v1320 = vpop.f32.mrb[0].mxu0
      %v1321 = vadd.f32 0.0, %v1320
      %v1322 = vpop.f32.mrb[0].mxu0
      %1323 = vdwg.mxu0
      %v1324 = vadd.f32 %v1141, %v1321
      %v1325 = vlaneseq
      %v1326 = vshrl.u32 %v1325, 7
      %v1327 = vsub.s32 0, %v1326
      %v1328 = vrot.slane %v272, %v1327
      %v1329 = vadd.f32 %v1324, %v1328
      %v1330 = vld [vmem:[%s1 + $0x1b8] sm:$0x1]
      %v1331 = vld [vmem:[%s1 + $0x1c0] sm:$0x1]
      %v1332 = vld [vmem:[%s1 + $0x1c8] sm:$0xff]
      %v1333 = vld [vmem:[%s1 + $0x1d0] sm:$0xff]
      %v1334 = vld [vmem:[%s1 + $0x1d8] sm:$0xff]
      %v1335 = vld [vmem:[%s1 + $0x1e0] sm:$0xff]
      %v1336 = vld [vmem:[%s1 + $0x1e8] sm:$0x1]
      %v1337 = vld [vmem:[%s1 + $0x1f0] sm:$0xff]
      %v1338 = vld [vmem:[%s1 + $0x1f8] sm:$0xff]
      %v1339 = vld [vmem:[%s1 + $0x200] sm:$0xff]
      %v1340 = vld [vmem:[%s1 + $0x208] sm:$0xff]
      %v1341 = vld [vmem:[%s1 + $0x210] sm:$0x1]
      %v1342 = vld [vmem:[%s1 + $0x218] sm:$0x1]
      %v1343 = vld [vmem:[%s1 + $0x220] sm:$0x1]
      %v1344 = vld [vmem:[%s1 + $0x228] sm:$0xff]
      %v1345 = vld [vmem:[%s1 + $0x230] sm:$0xff]
      %v1346 = vld [vmem:[%s1 + $0x238] sm:$0xff]
      %v1347 = vld [vmem:[%s1 + $0x240] sm:$0xff]
      %v1348 = vld [vmem:[%s1 + $0x248] sm:$0x1]
      %v1349 = vld [vmem:[%s1 + $0x250] sm:$0xff]
      %v1350 = vld [vmem:[%s1 + $0x258] sm:$0xff]
      %v1351 = vld [vmem:[%s1 + $0x260] sm:$0xff]
      %v1352 = vld [vmem:[%s1 + $0x268] sm:$0xff]
      %v1353 = vld [vmem:[%s1 + $0x270] sm:$0xff]
      %v1354 = vld [vmem:[%s1 + $0x278] sm:$0xff]
      %v1355 = vld [vmem:[%s1 + $0x280] sm:$0xff]
      %v1356 = vld [vmem:[%s1 + $0x288] sm:$0xff]
      %v1357 = vld [vmem:[%s1 + $0x290] sm:$0x1]
      %v1358 = vsel %vm273, %v1329, 0.0
      %1359 = vadd.xlane.f32.xlu0 %v1358
      %v1360 = vpop.xlane.xlu0 %1359
      %v1361 = vmul.f32 %v1360, %v277
      %v1362 = vsub.f32 %v1329, %v1361
      %v1363 = vmul.f32 %v1362, %v1362
      %v1364 = vsel %vm273, %v1363, 0.0
      %1365 = vadd.xlane.f32.xlu0 %v1364
      %v1366 = vpop.xlane.xlu0 %1365
      %v1367 = vmul.f32 %v1366, %v277
      %v1368 = vadd.f32 %v1367, 1e-05
      %v1369 = vrsqrt.pop %v1368
      %v1370 = vmul.f32 %v1362, %v1369
      %v1371 = vlaneseq
      %v1372 = vshrl.u32 %v1371, 7
      %v1373 = vsub.s32 0, %v1372
      %v1374 = vrot.slane %v1330, %v1373
      %v1375 = vmul.f32 %v1370, %v1374
      %v1376 = vlaneseq
      %v1377 = vshrl.u32 %v1376, 7
      %v1378 = vsub.s32 0, %v1377
      %v1379 = vrot.slane %v1331, %v1378
      %v1380 = vadd.f32 %v1375, %v1379
      %v1381 = vlaneseq
      %v1382 = vshrl.u32 %v1381, 7
      %v1383 = vsub.s32 0, %v1382
      %v1384 = vrot.slane %v1336, %v1383
      %v1386 = vsel %vm302, %v1380, 0
      %1388 = vmatprep.subr.mxu0 0.0
      %1389 = vmatpush1.msra.mxu0 %v1332
      %1390 = vmatprep.subr.mxu0 0.0
      %1391 = vmatpush1.msra.mxu0 %v1333
      %1392 = vmatprep.subr.mxu0 0.0
      %1393 = vmatpush1.msra.mxu0 %v1334
      %1394 = vmatprep.subr.mxu0 0.0
      %1395 = vmatpush1.msra.mxu0 %v1335
      %1396 = vmatprep.subr.mxu0 0.0
      %1397 = vmatpush1.msra.mxu0 0.0
      %1398 = vmatprep.subr.mxu0 0.0
      %1399 = vmatpush1.msra.mxu0 0.0
      %1400 = vmatprep.subr.mxu0 0.0
      %1401 = vmatpush1.msra.mxu0 0.0
      %1402 = vmatprep.subr.mxu0 0.0
      %1403 = vmatpush1.msra.mxu0 0.0
      %1404 = vmatprep.subr.mxu0 0.0
      %1405 = vmatpush1.msra.mxu0 0.0
      %1406 = vmatprep.subr.mxu0 0.0
      %1407 = vmatpush1.msra.mxu0 0.0
      %1408 = vmatprep.subr.mxu0 0.0
      %1409 = vmatpush1.msra.mxu0 0.0
      %1410 = vmatprep.subr.mxu0 0.0
      %1411 = vmatpush1.msra.mxu0 0.0
      %1412 = vmatprep.subr.mxu0 0.0
      %1413 = vmatpush1.msra.mxu0 0.0
      %1414 = vmatprep.subr.mxu0 0.0
      %1415 = vmatpush1.msra.mxu0 0.0
      %1416 = vmatprep.subr.mxu0 0.0
      %1417 = vmatpush1.msra.mxu0 0.0
      %1418 = vmatprep.subr.mxu0 0.0
      %1419 = vmatpush1.msra.mxu0 0.0
      %1420 = vmatprep.subr.mxu0 0.0
      %1421 = vmatpush1.msra.mxu0 0.0
      %1422 = vmatprep.subr.mxu0 0.0
      %1423 = vmatpush1.msra.mxu0 0.0
      %1424 = vmatprep.subr.mxu0 0.0
      %1425 = vmatpush1.msra.mxu0 0.0
      %1426 = vmatprep.subr.mxu0 0.0
      %1427 = vmatpush1.msra.mxu0 0.0
      %1428 = vmatprep.subr.mxu0 0.0
      %1429 = vmatpush1.msra.mxu0 0.0
      %1430 = vmatprep.subr.mxu0 0.0
      %1431 = vmatpush1.msra.mxu0 0.0
      %1432 = vmatprep.subr.mxu0 0.0
      %1433 = vmatpush1.msra.mxu0 0.0
      %1434 = vmatprep.subr.mxu0 0.0
      %1435 = vmatpush1.msra.mxu0 0.0
      %1436 = vmatprep.subr.mxu0 0.0
      %1437 = vmatpush1.msra.mxu0 0.0
      %1438 = vmatprep.subr.mxu0 0.0
      %1439 = vmatpush1.msra.mxu0 0.0
      %1440 = vmatprep.subr.mxu0 0.0
      %1441 = vmatpush1.msra.mxu0 0.0
      %1442 = vmatprep.subr.mxu0 0.0
      %1443 = vmatpush1.msra.mxu0 0.0
      %1444 = vmatprep.subr.mxu0 0.0
      %1445 = vmatpush1.msra.mxu0 0.0
      %1446 = vmatprep.subr.mxu0 0.0
      %1447 = vmatpush1.msra.mxu0 0.0
      %1448 = vmatprep.subr.mxu0 0.0
      %1449 = vmatpush1.msra.mxu0 0.0
      %1450 = vmatprep.subr.mxu0 0.0
      %1451 = vmatpush1.msra.mxu0 0.0
      %1452 = vmatprep.mubr.f32.mxu0 0.0
      %1453 = vmatmul.mubr.f32.gmra.mrb[0].mxu0 %v1386
      %v1454 = vpop.f32.mrb[0].mxu0
      %v1455 = vadd.f32 %v1384, %v1454
      %v1456 = vpop.f32.mrb[0].mxu0
      %1457 = vdwg.mxu0
      %1459 = vrot.lane.b32.xlu0 %v1455, 96
      %v1460 = vpop.permute.xlu0 %1459
      %v1461 = vsel %vm379, %v1455, 0
      %v1463 = vsel %vm379, %v1460, 0
      %1465 = vmatprep.subr.mxu0 0.0
      %1466 = vmatpush1.xpose.msra.mxu0 %v1463
      %1467 = vmatprep.subr.mxu0 0.0
      %1468 = vmatpush1.xpose.msra.mxu0 0.0
      %1469 = vmatprep.subr.mxu0 0.0
      %1470 = vmatpush1.xpose.msra.mxu0 0.0
      %1471 = vmatprep.subr.mxu0 0.0
      %1472 = vmatpush1.xpose.msra.mxu0 0.0
      %1473 = vmatprep.subr.mxu0 0.0
      %1474 = vmatpush1.xpose.msra.mxu0 0.0
      %1475 = vmatprep.subr.mxu0 0.0
      %1476 = vmatpush1.xpose.msra.mxu0 0.0
      %1477 = vmatprep.subr.mxu0 0.0
      %1478 = vmatpush1.xpose.msra.mxu0 0.0
      %1479 = vmatprep.subr.mxu0 0.0
      %1480 = vmatpush1.xpose.msra.mxu0 0.0
      %1481 = vmatprep.subr.mxu0 0.0
      %1482 = vmatpush1.xpose.msra.mxu0 0.0
      %1483 = vmatprep.subr.mxu0 0.0
      %1484 = vmatpush1.xpose.msra.mxu0 0.0
      %1485 = vmatprep.subr.mxu0 0.0
      %1486 = vmatpush1.xpose.msra.mxu0 0.0
      %1487 = vmatprep.subr.mxu0 0.0
      %1488 = vmatpush1.xpose.msra.mxu0 0.0
      %1489 = vmatprep.subr.mxu0 0.0
      %1490 = vmatpush1.xpose.msra.mxu0 0.0
      %1491 = vmatprep.subr.mxu0 0.0
      %1492 = vmatpush1.xpose.msra.mxu0 0.0
      %1493 = vmatprep.subr.mxu0 0.0
      %1494 = vmatpush1.xpose.msra.mxu0 0.0
      %1495 = vmatprep.subr.mxu0 0.0
      %1496 = vmatpush1.xpose.msra.mxu0 0.0
      %1497 = vmatprep.subr.mxu0 0.0
      %1498 = vmatpush1.xpose.msra.mxu0 0.0
      %1499 = vmatprep.subr.mxu0 0.0
      %1500 = vmatpush1.xpose.msra.mxu0 0.0
      %1501 = vmatprep.subr.mxu0 0.0
      %1502 = vmatpush1.xpose.msra.mxu0 0.0
      %1503 = vmatprep.subr.mxu0 0.0
      %1504 = vmatpush1.xpose.msra.mxu0 0.0
      %1505 = vmatprep.subr.mxu0 0.0
      %1506 = vmatpush1.xpose.msra.mxu0 0.0
      %1507 = vmatprep.subr.mxu0 0.0
      %1508 = vmatpush1.xpose.msra.mxu0 0.0
      %1509 = vmatprep.subr.mxu0 0.0
      %1510 = vmatpush1.xpose.msra.mxu0 0.0
      %1511 = vmatprep.subr.mxu0 0.0
      %1512 = vmatpush1.xpose.msra.mxu0 0.0
      %1513 = vmatprep.subr.mxu0 0.0
      %1514 = vmatpush1.xpose.msra.mxu0 0.0
      %1515 = vmatprep.subr.mxu0 0.0
      %1516 = vmatpush1.xpose.msra.mxu0 0.0
      %1517 = vmatprep.subr.mxu0 0.0
      %1518 = vmatpush1.xpose.msra.mxu0 0.0
      %1519 = vmatprep.subr.mxu0 0.0
      %1520 = vmatpush1.xpose.msra.mxu0 0.0
      %1521 = vmatprep.subr.mxu0 0.0
      %1522 = vmatpush1.xpose.msra.mxu0 0.0
      %1523 = vmatprep.subr.mxu0 0.0
      %1524 = vmatpush1.xpose.msra.mxu0 0.0
      %1525 = vmatprep.subr.mxu0 0.0
      %1526 = vmatpush1.xpose.msra.mxu0 0.0
      %1527 = vmatprep.subr.mxu0 0.0
      %1528 = vmatpush1.xpose.msra.mxu0 0.0
      %1529 = vmatprep.mubr.f32.mxu0 0.0
      %1530 = vmatmul.mubr.f32.gmra.mrb[0].mxu0 %v1461
      %v1531 = vpop.f32.mrb[0].mxu0
      %v1532 = vadd.f32 0.0, %v1531
      %v1533 = vpop.f32.mrb[0].mxu0
      %1534 = vdwg.mxu0
      %v1535 = vmul.f32 %v1532, 0.35355338
      %v1536 = vsel %vm455, %v1535, -inf
      %1537 = vmax.xlane.f32.xlu0 %v1536
      %v1538 = vpop.xlane.xlu0 %1537
      %v1539 = vsub.f32 %v1535, %v1538
      %v1540 = vmul.f32 %v1539, 1.442695
      %v1541 = vpow.pop %v1540
      %v1542 = vsel %vm455, %v1541, 0.0
      %1543 = vadd.xlane.f32.xlu0 %v1542
      %v1544 = vpop.xlane.xlu0 %1543
      %v1545 = vrcp.pop %v1544
      %v1546 = vmul.f32 %v1541, %v1545
      %1547 = vrot.lane.b32.xlu0 %v1455, 64
      %v1548 = vpop.permute.xlu0 %1547
      %v1550 = vsel %vm469, %v1546, 0
      %v1552 = vsel %vm473, %v1548, 0
      %1554 = vmatprep.subr.mxu0 0.0
      %1555 = vmatpush1.msra.mxu0 %v1552
      %1556 = vmatprep.subr.mxu0 0.0
      %1557 = vmatpush1.msra.mxu0 0.0
      %1558 = vmatprep.subr.mxu0 0.0
      %1559 = vmatpush1.msra.mxu0 0.0
      %1560 = vmatprep.subr.mxu0 0.0
      %1561 = vmatpush1.msra.mxu0 0.0
      %1562 = vmatprep.subr.mxu0 0.0
      %1563 = vmatpush1.msra.mxu0 0.0
      %1564 = vmatprep.subr.mxu0 0.0
      %1565 = vmatpush1.msra.mxu0 0.0
      %1566 = vmatprep.subr.mxu0 0.0
      %1567 = vmatpush1.msra.mxu0 0.0
      %1568 = vmatprep.subr.mxu0 0.0
      %1569 = vmatpush1.msra.mxu0 0.0
      %1570 = vmatprep.subr.mxu0 0.0
      %1571 = vmatpush1.msra.mxu0 0.0
      %1572 = vmatprep.subr.mxu0 0.0
      %1573 = vmatpush1.msra.mxu0 0.0
      %1574 = vmatprep.subr.mxu0 0.0
      %1575 = vmatpush1.msra.mxu0 0.0
      %1576 = vmatprep.subr.mxu0 0.0
      %1577 = vmatpush1.msra.mxu0 0.0
      %1578 = vmatprep.subr.mxu0 0.0
      %1579 = vmatpush1.msra.mxu0 0.0
      %1580 = vmatprep.subr.mxu0 0.0
      %1581 = vmatpush1.msra.mxu0 0.0
      %1582 = vmatprep.subr.mxu0 0.0
      %1583 = vmatpush1.msra.mxu0 0.0
      %1584 = vmatprep.subr.mxu0 0.0
      %1585 = vmatpush1.msra.mxu0 0.0
      %1586 = vmatprep.subr.mxu0 0.0
      %1587 = vmatpush1.msra.mxu0 0.0
      %1588 = vmatprep.subr.mxu0 0.0
      %1589 = vmatpush1.msra.mxu0 0.0
      %1590 = vmatprep.subr.mxu0 0.0
      %1591 = vmatpush1.msra.mxu0 0.0
      %1592 = vmatprep.subr.mxu0 0.0
      %1593 = vmatpush1.msra.mxu0 0.0
      %1594 = vmatprep.subr.mxu0 0.0
      %1595 = vmatpush1.msra.mxu0 0.0
      %1596 = vmatprep.subr.mxu0 0.0
      %1597 = vmatpush1.msra.mxu0 0.0
      %1598 = vmatprep.subr.mxu0 0.0
      %1599 = vmatpush1.msra.mxu0 0.0
      %1600 = vmatprep.subr.mxu0 0.0
      %1601 = vmatpush1.msra.mxu0 0.0
      %1602 = vmatprep.subr.mxu0 0.0
      %1603 = vmatpush1.msra.mxu0 0.0
      %1604 = vmatprep.subr.mxu0 0.0
      %1605 = vmatpush1.msra.mxu0 0.0
      %1606 = vmatprep.subr.mxu0 0.0
      %1607 = vmatpush1.msra.mxu0 0.0
      %1608 = vmatprep.subr.mxu0 0.0
      %1609 = vmatpush1.msra.mxu0 0.0
      %1610 = vmatprep.subr.mxu0 0.0
      %1611 = vmatpush1.msra.mxu0 0.0
      %1612 = vmatprep.subr.mxu0 0.0
      %1613 = vmatpush1.msra.mxu0 0.0
      %1614 = vmatprep.subr.mxu0 0.0
      %1615 = vmatpush1.msra.mxu0 0.0
      %1616 = vmatprep.subr.mxu0 0.0
      %1617 = vmatpush1.msra.mxu0 0.0
      %1618 = vmatprep.mubr.f32.mxu0 0.0
      %1619 = vmatmul.mubr.f32.gmra.mrb[0].mxu0 %v1550
      %v1620 = vpop.f32.mrb[0].mxu0
      %v1621 = vadd.f32 0.0, %v1620
      %v1622 = vpop.f32.mrb[0].mxu0
      %1623 = vdwg.mxu0
      %1624 = vrot.lane.b32.xlu0 %v1455, 120
      %v1625 = vpop.permute.xlu0 %1624
      %1626 = vrot.lane.b32.xlu0 %v1455, 88
      %v1627 = vpop.permute.xlu0 %1626
      %v1628 = vsel %vm379, %v1625, 0
      %v1630 = vsel %vm379, %v1627, 0
      %1632 = vmatprep.subr.mxu0 0.0
      %1633 = vmatpush1.xpose.msra.mxu0 %v1630
      %1634 = vmatprep.subr.mxu0 0.0
      %1635 = vmatpush1.xpose.msra.mxu0 0.0
      %1636 = vmatprep.subr.mxu0 0.0
      %1637 = vmatpush1.xpose.msra.mxu0 0.0
      %1638 = vmatprep.subr.mxu0 0.0
      %1639 = vmatpush1.xpose.msra.mxu0 0.0
      %1640 = vmatprep.subr.mxu0 0.0
      %1641 = vmatpush1.xpose.msra.mxu0 0.0
      %1642 = vmatprep.subr.mxu0 0.0
      %1643 = vmatpush1.xpose.msra.mxu0 0.0
      %1644 = vmatprep.subr.mxu0 0.0
      %1645 = vmatpush1.xpose.msra.mxu0 0.0
      %1646 = vmatprep.subr.mxu0 0.0
      %1647 = vmatpush1.xpose.msra.mxu0 0.0
      %1648 = vmatprep.subr.mxu0 0.0
      %1649 = vmatpush1.xpose.msra.mxu0 0.0
      %1650 = vmatprep.subr.mxu0 0.0
      %1651 = vmatpush1.xpose.msra.mxu0 0.0
      %1652 = vmatprep.subr.mxu0 0.0
      %1653 = vmatpush1.xpose.msra.mxu0 0.0
      %1654 = vmatprep.subr.mxu0 0.0
      %1655 = vmatpush1.xpose.msra.mxu0 0.0
      %1656 = vmatprep.subr.mxu0 0.0
      %1657 = vmatpush1.xpose.msra.mxu0 0.0
      %1658 = vmatprep.subr.mxu0 0.0
      %1659 = vmatpush1.xpose.msra.mxu0 0.0
      %1660 = vmatprep.subr.mxu0 0.0
      %1661 = vmatpush1.xpose.msra.mxu0 0.0
      %1662 = vmatprep.subr.mxu0 0.0
      %1663 = vmatpush1.xpose.msra.mxu0 0.0
      %1664 = vmatprep.subr.mxu0 0.0
      %1665 = vmatpush1.xpose.msra.mxu0 0.0
      %1666 = vmatprep.subr.mxu0 0.0
      %1667 = vmatpush1.xpose.msra.mxu0 0.0
      %1668 = vmatprep.subr.mxu0 0.0
      %1669 = vmatpush1.xpose.msra.mxu0 0.0
      %1670 = vmatprep.subr.mxu0 0.0
      %1671 = vmatpush1.xpose.msra.mxu0 0.0
      %1672 = vmatprep.subr.mxu0 0.0
      %1673 = vmatpush1.xpose.msra.mxu0 0.0
      %1674 = vmatprep.subr.mxu0 0.0
      %1675 = vmatpush1.xpose.msra.mxu0 0.0
      %1676 = vmatprep.subr.mxu0 0.0
      %1677 = vmatpush1.xpose.msra.mxu0 0.0
      %1678 = vmatprep.subr.mxu0 0.0
      %1679 = vmatpush1.xpose.msra.mxu0 0.0
      %1680 = vmatprep.subr.mxu0 0.0
      %1681 = vmatpush1.xpose.msra.mxu0 0.0
      %1682 = vmatprep.subr.mxu0 0.0
      %1683 = vmatpush1.xpose.msra.mxu0 0.0
      %1684 = vmatprep.subr.mxu0 0.0
      %1685 = vmatpush1.xpose.msra.mxu0 0.0
      %1686 = vmatprep.subr.mxu0 0.0
      %1687 = vmatpush1.xpose.msra.mxu0 0.0
      %1688 = vmatprep.subr.mxu0 0.0
      %1689 = vmatpush1.xpose.msra.mxu0 0.0
      %1690 = vmatprep.subr.mxu0 0.0
      %1691 = vmatpush1.xpose.msra.mxu0 0.0
      %1692 = vmatprep.subr.mxu0 0.0
      %1693 = vmatpush1.xpose.msra.mxu0 0.0
      %1694 = vmatprep.subr.mxu0 0.0
      %1695 = vmatpush1.xpose.msra.mxu0 0.0
      %1696 = vmatprep.mubr.f32.mxu0 0.0
      %1697 = vmatmul.mubr.f32.gmra.mrb[0].mxu0 %v1628
      %v1698 = vpop.f32.mrb[0].mxu0
      %v1699 = vadd.f32 0.0, %v1698
      %v1700 = vpop.f32.mrb[0].mxu0
      %1701 = vdwg.mxu0
      %v1702 = vmul.f32 %v1699, 0.35355338
      %v1703 = vsel %vm455, %v1702, -inf
      %1704 = vmax.xlane.f32.xlu0 %v1703
      %v1705 = vpop.xlane.xlu0 %1704
      %v1706 = vsub.f32 %v1702, %v1705
      %v1707 = vmul.f32 %v1706, 1.442695
      %v1708 = vpow.pop %v1707
      %v1709 = vsel %vm455, %v1708, 0.0
      %1710 = vadd.xlane.f32.xlu0 %v1709
      %v1711 = vpop.xlane.xlu0 %1710
      %v1712 = vrcp.pop %v1711
      %v1713 = vmul.f32 %v1708, %v1712
      %1714 = vrot.lane.b32.xlu0 %v1455, 56
      %v1715 = vpop.permute.xlu0 %1714
      %v1717 = vsel %vm469, %v1713, 0
      %v1719 = vsel %vm473, %v1715, 0
      %1721 = vmatprep.subr.mxu0 0.0
      %1722 = vmatpush1.msra.mxu0 %v1719
      %1723 = vmatprep.subr.mxu0 0.0
      %1724 = vmatpush1.msra.mxu0 0.0
      %1725 = vmatprep.subr.mxu0 0.0
      %1726 = vmatpush1.msra.mxu0 0.0
      %1727 = vmatprep.subr.mxu0 0.0
      %1728 = vmatpush1.msra.mxu0 0.0
      %1729 = vmatprep.subr.mxu0 0.0
      %1730 = vmatpush1.msra.mxu0 0.0
      %1731 = vmatprep.subr.mxu0 0.0
      %1732 = vmatpush1.msra.mxu0 0.0
      %1733 = vmatprep.subr.mxu0 0.0
      %1734 = vmatpush1.msra.mxu0 0.0
      %1735 = vmatprep.subr.mxu0 0.0
      %1736 = vmatpush1.msra.mxu0 0.0
      %1737 = vmatprep.subr.mxu0 0.0
      %1738 = vmatpush1.msra.mxu0 0.0
      %1739 = vmatprep.subr.mxu0 0.0
      %1740 = vmatpush1.msra.mxu0 0.0
      %1741 = vmatprep.subr.mxu0 0.0
      %1742 = vmatpush1.msra.mxu0 0.0
      %1743 = vmatprep.subr.mxu0 0.0
      %1744 = vmatpush1.msra.mxu0 0.0
      %1745 = vmatprep.subr.mxu0 0.0
      %1746 = vmatpush1.msra.mxu0 0.0
      %1747 = vmatprep.subr.mxu0 0.0
      %1748 = vmatpush1.msra.mxu0 0.0
      %1749 = vmatprep.subr.mxu0 0.0
      %1750 = vmatpush1.msra.mxu0 0.0
      %1751 = vmatprep.subr.mxu0 0.0
      %1752 = vmatpush1.msra.mxu0 0.0
      %1753 = vmatprep.subr.mxu0 0.0
      %1754 = vmatpush1.msra.mxu0 0.0
      %1755 = vmatprep.subr.mxu0 0.0
      %1756 = vmatpush1.msra.mxu0 0.0
      %1757 = vmatprep.subr.mxu0 0.0
      %1758 = vmatpush1.msra.mxu0 0.0
      %1759 = vmatprep.subr.mxu0 0.0
      %1760 = vmatpush1.msra.mxu0 0.0
      %1761 = vmatprep.subr.mxu0 0.0
      %1762 = vmatpush1.msra.mxu0 0.0
      %1763 = vmatprep.subr.mxu0 0.0
      %1764 = vmatpush1.msra.mxu0 0.0
      %1765 = vmatprep.subr.mxu0 0.0
      %1766 = vmatpush1.msra.mxu0 0.0
      %1767 = vmatprep.subr.mxu0 0.0
      %1768 = vmatpush1.msra.mxu0 0.0
      %1769 = vmatprep.subr.mxu0 0.0
      %1770 = vmatpush1.msra.mxu0 0.0
      %1771 = vmatprep.subr.mxu0 0.0
      %1772 = vmatpush1.msra.mxu0 0.0
      %1773 = vmatprep.subr.mxu0 0.0
      %1774 = vmatpush1.msra.mxu0 0.0
      %1775 = vmatprep.subr.mxu0 0.0
      %1776 = vmatpush1.msra.mxu0 0.0
      %1777 = vmatprep.subr.mxu0 0.0
      %1778 = vmatpush1.msra.mxu0 0.0
      %1779 = vmatprep.subr.mxu0 0.0
      %1780 = vmatpush1.msra.mxu0 0.0
      %1781 = vmatprep.subr.mxu0 0.0
      %1782 = vmatpush1.msra.mxu0 0.0
      %1783 = vmatprep.subr.mxu0 0.0
      %1784 = vmatpush1.msra.mxu0 0.0
      %1785 = vmatprep.mubr.f32.mxu0 0.0
      %1786 = vmatmul.mubr.f32.gmra.mrb[0].mxu0 %v1717
      %v1787 = vpop.f32.mrb[0].mxu0
      %v1788 = vadd.f32 0.0, %v1787
      %v1789 = vpop.f32.mrb[0].mxu0
      %1790 = vdwg.mxu0
      %1791 = vrot.lane.b32.xlu0 %v1455, 112
      %v1792 = vpop.permute.xlu0 %1791
      %1793 = vrot.lane.b32.xlu0 %v1455, 80
      %v1794 = vpop.permute.xlu0 %1793
      %v1795 = vsel %vm379, %v1792, 0
      %v1797 = vsel %vm379, %v1794, 0
      %1799 = vmatprep.subr.mxu0 0.0
      %1800 = vmatpush1.xpose.msra.mxu0 %v1797
      %1801 = vmatprep.subr.mxu0 0.0
      %1802 = vmatpush1.xpose.msra.mxu0 0.0
      %1803 = vmatprep.subr.mxu0 0.0
      %1804 = vmatpush1.xpose.msra.mxu0 0.0
      %1805 = vmatprep.subr.mxu0 0.0
      %1806 = vmatpush1.xpose.msra.mxu0 0.0
      %1807 = vmatprep.subr.mxu0 0.0
      %1808 = vmatpush1.xpose.msra.mxu0 0.0
      %1809 = vmatprep.subr.mxu0 0.0
      %1810 = vmatpush1.xpose.msra.mxu0 0.0
      %1811 = vmatprep.subr.mxu0 0.0
      %1812 = vmatpush1.xpose.msra.mxu0 0.0
      %1813 = vmatprep.subr.mxu0 0.0
      %1814 = vmatpush1.xpose.msra.mxu0 0.0
      %1815 = vmatprep.subr.mxu0 0.0
      %1816 = vmatpush1.xpose.msra.mxu0 0.0
      %1817 = vmatprep.subr.mxu0 0.0
      %1818 = vmatpush1.xpose.msra.mxu0 0.0
      %1819 = vmatprep.subr.mxu0 0.0
      %1820 = vmatpush1.xpose.msra.mxu0 0.0
      %1821 = vmatprep.subr.mxu0 0.0
      %1822 = vmatpush1.xpose.msra.mxu0 0.0
      %1823 = vmatprep.subr.mxu0 0.0
      %1824 = vmatpush1.xpose.msra.mxu0 0.0
      %1825 = vmatprep.subr.mxu0 0.0
      %1826 = vmatpush1.xpose.msra.mxu0 0.0
      %1827 = vmatprep.subr.mxu0 0.0
      %1828 = vmatpush1.xpose.msra.mxu0 0.0
      %1829 = vmatprep.subr.mxu0 0.0
      %1830 = vmatpush1.xpose.msra.mxu0 0.0
      %1831 = vmatprep.subr.mxu0 0.0
      %1832 = vmatpush1.xpose.msra.mxu0 0.0
      %1833 = vmatprep.subr.mxu0 0.0
      %1834 = vmatpush1.xpose.msra.mxu0 0.0
      %1835 = vmatprep.subr.mxu0 0.0
      %1836 = vmatpush1.xpose.msra.mxu0 0.0
      %1837 = vmatprep.subr.mxu0 0.0
      %1838 = vmatpush1.xpose.msra.mxu0 0.0
      %1839 = vmatprep.subr.mxu0 0.0
      %1840 = vmatpush1.xpose.msra.mxu0 0.0
      %1841 = vmatprep.subr.mxu0 0.0
      %1842 = vmatpush1.xpose.msra.mxu0 0.0
      %1843 = vmatprep.subr.mxu0 0.0
      %1844 = vmatpush1.xpose.msra.mxu0 0.0
      %1845 = vmatprep.subr.mxu0 0.0
      %1846 = vmatpush1.xpose.msra.mxu0 0.0
      %1847 = vmatprep.subr.mxu0 0.0
      %1848 = vmatpush1.xpose.msra.mxu0 0.0
      %1849 = vmatprep.subr.mxu0 0.0
      %1850 = vmatpush1.xpose.msra.mxu0 0.0
      %1851 = vmatprep.subr.mxu0 0.0
      %1852 = vmatpush1.xpose.msra.mxu0 0.0
      %1853 = vmatprep.subr.mxu0 0.0
      %1854 = vmatpush1.xpose.msra.mxu0 0.0
      %1855 = vmatprep.subr.mxu0 0.0
      %1856 = vmatpush1.xpose.msra.mxu0 0.0
      %1857 = vmatprep.subr.mxu0 0.0
      %1858 = vmatpush1.xpose.msra.mxu0 0.0
      %1859 = vmatprep.subr.mxu0 0.0
      %1860 = vmatpush1.xpose.msra.mxu0 0.0
      %1861 = vmatprep.subr.mxu0 0.0
      %1862 = vmatpush1.xpose.msra.mxu0 0.0
      %1863 = vmatprep.mubr.f32.mxu0 0.0
      %1864 = vmatmul.mubr.f32.gmra.mrb[0].mxu0 %v1795
      %v1865 = vpop.f32.mrb[0].mxu0
      %v1866 = vadd.f32 0.0, %v1865
      %v1867 = vpop.f32.mrb[0].mxu0
      %1868 = vdwg.mxu0
      %v1869 = vmul.f32 %v1866, 0.35355338
      %v1870 = vsel %vm455, %v1869, -inf
      %1871 = vmax.xlane.f32.xlu0 %v1870
      %v1872 = vpop.xlane.xlu0 %1871
      %v1873 = vsub.f32 %v1869, %v1872
      %v1874 = vmul.f32 %v1873, 1.442695
      %v1875 = vpow.pop %v1874
      %v1876 = vsel %vm455, %v1875, 0.0
      %1877 = vadd.xlane.f32.xlu0 %v1876
      %v1878 = vpop.xlane.xlu0 %1877
      %v1879 = vrcp.pop %v1878
      %v1880 = vmul.f32 %v1875, %v1879
      %1881 = vrot.lane.b32.xlu0 %v1455, 48
      %v1882 = vpop.permute.xlu0 %1881
      %v1884 = vsel %vm469, %v1880, 0
      %v1886 = vsel %vm473, %v1882, 0
      %1888 = vmatprep.subr.mxu0 0.0
      %1889 = vmatpush1.msra.mxu0 %v1886
      %1890 = vmatprep.subr.mxu0 0.0
      %1891 = vmatpush1.msra.mxu0 0.0
      %1892 = vmatprep.subr.mxu0 0.0
      %1893 = vmatpush1.msra.mxu0 0.0
      %1894 = vmatprep.subr.mxu0 0.0
      %1895 = vmatpush1.msra.mxu0 0.0
      %1896 = vmatprep.subr.mxu0 0.0
      %1897 = vmatpush1.msra.mxu0 0.0
      %1898 = vmatprep.subr.mxu0 0.0
      %1899 = vmatpush1.msra.mxu0 0.0
      %1900 = vmatprep.subr.mxu0 0.0
      %1901 = vmatpush1.msra.mxu0 0.0
      %1902 = vmatprep.subr.mxu0 0.0
      %1903 = vmatpush1.msra.mxu0 0.0
      %1904 = vmatprep.subr.mxu0 0.0
      %1905 = vmatpush1.msra.mxu0 0.0
      %1906 = vmatprep.subr.mxu0 0.0
      %1907 = vmatpush1.msra.mxu0 0.0
      %1908 = vmatprep.subr.mxu0 0.0
      %1909 = vmatpush1.msra.mxu0 0.0
      %1910 = vmatprep.subr.mxu0 0.0
      %1911 = vmatpush1.msra.mxu0 0.0
      %1912 = vmatprep.subr.mxu0 0.0
      %1913 = vmatpush1.msra.mxu0 0.0
      %1914 = vmatprep.subr.mxu0 0.0
      %1915 = vmatpush1.msra.mxu0 0.0
      %1916 = vmatprep.subr.mxu0 0.0
      %1917 = vmatpush1.msra.mxu0 0.0
      %1918 = vmatprep.subr.mxu0 0.0
      %1919 = vmatpush1.msra.mxu0 0.0
      %1920 = vmatprep.subr.mxu0 0.0
      %1921 = vmatpush1.msra.mxu0 0.0
      %1922 = vmatprep.subr.mxu0 0.0
      %1923 = vmatpush1.msra.mxu0 0.0
      %1924 = vmatprep.subr.mxu0 0.0
      %1925 = vmatpush1.msra.mxu0 0.0
      %1926 = vmatprep.subr.mxu0 0.0
      %1927 = vmatpush1.msra.mxu0 0.0
      %1928 = vmatprep.subr.mxu0 0.0
      %1929 = vmatpush1.msra.mxu0 0.0
      %1930 = vmatprep.subr.mxu0 0.0
      %1931 = vmatpush1.msra.mxu0 0.0
      %1932 = vmatprep.subr.mxu0 0.0
      %1933 = vmatpush1.msra.mxu0 0.0
      %1934 = vmatprep.subr.mxu0 0.0
      %1935 = vmatpush1.msra.mxu0 0.0
      %1936 = vmatprep.subr.mxu0 0.0
      %1937 = vmatpush1.msra.mxu0 0.0
      %1938 = vmatprep.subr.mxu0 0.0
      %1939 = vmatpush1.msra.mxu0 0.0
      %1940 = vmatprep.subr.mxu0 0.0
      %1941 = vmatpush1.msra.mxu0 0.0
      %1942 = vmatprep.subr.mxu0 0.0
      %1943 = vmatpush1.msra.mxu0 0.0
      %1944 = vmatprep.subr.mxu0 0.0
      %1945 = vmatpush1.msra.mxu0 0.0
      %1946 = vmatprep.subr.mxu0 0.0
      %1947 = vmatpush1.msra.mxu0 0.0
      %1948 = vmatprep.subr.mxu0 0.0
      %1949 = vmatpush1.msra.mxu0 0.0
      %1950 = vmatprep.subr.mxu0 0.0
      %1951 = vmatpush1.msra.mxu0 0.0
      %1952 = vmatprep.mubr.f32.mxu0 0.0
      %1953 = vmatmul.mubr.f32.gmra.mrb[0].mxu0 %v1884
      %v1954 = vpop.f32.mrb[0].mxu0
      %v1955 = vadd.f32 0.0, %v1954
      %v1956 = vpop.f32.mrb[0].mxu0
      %1957 = vdwg.mxu0
      %1958 = vrot.lane.b32.xlu0 %v1455, 104
      %v1959 = vpop.permute.xlu0 %1958
      %1960 = vrot.lane.b32.xlu0 %v1455, 72
      %v1961 = vpop.permute.xlu0 %1960
      %v1962 = vsel %vm379, %v1959, 0
      %v1964 = vsel %vm379, %v1961, 0
      %1966 = vmatprep.subr.mxu0 0.0
      %1967 = vmatpush1.xpose.msra.mxu0 %v1964
      %1968 = vmatprep.subr.mxu0 0.0
      %1969 = vmatpush1.xpose.msra.mxu0 0.0
      %1970 = vmatprep.subr.mxu0 0.0
      %1971 = vmatpush1.xpose.msra.mxu0 0.0
      %1972 = vmatprep.subr.mxu0 0.0
      %1973 = vmatpush1.xpose.msra.mxu0 0.0
      %1974 = vmatprep.subr.mxu0 0.0
      %1975 = vmatpush1.xpose.msra.mxu0 0.0
      %1976 = vmatprep.subr.mxu0 0.0
      %1977 = vmatpush1.xpose.msra.mxu0 0.0
      %1978 = vmatprep.subr.mxu0 0.0
      %1979 = vmatpush1.xpose.msra.mxu0 0.0
      %1980 = vmatprep.subr.mxu0 0.0
      %1981 = vmatpush1.xpose.msra.mxu0 0.0
      %1982 = vmatprep.subr.mxu0 0.0
      %1983 = vmatpush1.xpose.msra.mxu0 0.0
      %1984 = vmatprep.subr.mxu0 0.0
      %1985 = vmatpush1.xpose.msra.mxu0 0.0
      %1986 = vmatprep.subr.mxu0 0.0
      %1987 = vmatpush1.xpose.msra.mxu0 0.0
      %1988 = vmatprep.subr.mxu0 0.0
      %1989 = vmatpush1.xpose.msra.mxu0 0.0
      %1990 = vmatprep.subr.mxu0 0.0
      %1991 = vmatpush1.xpose.msra.mxu0 0.0
      %1992 = vmatprep.subr.mxu0 0.0
      %1993 = vmatpush1.xpose.msra.mxu0 0.0
      %1994 = vmatprep.subr.mxu0 0.0
      %1995 = vmatpush1.xpose.msra.mxu0 0.0
      %1996 = vmatprep.subr.mxu0 0.0
      %1997 = vmatpush1.xpose.msra.mxu0 0.0
      %1998 = vmatprep.subr.mxu0 0.0
      %1999 = vmatpush1.xpose.msra.mxu0 0.0
      %2000 = vmatprep.subr.mxu0 0.0
      %2001 = vmatpush1.xpose.msra.mxu0 0.0
      %2002 = vmatprep.subr.mxu0 0.0
      %2003 = vmatpush1.xpose.msra.mxu0 0.0
      %2004 = vmatprep.subr.mxu0 0.0
      %2005 = vmatpush1.xpose.msra.mxu0 0.0
      %2006 = vmatprep.subr.mxu0 0.0
      %2007 = vmatpush1.xpose.msra.mxu0 0.0
      %2008 = vmatprep.subr.mxu0 0.0
      %2009 = vmatpush1.xpose.msra.mxu0 0.0
      %2010 = vmatprep.subr.mxu0 0.0
      %2011 = vmatpush1.xpose.msra.mxu0 0.0
      %2012 = vmatprep.subr.mxu0 0.0
      %2013 = vmatpush1.xpose.msra.mxu0 0.0
      %2014 = vmatprep.subr.mxu0 0.0
      %2015 = vmatpush1.xpose.msra.mxu0 0.0
      %2016 = vmatprep.subr.mxu0 0.0
      %2017 = vmatpush1.xpose.msra.mxu0 0.0
      %2018 = vmatprep.subr.mxu0 0.0
      %2019 = vmatpush1.xpose.msra.mxu0 0.0
      %2020 = vmatprep.subr.mxu0 0.0
      %2021 = vmatpush1.xpose.msra.mxu0 0.0
      %2022 = vmatprep.subr.mxu0 0.0
      %2023 = vmatpush1.xpose.msra.mxu0 0.0
      %2024 = vmatprep.subr.mxu0 0.0
      %2025 = vmatpush1.xpose.msra.mxu0 0.0
      %2026 = vmatprep.subr.mxu0 0.0
      %2027 = vmatpush1.xpose.msra.mxu0 0.0
      %2028 = vmatprep.subr.mxu0 0.0
      %2029 = vmatpush1.xpose.msra.mxu0 0.0
      %2030 = vmatprep.mubr.f32.mxu0 0.0
      %2031 = vmatmul.mubr.f32.gmra.mrb[0].mxu0 %v1962
      %v2032 = vpop.f32.mrb[0].mxu0
      %v2033 = vadd.f32 0.0, %v2032
      %v2034 = vpop.f32.mrb[0].mxu0
      %2035 = vdwg.mxu0
      %v2036 = vmul.f32 %v2033, 0.35355338
      %v2037 = vsel %vm455, %v2036, -inf
      %2038 = vmax.xlane.f32.xlu0 %v2037
      %v2039 = vpop.xlane.xlu0 %2038
      %v2040 = vsub.f32 %v2036, %v2039
      %v2041 = vmul.f32 %v2040, 1.442695
      %v2042 = vpow.pop %v2041
      %v2043 = vsel %vm455, %v2042, 0.0
      %2044 = vadd.xlane.f32.xlu0 %v2043
      %v2045 = vpop.xlane.xlu0 %2044
      %v2046 = vrcp.pop %v2045
      %v2047 = vmul.f32 %v2042, %v2046
      %2048 = vrot.lane.b32.xlu0 %v1455, 40
      %v2049 = vpop.permute.xlu0 %2048
      %v2051 = vsel %vm469, %v2047, 0
      %v2053 = vsel %vm473, %v2049, 0
      %2055 = vmatprep.subr.mxu0 0.0
      %2056 = vmatpush1.msra.mxu0 %v2053
      %2057 = vmatprep.subr.mxu0 0.0
      %2058 = vmatpush1.msra.mxu0 0.0
      %2059 = vmatprep.subr.mxu0 0.0
      %2060 = vmatpush1.msra.mxu0 0.0
      %2061 = vmatprep.subr.mxu0 0.0
      %2062 = vmatpush1.msra.mxu0 0.0
      %2063 = vmatprep.subr.mxu0 0.0
      %2064 = vmatpush1.msra.mxu0 0.0
      %2065 = vmatprep.subr.mxu0 0.0
      %2066 = vmatpush1.msra.mxu0 0.0
      %2067 = vmatprep.subr.mxu0 0.0
      %2068 = vmatpush1.msra.mxu0 0.0
      %2069 = vmatprep.subr.mxu0 0.0
      %2070 = vmatpush1.msra.mxu0 0.0
      %2071 = vmatprep.subr.mxu0 0.0
      %2072 = vmatpush1.msra.mxu0 0.0
      %2073 = vmatprep.subr.mxu0 0.0
      %2074 = vmatpush1.msra.mxu0 0.0
      %2075 = vmatprep.subr.mxu0 0.0
      %2076 = vmatpush1.msra.mxu0 0.0
      %2077 = vmatprep.subr.mxu0 0.0
      %2078 = vmatpush1.msra.mxu0 0.0
      %2079 = vmatprep.subr.mxu0 0.0
      %2080 = vmatpush1.msra.mxu0 0.0
      %2081 = vmatprep.subr.mxu0 0.0
      %2082 = vmatpush1.msra.mxu0 0.0
      %2083 = vmatprep.subr.mxu0 0.0
      %2084 = vmatpush1.msra.mxu0 0.0
      %2085 = vmatprep.subr.mxu0 0.0
      %2086 = vmatpush1.msra.mxu0 0.0
      %2087 = vmatprep.subr.mxu0 0.0
      %2088 = vmatpush1.msra.mxu0 0.0
      %2089 = vmatprep.subr.mxu0 0.0
      %2090 = vmatpush1.msra.mxu0 0.0
      %2091 = vmatprep.subr.mxu0 0.0
      %2092 = vmatpush1.msra.mxu0 0.0
      %2093 = vmatprep.subr.mxu0 0.0
      %2094 = vmatpush1.msra.mxu0 0.0
      %2095 = vmatprep.subr.mxu0 0.0
      %2096 = vmatpush1.msra.mxu0 0.0
      %2097 = vmatprep.subr.mxu0 0.0
      %2098 = vmatpush1.msra.mxu0 0.0
      %2099 = vmatprep.subr.mxu0 0.0
      %2100 = vmatpush1.msra.mxu0 0.0
      %2101 = vmatprep.subr.mxu0 0.0
      %2102 = vmatpush1.msra.mxu0 0.0
      %2103 = vmatprep.subr.mxu0 0.0
      %2104 = vmatpush1.msra.mxu0 0.0
      %2105 = vmatprep.subr.mxu0 0.0
      %2106 = vmatpush1.msra.mxu0 0.0
      %2107 = vmatprep.subr.mxu0 0.0
      %2108 = vmatpush1.msra.mxu0 0.0
      %2109 = vmatprep.subr.mxu0 0.0
      %2110 = vmatpush1.msra.mxu0 0.0
      %2111 = vmatprep.subr.mxu0 0.0
      %2112 = vmatpush1.msra.mxu0 0.0
      %2113 = vmatprep.subr.mxu0 0.0
      %2114 = vmatpush1.msra.mxu0 0.0
      %2115 = vmatprep.subr.mxu0 0.0
      %2116 = vmatpush1.msra.mxu0 0.0
      %2117 = vmatprep.subr.mxu0 0.0
      %2118 = vmatpush1.msra.mxu0 0.0
      %2119 = vmatprep.mubr.f32.mxu0 0.0
      %2120 = vmatmul.mubr.f32.gmra.mrb[0].mxu0 %v2051
      %v2121 = vpop.f32.mrb[0].mxu0
      %v2122 = vadd.f32 0.0, %v2121
      %v2123 = vpop.f32.mrb[0].mxu0
      %2124 = vdwg.mxu0
      %2126 = vrot.lane.b32.xlu0 %v1788, 8
      %v2127 = vpop.permute.xlu0 %2126
      %2130 = vrot.lane.b32.xlu0 %v1955, 16
      %v2131 = vpop.permute.xlu0 %2130
      %2134 = vrot.lane.b32.xlu0 %v2122, 24
      %v2135 = vpop.permute.xlu0 %2134
      %v2137 = vsel %vm379, %v1621, %v2127
      %v2138 = vsel %vm1060, %v2137, %v2131
      %v2139 = vsel %vm1062, %v2138, %v2135
      %v2140 = vlaneseq
      %v2141 = vshrl.u32 %v2140, 7
      %v2142 = vsub.s32 0, %v2141
      %v2143 = vrot.slane %v1341, %v2142
      %v2145 = vsel %vm302, %v2139, 0
      %2147 = vmatprep.subr.mxu0 0.0
      %2148 = vmatpush1.msra.mxu0 %v1337
      %2149 = vmatprep.subr.mxu0 0.0
      %2150 = vmatpush1.msra.mxu0 %v1338
      %2151 = vmatprep.subr.mxu0 0.0
      %2152 = vmatpush1.msra.mxu0 %v1339
      %2153 = vmatprep.subr.mxu0 0.0
      %2154 = vmatpush1.msra.mxu0 %v1340
      %2155 = vmatprep.subr.mxu0 0.0
      %2156 = vmatpush1.msra.mxu0 0.0
      %2157 = vmatprep.subr.mxu0 0.0
      %2158 = vmatpush1.msra.mxu0 0.0
      %2159 = vmatprep.subr.mxu0 0.0
      %2160 = vmatpush1.msra.mxu0 0.0
      %2161 = vmatprep.subr.mxu0 0.0
      %2162 = vmatpush1.msra.mxu0 0.0
      %2163 = vmatprep.subr.mxu0 0.0
      %2164 = vmatpush1.msra.mxu0 0.0
      %2165 = vmatprep.subr.mxu0 0.0
      %2166 = vmatpush1.msra.mxu0 0.0
      %2167 = vmatprep.subr.mxu0 0.0
      %2168 = vmatpush1.msra.mxu0 0.0
      %2169 = vmatprep.subr.mxu0 0.0
      %2170 = vmatpush1.msra.mxu0 0.0
      %2171 = vmatprep.subr.mxu0 0.0
      %2172 = vmatpush1.msra.mxu0 0.0
      %2173 = vmatprep.subr.mxu0 0.0
      %2174 = vmatpush1.msra.mxu0 0.0
      %2175 = vmatprep.subr.mxu0 0.0
      %2176 = vmatpush1.msra.mxu0 0.0
      %2177 = vmatprep.subr.mxu0 0.0
      %2178 = vmatpush1.msra.mxu0 0.0
      %2179 = vmatprep.subr.mxu0 0.0
      %2180 = vmatpush1.msra.mxu0 0.0
      %2181 = vmatprep.subr.mxu0 0.0
      %2182 = vmatpush1.msra.mxu0 0.0
      %2183 = vmatprep.subr.mxu0 0.0
      %2184 = vmatpush1.msra.mxu0 0.0
      %2185 = vmatprep.subr.mxu0 0.0
      %2186 = vmatpush1.msra.mxu0 0.0
      %2187 = vmatprep.subr.mxu0 0.0
      %2188 = vmatpush1.msra.mxu0 0.0
      %2189 = vmatprep.subr.mxu0 0.0
      %2190 = vmatpush1.msra.mxu0 0.0
      %2191 = vmatprep.subr.mxu0 0.0
      %2192 = vmatpush1.msra.mxu0 0.0
      %2193 = vmatprep.subr.mxu0 0.0
      %2194 = vmatpush1.msra.mxu0 0.0
      %2195 = vmatprep.subr.mxu0 0.0
      %2196 = vmatpush1.msra.mxu0 0.0
      %2197 = vmatprep.subr.mxu0 0.0
      %2198 = vmatpush1.msra.mxu0 0.0
      %2199 = vmatprep.subr.mxu0 0.0
      %2200 = vmatpush1.msra.mxu0 0.0
      %2201 = vmatprep.subr.mxu0 0.0
      %2202 = vmatpush1.msra.mxu0 0.0
      %2203 = vmatprep.subr.mxu0 0.0
      %2204 = vmatpush1.msra.mxu0 0.0
      %2205 = vmatprep.subr.mxu0 0.0
      %2206 = vmatpush1.msra.mxu0 0.0
      %2207 = vmatprep.subr.mxu0 0.0
      %2208 = vmatpush1.msra.mxu0 0.0
      %2209 = vmatprep.subr.mxu0 0.0
      %2210 = vmatpush1.msra.mxu0 0.0
      %2211 = vmatprep.mubr.f32.mxu0 0.0
      %2212 = vmatmul.mubr.f32.gmra.mrb[0].mxu0 %v2145
      %v2213 = vpop.f32.mrb[0].mxu0
      %v2214 = vadd.f32 %v2143, %v2213
      %v2215 = vpop.f32.mrb[0].mxu0
      %2216 = vdwg.mxu0
      %v2217 = vadd.f32 %v1329, %v2214
      %v2218 = vsel %vm273, %v2217, 0.0
      %2219 = vadd.xlane.f32.xlu0 %v2218
      %v2220 = vpop.xlane.xlu0 %2219
      %v2221 = vmul.f32 %v2220, %v277
      %v2222 = vsub.f32 %v2217, %v2221
      %v2223 = vmul.f32 %v2222, %v2222
      %v2224 = vsel %vm273, %v2223, 0.0
      %2225 = vadd.xlane.f32.xlu0 %v2224
      %v2226 = vpop.xlane.xlu0 %2225
      %v2227 = vmul.f32 %v2226, %v277
      %v2228 = vadd.f32 %v2227, 1e-05
      %v2229 = vrsqrt.pop %v2228
      %v2230 = vmul.f32 %v2222, %v2229
      %v2231 = vlaneseq
      %v2232 = vshrl.u32 %v2231, 7
      %v2233 = vsub.s32 0, %v2232
      %v2234 = vrot.slane %v1342, %v2233
      %v2235 = vmul.f32 %v2230, %v2234
      %v2236 = vlaneseq
      %v2237 = vshrl.u32 %v2236, 7
      %v2238 = vsub.s32 0, %v2237
      %v2239 = vrot.slane %v1343, %v2238
      %v2240 = vadd.f32 %v2235, %v2239
      %v2241 = vlaneseq
      %v2242 = vshrl.u32 %v2241, 7
      %v2243 = vsub.s32 0, %v2242
      %v2244 = vrot.slane %v1348, %v2243
      %v2246 = vsel %vm302, %v2240, 0
      %2248 = vmatprep.subr.mxu0 0.0
      %2249 = vmatpush1.msra.mxu0 %v1344
      %2250 = vmatprep.subr.mxu0 0.0
      %2251 = vmatpush1.msra.mxu0 %v1345
      %2252 = vmatprep.subr.mxu0 0.0
      %2253 = vmatpush1.msra.mxu0 %v1346
      %2254 = vmatprep.subr.mxu0 0.0
      %2255 = vmatpush1.msra.mxu0 %v1347
      %2256 = vmatprep.subr.mxu0 0.0
      %2257 = vmatpush1.msra.mxu0 0.0
      %2258 = vmatprep.subr.mxu0 0.0
      %2259 = vmatpush1.msra.mxu0 0.0
      %2260 = vmatprep.subr.mxu0 0.0
      %2261 = vmatpush1.msra.mxu0 0.0
      %2262 = vmatprep.subr.mxu0 0.0
      %2263 = vmatpush1.msra.mxu0 0.0
      %2264 = vmatprep.subr.mxu0 0.0
      %2265 = vmatpush1.msra.mxu0 0.0
      %2266 = vmatprep.subr.mxu0 0.0
      %2267 = vmatpush1.msra.mxu0 0.0
      %2268 = vmatprep.subr.mxu0 0.0
      %2269 = vmatpush1.msra.mxu0 0.0
      %2270 = vmatprep.subr.mxu0 0.0
      %2271 = vmatpush1.msra.mxu0 0.0
      %2272 = vmatprep.subr.mxu0 0.0
      %2273 = vmatpush1.msra.mxu0 0.0
      %2274 = vmatprep.subr.mxu0 0.0
      %2275 = vmatpush1.msra.mxu0 0.0
      %2276 = vmatprep.subr.mxu0 0.0
      %2277 = vmatpush1.msra.mxu0 0.0
      %2278 = vmatprep.subr.mxu0 0.0
      %2279 = vmatpush1.msra.mxu0 0.0
      %2280 = vmatprep.subr.mxu0 0.0
      %2281 = vmatpush1.msra.mxu0 0.0
      %2282 = vmatprep.subr.mxu0 0.0
      %2283 = vmatpush1.msra.mxu0 0.0
      %2284 = vmatprep.subr.mxu0 0.0
      %2285 = vmatpush1.msra.mxu0 0.0
      %2286 = vmatprep.subr.mxu0 0.0
      %2287 = vmatpush1.msra.mxu0 0.0
      %2288 = vmatprep.subr.mxu0 0.0
      %2289 = vmatpush1.msra.mxu0 0.0
      %2290 = vmatprep.subr.mxu0 0.0
      %2291 = vmatpush1.msra.mxu0 0.0
      %2292 = vmatprep.subr.mxu0 0.0
      %2293 = vmatpush1.msra.mxu0 0.0
      %2294 = vmatprep.subr.mxu0 0.0
      %2295 = vmatpush1.msra.mxu0 0.0
      %2296 = vmatprep.subr.mxu0 0.0
      %2297 = vmatpush1.msra.mxu0 0.0
      %2298 = vmatprep.subr.mxu0 0.0
      %2299 = vmatpush1.msra.mxu0 0.0
      %2300 = vmatprep.subr.mxu0 0.0
      %2301 = vmatpush1.msra.mxu0 0.0
      %2302 = vmatprep.subr.mxu0 0.0
      %2303 = vmatpush1.msra.mxu0 0.0
      %2304 = vmatprep.subr.mxu0 0.0
      %2305 = vmatpush1.msra.mxu0 0.0
      %2306 = vmatprep.subr.mxu0 0.0
      %2307 = vmatpush1.msra.mxu0 0.0
      %2308 = vmatprep.subr.mxu0 0.0
      %2309 = vmatpush1.msra.mxu0 0.0
      %2310 = vmatprep.subr.mxu0 0.0
      %2311 = vmatpush1.msra.mxu0 0.0
      %2312 = vmatprep.mubr.f32.mxu0 0.0
      %2313 = vmatmul.mubr.f32.gmra.mrb[0].mxu0 %v2246
      %v2314 = vpop.f32.mrb[0].mxu0
      %v2315 = vadd.f32 %v2244, %v2314
      %v2316 = vpop.f32.mrb[0].mxu0
      %2317 = vdwg.mxu0
      %v2318 = vmul.f32 %v2315, %v2315
      %v2319 = vmul.f32 %v2315, %v2318
      %v2320 = vmul.f32 %v2319, 0.044715
      %v2321 = vadd.f32 %v2315, %v2320
      %v2322 = vmul.f32 %v2321, 0.7978846
      %v2323 = vtanh.pop %v2322
      %v2324 = vadd.f32 %v2323, 1.0
      %v2325 = vmul.f32 %v2324, 0.5
      %v2326 = vmul.f32 %v2315, %v2325
      %v2328 = vsel %vm171, %v2326, 0
      %2330 = vmatprep.subr.mxu0 0.0
      %2331 = vmatpush1.msra.mxu0 %v1349
      %2332 = vmatprep.subr.mxu0 0.0
      %2333 = vmatpush1.msra.mxu0 %v1350
      %2334 = vmatprep.subr.mxu0 0.0
      %2335 = vmatpush1.msra.mxu0 %v1351
      %2336 = vmatprep.subr.mxu0 0.0
      %2337 = vmatpush1.msra.mxu0 %v1352
      %2338 = vmatprep.subr.mxu0 0.0
      %2339 = vmatpush1.msra.mxu0 %v1353
      %2340 = vmatprep.subr.mxu0 0.0
      %2341 = vmatpush1.msra.mxu0 %v1354
      %2342 = vmatprep.subr.mxu0 0.0
      %2343 = vmatpush1.msra.mxu0 %v1355
      %2344 = vmatprep.subr.mxu0 0.0
      %2345 = vmatpush1.msra.mxu0 %v1356
      %2346 = vmatprep.subr.mxu0 0.0
      %2347 = vmatpush1.msra.mxu0 0.0
      %2348 = vmatprep.subr.mxu0 0.0
      %2349 = vmatpush1.msra.mxu0 0.0
      %2350 = vmatprep.subr.mxu0 0.0
      %2351 = vmatpush1.msra.mxu0 0.0
      %2352 = vmatprep.subr.mxu0 0.0
      %2353 = vmatpush1.msra.mxu0 0.0
      %2354 = vmatprep.subr.mxu0 0.0
      %2355 = vmatpush1.msra.mxu0 0.0
      %2356 = vmatprep.subr.mxu0 0.0
      %2357 = vmatpush1.msra.mxu0 0.0
      %2358 = vmatprep.subr.mxu0 0.0
      %2359 = vmatpush1.msra.mxu0 0.0
      %2360 = vmatprep.subr.mxu0 0.0
      %2361 = vmatpush1.msra.mxu0 0.0
      %2362 = vmatprep.subr.mxu0 0.0
      %2363 = vmatpush1.msra.mxu0 0.0
      %2364 = vmatprep.subr.mxu0 0.0
      %2365 = vmatpush1.msra.mxu0 0.0
      %2366 = vmatprep.subr.mxu0 0.0
      %2367 = vmatpush1.msra.mxu0 0.0
      %2368 = vmatprep.subr.mxu0 0.0
      %2369 = vmatpush1.msra.mxu0 0.0
      %2370 = vmatprep.subr.mxu0 0.0
      %2371 = vmatpush1.msra.mxu0 0.0
      %2372 = vmatprep.subr.mxu0 0.0
      %2373 = vmatpush1.msra.mxu0 0.0
      %2374 = vmatprep.subr.mxu0 0.0
      %2375 = vmatpush1.msra.mxu0 0.0
      %2376 = vmatprep.subr.mxu0 0.0
      %2377 = vmatpush1.msra.mxu0 0.0
      %2378 = vmatprep.subr.mxu0 0.0
      %2379 = vmatpush1.msra.mxu0 0.0
      %2380 = vmatprep.subr.mxu0 0.0
      %2381 = vmatpush1.msra.mxu0 0.0
      %2382 = vmatprep.subr.mxu0 0.0
      %2383 = vmatpush1.msra.mxu0 0.0
      %2384 = vmatprep.subr.mxu0 0.0
      %2385 = vmatpush1.msra.mxu0 0.0
      %2386 = vmatprep.subr.mxu0 0.0
      %2387 = vmatpush1.msra.mxu0 0.0
      %2388 = vmatprep.subr.mxu0 0.0
      %2389 = vmatpush1.msra.mxu0 0.0
      %2390 = vmatprep.subr.mxu0 0.0
      %2391 = vmatpush1.msra.mxu0 0.0
      %2392 = vmatprep.subr.mxu0 0.0
      %2393 = vmatpush1.msra.mxu0 0.0
      %2394 = vmatprep.mubr.f32.mxu0 0.0
      %2395 = vmatmul.mubr.f32.gmra.mrb[0].mxu0 %v2328
      %v2396 = vpop.f32.mrb[0].mxu0
      %v2397 = vadd.f32 0.0, %v2396
      %v2398 = vpop.f32.mrb[0].mxu0
      %2399 = vdwg.mxu0
      %v2400 = vadd.f32 %v2217, %v2397
      %v2401 = vlaneseq
      %v2402 = vshrl.u32 %v2401, 7
      %v2403 = vsub.s32 0, %v2402
      %v2404 = vrot.slane %v1357, %v2403
      %v2405 = vadd.f32 %v2400, %v2404
      %v2406 = vsel %vm273, %v2405, 0.0
      %2407 = vadd.xlane.f32.xlu0 %v2406
      %v2408 = vpop.xlane.xlu0 %2407
      %v2409 = vmul.f32 %v2408, %v277
      %v2410 = vsub.f32 %v2405, %v2409
      %v2411 = vmul.f32 %v2410, %v2410
      %v2412 = vsel %vm273, %v2411, 0.0
      %2413 = vadd.xlane.f32.xlu0 %v2412
      %v2414 = vpop.xlane.xlu0 %2413
      %v2415 = vmul.f32 %v2414, %v277
      %v2416 = vadd.f32 %v2415, 1e-05
      %v2417 = vrsqrt.pop %v2416
      %v2418 = vmul.f32 %v2410, %v2417
      %v2419 = vlaneseq
      %v2420 = vshrl.u32 %v2419, 7
      %v2421 = vsub.s32 0, %v2420
      %v2422 = vrot.slane %v167, %v2421
      %v2423 = vmul.f32 %v2418, %v2422
      %v2424 = vlaneseq
      %v2425 = vshrl.u32 %v2424, 7
      %v2426 = vsub.s32 0, %v2425
      %v2427 = vrot.slane %v168, %v2426
      %v2428 = vadd.f32 %v2423, %v2427
      %2429 = vst.msk [vmem:[%s141] sm:$0x1f] %vm273, %v2428
      %p2430 = scmp.lt.s32.totalorder %s13, 1
      %s2431 = scalar_select %p2430, %s13, 1
      %s2432 = smul.addr %s2431, 8
      %s2433 = scalar_lea.vmem %s2, %s2432
      // Predicated region
      $region29: #{vit_transformer_maria_forward.2} parent=27 // pred_check
        %p2434 = pneg %p78
      $region30: #{vit_transformer_maria_forward.2} parent=27 // pred_check_branch
        %2436 = sbr.rel (%p2434) target = $region32
      $region31: #{vit_transformer_maria_forward.2} parent=27 // pred_region
        _
      $region32: #{vit_transformer_maria_forward.2} parent=27 // pred_fallthru
        _
    $region28: #{vit_transformer_maria_forward.2} parent=5 // pred_fallthru
      _
    %p2437 = scmp.le.s32.totalorder 2, %s8
    // Predicated region
    $region33: #{vit_transformer_maria_forward.2} parent=5 // pred_check
      %p2438 = pneg %p2437
    $region34: #{vit_transformer_maria_forward.2} parent=5 // pred_check_branch
      %2440 = sbr.rel (%p2438) target = $region36
    $region35: #{vit_transformer_maria_forward.2} parent=5 // pred_region
      %s2441 = ssub.s32 %s8, 2
      // Predicated region
      $region37: #{vit_transformer_maria_forward.2} parent=35 // pred_check
        %p2442 = pneg %p84
      $region38: #{vit_transformer_maria_forward.2} parent=35 // pred_check_branch
        %2444 = sbr.rel (%p2442) target = $region40
      $region39: #{vit_transformer_maria_forward.2} parent=35 // pred_region
        %p2445 = scmp.lt.s32.totalorder %s14, 1
        %s2446 = scalar_select %p2445, %s14, 1
        %s2447 = smul.addr %s2446, 8
        %s2448 = scalar_lea.vmem %s2, %s2447
      $region40: #{vit_transformer_maria_forward.2} parent=35 // pred_fallthru
        _
    $region36: #{vit_transformer_maria_forward.2} parent=5 // pred_fallthru
      _
  $region6: #{vit_transformer_maria_forward.2} parent=0 // loop_footer
    %s12 = sadd.s32 1, %s8
  $region7: #{vit_transformer_maria_forward.2} parent=0 // loop_footer_branch
    %7 = sbr.rel target = $region3
  $region8: #{vit_transformer_maria_forward.2} parent=0 // loop_exit
    _

// kernel: vit_transformer_maria_forward.3
$region0: #{vit_transformer_maria_forward.3}
  #allocation0 [shape = 'u32[]', space=smem, size = 0x4, offset = 0x4, fixed_abs, tag = 'smem constant byte address 0x4 - core index']
  #allocation1 [shape = 'u32[144,128]{1,0:T(1,128)}', space=vmem, size = 0x12000, scoped, tag = 'internal scratch']
  %s0 = inlined_call_operand.vmem [shape: f32[2,5,32], index: 0, kind: input, shape index: {}]
  %s1 = inlined_call_operand.vmem [shape: f32[2,5,32], index: 1, kind: input, shape index: {}]
  %s2 = inlined_call_operand.vmem [shape: f32[2,1,5], index: 2, kind: input, shape index: {}]
  %s3 = inlined_call_operand.vmem [shape: f32[768,128], index: 3, kind: input, shape index: {}]
  %s4 = inlined_call_operand.vmem [shape: f32[2,5,1,128], index: 4, kind: output, shape index: {}]
  %s5 = sld [smem:[#allocation0]]
  $region49: #{vit_transformer_maria_forward.3} parent=0
    _
  %s7 = ssub.s32 1, %s5
  %s8 = scalar_select 0, %s7, %s5
  loop: start=0, step=1, limit=12
  $region2: #{vit_transformer_maria_forward.3} parent=0 // loop_pre_header
    _
  $region3: #{vit_transformer_maria_forward.3} parent=0 // loop_header
    %s10 = sphi 0, %s14
    %p11 = scmp.ge.s32.totalorder %s10, 12
    %s17 = sphi 0, %s29
    %s18 = sphi 0, %s25
    %s19 = sphi 0, %s17
    %s20 = sphi 0, %s18
    %s21 = sphi 0, %s19
    %s22 = sphi 0, %s20
    %s32 = sphi 0, %s34
    %s35 = sphi 0, %s32
    %s36 = sphi 0, %s35
    %s52 = sphi 0, %s36
    %s58 = sphi 0, %s60
    %s61 = sphi 0, %s58
    %s62 = sphi 0, %s61
    %s78 = sphi 0, %s62
    %s84 = sphi 0, %s86
    %s87 = sphi 0, %s84
    %s88 = sphi 0, %s87
    %s104 = sphi 0, %s88
    %s108 = sphi 0, %s108
    %s110 = sphi 0, %s108
    %s111 = sphi 0, %s110
    %s125 = sphi 0, %s111
    %s133 = sphi 0, %s135
    %s136 = sphi 0, %s133
    %s137 = sphi 0, %s136
    %s153 = sphi 0, %s137
  $region4: #{vit_transformer_maria_forward.3} parent=0 // loop_header_branch
    %13 = sbr.rel (%p11) target = $region8
  $region5: #{vit_transformer_maria_forward.3} parent=0 // loop_body
    %s15 = ssub.s32 %s10, 1
    %s16 = ssub.s32 %s10, 2
    %s23 = sadd.s32 1, %s18
    %p24 = scmp.ge.s32.totalorder %s23, 5
    %s25 = scalar_select %p24, 0, %s23
    %s26 = sadd.s32 1, %s17
    %s27 = scalar_select %p24, %s26, %s17
    %p28 = scmp.ge.s32.totalorder %s27, 2
    %s29 = scalar_select %p28, 0, %s27
    %s30 = ssub.s32 %s17, %s29
    %p31 = scmp.eq.s32.totalorder %s30, 0
    %s33 = sadd.s32 %s32, 1
    %s34 = scalar_select %p31, %s32, %s33
    %p37 = pneg %p31
    %p38 = scmp.eq.s32.totalorder %s10, 9
    %p39 = por %p37, %p38
    %p40 = scmp.ne.s32.totalorder %s32, %s35
    %p41 = scmp.eq.s32.totalorder %s10, 0
    %p42 = por %p40, %p41
    %p43 = scmp.ne.s32.totalorder %s32, %s35
    %p44 = scmp.eq.s32.totalorder %s15, 9
    %p45 = por %p43, %p44
    %p46 = scmp.ne.s32.totalorder %s35, %s36
    %p47 = scmp.eq.s32.totalorder %s15, 0
    %p48 = por %p46, %p47
    %p49 = scmp.ne.s32.totalorder %s35, %s36
    %p50 = scmp.eq.s32.totalorder %s16, 9
    %p51 = por %p49, %p50
    %p53 = scmp.ne.s32.totalorder %s36, %s52
    %p54 = scmp.eq.s32.totalorder %s16, 0
    %p55 = por %p53, %p54
    %s56 = ssub.s32 %s17, %s29
    %p57 = scmp.eq.s32.totalorder %s56, 0
    %s59 = sadd.s32 %s58, 1
    %s60 = scalar_select %p57, %s58, %s59
    %p63 = pneg %p57
    %p64 = scmp.eq.s32.totalorder %s10, 9
    %p65 = por %p63, %p64
    %p66 = scmp.ne.s32.totalorder %s58, %s61
    %p67 = scmp.eq.s32.totalorder %s10, 0
    %p68 = por %p66, %p67
    %p69 = scmp.ne.s32.totalorder %s58, %s61
    %p70 = scmp.eq.s32.totalorder %s15, 9
    %p71 = por %p69, %p70
    %p72 = scmp.ne.s32.totalorder %s61, %s62
    %p73 = scmp.eq.s32.totalorder %s15, 0
    %p74 = por %p72, %p73
    %p75 = scmp.ne.s32.totalorder %s61, %s62
    %p76 = scmp.eq.s32.totalorder %s16, 9
    %p77 = por %p75, %p76
    %p79 = scmp.ne.s32.totalorder %s62, %s78
    %p80 = scmp.eq.s32.totalorder %s16, 0
    %p81 = por %p79, %p80
    %s82 = ssub.s32 %s17, %s29
    %p83 = scmp.eq.s32.totalorder %s82, 0
    %s85 = sadd.s32 %s84, 1
    %s86 = scalar_select %p83, %s84, %s85
    %p89 = pneg %p83
    %p90 = scmp.eq.s32.totalorder %s10, 9
    %p91 = por %p89, %p90
    %p92 = scmp.ne.s32.totalorder %s84, %s87
    %p93 = scmp.eq.s32.totalorder %s10, 0
    %p94 = por %p92, %p93
    %p95 = scmp.ne.s32.totalorder %s84, %s87
    %p96 = scmp.eq.s32.totalorder %s15, 9
    %p97 = por %p95, %p96
    %p98 = scmp.ne.s32.totalorder %s87, %s88
    %p99 = scmp.eq.s32.totalorder %s15, 0
    %p100 = por %p98, %p99
    %p101 = scmp.ne.s32.totalorder %s87, %s88
    %p102 = scmp.eq.s32.totalorder %s16, 9
    %p103 = por %p101, %p102
    %p105 = scmp.ne.s32.totalorder %s88, %s104
    %p106 = scmp.eq.s32.totalorder %s16, 0
    %p107 = por %p105, %p106
    %s109 = sadd.s32 %s108, 1
    %p112 = scmp.eq.s32.totalorder %s10, 9
    %p113 = scmp.ne.s32.totalorder %s108, %s110
    %p114 = scmp.eq.s32.totalorder %s10, 0
    %p115 = por %p113, %p114
    %p116 = scmp.ne.s32.totalorder %s108, %s110
    %p117 = scmp.eq.s32.totalorder %s15, 9
    %p118 = por %p116, %p117
    %p119 = scmp.ne.s32.totalorder %s110, %s111
    %p120 = scmp.eq.s32.totalorder %s15, 0
    %p121 = por %p119, %p120
    %p122 = scmp.ne.s32.totalorder %s110, %s111
    %p123 = scmp.eq.s32.totalorder %s16, 9
    %p124 = por %p122, %p123
    %p126 = scmp.ne.s32.totalorder %s111, %s125
    %p127 = scmp.eq.s32.totalorder %s16, 0
    %p128 = por %p126, %p127
    %s129 = ssub.s32 %s17, %s29
    %s130 = ssub.s32 %s18, %s25
    %s131 = sor.u32 %s129, %s130
    %p132 = scmp.eq.s32.totalorder %s131, 0
    %s134 = sadd.s32 %s133, 1
    %s135 = scalar_select %p132, %s133, %s134
    %p138 = pneg %p132
    %p139 = scmp.eq.s32.totalorder %s10, 9
    %p140 = por %p138, %p139
    %p141 = scmp.ne.s32.totalorder %s133, %s136
    %p142 = scmp.eq.s32.totalorder %s10, 0
    %p143 = por %p141, %p142
    %p144 = scmp.ne.s32.totalorder %s133, %s136
    %p145 = scmp.eq.s32.totalorder %s15, 9
    %p146 = por %p144, %p145
    %p147 = scmp.ne.s32.totalorder %s136, %s137
    %p148 = scmp.eq.s32.totalorder %s15, 0
    %p149 = por %p147, %p148
    %p150 = scmp.ne.s32.totalorder %s136, %s137
    %p151 = scmp.eq.s32.totalorder %s16, 9
    %p152 = por %p150, %p151
    %p154 = scmp.ne.s32.totalorder %s137, %s153
    %p155 = scmp.eq.s32.totalorder %s16, 0
    %p156 = por %p154, %p155
    %p157 = scmp.le.s32.totalorder 1, %s10
    %p158 = scmp.lt.s32.totalorder %s10, 11
    %p159 = pnand %p157, %p158
    %p160 = pneg %p159
    // Predicated region
    $region9: #{vit_transformer_maria_forward.3} parent=5 // pred_check
      _
    $region10: #{vit_transformer_maria_forward.3} parent=5 // pred_check_branch
      %162 = sbr.rel (%p159) target = $region12
    $region11: #{vit_transformer_maria_forward.3} parent=5 // pred_region
      %s163 = ssub.s32 %s10, 1
      // Predicated region
      $region13: #{vit_transformer_maria_forward.3} parent=11 // pred_check
        %p164 = pneg %p121
      $region14: #{vit_transformer_maria_forward.3} parent=11 // pred_check_branch
        %166 = sbr.rel (%p164) target = $region16
      $region15: #{vit_transformer_maria_forward.3} parent=11 // pred_region
        _
      $region16: #{vit_transformer_maria_forward.3} parent=11 // pred_fallthru
        _
    $region12: #{vit_transformer_maria_forward.3} parent=5 // pred_fallthru
      _
    %p167 = scmp.lt.s32.totalorder %s10, 10
    // Predicated region
    $region17: #{vit_transformer_maria_forward.3} parent=5 // pred_check
      %p168 = pneg %p167
    $region18: #{vit_transformer_maria_forward.3} parent=5 // pred_check_branch
      %170 = sbr.rel (%p168) target = $region20
    $region19: #{vit_transformer_maria_forward.3} parent=5 // pred_region
      // Predicated region
      $region21: #{vit_transformer_maria_forward.3} parent=19 // pred_check
        %p171 = pneg %p42
      $region22: #{vit_transformer_maria_forward.3} parent=19 // pred_check_branch
        %173 = sbr.rel (%p171) target = $region24
      $region23: #{vit_transformer_maria_forward.3} parent=19 // pred_region
        %p174 = scmp.lt.s32.totalorder %s17, 1
        %s175 = scalar_select %p174, %s17, 1
        %s176 = smul.addr %s175, 8
        %s177 = scalar_lea.vmem %s0, %s176
      $region24: #{vit_transformer_maria_forward.3} parent=19 // pred_fallthru
        _
      // Predicated region
      $region25: #{vit_transformer_maria_forward.3} parent=19 // pred_check
        %p178 = pneg %p68
      $region26: #{vit_transformer_maria_forward.3} parent=19 // pred_check_branch
        %180 = sbr.rel (%p178) target = $region28
      $region27: #{vit_transformer_maria_forward.3} parent=19 // pred_region
        %p181 = scmp.lt.s32.totalorder %s17, 1
        %s182 = scalar_select %p181, %s17, 1
        %s183 = smul.addr %s182, 8
        %s184 = scalar_lea.vmem %s1, %s183
      $region28: #{vit_transformer_maria_forward.3} parent=19 // pred_fallthru
        _
      // Predicated region
      $region29: #{vit_transformer_maria_forward.3} parent=19 // pred_check
        %p185 = pneg %p94
      $region30: #{vit_transformer_maria_forward.3} parent=19 // pred_check_branch
        %187 = sbr.rel (%p185) target = $region32
      $region31: #{vit_transformer_maria_forward.3} parent=19 // pred_region
        %p188 = scmp.lt.s32.totalorder %s17, 1
        %s189 = scalar_select %p188, %s17, 1
        %s190 = scalar_lea.vmem %s2, %s189
      $region32: #{vit_transformer_maria_forward.3} parent=19 // pred_fallthru
        _
    $region20: #{vit_transformer_maria_forward.3} parent=5 // pred_fallthru
      _
    %p191 = scmp.le.s32.totalorder 1, %s10
    %p192 = scmp.lt.s32.totalorder %s10, 11
    %p193 = pnand %p191, %p192
    %p194 = pneg %p193
    // Predicated region
    $region33: #{vit_transformer_maria_forward.3} parent=5 // pred_check
      _
    $region34: #{vit_transformer_maria_forward.3} parent=5 // pred_check_branch
      %196 = sbr.rel (%p193) target = $region36
    $region35: #{vit_transformer_maria_forward.3} parent=5 // pred_region
      %s197 = ssub.s32 %s10, 1
      %p198 = scmp.lt.s32.totalorder %s19, 1
      %s199 = scalar_select %p198, %s19, 1
      %s200 = smul.addr %s199, 8
      %s201 = scalar_lea.vmem %s0, %s200
      %p202 = pneg %p48
      %p203 = pneg %p45
      %p204 = scmp.lt.s32.totalorder %s19, 1
      %s205 = scalar_select %p204, %s19, 1
      %s206 = smul.addr %s205, 8
      %s207 = scalar_lea.vmem %s1, %s206
      %p208 = pneg %p74
      %p209 = pneg %p71
      %p210 = scmp.lt.s32.totalorder %s19, 1
      %s211 = scalar_select %p210, %s19, 1
      %s212 = scalar_lea.vmem %s2, %s211
      %p213 = pneg %p100
      %p214 = pneg %p97
      %p215 = pneg %p121
      %p216 = pneg %p118
      %p217 = pneg %p149
      %p218 = pneg %p146
      %p219 = scmp.lt.s32.totalorder %s19, 1
      %s220 = scalar_select %p219, %s19, 1
      %p221 = scmp.lt.s32.totalorder %s20, 4
      %s222 = scalar_select %p221, %s20, 4
      %s223 = smul.addr %s220, 5
      %s224 = sadd.s32 %s222, %s223
      %s225 = scalar_lea.vmem %s4, %s224
      %p226 = scmp.lt.s32.totalorder %s19, 1
      %s227 = scalar_select %p226, %s19, 1
      %s228 = smul.addr %s227, 8
      %s229 = scalar_lea.vmem %s0, %s228
      %p230 = scmp.lt.s32.totalorder %s19, 1
      %s231 = scalar_select %p230, %s19, 1
      %s232 = smul.addr %s231, 8
      %s233 = scalar_lea.vmem %s1, %s232
      %p234 = scmp.lt.s32.totalorder %s19, 1
      %s235 = scalar_select %p234, %s19, 1
      %s236 = scalar_lea.vmem %s2, %s235
      %p237 = scmp.lt.s32.totalorder %s19, 1
      %s238 = scalar_select %p237, %s19, 1
      %p239 = scmp.lt.s32.totalorder %s20, 4
      %s240 = scalar_select %p239, %s20, 4
      %s241 = smul.addr %s238, 5
      %s242 = sadd.s32 %s240, %s241
      %s243 = scalar_lea.vmem %s4, %s242
      %v244 = vld [vmem:[%s3] sm:$0x1f]
      %v245 = vld [vmem:[%s3 + $0x8] sm:$0xff]
      %v246 = vld [vmem:[%s3 + $0x10] sm:$0xff]
      %v247 = vld [vmem:[%s3 + $0x18] sm:$0xff]
      %v248 = vld [vmem:[%s3 + $0x20] sm:$0xff]
      %v249 = vld [vmem:[%s3 + $0x28] sm:$0x1]
      %v250 = vld [vmem:[%s229] sm:$0x1f]
      %v251 = vmul.f32 %v250, 32.0
      %v252 = vmul.f32 %v244, 6.656854
      %v253 = vadd.f32 %v251, %v252
      %v254 = vld [vmem:[%s233] sm:$0x1f]
      %v255 = vlaneseq
      %v256 = vand.u32 %v255, 127
      %v257 = vstv %s20
      %vm258 = vcmp.le.s32.totalorder %v256, %v257
      %v259 = vsel %vm258, 0.0, -1e+09
      %v260 = vld [vmem:[%s236] sm:$0x1]
      %v261 = vadd.f32 %v259, %v260
      %v262 = vld [vmem:[%s3 + $0x30] sm:$0xff]
      %v263 = vld [vmem:[%s3 + $0x38] sm:$0xff]
      %v264 = vld [vmem:[%s3 + $0x40] sm:$0xff]
      %v265 = vld [vmem:[%s3 + $0x48] sm:$0xff]
      %v266 = vld [vmem:[%s3 + $0x50] sm:$0x1]
      %v267 = vld [vmem:[%s3 + $0x58] sm:$0xff]
      %v268 = vld [vmem:[%s3 + $0x60] sm:$0xff]
      %v269 = vld [vmem:[%s3 + $0x68] sm:$0xff]
      %v270 = vld [vmem:[%s3 + $0x70] sm:$0xff]
      %v271 = vld [vmem:[%s3 + $0x78] sm:$0x1]
      %v272 = vld [vmem:[%s3 + $0x80] sm:$0x1]
      %v273 = vld [vmem:[%s3 + $0x88] sm:$0x1]
      %v274 = vld [vmem:[%s3 + $0x90] sm:$0xff]
      %v275 = vld [vmem:[%s3 + $0x98] sm:$0xff]
      %v276 = vld [vmem:[%s3 + $0xa0] sm:$0xff]
      %v277 = vld [vmem:[%s3 + $0xa8] sm:$0xff]
      %v278 = vld [vmem:[%s3 + $0xb0] sm:$0x1]
      %v279 = vld [vmem:[%s3 + $0xb8] sm:$0xff]
      %v280 = vld [vmem:[%s3 + $0xc0] sm:$0xff]
      %v281 = vld [vmem:[%s3 + $0xc8] sm:$0xff]
      %v282 = vld [vmem:[%s3 + $0xd0] sm:$0xff]
      %v283 = vld [vmem:[%s3 + $0xd8] sm:$0x1]
      %v284 = vld [vmem:[%s3 + $0xe0] sm:$0xff]
      %v285 = vld [vmem:[%s3 + $0xe8] sm:$0xff]
      %v286 = vld [vmem:[%s3 + $0xf0] sm:$0xff]
      %v287 = vld [vmem:[%s3 + $0xf8] sm:$0xff]
      %v288 = vld [vmem:[%s3 + $0x100] sm:$0x1]
      %v289 = vld [vmem:[%s3 + $0x108] sm:$0x1]
      %v290 = vld [vmem:[%s3 + $0x110] sm:$0x1]
      %v291 = vld [vmem:[%s3 + $0x118] sm:$0xff]
      %v292 = vld [vmem:[%s3 + $0x120] sm:$0xff]
      %v293 = vld [vmem:[%s3 + $0x128] sm:$0xff]
      %v294 = vld [vmem:[%s3 + $0x130] sm:$0xff]
      %v295 = vld [vmem:[%s3 + $0x138] sm:$0x1]
      %v296 = vld [vmem:[%s3 + $0x140] sm:$0xff]
      %v297 = vld [vmem:[%s3 + $0x148] sm:$0xff]
      %v298 = vld [vmem:[%s3 + $0x150] sm:$0xff]
      %v299 = vld [vmem:[%s3 + $0x158] sm:$0xff]
      %v300 = vld [vmem:[%s3 + $0x160] sm:$0xff]
      %v301 = vld [vmem:[%s3 + $0x168] sm:$0xff]
      %v302 = vld [vmem:[%s3 + $0x170] sm:$0xff]
      %v303 = vld [vmem:[%s3 + $0x178] sm:$0xff]
      %v304 = vld [vmem:[%s3 + $0x180] sm:$0x1]
      %v305 = vld [vmem:[%s3 + $0x188] sm:$0x1]
      %v306 = vld [vmem:[%s3 + $0x190] sm:$0x1]
      %v307 = vlaneseq
      %v308 = vshrl.u32 %v307, 7
      %v309 = vsub.s32 0, %v308
      %v310 = vrot.slane %v266, %v309
      %vm311 = vcmask 261120
      %v313 = vsel %vm311, %v253, 0
      %315 = vmatprep.subr.mxu0 0.0
      %316 = vmatpush1.msra.mxu0 %v262
      %317 = vmatprep.subr.mxu0 0.0
      %318 = vmatpush1.msra.mxu0 %v263
      %319 = vmatprep.subr.mxu0 0.0
      %320 = vmatpush1.msra.mxu0 %v264
      %321 = vmatprep.subr.mxu0 0.0
      %322 = vmatpush1.msra.mxu0 %v265
      %323 = vmatprep.subr.mxu0 0.0
      %324 = vmatpush1.msra.mxu0 0.0
      %325 = vmatprep.subr.mxu0 0.0
      %326 = vmatpush1.msra.mxu0 0.0
      %327 = vmatprep.subr.mxu0 0.0
      %328 = vmatpush1.msra.mxu0 0.0
      %329 = vmatprep.subr.mxu0 0.0
      %330 = vmatpush1.msra.mxu0 0.0
      %331 = vmatprep.subr.mxu0 0.0
      %332 = vmatpush1.msra.mxu0 0.0
      %333 = vmatprep.subr.mxu0 0.0
      %334 = vmatpush1.msra.mxu0 0.0
      %335 = vmatprep.subr.mxu0 0.0
      %336 = vmatpush1.msra.mxu0 0.0
      %337 = vmatprep.subr.mxu0 0.0
      %338 = vmatpush1.msra.mxu0 0.0
      %339 = vmatprep.subr.mxu0 0.0
      %340 = vmatpush1.msra.mxu0 0.0
      %341 = vmatprep.subr.mxu0 0.0
      %342 = vmatpush1.msra.mxu0 0.0
      %343 = vmatprep.subr.mxu0 0.0
      %344 = vmatpush1.msra.mxu0 0.0
      %345 = vmatprep.subr.mxu0 0.0
      %346 = vmatpush1.msra.mxu0 0.0
      %347 = vmatprep.subr.mxu0 0.0
      %348 = vmatpush1.msra.mxu0 0.0
      %349 = vmatprep.subr.mxu0 0.0
      %350 = vmatpush1.msra.mxu0 0.0
      %351 = vmatprep.subr.mxu0 0.0
      %352 = vmatpush1.msra.mxu0 0.0
      %353 = vmatprep.subr.mxu0 0.0
      %354 = vmatpush1.msra.mxu0 0.0
      %355 = vmatprep.subr.mxu0 0.0
      %356 = vmatpush1.msra.mxu0 0.0
      %357 = vmatprep.subr.mxu0 0.0
      %358 = vmatpush1.msra.mxu0 0.0
      %359 = vmatprep.subr.mxu0 0.0
      %360 = vmatpush1.msra.mxu0 0.0
      %361 = vmatprep.subr.mxu0 0.0
      %362 = vmatpush1.msra.mxu0 0.0
      %363 = vmatprep.subr.mxu0 0.0
      %364 = vmatpush1.msra.mxu0 0.0
      %365 = vmatprep.subr.mxu0 0.0
      %366 = vmatpush1.msra.mxu0 0.0
      %367 = vmatprep.subr.mxu0 0.0
      %368 = vmatpush1.msra.mxu0 0.0
      %369 = vmatprep.subr.mxu0 0.0
      %370 = vmatpush1.msra.mxu0 0.0
      %371 = vmatprep.subr.mxu0 0.0
      %372 = vmatpush1.msra.mxu0 0.0
      %373 = vmatprep.subr.mxu0 0.0
      %374 = vmatpush1.msra.mxu0 0.0
      %375 = vmatprep.subr.mxu0 0.0
      %376 = vmatpush1.msra.mxu0 0.0
      %377 = vmatprep.subr.mxu0 0.0
      %378 = vmatpush1.msra.mxu0 0.0
      %379 = vmatprep.mubr.f32.mxu0 0.0
      %380 = vmatmul.mubr.f32.gmra.mrb[0].mxu0 %v313
      %v381 = vpop.f32.mrb[0].mxu0
      %v382 = vadd.f32 %v310, %v381
      %v383 = vpop.f32.mrb[0].mxu0
      %384 = vdwg.mxu0
      %386 = vrot.lane.b32.xlu0 %v382, 96
      %v387 = vpop.permute.xlu0 %386
      %vm388 = vcmask 64512
      %v389 = vsel %vm388, %v382, 0
      %v391 = vsel %vm388, %v387, 0
      %393 = vmatprep.subr.mxu0 0.0
      %394 = vmatpush1.xpose.msra.mxu0 %v391
      %395 = vmatprep.subr.mxu0 0.0
      %396 = vmatpush1.xpose.msra.mxu0 0.0
      %397 = vmatprep.subr.mxu0 0.0
      %398 = vmatpush1.xpose.msra.mxu0 0.0
      %399 = vmatprep.subr.mxu0 0.0
      %400 = vmatpush1.xpose.msra.mxu0 0.0
      %401 = vmatprep.subr.mxu0 0.0
      %402 = vmatpush1.xpose.msra.mxu0 0.0
      %403 = vmatprep.subr.mxu0 0.0
      %404 = vmatpush1.xpose.msra.mxu0 0.0
      %405 = vmatprep.subr.mxu0 0.0
      %406 = vmatpush1.xpose.msra.mxu0 0.0
      %407 = vmatprep.subr.mxu0 0.0
      %408 = vmatpush1.xpose.msra.mxu0 0.0
      %409 = vmatprep.subr.mxu0 0.0
      %410 = vmatpush1.xpose.msra.mxu0 0.0
      %411 = vmatprep.subr.mxu0 0.0
      %412 = vmatpush1.xpose.msra.mxu0 0.0
      %413 = vmatprep.subr.mxu0 0.0
      %414 = vmatpush1.xpose.msra.mxu0 0.0
      %415 = vmatprep.subr.mxu0 0.0
      %416 = vmatpush1.xpose.msra.mxu0 0.0
      %417 = vmatprep.subr.mxu0 0.0
      %418 = vmatpush1.xpose.msra.mxu0 0.0
      %419 = vmatprep.subr.mxu0 0.0
      %420 = vmatpush1.xpose.msra.mxu0 0.0
      %421 = vmatprep.subr.mxu0 0.0
      %422 = vmatpush1.xpose.msra.mxu0 0.0
      %423 = vmatprep.subr.mxu0 0.0
      %424 = vmatpush1.xpose.msra.mxu0 0.0
      %425 = vmatprep.subr.mxu0 0.0
      %426 = vmatpush1.xpose.msra.mxu0 0.0
      %427 = vmatprep.subr.mxu0 0.0
      %428 = vmatpush1.xpose.msra.mxu0 0.0
      %429 = vmatprep.subr.mxu0 0.0
      %430 = vmatpush1.xpose.msra.mxu0 0.0
      %431 = vmatprep.subr.mxu0 0.0
      %432 = vmatpush1.xpose.msra.mxu0 0.0
      %433 = vmatprep.subr.mxu0 0.0
      %434 = vmatpush1.xpose.msra.mxu0 0.0
      %435 = vmatprep.subr.mxu0 0.0
      %436 = vmatpush1.xpose.msra.mxu0 0.0
      %437 = vmatprep.subr.mxu0 0.0
      %438 = vmatpush1.xpose.msra.mxu0 0.0
      %439 = vmatprep.subr.mxu0 0.0
      %440 = vmatpush1.xpose.msra.mxu0 0.0
      %441 = vmatprep.subr.mxu0 0.0
      %442 = vmatpush1.xpose.msra.mxu0 0.0
      %443 = vmatprep.subr.mxu0 0.0
      %444 = vmatpush1.xpose.msra.mxu0 0.0
      %445 = vmatprep.subr.mxu0 0.0
      %446 = vmatpush1.xpose.msra.mxu0 0.0
      %447 = vmatprep.subr.mxu0 0.0
      %448 = vmatpush1.xpose.msra.mxu0 0.0
      %449 = vmatprep.subr.mxu0 0.0
      %450 = vmatpush1.xpose.msra.mxu0 0.0
      %451 = vmatprep.subr.mxu0 0.0
      %452 = vmatpush1.xpose.msra.mxu0 0.0
      %453 = vmatprep.subr.mxu0 0.0
      %454 = vmatpush1.xpose.msra.mxu0 0.0
      %455 = vmatprep.subr.mxu0 0.0
      %456 = vmatpush1.xpose.msra.mxu0 0.0
      %457 = vmatprep.mubr.f32.mxu0 0.0
      %458 = vmatmul.mubr.f32.gmra.mrb[0].mxu0 %v389
      %v459 = vpop.f32.mrb[0].mxu0
      %v460 = vadd.f32 0.0, %v459
      %v461 = vpop.f32.mrb[0].mxu0
      %462 = vdwg.mxu0
      %v463 = vmul.f32 %v460, 0.35355338
      %v464 = vlaneseq
      %v465 = vshrl.u32 %v464, 7
      %v466 = vsub.s32 0, %v465
      %v467 = vrot.slane %v261, %v466
      %v468 = vadd.f32 %v463, %v467
      %vm469 = vcmask 36864
      %v470 = vsel %vm469, %v468, -inf
      %471 = vmax.xlane.f32.xlu0 %v470
      %v472 = vpop.xlane.xlu0 %471
      %v473 = vsub.f32 %v468, %v472
      %v474 = vmul.f32 %v473, 1.442695
      %v475 = vpow.pop %v474
      %v476 = vsel %vm469, %v475, 0.0
      %477 = vadd.xlane.f32.xlu0 %v476
      %v478 = vpop.xlane.xlu0 %477
      %v479 = vrcp.pop %v478
      %v480 = vmul.f32 %v475, %v479
      %481 = vrot.lane.b32.xlu0 %v382, 64
      %v482 = vpop.permute.xlu0 %481
      %vm483 = vcmask 39936
      %v485 = vsel %vm483, %v480, 0
      %vm487 = vcmask 1044480
      %v488 = vsel %vm487, %v482, 0
      %490 = vmatprep.subr.mxu0 0.0
      %491 = vmatpush1.msra.mxu0 %v488
      %492 = vmatprep.subr.mxu0 0.0
      %493 = vmatpush1.msra.mxu0 0.0
      %494 = vmatprep.subr.mxu0 0.0
      %495 = vmatpush1.msra.mxu0 0.0
      %496 = vmatprep.subr.mxu0 0.0
      %497 = vmatpush1.msra.mxu0 0.0
      %498 = vmatprep.subr.mxu0 0.0
      %499 = vmatpush1.msra.mxu0 0.0
      %500 = vmatprep.subr.mxu0 0.0
      %501 = vmatpush1.msra.mxu0 0.0
      %502 = vmatprep.subr.mxu0 0.0
      %503 = vmatpush1.msra.mxu0 0.0
      %504 = vmatprep.subr.mxu0 0.0
      %505 = vmatpush1.msra.mxu0 0.0
      %506 = vmatprep.subr.mxu0 0.0
      %507 = vmatpush1.msra.mxu0 0.0
      %508 = vmatprep.subr.mxu0 0.0
      %509 = vmatpush1.msra.mxu0 0.0
      %510 = vmatprep.subr.mxu0 0.0
      %511 = vmatpush1.msra.mxu0 0.0
      %512 = vmatprep.subr.mxu0 0.0
      %513 = vmatpush1.msra.mxu0 0.0
      %514 = vmatprep.subr.mxu0 0.0
      %515 = vmatpush1.msra.mxu0 0.0
      %516 = vmatprep.subr.mxu0 0.0
      %517 = vmatpush1.msra.mxu0 0.0
      %518 = vmatprep.subr.mxu0 0.0
      %519 = vmatpush1.msra.mxu0 0.0
      %520 = vmatprep.subr.mxu0 0.0
      %521 = vmatpush1.msra.mxu0 0.0
      %522 = vmatprep.subr.mxu0 0.0
      %523 = vmatpush1.msra.mxu0 0.0
      %524 = vmatprep.subr.mxu0 0.0
      %525 = vmatpush1.msra.mxu0 0.0
      %526 = vmatprep.subr.mxu0 0.0
      %527 = vmatpush1.msra.mxu0 0.0
      %528 = vmatprep.subr.mxu0 0.0
      %529 = vmatpush1.msra.mxu0 0.0
      %530 = vmatprep.subr.mxu0 0.0
      %531 = vmatpush1.msra.mxu0 0.0
      %532 = vmatprep.subr.mxu0 0.0
      %533 = vmatpush1.msra.mxu0 0.0
      %534 = vmatprep.subr.mxu0 0.0
      %535 = vmatpush1.msra.mxu0 0.0
      %536 = vmatprep.subr.mxu0 0.0
      %537 = vmatpush1.msra.mxu0 0.0
      %538 = vmatprep.subr.mxu0 0.0
      %539 = vmatpush1.msra.mxu0 0.0
      %540 = vmatprep.subr.mxu0 0.0
      %541 = vmatpush1.msra.mxu0 0.0
      %542 = vmatprep.subr.mxu0 0.0
      %543 = vmatpush1.msra.mxu0 0.0
      %544 = vmatprep.subr.mxu0 0.0
      %545 = vmatpush1.msra.mxu0 0.0
      %546 = vmatprep.subr.mxu0 0.0
      %547 = vmatpush1.msra.mxu0 0.0
      %548 = vmatprep.subr.mxu0 0.0
      %549 = vmatpush1.msra.mxu0 0.0
      %550 = vmatprep.subr.mxu0 0.0
      %551 = vmatpush1.msra.mxu0 0.0
      %552 = vmatprep.subr.mxu0 0.0
      %553 = vmatpush1.msra.mxu0 0.0
      %554 = vmatprep.mubr.f32.mxu0 0.0
      %555 = vmatmul.mubr.f32.gmra.mrb[0].mxu0 %v485
      %v556 = vpop.f32.mrb[0].mxu0
      %v557 = vadd.f32 0.0, %v556
      %v558 = vpop.f32.mrb[0].mxu0
      %559 = vdwg.mxu0
      %560 = vrot.lane.b32.xlu0 %v382, 120
      %v561 = vpop.permute.xlu0 %560
      %562 = vrot.lane.b32.xlu0 %v382, 88
      %v563 = vpop.permute.xlu0 %562
      %v564 = vsel %vm388, %v561, 0
      %v566 = vsel %vm388, %v563, 0
      %568 = vmatprep.subr.mxu0 0.0
      %569 = vmatpush1.xpose.msra.mxu0 %v566
      %570 = vmatprep.subr.mxu0 0.0
      %571 = vmatpush1.xpose.msra.mxu0 0.0
      %572 = vmatprep.subr.mxu0 0.0
      %573 = vmatpush1.xpose.msra.mxu0 0.0
      %574 = vmatprep.subr.mxu0 0.0
      %575 = vmatpush1.xpose.msra.mxu0 0.0
      %576 = vmatprep.subr.mxu0 0.0
      %577 = vmatpush1.xpose.msra.mxu0 0.0
      %578 = vmatprep.subr.mxu0 0.0
      %579 = vmatpush1.xpose.msra.mxu0 0.0
      %580 = vmatprep.subr.mxu0 0.0
      %581 = vmatpush1.xpose.msra.mxu0 0.0
      %582 = vmatprep.subr.mxu0 0.0
      %583 = vmatpush1.xpose.msra.mxu0 0.0
      %584 = vmatprep.subr.mxu0 0.0
      %585 = vmatpush1.xpose.msra.mxu0 0.0
      %586 = vmatprep.subr.mxu0 0.0
      %587 = vmatpush1.xpose.msra.mxu0 0.0
      %588 = vmatprep.subr.mxu0 0.0
      %589 = vmatpush1.xpose.msra.mxu0 0.0
      %590 = vmatprep.subr.mxu0 0.0
      %591 = vmatpush1.xpose.msra.mxu0 0.0
      %592 = vmatprep.subr.mxu0 0.0
      %593 = vmatpush1.xpose.msra.mxu0 0.0
      %594 = vmatprep.subr.mxu0 0.0
      %595 = vmatpush1.xpose.msra.mxu0 0.0
      %596 = vmatprep.subr.mxu0 0.0
      %597 = vmatpush1.xpose.msra.mxu0 0.0
      %598 = vmatprep.subr.mxu0 0.0
      %599 = vmatpush1.xpose.msra.mxu0 0.0
      %600 = vmatprep.subr.mxu0 0.0
      %601 = vmatpush1.xpose.msra.mxu0 0.0
      %602 = vmatprep.subr.mxu0 0.0
      %603 = vmatpush1.xpose.msra.mxu0 0.0
      %604 = vmatprep.subr.mxu0 0.0
      %605 = vmatpush1.xpose.msra.mxu0 0.0
      %606 = vmatprep.subr.mxu0 0.0
      %607 = vmatpush1.xpose.msra.mxu0 0.0
      %608 = vmatprep.subr.mxu0 0.0
      %609 = vmatpush1.xpose.msra.mxu0 0.0
      %610 = vmatprep.subr.mxu0 0.0
      %611 = vmatpush1.xpose.msra.mxu0 0.0
      %612 = vmatprep.subr.mxu0 0.0
      %613 = vmatpush1.xpose.msra.mxu0 0.0
      %614 = vmatprep.subr.mxu0 0.0
      %615 = vmatpush1.xpose.msra.mxu0 0.0
      %616 = vmatprep.subr.mxu0 0.0
      %617 = vmatpush1.xpose.msra.mxu0 0.0
      %618 = vmatprep.subr.mxu0 0.0
      %619 = vmatpush1.xpose.msra.mxu0 0.0
      %620 = vmatprep.subr.mxu0 0.0
      %621 = vmatpush1.xpose.msra.mxu0 0.0
      %622 = vmatprep.subr.mxu0 0.0
      %623 = vmatpush1.xpose.msra.mxu0 0.0
      %624 = vmatprep.subr.mxu0 0.0
      %625 = vmatpush1.xpose.msra.mxu0 0.0
      %626 = vmatprep.subr.mxu0 0.0
      %627 = vmatpush1.xpose.msra.mxu0 0.0
      %628 = vmatprep.subr.mxu0 0.0
      %629 = vmatpush1.xpose.msra.mxu0 0.0
      %630 = vmatprep.subr.mxu0 0.0
      %631 = vmatpush1.xpose.msra.mxu0 0.0
      %632 = vmatprep.mubr.f32.mxu0 0.0
      %633 = vmatmul.mubr.f32.gmra.mrb[0].mxu0 %v564
      %v634 = vpop.f32.mrb[0].mxu0
      %v635 = vadd.f32 0.0, %v634
      %v636 = vpop.f32.mrb[0].mxu0
      %637 = vdwg.mxu0
      %v638 = vmul.f32 %v635, 0.35355338
      %v639 = vadd.f32 %v638, %v467
      %v640 = vsel %vm469, %v639, -inf
      %641 = vmax.xlane.f32.xlu0 %v640
      %v642 = vpop.xlane.xlu0 %641
      %v643 = vsub.f32 %v639, %v642
      %v644 = vmul.f32 %v643, 1.442695
      %v645 = vpow.pop %v644
      %v646 = vsel %vm469, %v645, 0.0
      %647 = vadd.xlane.f32.xlu0 %v646
      %v648 = vpop.xlane.xlu0 %647
      %v649 = vrcp.pop %v648
      %v650 = vmul.f32 %v645, %v649
      %651 = vrot.lane.b32.xlu0 %v382, 56
      %v652 = vpop.permute.xlu0 %651
      %v654 = vsel %vm483, %v650, 0
      %v656 = vsel %vm487, %v652, 0
      %658 = vmatprep.subr.mxu0 0.0
      %659 = vmatpush1.msra.mxu0 %v656
      %660 = vmatprep.subr.mxu0 0.0
      %661 = vmatpush1.msra.mxu0 0.0
      %662 = vmatprep.subr.mxu0 0.0
      %663 = vmatpush1.msra.mxu0 0.0
      %664 = vmatprep.subr.mxu0 0.0
      %665 = vmatpush1.msra.mxu0 0.0
      %666 = vmatprep.subr.mxu0 0.0
      %667 = vmatpush1.msra.mxu0 0.0
      %668 = vmatprep.subr.mxu0 0.0
      %669 = vmatpush1.msra.mxu0 0.0
      %670 = vmatprep.subr.mxu0 0.0
      %671 = vmatpush1.msra.mxu0 0.0
      %672 = vmatprep.subr.mxu0 0.0
      %673 = vmatpush1.msra.mxu0 0.0
      %674 = vmatprep.subr.mxu0 0.0
      %675 = vmatpush1.msra.mxu0 0.0
      %676 = vmatprep.subr.mxu0 0.0
      %677 = vmatpush1.msra.mxu0 0.0
      %678 = vmatprep.subr.mxu0 0.0
      %679 = vmatpush1.msra.mxu0 0.0
      %680 = vmatprep.subr.mxu0 0.0
      %681 = vmatpush1.msra.mxu0 0.0
      %682 = vmatprep.subr.mxu0 0.0
      %683 = vmatpush1.msra.mxu0 0.0
      %684 = vmatprep.subr.mxu0 0.0
      %685 = vmatpush1.msra.mxu0 0.0
      %686 = vmatprep.subr.mxu0 0.0
      %687 = vmatpush1.msra.mxu0 0.0
      %688 = vmatprep.subr.mxu0 0.0
      %689 = vmatpush1.msra.mxu0 0.0
      %690 = vmatprep.subr.mxu0 0.0
      %691 = vmatpush1.msra.mxu0 0.0
      %692 = vmatprep.subr.mxu0 0.0
      %693 = vmatpush1.msra.mxu0 0.0
      %694 = vmatprep.subr.mxu0 0.0
      %695 = vmatpush1.msra.mxu0 0.0
      %696 = vmatprep.subr.mxu0 0.0
      %697 = vmatpush1.msra.mxu0 0.0
      %698 = vmatprep.subr.mxu0 0.0
      %699 = vmatpush1.msra.mxu0 0.0
      %700 = vmatprep.subr.mxu0 0.0
      %701 = vmatpush1.msra.mxu0 0.0
      %702 = vmatprep.subr.mxu0 0.0
      %703 = vmatpush1.msra.mxu0 0.0
      %704 = vmatprep.subr.mxu0 0.0
      %705 = vmatpush1.msra.mxu0 0.0
      %706 = vmatprep.subr.mxu0 0.0
      %707 = vmatpush1.msra.mxu0 0.0
      %708 = vmatprep.subr.mxu0 0.0
      %709 = vmatpush1.msra.mxu0 0.0
      %710 = vmatprep.subr.mxu0 0.0
      %711 = vmatpush1.msra.mxu0 0.0
      %712 = vmatprep.subr.mxu0 0.0
      %713 = vmatpush1.msra.mxu0 0.0
      %714 = vmatprep.subr.mxu0 0.0
      %715 = vmatpush1.msra.mxu0 0.0
      %716 = vmatprep.subr.mxu0 0.0
      %717 = vmatpush1.msra.mxu0 0.0
      %718 = vmatprep.subr.mxu0 0.0
      %719 = vmatpush1.msra.mxu0 0.0
      %720 = vmatprep.subr.mxu0 0.0
      %721 = vmatpush1.msra.mxu0 0.0
      %722 = vmatprep.mubr.f32.mxu0 0.0
      %723 = vmatmul.mubr.f32.gmra.mrb[0].mxu0 %v654
      %v724 = vpop.f32.mrb[0].mxu0
      %v725 = vadd.f32 0.0, %v724
      %v726 = vpop.f32.mrb[0].mxu0
      %727 = vdwg.mxu0
      %728 = vrot.lane.b32.xlu0 %v382, 112
      %v729 = vpop.permute.xlu0 %728
      %730 = vrot.lane.b32.xlu0 %v382, 80
      %v731 = vpop.permute.xlu0 %730
      %v732 = vsel %vm388, %v729, 0
      %v734 = vsel %vm388, %v731, 0
      %736 = vmatprep.subr.mxu0 0.0
      %737 = vmatpush1.xpose.msra.mxu0 %v734
      %738 = vmatprep.subr.mxu0 0.0
      %739 = vmatpush1.xpose.msra.mxu0 0.0
      %740 = vmatprep.subr.mxu0 0.0
      %741 = vmatpush1.xpose.msra.mxu0 0.0
      %742 = vmatprep.subr.mxu0 0.0
      %743 = vmatpush1.xpose.msra.mxu0 0.0
      %744 = vmatprep.subr.mxu0 0.0
      %745 = vmatpush1.xpose.msra.mxu0 0.0
      %746 = vmatprep.subr.mxu0 0.0
      %747 = vmatpush1.xpose.msra.mxu0 0.0
      %748 = vmatprep.subr.mxu0 0.0
      %749 = vmatpush1.xpose.msra.mxu0 0.0
      %750 = vmatprep.subr.mxu0 0.0
      %751 = vmatpush1.xpose.msra.mxu0 0.0
      %752 = vmatprep.subr.mxu0 0.0
      %753 = vmatpush1.xpose.msra.mxu0 0.0
      %754 = vmatprep.subr.mxu0 0.0
      %755 = vmatpush1.xpose.msra.mxu0 0.0
      %756 = vmatprep.subr.mxu0 0.0
      %757 = vmatpush1.xpose.msra.mxu0 0.0
      %758 = vmatprep.subr.mxu0 0.0
      %759 = vmatpush1.xpose.msra.mxu0 0.0
      %760 = vmatprep.subr.mxu0 0.0
      %761 = vmatpush1.xpose.msra.mxu0 0.0
      %762 = vmatprep.subr.mxu0 0.0
      %763 = vmatpush1.xpose.msra.mxu0 0.0
      %764 = vmatprep.subr.mxu0 0.0
      %765 = vmatpush1.xpose.msra.mxu0 0.0
      %766 = vmatprep.subr.mxu0 0.0
      %767 = vmatpush1.xpose.msra.mxu0 0.0
      %768 = vmatprep.subr.mxu0 0.0
      %769 = vmatpush1.xpose.msra.mxu0 0.0
      %770 = vmatprep.subr.mxu0 0.0
      %771 = vmatpush1.xpose.msra.mxu0 0.0
      %772 = vmatprep.subr.mxu0 0.0
      %773 = vmatpush1.xpose.msra.mxu0 0.0
      %774 = vmatprep.subr.mxu0 0.0
      %775 = vmatpush1.xpose.msra.mxu0 0.0
      %776 = vmatprep.subr.mxu0 0.0
      %777 = vmatpush1.xpose.msra.mxu0 0.0
      %778 = vmatprep.subr.mxu0 0.0
      %779 = vmatpush1.xpose.msra.mxu0 0.0
      %780 = vmatprep.subr.mxu0 0.0
      %781 = vmatpush1.xpose.msra.mxu0 0.0
      %782 = vmatprep.subr.mxu0 0.0
      %783 = vmatpush1.xpose.msra.mxu0 0.0
      %784 = vmatprep.subr.mxu0 0.0
      %785 = vmatpush1.xpose.msra.mxu0 0.0
      %786 = vmatprep.subr.mxu0 0.0
      %787 = vmatpush1.xpose.msra.mxu0 0.0
      %788 = vmatprep.subr.mxu0 0.0
      %789 = vmatpush1.xpose.msra.mxu0 0.0
      %790 = vmatprep.subr.mxu0 0.0
      %791 = vmatpush1.xpose.msra.mxu0 0.0
      %792 = vmatprep.subr.mxu0 0.0
      %793 = vmatpush1.xpose.msra.mxu0 0.0
      %794 = vmatprep.subr.mxu0 0.0
      %795 = vmatpush1.xpose.msra.mxu0 0.0
      %796 = vmatprep.subr.mxu0 0.0
      %797 = vmatpush1.xpose.msra.mxu0 0.0
      %798 = vmatprep.subr.mxu0 0.0
      %799 = vmatpush1.xpose.msra.mxu0 0.0
      %800 = vmatprep.mubr.f32.mxu0 0.0
      %801 = vmatmul.mubr.f32.gmra.mrb[0].mxu0 %v732
      %v802 = vpop.f32.mrb[0].mxu0
      %v803 = vadd.f32 0.0, %v802
      %v804 = vpop.f32.mrb[0].mxu0
      %805 = vdwg.mxu0
      %v806 = vmul.f32 %v803, 0.35355338
      %v807 = vadd.f32 %v806, %v467
      %v808 = vsel %vm469, %v807, -inf
      %809 = vmax.xlane.f32.xlu0 %v808
      %v810 = vpop.xlane.xlu0 %809
      %v811 = vsub.f32 %v807, %v810
      %v812 = vmul.f32 %v811, 1.442695
      %v813 = vpow.pop %v812
      %v814 = vsel %vm469, %v813, 0.0
      %815 = vadd.xlane.f32.xlu0 %v814
      %v816 = vpop.xlane.xlu0 %815
      %v817 = vrcp.pop %v816
      %v818 = vmul.f32 %v813, %v817
      %819 = vrot.lane.b32.xlu0 %v382, 48
      %v820 = vpop.permute.xlu0 %819
      %v822 = vsel %vm483, %v818, 0
      %v824 = vsel %vm487, %v820, 0
      %826 = vmatprep.subr.mxu0 0.0
      %827 = vmatpush1.msra.mxu0 %v824
      %828 = vmatprep.subr.mxu0 0.0
      %829 = vmatpush1.msra.mxu0 0.0
      %830 = vmatprep.subr.mxu0 0.0
      %831 = vmatpush1.msra.mxu0 0.0
      %832 = vmatprep.subr.mxu0 0.0
      %833 = vmatpush1.msra.mxu0 0.0
      %834 = vmatprep.subr.mxu0 0.0
      %835 = vmatpush1.msra.mxu0 0.0
      %836 = vmatprep.subr.mxu0 0.0
      %837 = vmatpush1.msra.mxu0 0.0
      %838 = vmatprep.subr.mxu0 0.0
      %839 = vmatpush1.msra.mxu0 0.0
      %840 = vmatprep.subr.mxu0 0.0
      %841 = vmatpush1.msra.mxu0 0.0
      %842 = vmatprep.subr.mxu0 0.0
      %843 = vmatpush1.msra.mxu0 0.0
      %844 = vmatprep.subr.mxu0 0.0
      %845 = vmatpush1.msra.mxu0 0.0
      %846 = vmatprep.subr.mxu0 0.0
      %847 = vmatpush1.msra.mxu0 0.0
      %848 = vmatprep.subr.mxu0 0.0
      %849 = vmatpush1.msra.mxu0 0.0
      %850 = vmatprep.subr.mxu0 0.0
      %851 = vmatpush1.msra.mxu0 0.0
      %852 = vmatprep.subr.mxu0 0.0
      %853 = vmatpush1.msra.mxu0 0.0
      %854 = vmatprep.subr.mxu0 0.0
      %855 = vmatpush1.msra.mxu0 0.0
      %856 = vmatprep.subr.mxu0 0.0
      %857 = vmatpush1.msra.mxu0 0.0
      %858 = vmatprep.subr.mxu0 0.0
      %859 = vmatpush1.msra.mxu0 0.0
      %860 = vmatprep.subr.mxu0 0.0
      %861 = vmatpush1.msra.mxu0 0.0
      %862 = vmatprep.subr.mxu0 0.0
      %863 = vmatpush1.msra.mxu0 0.0
      %864 = vmatprep.subr.mxu0 0.0
      %865 = vmatpush1.msra.mxu0 0.0
      %866 = vmatprep.subr.mxu0 0.0
      %867 = vmatpush1.msra.mxu0 0.0
      %868 = vmatprep.subr.mxu0 0.0
      %869 = vmatpush1.msra.mxu0 0.0
      %870 = vmatprep.subr.mxu0 0.0
      %871 = vmatpush1.msra.mxu0 0.0
      %872 = vmatprep.subr.mxu0 0.0
      %873 = vmatpush1.msra.mxu0 0.0
      %874 = vmatprep.subr.mxu0 0.0
      %875 = vmatpush1.msra.mxu0 0.0
      %876 = vmatprep.subr.mxu0 0.0
      %877 = vmatpush1.msra.mxu0 0.0
      %878 = vmatprep.subr.mxu0 0.0
      %879 = vmatpush1.msra.mxu0 0.0
      %880 = vmatprep.subr.mxu0 0.0
      %881 = vmatpush1.msra.mxu0 0.0
      %882 = vmatprep.subr.mxu0 0.0
      %883 = vmatpush1.msra.mxu0 0.0
      %884 = vmatprep.subr.mxu0 0.0
      %885 = vmatpush1.msra.mxu0 0.0
      %886 = vmatprep.subr.mxu0 0.0
      %887 = vmatpush1.msra.mxu0 0.0
      %888 = vmatprep.subr.mxu0 0.0
      %889 = vmatpush1.msra.mxu0 0.0
      %890 = vmatprep.mubr.f32.mxu0 0.0
      %891 = vmatmul.mubr.f32.gmra.mrb[0].mxu0 %v822
      %v892 = vpop.f32.mrb[0].mxu0
      %v893 = vadd.f32 0.0, %v892
      %v894 = vpop.f32.mrb[0].mxu0
      %895 = vdwg.mxu0
      %896 = vrot.lane.b32.xlu0 %v382, 104
      %v897 = vpop.permute.xlu0 %896
      %898 = vrot.lane.b32.xlu0 %v382, 72
      %v899 = vpop.permute.xlu0 %898
      %v900 = vsel %vm388, %v897, 0
      %v902 = vsel %vm388, %v899, 0
      %904 = vmatprep.subr.mxu0 0.0
      %905 = vmatpush1.xpose.msra.mxu0 %v902
      %906 = vmatprep.subr.mxu0 0.0
      %907 = vmatpush1.xpose.msra.mxu0 0.0
      %908 = vmatprep.subr.mxu0 0.0
      %909 = vmatpush1.xpose.msra.mxu0 0.0
      %910 = vmatprep.subr.mxu0 0.0
      %911 = vmatpush1.xpose.msra.mxu0 0.0
      %912 = vmatprep.subr.mxu0 0.0
      %913 = vmatpush1.xpose.msra.mxu0 0.0
      %914 = vmatprep.subr.mxu0 0.0
      %915 = vmatpush1.xpose.msra.mxu0 0.0
      %916 = vmatprep.subr.mxu0 0.0
      %917 = vmatpush1.xpose.msra.mxu0 0.0
      %918 = vmatprep.subr.mxu0 0.0
      %919 = vmatpush1.xpose.msra.mxu0 0.0
      %920 = vmatprep.subr.mxu0 0.0
      %921 = vmatpush1.xpose.msra.mxu0 0.0
      %922 = vmatprep.subr.mxu0 0.0
      %923 = vmatpush1.xpose.msra.mxu0 0.0
      %924 = vmatprep.subr.mxu0 0.0
      %925 = vmatpush1.xpose.msra.mxu0 0.0
      %926 = vmatprep.subr.mxu0 0.0
      %927 = vmatpush1.xpose.msra.mxu0 0.0
      %928 = vmatprep.subr.mxu0 0.0
      %929 = vmatpush1.xpose.msra.mxu0 0.0
      %930 = vmatprep.subr.mxu0 0.0
      %931 = vmatpush1.xpose.msra.mxu0 0.0
      %932 = vmatprep.subr.mxu0 0.0
      %933 = vmatpush1.xpose.msra.mxu0 0.0
      %934 = vmatprep.subr.mxu0 0.0
      %935 = vmatpush1.xpose.msra.mxu0 0.0
      %936 = vmatprep.subr.mxu0 0.0
      %937 = vmatpush1.xpose.msra.mxu0 0.0
      %938 = vmatprep.subr.mxu0 0.0
      %939 = vmatpush1.xpose.msra.mxu0 0.0
      %940 = vmatprep.subr.mxu0 0.0
      %941 = vmatpush1.xpose.msra.mxu0 0.0
      %942 = vmatprep.subr.mxu0 0.0
      %943 = vmatpush1.xpose.msra.mxu0 0.0
      %944 = vmatprep.subr.mxu0 0.0
      %945 = vmatpush1.xpose.msra.mxu0 0.0
      %946 = vmatprep.subr.mxu0 0.0
      %947 = vmatpush1.xpose.msra.mxu0 0.0
      %948 = vmatprep.subr.mxu0 0.0
      %949 = vmatpush1.xpose.msra.mxu0 0.0
      %950 = vmatprep.subr.mxu0 0.0
      %951 = vmatpush1.xpose.msra.mxu0 0.0
      %952 = vmatprep.subr.mxu0 0.0
      %953 = vmatpush1.xpose.msra.mxu0 0.0
      %954 = vmatprep.subr.mxu0 0.0
      %955 = vmatpush1.xpose.msra.mxu0 0.0
      %956 = vmatprep.subr.mxu0 0.0
      %957 = vmatpush1.xpose.msra.mxu0 0.0
      %958 = vmatprep.subr.mxu0 0.0
      %959 = vmatpush1.xpose.msra.mxu0 0.0
      %960 = vmatprep.subr.mxu0 0.0
      %961 = vmatpush1.xpose.msra.mxu0 0.0
      %962 = vmatprep.subr.mxu0 0.0
      %963 = vmatpush1.xpose.msra.mxu0 0.0
      %964 = vmatprep.subr.mxu0 0.0
      %965 = vmatpush1.xpose.msra.mxu0 0.0
      %966 = vmatprep.subr.mxu0 0.0
      %967 = vmatpush1.xpose.msra.mxu0 0.0
      %968 = vmatprep.mubr.f32.mxu0 0.0
      %969 = vmatmul.mubr.f32.gmra.mrb[0].mxu0 %v900
      %v970 = vpop.f32.mrb[0].mxu0
      %v971 = vadd.f32 0.0, %v970
      %v972 = vpop.f32.mrb[0].mxu0
      %973 = vdwg.mxu0
      %v974 = vmul.f32 %v971, 0.35355338
      %v975 = vadd.f32 %v974, %v467
      %v976 = vsel %vm469, %v975, -inf
      %977 = vmax.xlane.f32.xlu0 %v976
      %v978 = vpop.xlane.xlu0 %977
      %v979 = vsub.f32 %v975, %v978
      %v980 = vmul.f32 %v979, 1.442695
      %v981 = vpow.pop %v980
      %v982 = vsel %vm469, %v981, 0.0
      %983 = vadd.xlane.f32.xlu0 %v982
      %v984 = vpop.xlane.xlu0 %983
      %v985 = vrcp.pop %v984
      %v986 = vmul.f32 %v981, %v985
      %987 = vrot.lane.b32.xlu0 %v382, 40
      %v988 = vpop.permute.xlu0 %987
      %v990 = vsel %vm483, %v986, 0
      %v992 = vsel %vm487, %v988, 0
      %994 = vmatprep.subr.mxu0 0.0
      %995 = vmatpush1.msra.mxu0 %v992
      %996 = vmatprep.subr.mxu0 0.0
      %997 = vmatpush1.msra.mxu0 0.0
      %998 = vmatprep.subr.mxu0 0.0
      %999 = vmatpush1.msra.mxu0 0.0
      %1000 = vmatprep.subr.mxu0 0.0
      %1001 = vmatpush1.msra.mxu0 0.0
      %1002 = vmatprep.subr.mxu0 0.0
      %1003 = vmatpush1.msra.mxu0 0.0
      %1004 = vmatprep.subr.mxu0 0.0
      %1005 = vmatpush1.msra.mxu0 0.0
      %1006 = vmatprep.subr.mxu0 0.0
      %1007 = vmatpush1.msra.mxu0 0.0
      %1008 = vmatprep.subr.mxu0 0.0
      %1009 = vmatpush1.msra.mxu0 0.0
      %1010 = vmatprep.subr.mxu0 0.0
      %1011 = vmatpush1.msra.mxu0 0.0
      %1012 = vmatprep.subr.mxu0 0.0
      %1013 = vmatpush1.msra.mxu0 0.0
      %1014 = vmatprep.subr.mxu0 0.0
      %1015 = vmatpush1.msra.mxu0 0.0
      %1016 = vmatprep.subr.mxu0 0.0
      %1017 = vmatpush1.msra.mxu0 0.0
      %1018 = vmatprep.subr.mxu0 0.0
      %1019 = vmatpush1.msra.mxu0 0.0
      %1020 = vmatprep.subr.mxu0 0.0
      %1021 = vmatpush1.msra.mxu0 0.0
      %1022 = vmatprep.subr.mxu0 0.0
      %1023 = vmatpush1.msra.mxu0 0.0
      %1024 = vmatprep.subr.mxu0 0.0
      %1025 = vmatpush1.msra.mxu0 0.0
      %1026 = vmatprep.subr.mxu0 0.0
      %1027 = vmatpush1.msra.mxu0 0.0
      %1028 = vmatprep.subr.mxu0 0.0
      %1029 = vmatpush1.msra.mxu0 0.0
      %1030 = vmatprep.subr.mxu0 0.0
      %1031 = vmatpush1.msra.mxu0 0.0
      %1032 = vmatprep.subr.mxu0 0.0
      %1033 = vmatpush1.msra.mxu0 0.0
      %1034 = vmatprep.subr.mxu0 0.0
      %1035 = vmatpush1.msra.mxu0 0.0
      %1036 = vmatprep.subr.mxu0 0.0
      %1037 = vmatpush1.msra.mxu0 0.0
      %1038 = vmatprep.subr.mxu0 0.0
      %1039 = vmatpush1.msra.mxu0 0.0
      %1040 = vmatprep.subr.mxu0 0.0
      %1041 = vmatpush1.msra.mxu0 0.0
      %1042 = vmatprep.subr.mxu0 0.0
      %1043 = vmatpush1.msra.mxu0 0.0
      %1044 = vmatprep.subr.mxu0 0.0
      %1045 = vmatpush1.msra.mxu0 0.0
      %1046 = vmatprep.subr.mxu0 0.0
      %1047 = vmatpush1.msra.mxu0 0.0
      %1048 = vmatprep.subr.mxu0 0.0
      %1049 = vmatpush1.msra.mxu0 0.0
      %1050 = vmatprep.subr.mxu0 0.0
      %1051 = vmatpush1.msra.mxu0 0.0
      %1052 = vmatprep.subr.mxu0 0.0
      %1053 = vmatpush1.msra.mxu0 0.0
      %1054 = vmatprep.subr.mxu0 0.0
      %1055 = vmatpush1.msra.mxu0 0.0
      %1056 = vmatprep.subr.mxu0 0.0
      %1057 = vmatpush1.msra.mxu0 0.0
      %1058 = vmatprep.mubr.f32.mxu0 0.0
      %1059 = vmatmul.mubr.f32.gmra.mrb[0].mxu0 %v990
      %v1060 = vpop.f32.mrb[0].mxu0
      %v1061 = vadd.f32 0.0, %v1060
      %v1062 = vpop.f32.mrb[0].mxu0
      %1063 = vdwg.mxu0
      %1065 = vrot.lane.b32.xlu0 %v725, 8
      %v1066 = vpop.permute.xlu0 %1065
      %1069 = vrot.lane.b32.xlu0 %v893, 16
      %v1070 = vpop.permute.xlu0 %1069
      %1073 = vrot.lane.b32.xlu0 %v1061, 24
      %v1074 = vpop.permute.xlu0 %1073
      %v1076 = vsel %vm388, %v557, %v1066
      %vm1077 = vcmask 130048
      %v1078 = vsel %vm1077, %v1076, %v1070
      %vm1079 = vcmask 195584
      %v1080 = vsel %vm1079, %v1078, %v1074
      %v1081 = vlaneseq
      %v1082 = vshrl.u32 %v1081, 7
      %v1083 = vsub.s32 0, %v1082
      %v1084 = vrot.slane %v271, %v1083
      %v1086 = vsel %vm311, %v1080, 0
      %1088 = vmatprep.subr.mxu0 0.0
      %1089 = vmatpush1.msra.mxu0 %v267
      %1090 = vmatprep.subr.mxu0 0.0
      %1091 = vmatpush1.msra.mxu0 %v268
      %1092 = vmatprep.subr.mxu0 0.0
      %1093 = vmatpush1.msra.mxu0 %v269
      %1094 = vmatprep.subr.mxu0 0.0
      %1095 = vmatpush1.msra.mxu0 %v270
      %1096 = vmatprep.subr.mxu0 0.0
      %1097 = vmatpush1.msra.mxu0 0.0
      %1098 = vmatprep.subr.mxu0 0.0
      %1099 = vmatpush1.msra.mxu0 0.0
      %1100 = vmatprep.subr.mxu0 0.0
      %1101 = vmatpush1.msra.mxu0 0.0
      %1102 = vmatprep.subr.mxu0 0.0
      %1103 = vmatpush1.msra.mxu0 0.0
      %1104 = vmatprep.subr.mxu0 0.0
      %1105 = vmatpush1.msra.mxu0 0.0
      %1106 = vmatprep.subr.mxu0 0.0
      %1107 = vmatpush1.msra.mxu0 0.0
      %1108 = vmatprep.subr.mxu0 0.0
      %1109 = vmatpush1.msra.mxu0 0.0
      %1110 = vmatprep.subr.mxu0 0.0
      %1111 = vmatpush1.msra.mxu0 0.0
      %1112 = vmatprep.subr.mxu0 0.0
      %1113 = vmatpush1.msra.mxu0 0.0
      %1114 = vmatprep.subr.mxu0 0.0
      %1115 = vmatpush1.msra.mxu0 0.0
      %1116 = vmatprep.subr.mxu0 0.0
      %1117 = vmatpush1.msra.mxu0 0.0
      %1118 = vmatprep.subr.mxu0 0.0
      %1119 = vmatpush1.msra.mxu0 0.0
      %1120 = vmatprep.subr.mxu0 0.0
      %1121 = vmatpush1.msra.mxu0 0.0
      %1122 = vmatprep.subr.mxu0 0.0
      %1123 = vmatpush1.msra.mxu0 0.0
      %1124 = vmatprep.subr.mxu0 0.0
      %1125 = vmatpush1.msra.mxu0 0.0
      %1126 = vmatprep.subr.mxu0 0.0
      %1127 = vmatpush1.msra.mxu0 0.0
      %1128 = vmatprep.subr.mxu0 0.0
      %1129 = vmatpush1.msra.mxu0 0.0
      %1130 = vmatprep.subr.mxu0 0.0
      %1131 = vmatpush1.msra.mxu0 0.0
      %1132 = vmatprep.subr.mxu0 0.0
      %1133 = vmatpush1.msra.mxu0 0.0
      %1134 = vmatprep.subr.mxu0 0.0
      %1135 = vmatpush1.msra.mxu0 0.0
      %1136 = vmatprep.subr.mxu0 0.0
      %1137 = vmatpush1.msra.mxu0 0.0
      %1138 = vmatprep.subr.mxu0 0.0
      %1139 = vmatpush1.msra.mxu0 0.0
      %1140 = vmatprep.subr.mxu0 0.0
      %1141 = vmatpush1.msra.mxu0 0.0
      %1142 = vmatprep.subr.mxu0 0.0
      %1143 = vmatpush1.msra.mxu0 0.0
      %1144 = vmatprep.subr.mxu0 0.0
      %1145 = vmatpush1.msra.mxu0 0.0
      %1146 = vmatprep.subr.mxu0 0.0
      %1147 = vmatpush1.msra.mxu0 0.0
      %1148 = vmatprep.subr.mxu0 0.0
      %1149 = vmatpush1.msra.mxu0 0.0
      %1150 = vmatprep.subr.mxu0 0.0
      %1151 = vmatpush1.msra.mxu0 0.0
      %1152 = vmatprep.mubr.f32.mxu0 0.0
      %1153 = vmatmul.mubr.f32.gmra.mrb[0].mxu0 %v1086
      %v1154 = vpop.f32.mrb[0].mxu0
      %v1155 = vadd.f32 %v1084, %v1154
      %v1156 = vpop.f32.mrb[0].mxu0
      %1157 = vdwg.mxu0
      %v1158 = vadd.f32 %v253, %v1155
      %vm1159 = vcmask 258048
      %v1160 = vsel %vm1159, %v1158, 0.0
      %1161 = vadd.xlane.f32.xlu0 %v1160
      %v1162 = vpop.xlane.xlu0 %1161
      %v1163 = vrcp.pop 32.0
      %v1164 = vmul.f32 %v1162, %v1163
      %v1165 = vsub.f32 %v1158, %v1164
      %v1166 = vmul.f32 %v1165, %v1165
      %v1167 = vsel %vm1159, %v1166, 0.0
      %1168 = vadd.xlane.f32.xlu0 %v1167
      %v1169 = vpop.xlane.xlu0 %1168
      %v1170 = vmul.f32 %v1169, %v1163
      %v1171 = vadd.f32 %v1170, 1e-05
      %v1172 = vrsqrt.pop %v1171
      %v1173 = vmul.f32 %v1165, %v1172
      %v1174 = vlaneseq
      %v1175 = vshrl.u32 %v1174, 7
      %v1176 = vsub.s32 0, %v1175
      %v1177 = vrot.slane %v272, %v1176
      %v1178 = vmul.f32 %v1173, %v1177
      %v1179 = vlaneseq
      %v1180 = vshrl.u32 %v1179, 7
      %v1181 = vsub.s32 0, %v1180
      %v1182 = vrot.slane %v273, %v1181
      %v1183 = vadd.f32 %v1178, %v1182
      %v1184 = vlaneseq
      %v1185 = vshrl.u32 %v1184, 7
      %v1186 = vsub.s32 0, %v1185
      %v1187 = vrot.slane %v278, %v1186
      %v1189 = vsel %vm311, %v1183, 0
      %1191 = vmatprep.subr.mxu0 0.0
      %1192 = vmatpush1.msra.mxu0 %v274
      %1193 = vmatprep.subr.mxu0 0.0
      %1194 = vmatpush1.msra.mxu0 %v275
      %1195 = vmatprep.subr.mxu0 0.0
      %1196 = vmatpush1.msra.mxu0 %v276
      %1197 = vmatprep.subr.mxu0 0.0
      %1198 = vmatpush1.msra.mxu0 %v277
      %1199 = vmatprep.subr.mxu0 0.0
      %1200 = vmatpush1.msra.mxu0 0.0
      %1201 = vmatprep.subr.mxu0 0.0
      %1202 = vmatpush1.msra.mxu0 0.0
      %1203 = vmatprep.subr.mxu0 0.0
      %1204 = vmatpush1.msra.mxu0 0.0
      %1205 = vmatprep.subr.mxu0 0.0
      %1206 = vmatpush1.msra.mxu0 0.0
      %1207 = vmatprep.subr.mxu0 0.0
      %1208 = vmatpush1.msra.mxu0 0.0
      %1209 = vmatprep.subr.mxu0 0.0
      %1210 = vmatpush1.msra.mxu0 0.0
      %1211 = vmatprep.subr.mxu0 0.0
      %1212 = vmatpush1.msra.mxu0 0.0
      %1213 = vmatprep.subr.mxu0 0.0
      %1214 = vmatpush1.msra.mxu0 0.0
      %1215 = vmatprep.subr.mxu0 0.0
      %1216 = vmatpush1.msra.mxu0 0.0
      %1217 = vmatprep.subr.mxu0 0.0
      %1218 = vmatpush1.msra.mxu0 0.0
      %1219 = vmatprep.subr.mxu0 0.0
      %1220 = vmatpush1.msra.mxu0 0.0
      %1221 = vmatprep.subr.mxu0 0.0
      %1222 = vmatpush1.msra.mxu0 0.0
      %1223 = vmatprep.subr.mxu0 0.0
      %1224 = vmatpush1.msra.mxu0 0.0
      %1225 = vmatprep.subr.mxu0 0.0
      %1226 = vmatpush1.msra.mxu0 0.0
      %1227 = vmatprep.subr.mxu0 0.0
      %1228 = vmatpush1.msra.mxu0 0.0
      %1229 = vmatprep.subr.mxu0 0.0
      %1230 = vmatpush1.msra.mxu0 0.0
      %1231 = vmatprep.subr.mxu0 0.0
      %1232 = vmatpush1.msra.mxu0 0.0
      %1233 = vmatprep.subr.mxu0 0.0
      %1234 = vmatpush1.msra.mxu0 0.0
      %1235 = vmatprep.subr.mxu0 0.0
      %1236 = vmatpush1.msra.mxu0 0.0
      %1237 = vmatprep.subr.mxu0 0.0
      %1238 = vmatpush1.msra.mxu0 0.0
      %1239 = vmatprep.subr.mxu0 0.0
      %1240 = vmatpush1.msra.mxu0 0.0
      %1241 = vmatprep.subr.mxu0 0.0
      %1242 = vmatpush1.msra.mxu0 0.0
      %1243 = vmatprep.subr.mxu0 0.0
      %1244 = vmatpush1.msra.mxu0 0.0
      %1245 = vmatprep.subr.mxu0 0.0
      %1246 = vmatpush1.msra.mxu0 0.0
      %1247 = vmatprep.subr.mxu0 0.0
      %1248 = vmatpush1.msra.mxu0 0.0
      %1249 = vmatprep.subr.mxu0 0.0
      %1250 = vmatpush1.msra.mxu0 0.0
      %1251 = vmatprep.subr.mxu0 0.0
      %1252 = vmatpush1.msra.mxu0 0.0
      %1253 = vmatprep.subr.mxu0 0.0
      %1254 = vmatpush1.msra.mxu0 0.0
      %1255 = vmatprep.mubr.f32.mxu0 0.0
      %1256 = vmatmul.mubr.f32.gmra.mrb[0].mxu0 %v1189
      %v1257 = vpop.f32.mrb[0].mxu0
      %v1258 = vadd.f32 %v1187, %v1257
      %v1259 = vpop.f32.mrb[0].mxu0
      %1260 = vdwg.mxu0
      %v1261 = vlaneseq
      %v1262 = vshrl.u32 %v1261, 7
      %v1263 = vsub.s32 0, %v1262
      %v1264 = vrot.slane %v283, %v1263
      %v1266 = vsel %vm311, %v254, 0
      %1268 = vmatprep.subr.mxu0 0.0
      %1269 = vmatpush1.msra.mxu0 %v279
      %1270 = vmatprep.subr.mxu0 0.0
      %1271 = vmatpush1.msra.mxu0 %v280
      %1272 = vmatprep.subr.mxu0 0.0
      %1273 = vmatpush1.msra.mxu0 %v281
      %1274 = vmatprep.subr.mxu0 0.0
      %1275 = vmatpush1.msra.mxu0 %v282
      %1276 = vmatprep.subr.mxu0 0.0
      %1277 = vmatpush1.msra.mxu0 0.0
      %1278 = vmatprep.subr.mxu0 0.0
      %1279 = vmatpush1.msra.mxu0 0.0
      %1280 = vmatprep.subr.mxu0 0.0
      %1281 = vmatpush1.msra.mxu0 0.0
      %1282 = vmatprep.subr.mxu0 0.0
      %1283 = vmatpush1.msra.mxu0 0.0
      %1284 = vmatprep.subr.mxu0 0.0
      %1285 = vmatpush1.msra.mxu0 0.0
      %1286 = vmatprep.subr.mxu0 0.0
      %1287 = vmatpush1.msra.mxu0 0.0
      %1288 = vmatprep.subr.mxu0 0.0
      %1289 = vmatpush1.msra.mxu0 0.0
      %1290 = vmatprep.subr.mxu0 0.0
      %1291 = vmatpush1.msra.mxu0 0.0
      %1292 = vmatprep.subr.mxu0 0.0
      %1293 = vmatpush1.msra.mxu0 0.0
      %1294 = vmatprep.subr.mxu0 0.0
      %1295 = vmatpush1.msra.mxu0 0.0
      %1296 = vmatprep.subr.mxu0 0.0
      %1297 = vmatpush1.msra.mxu0 0.0
      %1298 = vmatprep.subr.mxu0 0.0
      %1299 = vmatpush1.msra.mxu0 0.0
      %1300 = vmatprep.subr.mxu0 0.0
      %1301 = vmatpush1.msra.mxu0 0.0
      %1302 = vmatprep.subr.mxu0 0.0
      %1303 = vmatpush1.msra.mxu0 0.0
      %1304 = vmatprep.subr.mxu0 0.0
      %1305 = vmatpush1.msra.mxu0 0.0
      %1306 = vmatprep.subr.mxu0 0.0
      %1307 = vmatpush1.msra.mxu0 0.0
      %1308 = vmatprep.subr.mxu0 0.0
      %1309 = vmatpush1.msra.mxu0 0.0
      %1310 = vmatprep.subr.mxu0 0.0
      %1311 = vmatpush1.msra.mxu0 0.0
      %1312 = vmatprep.subr.mxu0 0.0
      %1313 = vmatpush1.msra.mxu0 0.0
      %1314 = vmatprep.subr.mxu0 0.0
      %1315 = vmatpush1.msra.mxu0 0.0
      %1316 = vmatprep.subr.mxu0 0.0
      %1317 = vmatpush1.msra.mxu0 0.0
      %1318 = vmatprep.subr.mxu0 0.0
      %1319 = vmatpush1.msra.mxu0 0.0
      %1320 = vmatprep.subr.mxu0 0.0
      %1321 = vmatpush1.msra.mxu0 0.0
      %1322 = vmatprep.subr.mxu0 0.0
      %1323 = vmatpush1.msra.mxu0 0.0
      %1324 = vmatprep.subr.mxu0 0.0
      %1325 = vmatpush1.msra.mxu0 0.0
      %1326 = vmatprep.subr.mxu0 0.0
      %1327 = vmatpush1.msra.mxu0 0.0
      %1328 = vmatprep.subr.mxu0 0.0
      %1329 = vmatpush1.msra.mxu0 0.0
      %1330 = vmatprep.subr.mxu0 0.0
      %1331 = vmatpush1.msra.mxu0 0.0
      %1332 = vmatprep.mubr.f32.mxu0 0.0
      %1333 = vmatmul.mubr.f32.gmra.mrb[0].mxu0 %v1266
      %v1334 = vpop.f32.mrb[0].mxu0
      %v1335 = vadd.f32 %v1264, %v1334
      %v1336 = vpop.f32.mrb[0].mxu0
      %1337 = vdwg.mxu0
      %v1339 = vsel %vm388, %v1258, 0
      %v1342 = vsel %vm388, %v1335, 0
      %1344 = vmatprep.subr.mxu0 0.0
      %1345 = vmatpush1.xpose.msra.mxu0 %v1342
      %1346 = vmatprep.subr.mxu0 0.0
      %1347 = vmatpush1.xpose.msra.mxu0 0.0
      %1348 = vmatprep.subr.mxu0 0.0
      %1349 = vmatpush1.xpose.msra.mxu0 0.0
      %1350 = vmatprep.subr.mxu0 0.0
      %1351 = vmatpush1.xpose.msra.mxu0 0.0
      %1352 = vmatprep.subr.mxu0 0.0
      %1353 = vmatpush1.xpose.msra.mxu0 0.0
      %1354 = vmatprep.subr.mxu0 0.0
      %1355 = vmatpush1.xpose.msra.mxu0 0.0
      %1356 = vmatprep.subr.mxu0 0.0
      %1357 = vmatpush1.xpose.msra.mxu0 0.0
      %1358 = vmatprep.subr.mxu0 0.0
      %1359 = vmatpush1.xpose.msra.mxu0 0.0
      %1360 = vmatprep.subr.mxu0 0.0
      %1361 = vmatpush1.xpose.msra.mxu0 0.0
      %1362 = vmatprep.subr.mxu0 0.0
      %1363 = vmatpush1.xpose.msra.mxu0 0.0
      %1364 = vmatprep.subr.mxu0 0.0
      %1365 = vmatpush1.xpose.msra.mxu0 0.0
      %1366 = vmatprep.subr.mxu0 0.0
      %1367 = vmatpush1.xpose.msra.mxu0 0.0
      %1368 = vmatprep.subr.mxu0 0.0
      %1369 = vmatpush1.xpose.msra.mxu0 0.0
      %1370 = vmatprep.subr.mxu0 0.0
      %1371 = vmatpush1.xpose.msra.mxu0 0.0
      %1372 = vmatprep.subr.mxu0 0.0
      %1373 = vmatpush1.xpose.msra.mxu0 0.0
      %1374 = vmatprep.subr.mxu0 0.0
      %1375 = vmatpush1.xpose.msra.mxu0 0.0
      %1376 = vmatprep.subr.mxu0 0.0
      %1377 = vmatpush1.xpose.msra.mxu0 0.0
      %1378 = vmatprep.subr.mxu0 0.0
      %1379 = vmatpush1.xpose.msra.mxu0 0.0
      %1380 = vmatprep.subr.mxu0 0.0
      %1381 = vmatpush1.xpose.msra.mxu0 0.0
      %1382 = vmatprep.subr.mxu0 0.0
      %1383 = vmatpush1.xpose.msra.mxu0 0.0
      %1384 = vmatprep.subr.mxu0 0.0
      %1385 = vmatpush1.xpose.msra.mxu0 0.0
      %1386 = vmatprep.subr.mxu0 0.0
      %1387 = vmatpush1.xpose.msra.mxu0 0.0
      %1388 = vmatprep.subr.mxu0 0.0
      %1389 = vmatpush1.xpose.msra.mxu0 0.0
      %1390 = vmatprep.subr.mxu0 0.0
      %1391 = vmatpush1.xpose.msra.mxu0 0.0
      %1392 = vmatprep.subr.mxu0 0.0
      %1393 = vmatpush1.xpose.msra.mxu0 0.0
      %1394 = vmatprep.subr.mxu0 0.0
      %1395 = vmatpush1.xpose.msra.mxu0 0.0
      %1396 = vmatprep.subr.mxu0 0.0
      %1397 = vmatpush1.xpose.msra.mxu0 0.0
      %1398 = vmatprep.subr.mxu0 0.0
      %1399 = vmatpush1.xpose.msra.mxu0 0.0
      %1400 = vmatprep.subr.mxu0 0.0
      %1401 = vmatpush1.xpose.msra.mxu0 0.0
      %1402 = vmatprep.subr.mxu0 0.0
      %1403 = vmatpush1.xpose.msra.mxu0 0.0
      %1404 = vmatprep.subr.mxu0 0.0
      %1405 = vmatpush1.xpose.msra.mxu0 0.0
      %1406 = vmatprep.subr.mxu0 0.0
      %1407 = vmatpush1.xpose.msra.mxu0 0.0
      %1408 = vmatprep.mubr.f32.mxu0 0.0
      %1409 = vmatmul.mubr.f32.gmra.mrb[0].mxu0 %v1339
      %v1410 = vpop.f32.mrb[0].mxu0
      %v1411 = vadd.f32 0.0, %v1410
      %v1412 = vpop.f32.mrb[0].mxu0
      %1413 = vdwg.mxu0
      %v1414 = vmul.f32 %v1411, 0.35355338
      %v1415 = vsel %vm469, %v1414, -inf
      %1416 = vmax.xlane.f32.xlu0 %v1415
      %v1417 = vpop.xlane.xlu0 %1416
      %v1418 = vsub.f32 %v1414, %v1417
      %v1419 = vmul.f32 %v1418, 1.442695
      %v1420 = vpow.pop %v1419
      %v1421 = vsel %vm469, %v1420, 0.0
      %1422 = vadd.xlane.f32.xlu0 %v1421
      %v1423 = vpop.xlane.xlu0 %1422
      %v1424 = vrcp.pop %v1423
      %v1425 = vmul.f32 %v1420, %v1424
      %1426 = vrot.lane.b32.xlu0 %v1335, 96
      %v1427 = vpop.permute.xlu0 %1426
      %v1429 = vsel %vm483, %v1425, 0
      %v1431 = vsel %vm487, %v1427, 0
      %1433 = vmatprep.subr.mxu0 0.0
      %1434 = vmatpush1.msra.mxu0 %v1431
      %1435 = vmatprep.subr.mxu0 0.0
      %1436 = vmatpush1.msra.mxu0 0.0
      %1437 = vmatprep.subr.mxu0 0.0
      %1438 = vmatpush1.msra.mxu0 0.0
      %1439 = vmatprep.subr.mxu0 0.0
      %1440 = vmatpush1.msra.mxu0 0.0
      %1441 = vmatprep.subr.mxu0 0.0
      %1442 = vmatpush1.msra.mxu0 0.0
      %1443 = vmatprep.subr.mxu0 0.0
      %1444 = vmatpush1.msra.mxu0 0.0
      %1445 = vmatprep.subr.mxu0 0.0
      %1446 = vmatpush1.msra.mxu0 0.0
      %1447 = vmatprep.subr.mxu0 0.0
      %1448 = vmatpush1.msra.mxu0 0.0
      %1449 = vmatprep.subr.mxu0 0.0
      %1450 = vmatpush1.msra.mxu0 0.0
      %1451 = vmatprep.subr.mxu0 0.0
      %1452 = vmatpush1.msra.mxu0 0.0
      %1453 = vmatprep.subr.mxu0 0.0
      %1454 = vmatpush1.msra.mxu0 0.0
      %1455 = vmatprep.subr.mxu0 0.0
      %1456 = vmatpush1.msra.mxu0 0.0
      %1457 = vmatprep.subr.mxu0 0.0
      %1458 = vmatpush1.msra.mxu0 0.0
      %1459 = vmatprep.subr.mxu0 0.0
      %1460 = vmatpush1.msra.mxu0 0.0
      %1461 = vmatprep.subr.mxu0 0.0
      %1462 = vmatpush1.msra.mxu0 0.0
      %1463 = vmatprep.subr.mxu0 0.0
      %1464 = vmatpush1.msra.mxu0 0.0
      %1465 = vmatprep.subr.mxu0 0.0
      %1466 = vmatpush1.msra.mxu0 0.0
      %1467 = vmatprep.subr.mxu0 0.0
      %1468 = vmatpush1.msra.mxu0 0.0
      %1469 = vmatprep.subr.mxu0 0.0
      %1470 = vmatpush1.msra.mxu0 0.0
      %1471 = vmatprep.subr.mxu0 0.0
      %1472 = vmatpush1.msra.mxu0 0.0
      %1473 = vmatprep.subr.mxu0 0.0
      %1474 = vmatpush1.msra.mxu0 0.0
      %1475 = vmatprep.subr.mxu0 0.0
      %1476 = vmatpush1.msra.mxu0 0.0
      %1477 = vmatprep.subr.mxu0 0.0
      %1478 = vmatpush1.msra.mxu0 0.0
      %1479 = vmatprep.subr.mxu0 0.0
      %1480 = vmatpush1.msra.mxu0 0.0
      %1481 = vmatprep.subr.mxu0 0.0
      %1482 = vmatpush1.msra.mxu0 0.0
      %1483 = vmatprep.subr.mxu0 0.0
      %1484 = vmatpush1.msra.mxu0 0.0
      %1485 = vmatprep.subr.mxu0 0.0
      %1486 = vmatpush1.msra.mxu0 0.0
      %1487 = vmatprep.subr.mxu0 0.0
      %1488 = vmatpush1.msra.mxu0 0.0
      %1489 = vmatprep.subr.mxu0 0.0
      %1490 = vmatpush1.msra.mxu0 0.0
      %1491 = vmatprep.subr.mxu0 0.0
      %1492 = vmatpush1.msra.mxu0 0.0
      %1493 = vmatprep.subr.mxu0 0.0
      %1494 = vmatpush1.msra.mxu0 0.0
      %1495 = vmatprep.subr.mxu0 0.0
      %1496 = vmatpush1.msra.mxu0 0.0
      %1497 = vmatprep.mubr.f32.mxu0 0.0
      %1498 = vmatmul.mubr.f32.gmra.mrb[0].mxu0 %v1429
      %v1499 = vpop.f32.mrb[0].mxu0
      %v1500 = vadd.f32 0.0, %v1499
      %v1501 = vpop.f32.mrb[0].mxu0
      %1502 = vdwg.mxu0
      %1503 = vrot.lane.b32.xlu0 %v1258, 120
      %v1504 = vpop.permute.xlu0 %1503
      %1505 = vrot.lane.b32.xlu0 %v1335, 120
      %v1506 = vpop.permute.xlu0 %1505
      %v1507 = vsel %vm388, %v1504, 0
      %v1509 = vsel %vm388, %v1506, 0
      %1511 = vmatprep.subr.mxu0 0.0
      %1512 = vmatpush1.xpose.msra.mxu0 %v1509
      %1513 = vmatprep.subr.mxu0 0.0
      %1514 = vmatpush1.xpose.msra.mxu0 0.0
      %1515 = vmatprep.subr.mxu0 0.0
      %1516 = vmatpush1.xpose.msra.mxu0 0.0
      %1517 = vmatprep.subr.mxu0 0.0
      %1518 = vmatpush1.xpose.msra.mxu0 0.0
      %1519 = vmatprep.subr.mxu0 0.0
      %1520 = vmatpush1.xpose.msra.mxu0 0.0
      %1521 = vmatprep.subr.mxu0 0.0
      %1522 = vmatpush1.xpose.msra.mxu0 0.0
      %1523 = vmatprep.subr.mxu0 0.0
      %1524 = vmatpush1.xpose.msra.mxu0 0.0
      %1525 = vmatprep.subr.mxu0 0.0
      %1526 = vmatpush1.xpose.msra.mxu0 0.0
      %1527 = vmatprep.subr.mxu0 0.0
      %1528 = vmatpush1.xpose.msra.mxu0 0.0
      %1529 = vmatprep.subr.mxu0 0.0
      %1530 = vmatpush1.xpose.msra.mxu0 0.0
      %1531 = vmatprep.subr.mxu0 0.0
      %1532 = vmatpush1.xpose.msra.mxu0 0.0
      %1533 = vmatprep.subr.mxu0 0.0
      %1534 = vmatpush1.xpose.msra.mxu0 0.0
      %1535 = vmatprep.subr.mxu0 0.0
      %1536 = vmatpush1.xpose.msra.mxu0 0.0
      %1537 = vmatprep.subr.mxu0 0.0
      %1538 = vmatpush1.xpose.msra.mxu0 0.0
      %1539 = vmatprep.subr.mxu0 0.0
      %1540 = vmatpush1.xpose.msra.mxu0 0.0
      %1541 = vmatprep.subr.mxu0 0.0
      %1542 = vmatpush1.xpose.msra.mxu0 0.0
      %1543 = vmatprep.subr.mxu0 0.0
      %1544 = vmatpush1.xpose.msra.mxu0 0.0
      %1545 = vmatprep.subr.mxu0 0.0
      %1546 = vmatpush1.xpose.msra.mxu0 0.0
      %1547 = vmatprep.subr.mxu0 0.0
      %1548 = vmatpush1.xpose.msra.mxu0 0.0
      %1549 = vmatprep.subr.mxu0 0.0
      %1550 = vmatpush1.xpose.msra.mxu0 0.0
      %1551 = vmatprep.subr.mxu0 0.0
      %1552 = vmatpush1.xpose.msra.mxu0 0.0
      %1553 = vmatprep.subr.mxu0 0.0
      %1554 = vmatpush1.xpose.msra.mxu0 0.0
      %1555 = vmatprep.subr.mxu0 0.0
      %1556 = vmatpush1.xpose.msra.mxu0 0.0
      %1557 = vmatprep.subr.mxu0 0.0
      %1558 = vmatpush1.xpose.msra.mxu0 0.0
      %1559 = vmatprep.subr.mxu0 0.0
      %1560 = vmatpush1.xpose.msra.mxu0 0.0
      %1561 = vmatprep.subr.mxu0 0.0
      %1562 = vmatpush1.xpose.msra.mxu0 0.0
      %1563 = vmatprep.subr.mxu0 0.0
      %1564 = vmatpush1.xpose.msra.mxu0 0.0
      %1565 = vmatprep.subr.mxu0 0.0
      %1566 = vmatpush1.xpose.msra.mxu0 0.0
      %1567 = vmatprep.subr.mxu0 0.0
      %1568 = vmatpush1.xpose.msra.mxu0 0.0
      %1569 = vmatprep.subr.mxu0 0.0
      %1570 = vmatpush1.xpose.msra.mxu0 0.0
      %1571 = vmatprep.subr.mxu0 0.0
      %1572 = vmatpush1.xpose.msra.mxu0 0.0
      %1573 = vmatprep.subr.mxu0 0.0
      %1574 = vmatpush1.xpose.msra.mxu0 0.0
      %1575 = vmatprep.mubr.f32.mxu0 0.0
      %1576 = vmatmul.mubr.f32.gmra.mrb[0].mxu0 %v1507
      %v1577 = vpop.f32.mrb[0].mxu0
      %v1578 = vadd.f32 0.0, %v1577
      %v1579 = vpop.f32.mrb[0].mxu0
      %1580 = vdwg.mxu0
      %v1581 = vmul.f32 %v1578, 0.35355338
      %v1582 = vsel %vm469, %v1581, -inf
      %1583 = vmax.xlane.f32.xlu0 %v1582
      %v1584 = vpop.xlane.xlu0 %1583
      %v1585 = vsub.f32 %v1581, %v1584
      %v1586 = vmul.f32 %v1585, 1.442695
      %v1587 = vpow.pop %v1586
      %v1588 = vsel %vm469, %v1587, 0.0
      %1589 = vadd.xlane.f32.xlu0 %v1588
      %v1590 = vpop.xlane.xlu0 %1589
      %v1591 = vrcp.pop %v1590
      %v1592 = vmul.f32 %v1587, %v1591
      %1593 = vrot.lane.b32.xlu0 %v1335, 88
      %v1594 = vpop.permute.xlu0 %1593
      %v1596 = vsel %vm483, %v1592, 0
      %v1598 = vsel %vm487, %v1594, 0
      %1600 = vmatprep.subr.mxu0 0.0
      %1601 = vmatpush1.msra.mxu0 %v1598
      %1602 = vmatprep.subr.mxu0 0.0
      %1603 = vmatpush1.msra.mxu0 0.0
      %1604 = vmatprep.subr.mxu0 0.0
      %1605 = vmatpush1.msra.mxu0 0.0
      %1606 = vmatprep.subr.mxu0 0.0
      %1607 = vmatpush1.msra.mxu0 0.0
      %1608 = vmatprep.subr.mxu0 0.0
      %1609 = vmatpush1.msra.mxu0 0.0
      %1610 = vmatprep.subr.mxu0 0.0
      %1611 = vmatpush1.msra.mxu0 0.0
      %1612 = vmatprep.subr.mxu0 0.0
      %1613 = vmatpush1.msra.mxu0 0.0
      %1614 = vmatprep.subr.mxu0 0.0
      %1615 = vmatpush1.msra.mxu0 0.0
      %1616 = vmatprep.subr.mxu0 0.0
      %1617 = vmatpush1.msra.mxu0 0.0
      %1618 = vmatprep.subr.mxu0 0.0
      %1619 = vmatpush1.msra.mxu0 0.0
      %1620 = vmatprep.subr.mxu0 0.0
      %1621 = vmatpush1.msra.mxu0 0.0
      %1622 = vmatprep.subr.mxu0 0.0
      %1623 = vmatpush1.msra.mxu0 0.0
      %1624 = vmatprep.subr.mxu0 0.0
      %1625 = vmatpush1.msra.mxu0 0.0
      %1626 = vmatprep.subr.mxu0 0.0
      %1627 = vmatpush1.msra.mxu0 0.0
      %1628 = vmatprep.subr.mxu0 0.0
      %1629 = vmatpush1.msra.mxu0 0.0
      %1630 = vmatprep.subr.mxu0 0.0
      %1631 = vmatpush1.msra.mxu0 0.0
      %1632 = vmatprep.subr.mxu0 0.0
      %1633 = vmatpush1.msra.mxu0 0.0
      %1634 = vmatprep.subr.mxu0 0.0
      %1635 = vmatpush1.msra.mxu0 0.0
      %1636 = vmatprep.subr.mxu0 0.0
      %1637 = vmatpush1.msra.mxu0 0.0
      %1638 = vmatprep.subr.mxu0 0.0
      %1639 = vmatpush1.msra.mxu0 0.0
      %1640 = vmatprep.subr.mxu0 0.0
      %1641 = vmatpush1.msra.mxu0 0.0
      %1642 = vmatprep.subr.mxu0 0.0
      %1643 = vmatpush1.msra.mxu0 0.0
      %1644 = vmatprep.subr.mxu0 0.0
      %1645 = vmatpush1.msra.mxu0 0.0
      %1646 = vmatprep.subr.mxu0 0.0
      %1647 = vmatpush1.msra.mxu0 0.0
      %1648 = vmatprep.subr.mxu0 0.0
      %1649 = vmatpush1.msra.mxu0 0.0
      %1650 = vmatprep.subr.mxu0 0.0
      %1651 = vmatpush1.msra.mxu0 0.0
      %1652 = vmatprep.subr.mxu0 0.0
      %1653 = vmatpush1.msra.mxu0 0.0
      %1654 = vmatprep.subr.mxu0 0.0
      %1655 = vmatpush1.msra.mxu0 0.0
      %1656 = vmatprep.subr.mxu0 0.0
      %1657 = vmatpush1.msra.mxu0 0.0
      %1658 = vmatprep.subr.mxu0 0.0
      %1659 = vmatpush1.msra.mxu0 0.0
      %1660 = vmatprep.subr.mxu0 0.0
      %1661 = vmatpush1.msra.mxu0 0.0
      %1662 = vmatprep.subr.mxu0 0.0
      %1663 = vmatpush1.msra.mxu0 0.0
      %1664 = vmatprep.mubr.f32.mxu0 0.0
      %1665 = vmatmul.mubr.f32.gmra.mrb[0].mxu0 %v1596
      %v1666 = vpop.f32.mrb[0].mxu0
      %v1667 = vadd.f32 0.0, %v1666
      %v1668 = vpop.f32.mrb[0].mxu0
      %1669 = vdwg.mxu0
      %1670 = vrot.lane.b32.xlu0 %v1258, 112
      %v1671 = vpop.permute.xlu0 %1670
      %1672 = vrot.lane.b32.xlu0 %v1335, 112
      %v1673 = vpop.permute.xlu0 %1672
      %v1674 = vsel %vm388, %v1671, 0
      %v1676 = vsel %vm388, %v1673, 0
      %1678 = vmatprep.subr.mxu0 0.0
      %1679 = vmatpush1.xpose.msra.mxu0 %v1676
      %1680 = vmatprep.subr.mxu0 0.0
      %1681 = vmatpush1.xpose.msra.mxu0 0.0
      %1682 = vmatprep.subr.mxu0 0.0
      %1683 = vmatpush1.xpose.msra.mxu0 0.0
      %1684 = vmatprep.subr.mxu0 0.0
      %1685 = vmatpush1.xpose.msra.mxu0 0.0
      %1686 = vmatprep.subr.mxu0 0.0
      %1687 = vmatpush1.xpose.msra.mxu0 0.0
      %1688 = vmatprep.subr.mxu0 0.0
      %1689 = vmatpush1.xpose.msra.mxu0 0.0
      %1690 = vmatprep.subr.mxu0 0.0
      %1691 = vmatpush1.xpose.msra.mxu0 0.0
      %1692 = vmatprep.subr.mxu0 0.0
      %1693 = vmatpush1.xpose.msra.mxu0 0.0
      %1694 = vmatprep.subr.mxu0 0.0
      %1695 = vmatpush1.xpose.msra.mxu0 0.0
      %1696 = vmatprep.subr.mxu0 0.0
      %1697 = vmatpush1.xpose.msra.mxu0 0.0
      %1698 = vmatprep.subr.mxu0 0.0
      %1699 = vmatpush1.xpose.msra.mxu0 0.0
      %1700 = vmatprep.subr.mxu0 0.0
      %1701 = vmatpush1.xpose.msra.mxu0 0.0
      %1702 = vmatprep.subr.mxu0 0.0
      %1703 = vmatpush1.xpose.msra.mxu0 0.0
      %1704 = vmatprep.subr.mxu0 0.0
      %1705 = vmatpush1.xpose.msra.mxu0 0.0
      %1706 = vmatprep.subr.mxu0 0.0
      %1707 = vmatpush1.xpose.msra.mxu0 0.0
      %1708 = vmatprep.subr.mxu0 0.0
      %1709 = vmatpush1.xpose.msra.mxu0 0.0
      %1710 = vmatprep.subr.mxu0 0.0
      %1711 = vmatpush1.xpose.msra.mxu0 0.0
      %1712 = vmatprep.subr.mxu0 0.0
      %1713 = vmatpush1.xpose.msra.mxu0 0.0
      %1714 = vmatprep.subr.mxu0 0.0
      %1715 = vmatpush1.xpose.msra.mxu0 0.0
      %1716 = vmatprep.subr.mxu0 0.0
      %1717 = vmatpush1.xpose.msra.mxu0 0.0
      %1718 = vmatprep.subr.mxu0 0.0
      %1719 = vmatpush1.xpose.msra.mxu0 0.0
      %1720 = vmatprep.subr.mxu0 0.0
      %1721 = vmatpush1.xpose.msra.mxu0 0.0
      %1722 = vmatprep.subr.mxu0 0.0
      %1723 = vmatpush1.xpose.msra.mxu0 0.0
      %1724 = vmatprep.subr.mxu0 0.0
      %1725 = vmatpush1.xpose.msra.mxu0 0.0
      %1726 = vmatprep.subr.mxu0 0.0
      %1727 = vmatpush1.xpose.msra.mxu0 0.0
      %1728 = vmatprep.subr.mxu0 0.0
      %1729 = vmatpush1.xpose.msra.mxu0 0.0
      %1730 = vmatprep.subr.mxu0 0.0
      %1731 = vmatpush1.xpose.msra.mxu0 0.0
      %1732 = vmatprep.subr.mxu0 0.0
      %1733 = vmatpush1.xpose.msra.mxu0 0.0
      %1734 = vmatprep.subr.mxu0 0.0
      %1735 = vmatpush1.xpose.msra.mxu0 0.0
      %1736 = vmatprep.subr.mxu0 0.0
      %1737 = vmatpush1.xpose.msra.mxu0 0.0
      %1738 = vmatprep.subr.mxu0 0.0
      %1739 = vmatpush1.xpose.msra.mxu0 0.0
      %1740 = vmatprep.subr.mxu0 0.0
      %1741 = vmatpush1.xpose.msra.mxu0 0.0
      %1742 = vmatprep.mubr.f32.mxu0 0.0
      %1743 = vmatmul.mubr.f32.gmra.mrb[0].mxu0 %v1674
      %v1744 = vpop.f32.mrb[0].mxu0
      %v1745 = vadd.f32 0.0, %v1744
      %v1746 = vpop.f32.mrb[0].mxu0
      %1747 = vdwg.mxu0
      %v1748 = vmul.f32 %v1745, 0.35355338
      %v1749 = vsel %vm469, %v1748, -inf
      %1750 = vmax.xlane.f32.xlu0 %v1749
      %v1751 = vpop.xlane.xlu0 %1750
      %v1752 = vsub.f32 %v1748, %v1751
      %v1753 = vmul.f32 %v1752, 1.442695
      %v1754 = vpow.pop %v1753
      %v1755 = vsel %vm469, %v1754, 0.0
      %1756 = vadd.xlane.f32.xlu0 %v1755
      %v1757 = vpop.xlane.xlu0 %1756
      %v1758 = vrcp.pop %v1757
      %v1759 = vmul.f32 %v1754, %v1758
      %1760 = vrot.lane.b32.xlu0 %v1335, 80
      %v1761 = vpop.permute.xlu0 %1760
      %v1763 = vsel %vm483, %v1759, 0
      %v1765 = vsel %vm487, %v1761, 0
      %1767 = vmatprep.subr.mxu0 0.0
      %1768 = vmatpush1.msra.mxu0 %v1765
      %1769 = vmatprep.subr.mxu0 0.0
      %1770 = vmatpush1.msra.mxu0 0.0
      %1771 = vmatprep.subr.mxu0 0.0
      %1772 = vmatpush1.msra.mxu0 0.0
      %1773 = vmatprep.subr.mxu0 0.0
      %1774 = vmatpush1.msra.mxu0 0.0
      %1775 = vmatprep.subr.mxu0 0.0
      %1776 = vmatpush1.msra.mxu0 0.0
      %1777 = vmatprep.subr.mxu0 0.0
      %1778 = vmatpush1.msra.mxu0 0.0
      %1779 = vmatprep.subr.mxu0 0.0
      %1780 = vmatpush1.msra.mxu0 0.0
      %1781 = vmatprep.subr.mxu0 0.0
      %1782 = vmatpush1.msra.mxu0 0.0
      %1783 = vmatprep.subr.mxu0 0.0
      %1784 = vmatpush1.msra.mxu0 0.0
      %1785 = vmatprep.subr.mxu0 0.0
      %1786 = vmatpush1.msra.mxu0 0.0
      %1787 = vmatprep.subr.mxu0 0.0
      %1788 = vmatpush1.msra.mxu0 0.0
      %1789 = vmatprep.subr.mxu0 0.0
      %1790 = vmatpush1.msra.mxu0 0.0
      %1791 = vmatprep.subr.mxu0 0.0
      %1792 = vmatpush1.msra.mxu0 0.0
      %1793 = vmatprep.subr.mxu0 0.0
      %1794 = vmatpush1.msra.mxu0 0.0
      %1795 = vmatprep.subr.mxu0 0.0
      %1796 = vmatpush1.msra.mxu0 0.0
      %1797 = vmatprep.subr.mxu0 0.0
      %1798 = vmatpush1.msra.mxu0 0.0
      %1799 = vmatprep.subr.mxu0 0.0
      %1800 = vmatpush1.msra.mxu0 0.0
      %1801 = vmatprep.subr.mxu0 0.0
      %1802 = vmatpush1.msra.mxu0 0.0
      %1803 = vmatprep.subr.mxu0 0.0
      %1804 = vmatpush1.msra.mxu0 0.0
      %1805 = vmatprep.subr.mxu0 0.0
      %1806 = vmatpush1.msra.mxu0 0.0
      %1807 = vmatprep.subr.mxu0 0.0
      %1808 = vmatpush1.msra.mxu0 0.0
      %1809 = vmatprep.subr.mxu0 0.0
      %1810 = vmatpush1.msra.mxu0 0.0
      %1811 = vmatprep.subr.mxu0 0.0
      %1812 = vmatpush1.msra.mxu0 0.0
      %1813 = vmatprep.subr.mxu0 0.0
      %1814 = vmatpush1.msra.mxu0 0.0
      %1815 = vmatprep.subr.mxu0 0.0
      %1816 = vmatpush1.msra.mxu0 0.0
      %1817 = vmatprep.subr.mxu0 0.0
      %1818 = vmatpush1.msra.mxu0 0.0
      %1819 = vmatprep.subr.mxu0 0.0
      %1820 = vmatpush1.msra.mxu0 0.0
      %1821 = vmatprep.subr.mxu0 0.0
      %1822 = vmatpush1.msra.mxu0 0.0
      %1823 = vmatprep.subr.mxu0 0.0
      %1824 = vmatpush1.msra.mxu0 0.0
      %1825 = vmatprep.subr.mxu0 0.0
      %1826 = vmatpush1.msra.mxu0 0.0
      %1827 = vmatprep.subr.mxu0 0.0
      %1828 = vmatpush1.msra.mxu0 0.0
      %1829 = vmatprep.subr.mxu0 0.0
      %1830 = vmatpush1.msra.mxu0 0.0
      %1831 = vmatprep.mubr.f32.mxu0 0.0
      %1832 = vmatmul.mubr.f32.gmra.mrb[0].mxu0 %v1763
      %v1833 = vpop.f32.mrb[0].mxu0
      %v1834 = vadd.f32 0.0, %v1833
      %v1835 = vpop.f32.mrb[0].mxu0
      %1836 = vdwg.mxu0
      %1837 = vrot.lane.b32.xlu0 %v1258, 104
      %v1838 = vpop.permute.xlu0 %1837
      %1839 = vrot.lane.b32.xlu0 %v1335, 104
      %v1840 = vpop.permute.xlu0 %1839
      %v1841 = vsel %vm388, %v1838, 0
      %v1843 = vsel %vm388, %v1840, 0
      %1845 = vmatprep.subr.mxu0 0.0
      %1846 = vmatpush1.xpose.msra.mxu0 %v1843
      %1847 = vmatprep.subr.mxu0 0.0
      %1848 = vmatpush1.xpose.msra.mxu0 0.0
      %1849 = vmatprep.subr.mxu0 0.0
      %1850 = vmatpush1.xpose.msra.mxu0 0.0
      %1851 = vmatprep.subr.mxu0 0.0
      %1852 = vmatpush1.xpose.msra.mxu0 0.0
      %1853 = vmatprep.subr.mxu0 0.0
      %1854 = vmatpush1.xpose.msra.mxu0 0.0
      %1855 = vmatprep.subr.mxu0 0.0
      %1856 = vmatpush1.xpose.msra.mxu0 0.0
      %1857 = vmatprep.subr.mxu0 0.0
      %1858 = vmatpush1.xpose.msra.mxu0 0.0
      %1859 = vmatprep.subr.mxu0 0.0
      %1860 = vmatpush1.xpose.msra.mxu0 0.0
      %1861 = vmatprep.subr.mxu0 0.0
      %1862 = vmatpush1.xpose.msra.mxu0 0.0
      %1863 = vmatprep.subr.mxu0 0.0
      %1864 = vmatpush1.xpose.msra.mxu0 0.0
      %1865 = vmatprep.subr.mxu0 0.0
      %1866 = vmatpush1.xpose.msra.mxu0 0.0
      %1867 = vmatprep.subr.mxu0 0.0
      %1868 = vmatpush1.xpose.msra.mxu0 0.0
      %1869 = vmatprep.subr.mxu0 0.0
      %1870 = vmatpush1.xpose.msra.mxu0 0.0
      %1871 = vmatprep.subr.mxu0 0.0
      %1872 = vmatpush1.xpose.msra.mxu0 0.0
      %1873 = vmatprep.subr.mxu0 0.0
      %1874 = vmatpush1.xpose.msra.mxu0 0.0
      %1875 = vmatprep.subr.mxu0 0.0
      %1876 = vmatpush1.xpose.msra.mxu0 0.0
      %1877 = vmatprep.subr.mxu0 0.0
      %1878 = vmatpush1.xpose.msra.mxu0 0.0
      %1879 = vmatprep.subr.mxu0 0.0
      %1880 = vmatpush1.xpose.msra.mxu0 0.0
      %1881 = vmatprep.subr.mxu0 0.0
      %1882 = vmatpush1.xpose.msra.mxu0 0.0
      %1883 = vmatprep.subr.mxu0 0.0
      %1884 = vmatpush1.xpose.msra.mxu0 0.0
      %1885 = vmatprep.subr.mxu0 0.0
      %1886 = vmatpush1.xpose.msra.mxu0 0.0
      %1887 = vmatprep.subr.mxu0 0.0
      %1888 = vmatpush1.xpose.msra.mxu0 0.0
      %1889 = vmatprep.subr.mxu0 0.0
      %1890 = vmatpush1.xpose.msra.mxu0 0.0
      %1891 = vmatprep.subr.mxu0 0.0
      %1892 = vmatpush1.xpose.msra.mxu0 0.0
      %1893 = vmatprep.subr.mxu0 0.0
      %1894 = vmatpush1.xpose.msra.mxu0 0.0
      %1895 = vmatprep.subr.mxu0 0.0
      %1896 = vmatpush1.xpose.msra.mxu0 0.0
      %1897 = vmatprep.subr.mxu0 0.0
      %1898 = vmatpush1.xpose.msra.mxu0 0.0
      %1899 = vmatprep.subr.mxu0 0.0
      %1900 = vmatpush1.xpose.msra.mxu0 0.0
      %1901 = vmatprep.subr.mxu0 0.0
      %1902 = vmatpush1.xpose.msra.mxu0 0.0
      %1903 = vmatprep.subr.mxu0 0.0
      %1904 = vmatpush1.xpose.msra.mxu0 0.0
      %1905 = vmatprep.subr.mxu0 0.0
      %1906 = vmatpush1.xpose.msra.mxu0 0.0
      %1907 = vmatprep.subr.mxu0 0.0
      %1908 = vmatpush1.xpose.msra.mxu0 0.0
      %1909 = vmatprep.mubr.f32.mxu0 0.0
      %1910 = vmatmul.mubr.f32.gmra.mrb[0].mxu0 %v1841
      %v1911 = vpop.f32.mrb[0].mxu0
      %v1912 = vadd.f32 0.0, %v1911
      %v1913 = vpop.f32.mrb[0].mxu0
      %1914 = vdwg.mxu0
      %v1915 = vmul.f32 %v1912, 0.35355338
      %v1916 = vsel %vm469, %v1915, -inf
      %1917 = vmax.xlane.f32.xlu0 %v1916
      %v1918 = vpop.xlane.xlu0 %1917
      %v1919 = vsub.f32 %v1915, %v1918
      %v1920 = vmul.f32 %v1919, 1.442695
      %v1921 = vpow.pop %v1920
      %v1922 = vsel %vm469, %v1921, 0.0
      %1923 = vadd.xlane.f32.xlu0 %v1922
      %v1924 = vpop.xlane.xlu0 %1923
      %v1925 = vrcp.pop %v1924
      %v1926 = vmul.f32 %v1921, %v1925
      %1927 = vrot.lane.b32.xlu0 %v1335, 72
      %v1928 = vpop.permute.xlu0 %1927
      %v1930 = vsel %vm483, %v1926, 0
      %v1932 = vsel %vm487, %v1928, 0
      %1934 = vmatprep.subr.mxu0 0.0
      %1935 = vmatpush1.msra.mxu0 %v1932
      %1936 = vmatprep.subr.mxu0 0.0
      %1937 = vmatpush1.msra.mxu0 0.0
      %1938 = vmatprep.subr.mxu0 0.0
      %1939 = vmatpush1.msra.mxu0 0.0
      %1940 = vmatprep.subr.mxu0 0.0
      %1941 = vmatpush1.msra.mxu0 0.0
      %1942 = vmatprep.subr.mxu0 0.0
      %1943 = vmatpush1.msra.mxu0 0.0
      %1944 = vmatprep.subr.mxu0 0.0
      %1945 = vmatpush1.msra.mxu0 0.0
      %1946 = vmatprep.subr.mxu0 0.0
      %1947 = vmatpush1.msra.mxu0 0.0
      %1948 = vmatprep.subr.mxu0 0.0
      %1949 = vmatpush1.msra.mxu0 0.0
      %1950 = vmatprep.subr.mxu0 0.0
      %1951 = vmatpush1.msra.mxu0 0.0
      %1952 = vmatprep.subr.mxu0 0.0
      %1953 = vmatpush1.msra.mxu0 0.0
      %1954 = vmatprep.subr.mxu0 0.0
      %1955 = vmatpush1.msra.mxu0 0.0
      %1956 = vmatprep.subr.mxu0 0.0
      %1957 = vmatpush1.msra.mxu0 0.0
      %1958 = vmatprep.subr.mxu0 0.0
      %1959 = vmatpush1.msra.mxu0 0.0
      %1960 = vmatprep.subr.mxu0 0.0
      %1961 = vmatpush1.msra.mxu0 0.0
      %1962 = vmatprep.subr.mxu0 0.0
      %1963 = vmatpush1.msra.mxu0 0.0
      %1964 = vmatprep.subr.mxu0 0.0
      %1965 = vmatpush1.msra.mxu0 0.0
      %1966 = vmatprep.subr.mxu0 0.0
      %1967 = vmatpush1.msra.mxu0 0.0
      %1968 = vmatprep.subr.mxu0 0.0
      %1969 = vmatpush1.msra.mxu0 0.0
      %1970 = vmatprep.subr.mxu0 0.0
      %1971 = vmatpush1.msra.mxu0 0.0
      %1972 = vmatprep.subr.mxu0 0.0
      %1973 = vmatpush1.msra.mxu0 0.0
      %1974 = vmatprep.subr.mxu0 0.0
      %1975 = vmatpush1.msra.mxu0 0.0
      %1976 = vmatprep.subr.mxu0 0.0
      %1977 = vmatpush1.msra.mxu0 0.0
      %1978 = vmatprep.subr.mxu0 0.0
      %1979 = vmatpush1.msra.mxu0 0.0
      %1980 = vmatprep.subr.mxu0 0.0
      %1981 = vmatpush1.msra.mxu0 0.0
      %1982 = vmatprep.subr.mxu0 0.0
      %1983 = vmatpush1.msra.mxu0 0.0
      %1984 = vmatprep.subr.mxu0 0.0
      %1985 = vmatpush1.msra.mxu0 0.0
      %1986 = vmatprep.subr.mxu0 0.0
      %1987 = vmatpush1.msra.mxu0 0.0
      %1988 = vmatprep.subr.mxu0 0.0
      %1989 = vmatpush1.msra.mxu0 0.0
      %1990 = vmatprep.subr.mxu0 0.0
      %1991 = vmatpush1.msra.mxu0 0.0
      %1992 = vmatprep.subr.mxu0 0.0
      %1993 = vmatpush1.msra.mxu0 0.0
      %1994 = vmatprep.subr.mxu0 0.0
      %1995 = vmatpush1.msra.mxu0 0.0
      %1996 = vmatprep.subr.mxu0 0.0
      %1997 = vmatpush1.msra.mxu0 0.0
      %1998 = vmatprep.mubr.f32.mxu0 0.0
      %1999 = vmatmul.mubr.f32.gmra.mrb[0].mxu0 %v1930
      %v2000 = vpop.f32.mrb[0].mxu0
      %v2001 = vadd.f32 0.0, %v2000
      %v2002 = vpop.f32.mrb[0].mxu0
      %2003 = vdwg.mxu0
      %2005 = vrot.lane.b32.xlu0 %v1667, 8
      %v2006 = vpop.permute.xlu0 %2005
      %2009 = vrot.lane.b32.xlu0 %v1834, 16
      %v2010 = vpop.permute.xlu0 %2009
      %2013 = vrot.lane.b32.xlu0 %v2001, 24
      %v2014 = vpop.permute.xlu0 %2013
      %v2016 = vsel %vm388, %v1500, %v2006
      %v2017 = vsel %vm1077, %v2016, %v2010
      %v2018 = vsel %vm1079, %v2017, %v2014
      %v2019 = vlaneseq
      %v2020 = vshrl.u32 %v2019, 7
      %v2021 = vsub.s32 0, %v2020
      %v2022 = vrot.slane %v288, %v2021
      %v2024 = vsel %vm311, %v2018, 0
      %2026 = vmatprep.subr.mxu0 0.0
      %2027 = vmatpush1.msra.mxu0 %v284
      %2028 = vmatprep.subr.mxu0 0.0
      %2029 = vmatpush1.msra.mxu0 %v285
      %2030 = vmatprep.subr.mxu0 0.0
      %2031 = vmatpush1.msra.mxu0 %v286
      %2032 = vmatprep.subr.mxu0 0.0
      %2033 = vmatpush1.msra.mxu0 %v287
      %2034 = vmatprep.subr.mxu0 0.0
      %2035 = vmatpush1.msra.mxu0 0.0
      %2036 = vmatprep.subr.mxu0 0.0
      %2037 = vmatpush1.msra.mxu0 0.0
      %2038 = vmatprep.subr.mxu0 0.0
      %2039 = vmatpush1.msra.mxu0 0.0
      %2040 = vmatprep.subr.mxu0 0.0
      %2041 = vmatpush1.msra.mxu0 0.0
      %2042 = vmatprep.subr.mxu0 0.0
      %2043 = vmatpush1.msra.mxu0 0.0
      %2044 = vmatprep.subr.mxu0 0.0
      %2045 = vmatpush1.msra.mxu0 0.0
      %2046 = vmatprep.subr.mxu0 0.0
      %2047 = vmatpush1.msra.mxu0 0.0
      %2048 = vmatprep.subr.mxu0 0.0
      %2049 = vmatpush1.msra.mxu0 0.0
      %2050 = vmatprep.subr.mxu0 0.0
      %2051 = vmatpush1.msra.mxu0 0.0
      %2052 = vmatprep.subr.mxu0 0.0
      %2053 = vmatpush1.msra.mxu0 0.0
      %2054 = vmatprep.subr.mxu0 0.0
      %2055 = vmatpush1.msra.mxu0 0.0
      %2056 = vmatprep.subr.mxu0 0.0
      %2057 = vmatpush1.msra.mxu0 0.0
      %2058 = vmatprep.subr.mxu0 0.0
      %2059 = vmatpush1.msra.mxu0 0.0
      %2060 = vmatprep.subr.mxu0 0.0
      %2061 = vmatpush1.msra.mxu0 0.0
      %2062 = vmatprep.subr.mxu0 0.0
      %2063 = vmatpush1.msra.mxu0 0.0
      %2064 = vmatprep.subr.mxu0 0.0
      %2065 = vmatpush1.msra.mxu0 0.0
      %2066 = vmatprep.subr.mxu0 0.0
      %2067 = vmatpush1.msra.mxu0 0.0
      %2068 = vmatprep.subr.mxu0 0.0
      %2069 = vmatpush1.msra.mxu0 0.0
      %2070 = vmatprep.subr.mxu0 0.0
      %2071 = vmatpush1.msra.mxu0 0.0
      %2072 = vmatprep.subr.mxu0 0.0
      %2073 = vmatpush1.msra.mxu0 0.0
      %2074 = vmatprep.subr.mxu0 0.0
      %2075 = vmatpush1.msra.mxu0 0.0
      %2076 = vmatprep.subr.mxu0 0.0
      %2077 = vmatpush1.msra.mxu0 0.0
      %2078 = vmatprep.subr.mxu0 0.0
      %2079 = vmatpush1.msra.mxu0 0.0
      %2080 = vmatprep.subr.mxu0 0.0
      %2081 = vmatpush1.msra.mxu0 0.0
      %2082 = vmatprep.subr.mxu0 0.0
      %2083 = vmatpush1.msra.mxu0 0.0
      %2084 = vmatprep.subr.mxu0 0.0
      %2085 = vmatpush1.msra.mxu0 0.0
      %2086 = vmatprep.subr.mxu0 0.0
      %2087 = vmatpush1.msra.mxu0 0.0
      %2088 = vmatprep.subr.mxu0 0.0
      %2089 = vmatpush1.msra.mxu0 0.0
      %2090 = vmatprep.mubr.f32.mxu0 0.0
      %2091 = vmatmul.mubr.f32.gmra.mrb[0].mxu0 %v2024
      %v2092 = vpop.f32.mrb[0].mxu0
      %v2093 = vadd.f32 %v2022, %v2092
      %v2094 = vpop.f32.mrb[0].mxu0
      %2095 = vdwg.mxu0
      %v2096 = vadd.f32 %v1183, %v2093
      %v2097 = vsel %vm1159, %v2096, 0.0
      %2098 = vadd.xlane.f32.xlu0 %v2097
      %v2099 = vpop.xlane.xlu0 %2098
      %v2100 = vmul.f32 %v2099, %v1163
      %v2101 = vsub.f32 %v2096, %v2100
      %v2102 = vmul.f32 %v2101, %v2101
      %v2103 = vsel %vm1159, %v2102, 0.0
      %2104 = vadd.xlane.f32.xlu0 %v2103
      %v2105 = vpop.xlane.xlu0 %2104
      %v2106 = vmul.f32 %v2105, %v1163
      %v2107 = vadd.f32 %v2106, 1e-05
      %v2108 = vrsqrt.pop %v2107
      %v2109 = vmul.f32 %v2101, %v2108
      %v2110 = vlaneseq
      %v2111 = vshrl.u32 %v2110, 7
      %v2112 = vsub.s32 0, %v2111
      %v2113 = vrot.slane %v289, %v2112
      %v2114 = vmul.f32 %v2109, %v2113
      %v2115 = vlaneseq
      %v2116 = vshrl.u32 %v2115, 7
      %v2117 = vsub.s32 0, %v2116
      %v2118 = vrot.slane %v290, %v2117
      %v2119 = vadd.f32 %v2114, %v2118
      %v2120 = vlaneseq
      %v2121 = vshrl.u32 %v2120, 7
      %v2122 = vsub.s32 0, %v2121
      %v2123 = vrot.slane %v295, %v2122
      %v2125 = vsel %vm311, %v2119, 0
      %2127 = vmatprep.subr.mxu0 0.0
      %2128 = vmatpush1.msra.mxu0 %v291
      %2129 = vmatprep.subr.mxu0 0.0
      %2130 = vmatpush1.msra.mxu0 %v292
      %2131 = vmatprep.subr.mxu0 0.0
      %2132 = vmatpush1.msra.mxu0 %v293
      %2133 = vmatprep.subr.mxu0 0.0
      %2134 = vmatpush1.msra.mxu0 %v294
      %2135 = vmatprep.subr.mxu0 0.0
      %2136 = vmatpush1.msra.mxu0 0.0
      %2137 = vmatprep.subr.mxu0 0.0
      %2138 = vmatpush1.msra.mxu0 0.0
      %2139 = vmatprep.subr.mxu0 0.0
      %2140 = vmatpush1.msra.mxu0 0.0
      %2141 = vmatprep.subr.mxu0 0.0
      %2142 = vmatpush1.msra.mxu0 0.0
      %2143 = vmatprep.subr.mxu0 0.0
      %2144 = vmatpush1.msra.mxu0 0.0
      %2145 = vmatprep.subr.mxu0 0.0
      %2146 = vmatpush1.msra.mxu0 0.0
      %2147 = vmatprep.subr.mxu0 0.0
      %2148 = vmatpush1.msra.mxu0 0.0
      %2149 = vmatprep.subr.mxu0 0.0
      %2150 = vmatpush1.msra.mxu0 0.0
      %2151 = vmatprep.subr.mxu0 0.0
      %2152 = vmatpush1.msra.mxu0 0.0
      %2153 = vmatprep.subr.mxu0 0.0
      %2154 = vmatpush1.msra.mxu0 0.0
      %2155 = vmatprep.subr.mxu0 0.0
      %2156 = vmatpush1.msra.mxu0 0.0
      %2157 = vmatprep.subr.mxu0 0.0
      %2158 = vmatpush1.msra.mxu0 0.0
      %2159 = vmatprep.subr.mxu0 0.0
      %2160 = vmatpush1.msra.mxu0 0.0
      %2161 = vmatprep.subr.mxu0 0.0
      %2162 = vmatpush1.msra.mxu0 0.0
      %2163 = vmatprep.subr.mxu0 0.0
      %2164 = vmatpush1.msra.mxu0 0.0
      %2165 = vmatprep.subr.mxu0 0.0
      %2166 = vmatpush1.msra.mxu0 0.0
      %2167 = vmatprep.subr.mxu0 0.0
      %2168 = vmatpush1.msra.mxu0 0.0
      %2169 = vmatprep.subr.mxu0 0.0
      %2170 = vmatpush1.msra.mxu0 0.0
      %2171 = vmatprep.subr.mxu0 0.0
      %2172 = vmatpush1.msra.mxu0 0.0
      %2173 = vmatprep.subr.mxu0 0.0
      %2174 = vmatpush1.msra.mxu0 0.0
      %2175 = vmatprep.subr.mxu0 0.0
      %2176 = vmatpush1.msra.mxu0 0.0
      %2177 = vmatprep.subr.mxu0 0.0
      %2178 = vmatpush1.msra.mxu0 0.0
      %2179 = vmatprep.subr.mxu0 0.0
      %2180 = vmatpush1.msra.mxu0 0.0
      %2181 = vmatprep.subr.mxu0 0.0
      %2182 = vmatpush1.msra.mxu0 0.0
      %2183 = vmatprep.subr.mxu0 0.0
      %2184 = vmatpush1.msra.mxu0 0.0
      %2185 = vmatprep.subr.mxu0 0.0
      %2186 = vmatpush1.msra.mxu0 0.0
      %2187 = vmatprep.subr.mxu0 0.0
      %2188 = vmatpush1.msra.mxu0 0.0
      %2189 = vmatprep.subr.mxu0 0.0
      %2190 = vmatpush1.msra.mxu0 0.0
      %2191 = vmatprep.mubr.f32.mxu0 0.0
      %2192 = vmatmul.mubr.f32.gmra.mrb[0].mxu0 %v2125
      %v2193 = vpop.f32.mrb[0].mxu0
      %v2194 = vadd.f32 %v2123, %v2193
      %v2195 = vpop.f32.mrb[0].mxu0
      %2196 = vdwg.mxu0
      %v2197 = vmax.f32 %v2194, 0.0
      %v2198 = vlaneseq
      %v2199 = vshrl.u32 %v2198, 7
      %v2200 = vsub.s32 0, %v2199
      %v2201 = vrot.slane %v304, %v2200
      %vm2202 = vcmask 523264
      %v2204 = vsel %vm2202, %v2197, 0
      %2206 = vmatprep.subr.mxu0 0.0
      %2207 = vmatpush1.msra.mxu0 %v296
      %2208 = vmatprep.subr.mxu0 0.0
      %2209 = vmatpush1.msra.mxu0 %v297
      %2210 = vmatprep.subr.mxu0 0.0
      %2211 = vmatpush1.msra.mxu0 %v298
      %2212 = vmatprep.subr.mxu0 0.0
      %2213 = vmatpush1.msra.mxu0 %v299
      %2214 = vmatprep.subr.mxu0 0.0
      %2215 = vmatpush1.msra.mxu0 %v300
      %2216 = vmatprep.subr.mxu0 0.0
      %2217 = vmatpush1.msra.mxu0 %v301
      %2218 = vmatprep.subr.mxu0 0.0
      %2219 = vmatpush1.msra.mxu0 %v302
      %2220 = vmatprep.subr.mxu0 0.0
      %2221 = vmatpush1.msra.mxu0 %v303
      %2222 = vmatprep.subr.mxu0 0.0
      %2223 = vmatpush1.msra.mxu0 0.0
      %2224 = vmatprep.subr.mxu0 0.0
      %2225 = vmatpush1.msra.mxu0 0.0
      %2226 = vmatprep.subr.mxu0 0.0
      %2227 = vmatpush1.msra.mxu0 0.0
      %2228 = vmatprep.subr.mxu0 0.0
      %2229 = vmatpush1.msra.mxu0 0.0
      %2230 = vmatprep.subr.mxu0 0.0
      %2231 = vmatpush1.msra.mxu0 0.0
      %2232 = vmatprep.subr.mxu0 0.0
      %2233 = vmatpush1.msra.mxu0 0.0
      %2234 = vmatprep.subr.mxu0 0.0
      %2235 = vmatpush1.msra.mxu0 0.0
      %2236 = vmatprep.subr.mxu0 0.0
      %2237 = vmatpush1.msra.mxu0 0.0
      %2238 = vmatprep.subr.mxu0 0.0
      %2239 = vmatpush1.msra.mxu0 0.0
      %2240 = vmatprep.subr.mxu0 0.0
      %2241 = vmatpush1.msra.mxu0 0.0
      %2242 = vmatprep.subr.mxu0 0.0
      %2243 = vmatpush1.msra.mxu0 0.0
      %2244 = vmatprep.subr.mxu0 0.0
      %2245 = vmatpush1.msra.mxu0 0.0
      %2246 = vmatprep.subr.mxu0 0.0
      %2247 = vmatpush1.msra.mxu0 0.0
      %2248 = vmatprep.subr.mxu0 0.0
      %2249 = vmatpush1.msra.mxu0 0.0
      %2250 = vmatprep.subr.mxu0 0.0
      %2251 = vmatpush1.msra.mxu0 0.0
      %2252 = vmatprep.subr.mxu0 0.0
      %2253 = vmatpush1.msra.mxu0 0.0
      %2254 = vmatprep.subr.mxu0 0.0
      %2255 = vmatpush1.msra.mxu0 0.0
      %2256 = vmatprep.subr.mxu0 0.0
      %2257 = vmatpush1.msra.mxu0 0.0
      %2258 = vmatprep.subr.mxu0 0.0
      %2259 = vmatpush1.msra.mxu0 0.0
      %2260 = vmatprep.subr.mxu0 0.0
      %2261 = vmatpush1.msra.mxu0 0.0
      %2262 = vmatprep.subr.mxu0 0.0
      %2263 = vmatpush1.msra.mxu0 0.0
      %2264 = vmatprep.subr.mxu0 0.0
      %2265 = vmatpush1.msra.mxu0 0.0
      %2266 = vmatprep.subr.mxu0 0.0
      %2267 = vmatpush1.msra.mxu0 0.0
      %2268 = vmatprep.subr.mxu0 0.0
      %2269 = vmatpush1.msra.mxu0 0.0
      %2270 = vmatprep.mubr.f32.mxu0 0.0
      %2271 = vmatmul.mubr.f32.gmra.mrb[0].mxu0 %v2204
      %v2272 = vpop.f32.mrb[0].mxu0
      %v2273 = vadd.f32 %v2201, %v2272
      %v2274 = vpop.f32.mrb[0].mxu0
      %2275 = vdwg.mxu0
      %v2276 = vadd.f32 %v2119, %v2273
      %v2277 = vsel %vm1159, %v2276, 0.0
      %2278 = vadd.xlane.f32.xlu0 %v2277
      %v2279 = vpop.xlane.xlu0 %2278
      %v2280 = vmul.f32 %v2279, %v1163
      %v2281 = vsub.f32 %v2276, %v2280
      %v2282 = vmul.f32 %v2281, %v2281
      %v2283 = vsel %vm1159, %v2282, 0.0
      %2284 = vadd.xlane.f32.xlu0 %v2283
      %v2285 = vpop.xlane.xlu0 %2284
      %v2286 = vmul.f32 %v2285, %v1163
      %v2287 = vadd.f32 %v2286, 1e-05
      %v2288 = vrsqrt.pop %v2287
      %v2289 = vmul.f32 %v2281, %v2288
      %v2290 = vlaneseq
      %v2291 = vshrl.u32 %v2290, 7
      %v2292 = vsub.s32 0, %v2291
      %v2293 = vrot.slane %v305, %v2292
      %v2294 = vmul.f32 %v2289, %v2293
      %v2295 = vlaneseq
      %v2296 = vshrl.u32 %v2295, 7
      %v2297 = vsub.s32 0, %v2296
      %v2298 = vrot.slane %v306, %v2297
      %v2299 = vadd.f32 %v2294, %v2298
      %v2300 = vld [vmem:[%s3 + $0x198] sm:$0xff]
      %v2301 = vld [vmem:[%s3 + $0x1a0] sm:$0xff]
      %v2302 = vld [vmem:[%s3 + $0x1a8] sm:$0xff]
      %v2303 = vld [vmem:[%s3 + $0x1b0] sm:$0xff]
      %v2304 = vld [vmem:[%s3 + $0x1b8] sm:$0x1]
      %v2305 = vld [vmem:[%s3 + $0x1c0] sm:$0xff]
      %v2306 = vld [vmem:[%s3 + $0x1c8] sm:$0xff]
      %v2307 = vld [vmem:[%s3 + $0x1d0] sm:$0xff]
      %v2308 = vld [vmem:[%s3 + $0x1d8] sm:$0xff]
      %v2309 = vld [vmem:[%s3 + $0x1e0] sm:$0x1]
      %v2310 = vld [vmem:[%s3 + $0x1e8] sm:$0x1]
      %v2311 = vld [vmem:[%s3 + $0x1f0] sm:$0x1]
      %v2312 = vld [vmem:[%s3 + $0x1f8] sm:$0xff]
      %v2313 = vld [vmem:[%s3 + $0x200] sm:$0xff]
      %v2314 = vld [vmem:[%s3 + $0x208] sm:$0xff]
      %v2315 = vld [vmem:[%s3 + $0x210] sm:$0xff]
      %v2316 = vld [vmem:[%s3 + $0x218] sm:$0x1]
      %v2317 = vld [vmem:[%s3 + $0x220] sm:$0xff]
      %v2318 = vld [vmem:[%s3 + $0x228] sm:$0xff]
      %v2319 = vld [vmem:[%s3 + $0x230] sm:$0xff]
      %v2320 = vld [vmem:[%s3 + $0x238] sm:$0xff]
      %v2321 = vld [vmem:[%s3 + $0x240] sm:$0x1]
      %v2322 = vld [vmem:[%s3 + $0x248] sm:$0xff]
      %v2323 = vld [vmem:[%s3 + $0x250] sm:$0xff]
      %v2324 = vld [vmem:[%s3 + $0x258] sm:$0xff]
      %v2325 = vld [vmem:[%s3 + $0x260] sm:$0xff]
      %v2326 = vld [vmem:[%s3 + $0x268] sm:$0x1]
      %v2327 = vld [vmem:[%s3 + $0x270] sm:$0x1]
      %v2328 = vld [vmem:[%s3 + $0x278] sm:$0x1]
      %v2329 = vld [vmem:[%s3 + $0x280] sm:$0xff]
      %v2330 = vld [vmem:[%s3 + $0x288] sm:$0xff]
      %v2331 = vld [vmem:[%s3 + $0x290] sm:$0xff]
      %v2332 = vld [vmem:[%s3 + $0x298] sm:$0xff]
      %v2333 = vld [vmem:[%s3 + $0x2a0] sm:$0x1]
      %v2334 = vld [vmem:[%s3 + $0x2a8] sm:$0xff]
      %v2335 = vld [vmem:[%s3 + $0x2b0] sm:$0xff]
      %v2336 = vld [vmem:[%s3 + $0x2b8] sm:$0xff]
      %v2337 = vld [vmem:[%s3 + $0x2c0] sm:$0xff]
      %v2338 = vld [vmem:[%s3 + $0x2c8] sm:$0xff]
      %v2339 = vld [vmem:[%s3 + $0x2d0] sm:$0xff]
      %v2340 = vld [vmem:[%s3 + $0x2d8] sm:$0xff]
      %v2341 = vld [vmem:[%s3 + $0x2e0] sm:$0xff]
      %v2342 = vld [vmem:[%s3 + $0x2e8] sm:$0x1]
      %v2343 = vld [vmem:[%s3 + $0x2f0] sm:$0x1]
      %v2344 = vld [vmem:[%s3 + $0x2f8] sm:$0x1]
      %v2345 = vlaneseq
      %v2346 = vshrl.u32 %v2345, 7
      %v2347 = vsub.s32 0, %v2346
      %v2348 = vrot.slane %v2304, %v2347
      %v2350 = vsel %vm311, %v2299, 0
      %2352 = vmatprep.subr.mxu0 0.0
      %2353 = vmatpush1.msra.mxu0 %v2300
      %2354 = vmatprep.subr.mxu0 0.0
      %2355 = vmatpush1.msra.mxu0 %v2301
      %2356 = vmatprep.subr.mxu0 0.0
      %2357 = vmatpush1.msra.mxu0 %v2302
      %2358 = vmatprep.subr.mxu0 0.0
      %2359 = vmatpush1.msra.mxu0 %v2303
      %2360 = vmatprep.subr.mxu0 0.0
      %2361 = vmatpush1.msra.mxu0 0.0
      %2362 = vmatprep.subr.mxu0 0.0
      %2363 = vmatpush1.msra.mxu0 0.0
      %2364 = vmatprep.subr.mxu0 0.0
      %2365 = vmatpush1.msra.mxu0 0.0
      %2366 = vmatprep.subr.mxu0 0.0
      %2367 = vmatpush1.msra.mxu0 0.0
      %2368 = vmatprep.subr.mxu0 0.0
      %2369 = vmatpush1.msra.mxu0 0.0
      %2370 = vmatprep.subr.mxu0 0.0
      %2371 = vmatpush1.msra.mxu0 0.0
      %2372 = vmatprep.subr.mxu0 0.0
      %2373 = vmatpush1.msra.mxu0 0.0
      %2374 = vmatprep.subr.mxu0 0.0
      %2375 = vmatpush1.msra.mxu0 0.0
      %2376 = vmatprep.subr.mxu0 0.0
      %2377 = vmatpush1.msra.mxu0 0.0
      %2378 = vmatprep.subr.mxu0 0.0
      %2379 = vmatpush1.msra.mxu0 0.0
      %2380 = vmatprep.subr.mxu0 0.0
      %2381 = vmatpush1.msra.mxu0 0.0
      %2382 = vmatprep.subr.mxu0 0.0
      %2383 = vmatpush1.msra.mxu0 0.0
      %2384 = vmatprep.subr.mxu0 0.0
      %2385 = vmatpush1.msra.mxu0 0.0
      %2386 = vmatprep.subr.mxu0 0.0
      %2387 = vmatpush1.msra.mxu0 0.0
      %2388 = vmatprep.subr.mxu0 0.0
      %2389 = vmatpush1.msra.mxu0 0.0
      %2390 = vmatprep.subr.mxu0 0.0
      %2391 = vmatpush1.msra.mxu0 0.0
      %2392 = vmatprep.subr.mxu0 0.0
      %2393 = vmatpush1.msra.mxu0 0.0
      %2394 = vmatprep.subr.mxu0 0.0
      %2395 = vmatpush1.msra.mxu0 0.0
      %2396 = vmatprep.subr.mxu0 0.0
      %2397 = vmatpush1.msra.mxu0 0.0
      %2398 = vmatprep.subr.mxu0 0.0
      %2399 = vmatpush1.msra.mxu0 0.0
      %2400 = vmatprep.subr.mxu0 0.0
      %2401 = vmatpush1.msra.mxu0 0.0
      %2402 = vmatprep.subr.mxu0 0.0
      %2403 = vmatpush1.msra.mxu0 0.0
      %2404 = vmatprep.subr.mxu0 0.0
      %2405 = vmatpush1.msra.mxu0 0.0
      %2406 = vmatprep.subr.mxu0 0.0
      %2407 = vmatpush1.msra.mxu0 0.0
      %2408 = vmatprep.subr.mxu0 0.0
      %2409 = vmatpush1.msra.mxu0 0.0
      %2410 = vmatprep.subr.mxu0 0.0
      %2411 = vmatpush1.msra.mxu0 0.0
      %2412 = vmatprep.subr.mxu0 0.0
      %2413 = vmatpush1.msra.mxu0 0.0
      %2414 = vmatprep.subr.mxu0 0.0
      %2415 = vmatpush1.msra.mxu0 0.0
      %2416 = vmatprep.mubr.f32.mxu0 0.0
      %2417 = vmatmul.mubr.f32.gmra.mrb[0].mxu0 %v2350
      %v2418 = vpop.f32.mrb[0].mxu0
      %v2419 = vadd.f32 %v2348, %v2418
      %v2420 = vpop.f32.mrb[0].mxu0
      %2421 = vdwg.mxu0
      %2423 = vrot.lane.b32.xlu0 %v2419, 96
      %v2424 = vpop.permute.xlu0 %2423
      %v2425 = vsel %vm388, %v2419, 0
      %v2427 = vsel %vm388, %v2424, 0
      %2429 = vmatprep.subr.mxu0 0.0
      %2430 = vmatpush1.xpose.msra.mxu0 %v2427
      %2431 = vmatprep.subr.mxu0 0.0
      %2432 = vmatpush1.xpose.msra.mxu0 0.0
      %2433 = vmatprep.subr.mxu0 0.0
      %2434 = vmatpush1.xpose.msra.mxu0 0.0
      %2435 = vmatprep.subr.mxu0 0.0
      %2436 = vmatpush1.xpose.msra.mxu0 0.0
      %2437 = vmatprep.subr.mxu0 0.0
      %2438 = vmatpush1.xpose.msra.mxu0 0.0
      %2439 = vmatprep.subr.mxu0 0.0
      %2440 = vmatpush1.xpose.msra.mxu0 0.0
      %2441 = vmatprep.subr.mxu0 0.0
      %2442 = vmatpush1.xpose.msra.mxu0 0.0
      %2443 = vmatprep.subr.mxu0 0.0
      %2444 = vmatpush1.xpose.msra.mxu0 0.0
      %2445 = vmatprep.subr.mxu0 0.0
      %2446 = vmatpush1.xpose.msra.mxu0 0.0
      %2447 = vmatprep.subr.mxu0 0.0
      %2448 = vmatpush1.xpose.msra.mxu0 0.0
      %2449 = vmatprep.subr.mxu0 0.0
      %2450 = vmatpush1.xpose.msra.mxu0 0.0
      %2451 = vmatprep.subr.mxu0 0.0
      %2452 = vmatpush1.xpose.msra.mxu0 0.0
      %2453 = vmatprep.subr.mxu0 0.0
      %2454 = vmatpush1.xpose.msra.mxu0 0.0
      %2455 = vmatprep.subr.mxu0 0.0
      %2456 = vmatpush1.xpose.msra.mxu0 0.0
      %2457 = vmatprep.subr.mxu0 0.0
      %2458 = vmatpush1.xpose.msra.mxu0 0.0
      %2459 = vmatprep.subr.mxu0 0.0
      %2460 = vmatpush1.xpose.msra.mxu0 0.0
      %2461 = vmatprep.subr.mxu0 0.0
      %2462 = vmatpush1.xpose.msra.mxu0 0.0
      %2463 = vmatprep.subr.mxu0 0.0
      %2464 = vmatpush1.xpose.msra.mxu0 0.0
      %2465 = vmatprep.subr.mxu0 0.0
      %2466 = vmatpush1.xpose.msra.mxu0 0.0
      %2467 = vmatprep.subr.mxu0 0.0
      %2468 = vmatpush1.xpose.msra.mxu0 0.0
      %2469 = vmatprep.subr.mxu0 0.0
      %2470 = vmatpush1.xpose.msra.mxu0 0.0
      %2471 = vmatprep.subr.mxu0 0.0
      %2472 = vmatpush1.xpose.msra.mxu0 0.0
      %2473 = vmatprep.subr.mxu0 0.0
      %2474 = vmatpush1.xpose.msra.mxu0 0.0
      %2475 = vmatprep.subr.mxu0 0.0
      %2476 = vmatpush1.xpose.msra.mxu0 0.0
      %2477 = vmatprep.subr.mxu0 0.0
      %2478 = vmatpush1.xpose.msra.mxu0 0.0
      %2479 = vmatprep.subr.mxu0 0.0
      %2480 = vmatpush1.xpose.msra.mxu0 0.0
      %2481 = vmatprep.subr.mxu0 0.0
      %2482 = vmatpush1.xpose.msra.mxu0 0.0
      %2483 = vmatprep.subr.mxu0 0.0
      %2484 = vmatpush1.xpose.msra.mxu0 0.0
      %2485 = vmatprep.subr.mxu0 0.0
      %2486 = vmatpush1.xpose.msra.mxu0 0.0
      %2487 = vmatprep.subr.mxu0 0.0
      %2488 = vmatpush1.xpose.msra.mxu0 0.0
      %2489 = vmatprep.subr.mxu0 0.0
      %2490 = vmatpush1.xpose.msra.mxu0 0.0
      %2491 = vmatprep.subr.mxu0 0.0
      %2492 = vmatpush1.xpose.msra.mxu0 0.0
      %2493 = vmatprep.mubr.f32.mxu0 0.0
      %2494 = vmatmul.mubr.f32.gmra.mrb[0].mxu0 %v2425
      %v2495 = vpop.f32.mrb[0].mxu0
      %v2496 = vadd.f32 0.0, %v2495
      %v2497 = vpop.f32.mrb[0].mxu0
      %2498 = vdwg.mxu0
      %v2499 = vmul.f32 %v2496, 0.35355338
      %v2500 = vadd.f32 %v2499, %v467
      %v2501 = vsel %vm469, %v2500, -inf
      %2502 = vmax.xlane.f32.xlu0 %v2501
      %v2503 = vpop.xlane.xlu0 %2502
      %v2504 = vsub.f32 %v2500, %v2503
      %v2505 = vmul.f32 %v2504, 1.442695
      %v2506 = vpow.pop %v2505
      %v2507 = vsel %vm469, %v2506, 0.0
      %2508 = vadd.xlane.f32.xlu0 %v2507
      %v2509 = vpop.xlane.xlu0 %2508
      %v2510 = vrcp.pop %v2509
      %v2511 = vmul.f32 %v2506, %v2510
      %2512 = vrot.lane.b32.xlu0 %v2419, 64
      %v2513 = vpop.permute.xlu0 %2512
      %v2515 = vsel %vm483, %v2511, 0
      %v2517 = vsel %vm487, %v2513, 0
      %2519 = vmatprep.subr.mxu0 0.0
      %2520 = vmatpush1.msra.mxu0 %v2517
      %2521 = vmatprep.subr.mxu0 0.0
      %2522 = vmatpush1.msra.mxu0 0.0
      %2523 = vmatprep.subr.mxu0 0.0
      %2524 = vmatpush1.msra.mxu0 0.0
      %2525 = vmatprep.subr.mxu0 0.0
      %2526 = vmatpush1.msra.mxu0 0.0
      %2527 = vmatprep.subr.mxu0 0.0
      %2528 = vmatpush1.msra.mxu0 0.0
      %2529 = vmatprep.subr.mxu0 0.0
      %2530 = vmatpush1.msra.mxu0 0.0
      %2531 = vmatprep.subr.mxu0 0.0
      %2532 = vmatpush1.msra.mxu0 0.0
      %2533 = vmatprep.subr.mxu0 0.0
      %2534 = vmatpush1.msra.mxu0 0.0
      %2535 = vmatprep.subr.mxu0 0.0
      %2536 = vmatpush1.msra.mxu0 0.0
      %2537 = vmatprep.subr.mxu0 0.0
      %2538 = vmatpush1.msra.mxu0 0.0
      %2539 = vmatprep.subr.mxu0 0.0
      %2540 = vmatpush1.msra.mxu0 0.0
      %2541 = vmatprep.subr.mxu0 0.0
      %2542 = vmatpush1.msra.mxu0 0.0
      %2543 = vmatprep.subr.mxu0 0.0
      %2544 = vmatpush1.msra.mxu0 0.0
      %2545 = vmatprep.subr.mxu0 0.0
      %2546 = vmatpush1.msra.mxu0 0.0
      %2547 = vmatprep.subr.mxu0 0.0
      %2548 = vmatpush1.msra.mxu0 0.0
      %2549 = vmatprep.subr.mxu0 0.0
      %2550 = vmatpush1.msra.mxu0 0.0
      %2551 = vmatprep.subr.mxu0 0.0
      %2552 = vmatpush1.msra.mxu0 0.0
      %2553 = vmatprep.subr.mxu0 0.0
      %2554 = vmatpush1.msra.mxu0 0.0
      %2555 = vmatprep.subr.mxu0 0.0
      %2556 = vmatpush1.msra.mxu0 0.0
      %2557 = vmatprep.subr.mxu0 0.0
      %2558 = vmatpush1.msra.mxu0 0.0
      %2559 = vmatprep.subr.mxu0 0.0
      %2560 = vmatpush1.msra.mxu0 0.0
      %2561 = vmatprep.subr.mxu0 0.0
      %2562 = vmatpush1.msra.mxu0 0.0
      %2563 = vmatprep.subr.mxu0 0.0
      %2564 = vmatpush1.msra.mxu0 0.0
      %2565 = vmatprep.subr.mxu0 0.0
      %2566 = vmatpush1.msra.mxu0 0.0
      %2567 = vmatprep.subr.mxu0 0.0
      %2568 = vmatpush1.msra.mxu0 0.0
      %2569 = vmatprep.subr.mxu0 0.0
      %2570 = vmatpush1.msra.mxu0 0.0
      %2571 = vmatprep.subr.mxu0 0.0
      %2572 = vmatpush1.msra.mxu0 0.0
      %2573 = vmatprep.subr.mxu0 0.0
      %2574 = vmatpush1.msra.mxu0 0.0
      %2575 = vmatprep.subr.mxu0 0.0
      %2576 = vmatpush1.msra.mxu0 0.0
      %2577 = vmatprep.subr.mxu0 0.0
      %2578 = vmatpush1.msra.mxu0 0.0
      %2579 = vmatprep.subr.mxu0 0.0
      %2580 = vmatpush1.msra.mxu0 0.0
      %2581 = vmatprep.subr.mxu0 0.0
      %2582 = vmatpush1.msra.mxu0 0.0
      %2583 = vmatprep.mubr.f32.mxu0 0.0
      %2584 = vmatmul.mubr.f32.gmra.mrb[0].mxu0 %v2515
      %v2585 = vpop.f32.mrb[0].mxu0
      %v2586 = vadd.f32 0.0, %v2585
      %v2587 = vpop.f32.mrb[0].mxu0
      %2588 = vdwg.mxu0
      %2589 = vrot.lane.b32.xlu0 %v2419, 120
      %v2590 = vpop.permute.xlu0 %2589
      %2591 = vrot.lane.b32.xlu0 %v2419, 88
      %v2592 = vpop.permute.xlu0 %2591
      %v2593 = vsel %vm388, %v2590, 0
      %v2595 = vsel %vm388, %v2592, 0
      %2597 = vmatprep.subr.mxu0 0.0
      %2598 = vmatpush1.xpose.msra.mxu0 %v2595
      %2599 = vmatprep.subr.mxu0 0.0
      %2600 = vmatpush1.xpose.msra.mxu0 0.0
      %2601 = vmatprep.subr.mxu0 0.0
      %2602 = vmatpush1.xpose.msra.mxu0 0.0
      %2603 = vmatprep.subr.mxu0 0.0
      %2604 = vmatpush1.xpose.msra.mxu0 0.0
      %2605 = vmatprep.subr.mxu0 0.0
      %2606 = vmatpush1.xpose.msra.mxu0 0.0
      %2607 = vmatprep.subr.mxu0 0.0
      %2608 = vmatpush1.xpose.msra.mxu0 0.0
      %2609 = vmatprep.subr.mxu0 0.0
      %2610 = vmatpush1.xpose.msra.mxu0 0.0
      %2611 = vmatprep.subr.mxu0 0.0
      %2612 = vmatpush1.xpose.msra.mxu0 0.0
      %2613 = vmatprep.subr.mxu0 0.0
      %2614 = vmatpush1.xpose.msra.mxu0 0.0
      %2615 = vmatprep.subr.mxu0 0.0
      %2616 = vmatpush1.xpose.msra.mxu0 0.0
      %2617 = vmatprep.subr.mxu0 0.0
      %2618 = vmatpush1.xpose.msra.mxu0 0.0
      %2619 = vmatprep.subr.mxu0 0.0
      %2620 = vmatpush1.xpose.msra.mxu0 0.0
      %2621 = vmatprep.subr.mxu0 0.0
      %2622 = vmatpush1.xpose.msra.mxu0 0.0
      %2623 = vmatprep.subr.mxu0 0.0
      %2624 = vmatpush1.xpose.msra.mxu0 0.0
      %2625 = vmatprep.subr.mxu0 0.0
      %2626 = vmatpush1.xpose.msra.mxu0 0.0
      %2627 = vmatprep.subr.mxu0 0.0
      %2628 = vmatpush1.xpose.msra.mxu0 0.0
      %2629 = vmatprep.subr.mxu0 0.0
      %2630 = vmatpush1.xpose.msra.mxu0 0.0
      %2631 = vmatprep.subr.mxu0 0.0
      %2632 = vmatpush1.xpose.msra.mxu0 0.0
      %2633 = vmatprep.subr.mxu0 0.0
      %2634 = vmatpush1.xpose.msra.mxu0 0.0
      %2635 = vmatprep.subr.mxu0 0.0
      %2636 = vmatpush1.xpose.msra.mxu0 0.0
      %2637 = vmatprep.subr.mxu0 0.0
      %2638 = vmatpush1.xpose.msra.mxu0 0.0
      %2639 = vmatprep.subr.mxu0 0.0
      %2640 = vmatpush1.xpose.msra.mxu0 0.0
      %2641 = vmatprep.subr.mxu0 0.0
      %2642 = vmatpush1.xpose.msra.mxu0 0.0
      %2643 = vmatprep.subr.mxu0 0.0
      %2644 = vmatpush1.xpose.msra.mxu0 0.0
      %2645 = vmatprep.subr.mxu0 0.0
      %2646 = vmatpush1.xpose.msra.mxu0 0.0
      %2647 = vmatprep.subr.mxu0 0.0
      %2648 = vmatpush1.xpose.msra.mxu0 0.0
      %2649 = vmatprep.subr.mxu0 0.0
      %2650 = vmatpush1.xpose.msra.mxu0 0.0
      %2651 = vmatprep.subr.mxu0 0.0
      %2652 = vmatpush1.xpose.msra.mxu0 0.0
      %2653 = vmatprep.subr.mxu0 0.0
      %2654 = vmatpush1.xpose.msra.mxu0 0.0
      %2655 = vmatprep.subr.mxu0 0.0
      %2656 = vmatpush1.xpose.msra.mxu0 0.0
      %2657 = vmatprep.subr.mxu0 0.0
      %2658 = vmatpush1.xpose.msra.mxu0 0.0
      %2659 = vmatprep.subr.mxu0 0.0
      %2660 = vmatpush1.xpose.msra.mxu0 0.0
      %2661 = vmatprep.mubr.f32.mxu0 0.0
      %2662 = vmatmul.mubr.f32.gmra.mrb[0].mxu0 %v2593
      %v2663 = vpop.f32.mrb[0].mxu0
      %v2664 = vadd.f32 0.0, %v2663
      %v2665 = vpop.f32.mrb[0].mxu0
      %2666 = vdwg.mxu0
      %v2667 = vmul.f32 %v2664, 0.35355338
      %v2668 = vadd.f32 %v2667, %v467
      %v2669 = vsel %vm469, %v2668, -inf
      %2670 = vmax.xlane.f32.xlu0 %v2669
      %v2671 = vpop.xlane.xlu0 %2670
      %v2672 = vsub.f32 %v2668, %v2671
      %v2673 = vmul.f32 %v2672, 1.442695
      %v2674 = vpow.pop %v2673
      %v2675 = vsel %vm469, %v2674, 0.0
      %2676 = vadd.xlane.f32.xlu0 %v2675
      %v2677 = vpop.xlane.xlu0 %2676
      %v2678 = vrcp.pop %v2677
      %v2679 = vmul.f32 %v2674, %v2678
      %2680 = vrot.lane.b32.xlu0 %v2419, 56
      %v2681 = vpop.permute.xlu0 %2680
      %v2683 = vsel %vm483, %v2679, 0
      %v2685 = vsel %vm487, %v2681, 0
      %2687 = vmatprep.subr.mxu0 0.0
      %2688 = vmatpush1.msra.mxu0 %v2685
      %2689 = vmatprep.subr.mxu0 0.0
      %2690 = vmatpush1.msra.mxu0 0.0
      %2691 = vmatprep.subr.mxu0 0.0
      %2692 = vmatpush1.msra.mxu0 0.0
      %2693 = vmatprep.subr.mxu0 0.0
      %2694 = vmatpush1.msra.mxu0 0.0
      %2695 = vmatprep.subr.mxu0 0.0
      %2696 = vmatpush1.msra.mxu0 0.0
      %2697 = vmatprep.subr.mxu0 0.0
      %2698 = vmatpush1.msra.mxu0 0.0
      %2699 = vmatprep.subr.mxu0 0.0
      %2700 = vmatpush1.msra.mxu0 0.0
      %2701 = vmatprep.subr.mxu0 0.0
      %2702 = vmatpush1.msra.mxu0 0.0
      %2703 = vmatprep.subr.mxu0 0.0
      %2704 = vmatpush1.msra.mxu0 0.0
      %2705 = vmatprep.subr.mxu0 0.0
      %2706 = vmatpush1.msra.mxu0 0.0
      %2707 = vmatprep.subr.mxu0 0.0
      %2708 = vmatpush1.msra.mxu0 0.0
      %2709 = vmatprep.subr.mxu0 0.0
      %2710 = vmatpush1.msra.mxu0 0.0
      %2711 = vmatprep.subr.mxu0 0.0
      %2712 = vmatpush1.msra.mxu0 0.0
      %2713 = vmatprep.subr.mxu0 0.0
      %2714 = vmatpush1.msra.mxu0 0.0
      %2715 = vmatprep.subr.mxu0 0.0
      %2716 = vmatpush1.msra.mxu0 0.0
      %2717 = vmatprep.subr.mxu0 0.0
      %2718 = vmatpush1.msra.mxu0 0.0
      %2719 = vmatprep.subr.mxu0 0.0
      %2720 = vmatpush1.msra.mxu0 0.0
      %2721 = vmatprep.subr.mxu0 0.0
      %2722 = vmatpush1.msra.mxu0 0.0
      %2723 = vmatprep.subr.mxu0 0.0
      %2724 = vmatpush1.msra.mxu0 0.0
      %2725 = vmatprep.subr.mxu0 0.0
      %2726 = vmatpush1.msra.mxu0 0.0
      %2727 = vmatprep.subr.mxu0 0.0
      %2728 = vmatpush1.msra.mxu0 0.0
      %2729 = vmatprep.subr.mxu0 0.0
      %2730 = vmatpush1.msra.mxu0 0.0
      %2731 = vmatprep.subr.mxu0 0.0
      %2732 = vmatpush1.msra.mxu0 0.0
      %2733 = vmatprep.subr.mxu0 0.0
      %2734 = vmatpush1.msra.mxu0 0.0
      %2735 = vmatprep.subr.mxu0 0.0
      %2736 = vmatpush1.msra.mxu0 0.0
      %2737 = vmatprep.subr.mxu0 0.0
      %2738 = vmatpush1.msra.mxu0 0.0
      %2739 = vmatprep.subr.mxu0 0.0
      %2740 = vmatpush1.msra.mxu0 0.0
      %2741 = vmatprep.subr.mxu0 0.0
      %2742 = vmatpush1.msra.mxu0 0.0
      %2743 = vmatprep.subr.mxu0 0.0
      %2744 = vmatpush1.msra.mxu0 0.0
      %2745 = vmatprep.subr.mxu0 0.0
      %2746 = vmatpush1.msra.mxu0 0.0
      %2747 = vmatprep.subr.mxu0 0.0
      %2748 = vmatpush1.msra.mxu0 0.0
      %2749 = vmatprep.subr.mxu0 0.0
      %2750 = vmatpush1.msra.mxu0 0.0
      %2751 = vmatprep.mubr.f32.mxu0 0.0
      %2752 = vmatmul.mubr.f32.gmra.mrb[0].mxu0 %v2683
      %v2753 = vpop.f32.mrb[0].mxu0
      %v2754 = vadd.f32 0.0, %v2753
      %v2755 = vpop.f32.mrb[0].mxu0
      %2756 = vdwg.mxu0
      %2757 = vrot.lane.b32.xlu0 %v2419, 112
      %v2758 = vpop.permute.xlu0 %2757
      %2759 = vrot.lane.b32.xlu0 %v2419, 80
      %v2760 = vpop.permute.xlu0 %2759
      %v2761 = vsel %vm388, %v2758, 0
      %v2763 = vsel %vm388, %v2760, 0
      %2765 = vmatprep.subr.mxu0 0.0
      %2766 = vmatpush1.xpose.msra.mxu0 %v2763
      %2767 = vmatprep.subr.mxu0 0.0
      %2768 = vmatpush1.xpose.msra.mxu0 0.0
      %2769 = vmatprep.subr.mxu0 0.0
      %2770 = vmatpush1.xpose.msra.mxu0 0.0
      %2771 = vmatprep.subr.mxu0 0.0
      %2772 = vmatpush1.xpose.msra.mxu0 0.0
      %2773 = vmatprep.subr.mxu0 0.0
      %2774 = vmatpush1.xpose.msra.mxu0 0.0
      %2775 = vmatprep.subr.mxu0 0.0
      %2776 = vmatpush1.xpose.msra.mxu0 0.0
      %2777 = vmatprep.subr.mxu0 0.0
      %2778 = vmatpush1.xpose.msra.mxu0 0.0
      %2779 = vmatprep.subr.mxu0 0.0
      %2780 = vmatpush1.xpose.msra.mxu0 0.0
      %2781 = vmatprep.subr.mxu0 0.0
      %2782 = vmatpush1.xpose.msra.mxu0 0.0
      %2783 = vmatprep.subr.mxu0 0.0
      %2784 = vmatpush1.xpose.msra.mxu0 0.0
      %2785 = vmatprep.subr.mxu0 0.0
      %2786 = vmatpush1.xpose.msra.mxu0 0.0
      %2787 = vmatprep.subr.mxu0 0.0
      %2788 = vmatpush1.xpose.msra.mxu0 0.0
      %2789 = vmatprep.subr.mxu0 0.0
      %2790 = vmatpush1.xpose.msra.mxu0 0.0
      %2791 = vmatprep.subr.mxu0 0.0
      %2792 = vmatpush1.xpose.msra.mxu0 0.0
      %2793 = vmatprep.subr.mxu0 0.0
      %2794 = vmatpush1.xpose.msra.mxu0 0.0
      %2795 = vmatprep.subr.mxu0 0.0
      %2796 = vmatpush1.xpose.msra.mxu0 0.0
      %2797 = vmatprep.subr.mxu0 0.0
      %2798 = vmatpush1.xpose.msra.mxu0 0.0
      %2799 = vmatprep.subr.mxu0 0.0
      %2800 = vmatpush1.xpose.msra.mxu0 0.0
      %2801 = vmatprep.subr.mxu0 0.0
      %2802 = vmatpush1.xpose.msra.mxu0 0.0
      %2803 = vmatprep.subr.mxu0 0.0
      %2804 = vmatpush1.xpose.msra.mxu0 0.0
      %2805 = vmatprep.subr.mxu0 0.0
      %2806 = vmatpush1.xpose.msra.mxu0 0.0
      %2807 = vmatprep.subr.mxu0 0.0
      %2808 = vmatpush1.xpose.msra.mxu0 0.0
      %2809 = vmatprep.subr.mxu0 0.0
      %2810 = vmatpush1.xpose.msra.mxu0 0.0
      %2811 = vmatprep.subr.mxu0 0.0
      %2812 = vmatpush1.xpose.msra.mxu0 0.0
      %2813 = vmatprep.subr.mxu0 0.0
      %2814 = vmatpush1.xpose.msra.mxu0 0.0
      %2815 = vmatprep.subr.mxu0 0.0
      %2816 = vmatpush1.xpose.msra.mxu0 0.0
      %2817 = vmatprep.subr.mxu0 0.0
      %2818 = vmatpush1.xpose.msra.mxu0 0.0
      %2819 = vmatprep.subr.mxu0 0.0
      %2820 = vmatpush1.xpose.msra.mxu0 0.0
      %2821 = vmatprep.subr.mxu0 0.0
      %2822 = vmatpush1.xpose.msra.mxu0 0.0
      %2823 = vmatprep.subr.mxu0 0.0
      %2824 = vmatpush1.xpose.msra.mxu0 0.0
      %2825 = vmatprep.subr.mxu0 0.0
      %2826 = vmatpush1.xpose.msra.mxu0 0.0
      %2827 = vmatprep.subr.mxu0 0.0
      %2828 = vmatpush1.xpose.msra.mxu0 0.0
      %2829 = vmatprep.mubr.f32.mxu0 0.0
      %2830 = vmatmul.mubr.f32.gmra.mrb[0].mxu0 %v2761
      %v2831 = vpop.f32.mrb[0].mxu0
      %v2832 = vadd.f32 0.0, %v2831
      %v2833 = vpop.f32.mrb[0].mxu0
      %2834 = vdwg.mxu0
      %v2835 = vmul.f32 %v2832, 0.35355338
      %v2836 = vadd.f32 %v2835, %v467
      %v2837 = vsel %vm469, %v2836, -inf
      %2838 = vmax.xlane.f32.xlu0 %v2837
      %v2839 = vpop.xlane.xlu0 %2838
      %v2840 = vsub.f32 %v2836, %v2839
      %v2841 = vmul.f32 %v2840, 1.442695
      %v2842 = vpow.pop %v2841
      %v2843 = vsel %vm469, %v2842, 0.0
      %2844 = vadd.xlane.f32.xlu0 %v2843
      %v2845 = vpop.xlane.xlu0 %2844
      %v2846 = vrcp.pop %v2845
      %v2847 = vmul.f32 %v2842, %v2846
      %2848 = vrot.lane.b32.xlu0 %v2419, 48
      %v2849 = vpop.permute.xlu0 %2848
      %v2851 = vsel %vm483, %v2847, 0
      %v2853 = vsel %vm487, %v2849, 0
      %2855 = vmatprep.subr.mxu0 0.0
      %2856 = vmatpush1.msra.mxu0 %v2853
      %2857 = vmatprep.subr.mxu0 0.0
      %2858 = vmatpush1.msra.mxu0 0.0
      %2859 = vmatprep.subr.mxu0 0.0
      %2860 = vmatpush1.msra.mxu0 0.0
      %2861 = vmatprep.subr.mxu0 0.0
      %2862 = vmatpush1.msra.mxu0 0.0
      %2863 = vmatprep.subr.mxu0 0.0
      %2864 = vmatpush1.msra.mxu0 0.0
      %2865 = vmatprep.subr.mxu0 0.0
      %2866 = vmatpush1.msra.mxu0 0.0
      %2867 = vmatprep.subr.mxu0 0.0
      %2868 = vmatpush1.msra.mxu0 0.0
      %2869 = vmatprep.subr.mxu0 0.0
      %2870 = vmatpush1.msra.mxu0 0.0
      %2871 = vmatprep.subr.mxu0 0.0
      %2872 = vmatpush1.msra.mxu0 0.0
      %2873 = vmatprep.subr.mxu0 0.0
      %2874 = vmatpush1.msra.mxu0 0.0
      %2875 = vmatprep.subr.mxu0 0.0
      %2876 = vmatpush1.msra.mxu0 0.0
      %2877 = vmatprep.subr.mxu0 0.0
      %2878 = vmatpush1.msra.mxu0 0.0
      %2879 = vmatprep.subr.mxu0 0.0
      %2880 = vmatpush1.msra.mxu0 0.0
      %2881 = vmatprep.subr.mxu0 0.0
      %2882 = vmatpush1.msra.mxu0 0.0
      %2883 = vmatprep.subr.mxu0 0.0
      %2884 = vmatpush1.msra.mxu0 0.0
      %2885 = vmatprep.subr.mxu0 0.0
      %2886 = vmatpush1.msra.mxu0 0.0
      %2887 = vmatprep.subr.mxu0 0.0
      %2888 = vmatpush1.msra.mxu0 0.0
      %2889 = vmatprep.subr.mxu0 0.0
      %2890 = vmatpush1.msra.mxu0 0.0
      %2891 = vmatprep.subr.mxu0 0.0
      %2892 = vmatpush1.msra.mxu0 0.0
      %2893 = vmatprep.subr.mxu0 0.0
      %2894 = vmatpush1.msra.mxu0 0.0
      %2895 = vmatprep.subr.mxu0 0.0
      %2896 = vmatpush1.msra.mxu0 0.0
      %2897 = vmatprep.subr.mxu0 0.0
      %2898 = vmatpush1.msra.mxu0 0.0
      %2899 = vmatprep.subr.mxu0 0.0
      %2900 = vmatpush1.msra.mxu0 0.0
      %2901 = vmatprep.subr.mxu0 0.0
      %2902 = vmatpush1.msra.mxu0 0.0
      %2903 = vmatprep.subr.mxu0 0.0
      %2904 = vmatpush1.msra.mxu0 0.0
      %2905 = vmatprep.subr.mxu0 0.0
      %2906 = vmatpush1.msra.mxu0 0.0
      %2907 = vmatprep.subr.mxu0 0.0
      %2908 = vmatpush1.msra.mxu0 0.0
      %2909 = vmatprep.subr.mxu0 0.0
      %2910 = vmatpush1.msra.mxu0 0.0
      %2911 = vmatprep.subr.mxu0 0.0
      %2912 = vmatpush1.msra.mxu0 0.0
      %2913 = vmatprep.subr.mxu0 0.0
      %2914 = vmatpush1.msra.mxu0 0.0
      %2915 = vmatprep.subr.mxu0 0.0
      %2916 = vmatpush1.msra.mxu0 0.0
      %2917 = vmatprep.subr.mxu0 0.0
      %2918 = vmatpush1.msra.mxu0 0.0
      %2919 = vmatprep.mubr.f32.mxu0 0.0
      %2920 = vmatmul.mubr.f32.gmra.mrb[0].mxu0 %v2851
      %v2921 = vpop.f32.mrb[0].mxu0
      %v2922 = vadd.f32 0.0, %v2921
      %v2923 = vpop.f32.mrb[0].mxu0
      %2924 = vdwg.mxu0
      %2925 = vrot.lane.b32.xlu0 %v2419, 104
      %v2926 = vpop.permute.xlu0 %2925
      %2927 = vrot.lane.b32.xlu0 %v2419, 72
      %v2928 = vpop.permute.xlu0 %2927
      %v2929 = vsel %vm388, %v2926, 0
      %v2931 = vsel %vm388, %v2928, 0
      %2933 = vmatprep.subr.mxu0 0.0
      %2934 = vmatpush1.xpose.msra.mxu0 %v2931
      %2935 = vmatprep.subr.mxu0 0.0
      %2936 = vmatpush1.xpose.msra.mxu0 0.0
      %2937 = vmatprep.subr.mxu0 0.0
      %2938 = vmatpush1.xpose.msra.mxu0 0.0
      %2939 = vmatprep.subr.mxu0 0.0
      %2940 = vmatpush1.xpose.msra.mxu0 0.0
      %2941 = vmatprep.subr.mxu0 0.0
      %2942 = vmatpush1.xpose.msra.mxu0 0.0
      %2943 = vmatprep.subr.mxu0 0.0
      %2944 = vmatpush1.xpose.msra.mxu0 0.0
      %2945 = vmatprep.subr.mxu0 0.0
      %2946 = vmatpush1.xpose.msra.mxu0 0.0
      %2947 = vmatprep.subr.mxu0 0.0
      %2948 = vmatpush1.xpose.msra.mxu0 0.0
      %2949 = vmatprep.subr.mxu0 0.0
      %2950 = vmatpush1.xpose.msra.mxu0 0.0
      %2951 = vmatprep.subr.mxu0 0.0
      %2952 = vmatpush1.xpose.msra.mxu0 0.0
      %2953 = vmatprep.subr.mxu0 0.0
      %2954 = vmatpush1.xpose.msra.mxu0 0.0
      %2955 = vmatprep.subr.mxu0 0.0
      %2956 = vmatpush1.xpose.msra.mxu0 0.0
      %2957 = vmatprep.subr.mxu0 0.0
      %2958 = vmatpush1.xpose.msra.mxu0 0.0
      %2959 = vmatprep.subr.mxu0 0.0
      %2960 = vmatpush1.xpose.msra.mxu0 0.0
      %2961 = vmatprep.subr.mxu0 0.0
      %2962 = vmatpush1.xpose.msra.mxu0 0.0
      %2963 = vmatprep.subr.mxu0 0.0
      %2964 = vmatpush1.xpose.msra.mxu0 0.0
      %2965 = vmatprep.subr.mxu0 0.0
      %2966 = vmatpush1.xpose.msra.mxu0 0.0
      %2967 = vmatprep.subr.mxu0 0.0
      %2968 = vmatpush1.xpose.msra.mxu0 0.0
      %2969 = vmatprep.subr.mxu0 0.0
      %2970 = vmatpush1.xpose.msra.mxu0 0.0
      %2971 = vmatprep.subr.mxu0 0.0
      %2972 = vmatpush1.xpose.msra.mxu0 0.0
      %2973 = vmatprep.subr.mxu0 0.0
      %2974 = vmatpush1.xpose.msra.mxu0 0.0
      %2975 = vmatprep.subr.mxu0 0.0
      %2976 = vmatpush1.xpose.msra.mxu0 0.0
      %2977 = vmatprep.subr.mxu0 0.0
      %2978 = vmatpush1.xpose.msra.mxu0 0.0
      %2979 = vmatprep.subr.mxu0 0.0
      %2980 = vmatpush1.xpose.msra.mxu0 0.0
      %2981 = vmatprep.subr.mxu0 0.0
      %2982 = vmatpush1.xpose.msra.mxu0 0.0
      %2983 = vmatprep.subr.mxu0 0.0
      %2984 = vmatpush1.xpose.msra.mxu0 0.0
      %2985 = vmatprep.subr.mxu0 0.0
      %2986 = vmatpush1.xpose.msra.mxu0 0.0
      %2987 = vmatprep.subr.mxu0 0.0
      %2988 = vmatpush1.xpose.msra.mxu0 0.0
      %2989 = vmatprep.subr.mxu0 0.0
      %2990 = vmatpush1.xpose.msra.mxu0 0.0
      %2991 = vmatprep.subr.mxu0 0.0
      %2992 = vmatpush1.xpose.msra.mxu0 0.0
      %2993 = vmatprep.subr.mxu0 0.0
      %2994 = vmatpush1.xpose.msra.mxu0 0.0
      %2995 = vmatprep.subr.mxu0 0.0
      %2996 = vmatpush1.xpose.msra.mxu0 0.0
      %2997 = vmatprep.mubr.f32.mxu0 0.0
      %2998 = vmatmul.mubr.f32.gmra.mrb[0].mxu0 %v2929
      %v2999 = vpop.f32.mrb[0].mxu0
      %v3000 = vadd.f32 0.0, %v2999
      %v3001 = vpop.f32.mrb[0].mxu0
      %3002 = vdwg.mxu0
      %v3003 = vmul.f32 %v3000, 0.35355338
      %v3004 = vadd.f32 %v3003, %v467
      %v3005 = vsel %vm469, %v3004, -inf
      %3006 = vmax.xlane.f32.xlu0 %v3005
      %v3007 = vpop.xlane.xlu0 %3006
      %v3008 = vsub.f32 %v3004, %v3007
      %v3009 = vmul.f32 %v3008, 1.442695
      %v3010 = vpow.pop %v3009
      %v3011 = vsel %vm469, %v3010, 0.0
      %3012 = vadd.xlane.f32.xlu0 %v3011
      %v3013 = vpop.xlane.xlu0 %3012
      %v3014 = vrcp.pop %v3013
      %v3015 = vmul.f32 %v3010, %v3014
      %3016 = vrot.lane.b32.xlu0 %v2419, 40
      %v3017 = vpop.permute.xlu0 %3016
      %v3019 = vsel %vm483, %v3015, 0
      %v3021 = vsel %vm487, %v3017, 0
      %3023 = vmatprep.subr.mxu0 0.0
      %3024 = vmatpush1.msra.mxu0 %v3021
      %3025 = vmatprep.subr.mxu0 0.0
      %3026 = vmatpush1.msra.mxu0 0.0
      %3027 = vmatprep.subr.mxu0 0.0
      %3028 = vmatpush1.msra.mxu0 0.0
      %3029 = vmatprep.subr.mxu0 0.0
      %3030 = vmatpush1.msra.mxu0 0.0
      %3031 = vmatprep.subr.mxu0 0.0
      %3032 = vmatpush1.msra.mxu0 0.0
      %3033 = vmatprep.subr.mxu0 0.0
      %3034 = vmatpush1.msra.mxu0 0.0
      %3035 = vmatprep.subr.mxu0 0.0
      %3036 = vmatpush1.msra.mxu0 0.0
      %3037 = vmatprep.subr.mxu0 0.0
      %3038 = vmatpush1.msra.mxu0 0.0
      %3039 = vmatprep.subr.mxu0 0.0
      %3040 = vmatpush1.msra.mxu0 0.0
      %3041 = vmatprep.subr.mxu0 0.0
      %3042 = vmatpush1.msra.mxu0 0.0
      %3043 = vmatprep.subr.mxu0 0.0
      %3044 = vmatpush1.msra.mxu0 0.0
      %3045 = vmatprep.subr.mxu0 0.0
      %3046 = vmatpush1.msra.mxu0 0.0
      %3047 = vmatprep.subr.mxu0 0.0
      %3048 = vmatpush1.msra.mxu0 0.0
      %3049 = vmatprep.subr.mxu0 0.0
      %3050 = vmatpush1.msra.mxu0 0.0
      %3051 = vmatprep.subr.mxu0 0.0
      %3052 = vmatpush1.msra.mxu0 0.0
      %3053 = vmatprep.subr.mxu0 0.0
      %3054 = vmatpush1.msra.mxu0 0.0
      %3055 = vmatprep.subr.mxu0 0.0
      %3056 = vmatpush1.msra.mxu0 0.0
      %3057 = vmatprep.subr.mxu0 0.0
      %3058 = vmatpush1.msra.mxu0 0.0
      %3059 = vmatprep.subr.mxu0 0.0
      %3060 = vmatpush1.msra.mxu0 0.0
      %3061 = vmatprep.subr.mxu0 0.0
      %3062 = vmatpush1.msra.mxu0 0.0
      %3063 = vmatprep.subr.mxu0 0.0
      %3064 = vmatpush1.msra.mxu0 0.0
      %3065 = vmatprep.subr.mxu0 0.0
      %3066 = vmatpush1.msra.mxu0 0.0
      %3067 = vmatprep.subr.mxu0 0.0
      %3068 = vmatpush1.msra.mxu0 0.0
      %3069 = vmatprep.subr.mxu0 0.0
      %3070 = vmatpush1.msra.mxu0 0.0
      %3071 = vmatprep.subr.mxu0 0.0
      %3072 = vmatpush1.msra.mxu0 0.0
      %3073 = vmatprep.subr.mxu0 0.0
      %3074 = vmatpush1.msra.mxu0 0.0
      %3075 = vmatprep.subr.mxu0 0.0
      %3076 = vmatpush1.msra.mxu0 0.0
      %3077 = vmatprep.subr.mxu0 0.0
      %3078 = vmatpush1.msra.mxu0 0.0
      %3079 = vmatprep.subr.mxu0 0.0
      %3080 = vmatpush1.msra.mxu0 0.0
      %3081 = vmatprep.subr.mxu0 0.0
      %3082 = vmatpush1.msra.mxu0 0.0
      %3083 = vmatprep.subr.mxu0 0.0
      %3084 = vmatpush1.msra.mxu0 0.0
      %3085 = vmatprep.subr.mxu0 0.0
      %3086 = vmatpush1.msra.mxu0 0.0
      %3087 = vmatprep.mubr.f32.mxu0 0.0
      %3088 = vmatmul.mubr.f32.gmra.mrb[0].mxu0 %v3019
      %v3089 = vpop.f32.mrb[0].mxu0
      %v3090 = vadd.f32 0.0, %v3089
      %v3091 = vpop.f32.mrb[0].mxu0
      %3092 = vdwg.mxu0
      %3094 = vrot.lane.b32.xlu0 %v2754, 8
      %v3095 = vpop.permute.xlu0 %3094
      %3098 = vrot.lane.b32.xlu0 %v2922, 16
      %v3099 = vpop.permute.xlu0 %3098
      %3102 = vrot.lane.b32.xlu0 %v3090, 24
      %v3103 = vpop.permute.xlu0 %3102
      %v3105 = vsel %vm388, %v2586, %v3095
      %v3106 = vsel %vm1077, %v3105, %v3099
      %v3107 = vsel %vm1079, %v3106, %v3103
      %v3108 = vlaneseq
      %v3109 = vshrl.u32 %v3108, 7
      %v3110 = vsub.s32 0, %v3109
      %v3111 = vrot.slane %v2309, %v3110
      %v3113 = vsel %vm311, %v3107, 0
      %3115 = vmatprep.subr.mxu0 0.0
      %3116 = vmatpush1.msra.mxu0 %v2305
      %3117 = vmatprep.subr.mxu0 0.0
      %3118 = vmatpush1.msra.mxu0 %v2306
      %3119 = vmatprep.subr.mxu0 0.0
      %3120 = vmatpush1.msra.mxu0 %v2307
      %3121 = vmatprep.subr.mxu0 0.0
      %3122 = vmatpush1.msra.mxu0 %v2308
      %3123 = vmatprep.subr.mxu0 0.0
      %3124 = vmatpush1.msra.mxu0 0.0
      %3125 = vmatprep.subr.mxu0 0.0
      %3126 = vmatpush1.msra.mxu0 0.0
      %3127 = vmatprep.subr.mxu0 0.0
      %3128 = vmatpush1.msra.mxu0 0.0
      %3129 = vmatprep.subr.mxu0 0.0
      %3130 = vmatpush1.msra.mxu0 0.0
      %3131 = vmatprep.subr.mxu0 0.0
      %3132 = vmatpush1.msra.mxu0 0.0
      %3133 = vmatprep.subr.mxu0 0.0
      %3134 = vmatpush1.msra.mxu0 0.0
      %3135 = vmatprep.subr.mxu0 0.0
      %3136 = vmatpush1.msra.mxu0 0.0
      %3137 = vmatprep.subr.mxu0 0.0
      %3138 = vmatpush1.msra.mxu0 0.0
      %3139 = vmatprep.subr.mxu0 0.0
      %3140 = vmatpush1.msra.mxu0 0.0
      %3141 = vmatprep.subr.mxu0 0.0
      %3142 = vmatpush1.msra.mxu0 0.0
      %3143 = vmatprep.subr.mxu0 0.0
      %3144 = vmatpush1.msra.mxu0 0.0
      %3145 = vmatprep.subr.mxu0 0.0
      %3146 = vmatpush1.msra.mxu0 0.0
      %3147 = vmatprep.subr.mxu0 0.0
      %3148 = vmatpush1.msra.mxu0 0.0
      %3149 = vmatprep.subr.mxu0 0.0
      %3150 = vmatpush1.msra.mxu0 0.0
      %3151 = vmatprep.subr.mxu0 0.0
      %3152 = vmatpush1.msra.mxu0 0.0
      %3153 = vmatprep.subr.mxu0 0.0
      %3154 = vmatpush1.msra.mxu0 0.0
      %3155 = vmatprep.subr.mxu0 0.0
      %3156 = vmatpush1.msra.mxu0 0.0
      %3157 = vmatprep.subr.mxu0 0.0
      %3158 = vmatpush1.msra.mxu0 0.0
      %3159 = vmatprep.subr.mxu0 0.0
      %3160 = vmatpush1.msra.mxu0 0.0
      %3161 = vmatprep.subr.mxu0 0.0
      %3162 = vmatpush1.msra.mxu0 0.0
      %3163 = vmatprep.subr.mxu0 0.0
      %3164 = vmatpush1.msra.mxu0 0.0
      %3165 = vmatprep.subr.mxu0 0.0
      %3166 = vmatpush1.msra.mxu0 0.0
      %3167 = vmatprep.subr.mxu0 0.0
      %3168 = vmatpush1.msra.mxu0 0.0
      %3169 = vmatprep.subr.mxu0 0.0
      %3170 = vmatpush1.msra.mxu0 0.0
      %3171 = vmatprep.subr.mxu0 0.0
      %3172 = vmatpush1.msra.mxu0 0.0
      %3173 = vmatprep.subr.mxu0 0.0
      %3174 = vmatpush1.msra.mxu0 0.0
      %3175 = vmatprep.subr.mxu0 0.0
      %3176 = vmatpush1.msra.mxu0 0.0
      %3177 = vmatprep.subr.mxu0 0.0
      %3178 = vmatpush1.msra.mxu0 0.0
      %3179 = vmatprep.mubr.f32.mxu0 0.0
      %3180 = vmatmul.mubr.f32.gmra.mrb[0].mxu0 %v3113
      %v3181 = vpop.f32.mrb[0].mxu0
      %v3182 = vadd.f32 %v3111, %v3181
      %v3183 = vpop.f32.mrb[0].mxu0
      %3184 = vdwg.mxu0
      %v3185 = vadd.f32 %v2299, %v3182
      %v3186 = vsel %vm1159, %v3185, 0.0
      %3187 = vadd.xlane.f32.xlu0 %v3186
      %v3188 = vpop.xlane.xlu0 %3187
      %v3189 = vmul.f32 %v3188, %v1163
      %v3190 = vsub.f32 %v3185, %v3189
      %v3191 = vmul.f32 %v3190, %v3190
      %v3192 = vsel %vm1159, %v3191, 0.0
      %3193 = vadd.xlane.f32.xlu0 %v3192
      %v3194 = vpop.xlane.xlu0 %3193
      %v3195 = vmul.f32 %v3194, %v1163
      %v3196 = vadd.f32 %v3195, 1e-05
      %v3197 = vrsqrt.pop %v3196
      %v3198 = vmul.f32 %v3190, %v3197
      %v3199 = vlaneseq
      %v3200 = vshrl.u32 %v3199, 7
      %v3201 = vsub.s32 0, %v3200
      %v3202 = vrot.slane %v2310, %v3201
      %v3203 = vmul.f32 %v3198, %v3202
      %v3204 = vlaneseq
      %v3205 = vshrl.u32 %v3204, 7
      %v3206 = vsub.s32 0, %v3205
      %v3207 = vrot.slane %v2311, %v3206
      %v3208 = vadd.f32 %v3203, %v3207
      %v3209 = vlaneseq
      %v3210 = vshrl.u32 %v3209, 7
      %v3211 = vsub.s32 0, %v3210
      %v3212 = vrot.slane %v2316, %v3211
      %v3214 = vsel %vm311, %v3208, 0
      %3216 = vmatprep.subr.mxu0 0.0
      %3217 = vmatpush1.msra.mxu0 %v2312
      %3218 = vmatprep.subr.mxu0 0.0
      %3219 = vmatpush1.msra.mxu0 %v2313
      %3220 = vmatprep.subr.mxu0 0.0
      %3221 = vmatpush1.msra.mxu0 %v2314
      %3222 = vmatprep.subr.mxu0 0.0
      %3223 = vmatpush1.msra.mxu0 %v2315
      %3224 = vmatprep.subr.mxu0 0.0
      %3225 = vmatpush1.msra.mxu0 0.0
      %3226 = vmatprep.subr.mxu0 0.0
      %3227 = vmatpush1.msra.mxu0 0.0
      %3228 = vmatprep.subr.mxu0 0.0
      %3229 = vmatpush1.msra.mxu0 0.0
      %3230 = vmatprep.subr.mxu0 0.0
      %3231 = vmatpush1.msra.mxu0 0.0
      %3232 = vmatprep.subr.mxu0 0.0
      %3233 = vmatpush1.msra.mxu0 0.0
      %3234 = vmatprep.subr.mxu0 0.0
      %3235 = vmatpush1.msra.mxu0 0.0
      %3236 = vmatprep.subr.mxu0 0.0
      %3237 = vmatpush1.msra.mxu0 0.0
      %3238 = vmatprep.subr.mxu0 0.0
      %3239 = vmatpush1.msra.mxu0 0.0
      %3240 = vmatprep.subr.mxu0 0.0
      %3241 = vmatpush1.msra.mxu0 0.0
      %3242 = vmatprep.subr.mxu0 0.0
      %3243 = vmatpush1.msra.mxu0 0.0
      %3244 = vmatprep.subr.mxu0 0.0
      %3245 = vmatpush1.msra.mxu0 0.0
      %3246 = vmatprep.subr.mxu0 0.0
      %3247 = vmatpush1.msra.mxu0 0.0
      %3248 = vmatprep.subr.mxu0 0.0
      %3249 = vmatpush1.msra.mxu0 0.0
      %3250 = vmatprep.subr.mxu0 0.0
      %3251 = vmatpush1.msra.mxu0 0.0
      %3252 = vmatprep.subr.mxu0 0.0
      %3253 = vmatpush1.msra.mxu0 0.0
      %3254 = vmatprep.subr.mxu0 0.0
      %3255 = vmatpush1.msra.mxu0 0.0
      %3256 = vmatprep.subr.mxu0 0.0
      %3257 = vmatpush1.msra.mxu0 0.0
      %3258 = vmatprep.subr.mxu0 0.0
      %3259 = vmatpush1.msra.mxu0 0.0
      %3260 = vmatprep.subr.mxu0 0.0
      %3261 = vmatpush1.msra.mxu0 0.0
      %3262 = vmatprep.subr.mxu0 0.0
      %3263 = vmatpush1.msra.mxu0 0.0
      %3264 = vmatprep.subr.mxu0 0.0
      %3265 = vmatpush1.msra.mxu0 0.0
      %3266 = vmatprep.subr.mxu0 0.0
      %3267 = vmatpush1.msra.mxu0 0.0
      %3268 = vmatprep.subr.mxu0 0.0
      %3269 = vmatpush1.msra.mxu0 0.0
      %3270 = vmatprep.subr.mxu0 0.0
      %3271 = vmatpush1.msra.mxu0 0.0
      %3272 = vmatprep.subr.mxu0 0.0
      %3273 = vmatpush1.msra.mxu0 0.0
      %3274 = vmatprep.subr.mxu0 0.0
      %3275 = vmatpush1.msra.mxu0 0.0
      %3276 = vmatprep.subr.mxu0 0.0
      %3277 = vmatpush1.msra.mxu0 0.0
      %3278 = vmatprep.subr.mxu0 0.0
      %3279 = vmatpush1.msra.mxu0 0.0
      %3280 = vmatprep.mubr.f32.mxu0 0.0
      %3281 = vmatmul.mubr.f32.gmra.mrb[0].mxu0 %v3214
      %v3282 = vpop.f32.mrb[0].mxu0
      %v3283 = vadd.f32 %v3212, %v3282
      %v3284 = vpop.f32.mrb[0].mxu0
      %3285 = vdwg.mxu0
      %v3286 = vlaneseq
      %v3287 = vshrl.u32 %v3286, 7
      %v3288 = vsub.s32 0, %v3287
      %v3289 = vrot.slane %v2321, %v3288
      %3290 = vmatprep.subr.mxu0 0.0
      %3291 = vmatpush1.msra.mxu0 %v2317
      %3292 = vmatprep.subr.mxu0 0.0
      %3293 = vmatpush1.msra.mxu0 %v2318
      %3294 = vmatprep.subr.mxu0 0.0
      %3295 = vmatpush1.msra.mxu0 %v2319
      %3296 = vmatprep.subr.mxu0 0.0
      %3297 = vmatpush1.msra.mxu0 %v2320
      %3298 = vmatprep.subr.mxu0 0.0
      %3299 = vmatpush1.msra.mxu0 0.0
      %3300 = vmatprep.subr.mxu0 0.0
      %3301 = vmatpush1.msra.mxu0 0.0
      %3302 = vmatprep.subr.mxu0 0.0
      %3303 = vmatpush1.msra.mxu0 0.0
      %3304 = vmatprep.subr.mxu0 0.0
      %3305 = vmatpush1.msra.mxu0 0.0
      %3306 = vmatprep.subr.mxu0 0.0
      %3307 = vmatpush1.msra.mxu0 0.0
      %3308 = vmatprep.subr.mxu0 0.0
      %3309 = vmatpush1.msra.mxu0 0.0
      %3310 = vmatprep.subr.mxu0 0.0
      %3311 = vmatpush1.msra.mxu0 0.0
      %3312 = vmatprep.subr.mxu0 0.0
      %3313 = vmatpush1.msra.mxu0 0.0
      %3314 = vmatprep.subr.mxu0 0.0
      %3315 = vmatpush1.msra.mxu0 0.0
      %3316 = vmatprep.subr.mxu0 0.0
      %3317 = vmatpush1.msra.mxu0 0.0
      %3318 = vmatprep.subr.mxu0 0.0
      %3319 = vmatpush1.msra.mxu0 0.0
      %3320 = vmatprep.subr.mxu0 0.0
      %3321 = vmatpush1.msra.mxu0 0.0
      %3322 = vmatprep.subr.mxu0 0.0
      %3323 = vmatpush1.msra.mxu0 0.0
      %3324 = vmatprep.subr.mxu0 0.0
      %3325 = vmatpush1.msra.mxu0 0.0
      %3326 = vmatprep.subr.mxu0 0.0
      %3327 = vmatpush1.msra.mxu0 0.0
      %3328 = vmatprep.subr.mxu0 0.0
      %3329 = vmatpush1.msra.mxu0 0.0
      %3330 = vmatprep.subr.mxu0 0.0
      %3331 = vmatpush1.msra.mxu0 0.0
      %3332 = vmatprep.subr.mxu0 0.0
      %3333 = vmatpush1.msra.mxu0 0.0
      %3334 = vmatprep.subr.mxu0 0.0
      %3335 = vmatpush1.msra.mxu0 0.0
      %3336 = vmatprep.subr.mxu0 0.0
      %3337 = vmatpush1.msra.mxu0 0.0
      %3338 = vmatprep.subr.mxu0 0.0
      %3339 = vmatpush1.msra.mxu0 0.0
      %3340 = vmatprep.subr.mxu0 0.0
      %3341 = vmatpush1.msra.mxu0 0.0
      %3342 = vmatprep.subr.mxu0 0.0
      %3343 = vmatpush1.msra.mxu0 0.0
      %3344 = vmatprep.subr.mxu0 0.0
      %3345 = vmatpush1.msra.mxu0 0.0
      %3346 = vmatprep.subr.mxu0 0.0
      %3347 = vmatpush1.msra.mxu0 0.0
      %3348 = vmatprep.subr.mxu0 0.0
      %3349 = vmatpush1.msra.mxu0 0.0
      %3350 = vmatprep.subr.mxu0 0.0
      %3351 = vmatpush1.msra.mxu0 0.0
      %3352 = vmatprep.subr.mxu0 0.0
      %3353 = vmatpush1.msra.mxu0 0.0
      %3354 = vmatprep.mubr.f32.mxu0 0.0
      %3355 = vmatmul.mubr.f32.gmra.mrb[0].mxu0 %v1266
      %v3356 = vpop.f32.mrb[0].mxu0
      %v3357 = vadd.f32 %v3289, %v3356
      %v3358 = vpop.f32.mrb[0].mxu0
      %3359 = vdwg.mxu0
      %v3361 = vsel %vm388, %v3283, 0
      %v3364 = vsel %vm388, %v3357, 0
      %3366 = vmatprep.subr.mxu0 0.0
      %3367 = vmatpush1.xpose.msra.mxu0 %v3364
      %3368 = vmatprep.subr.mxu0 0.0
      %3369 = vmatpush1.xpose.msra.mxu0 0.0
      %3370 = vmatprep.subr.mxu0 0.0
      %3371 = vmatpush1.xpose.msra.mxu0 0.0
      %3372 = vmatprep.subr.mxu0 0.0
      %3373 = vmatpush1.xpose.msra.mxu0 0.0
      %3374 = vmatprep.subr.mxu0 0.0
      %3375 = vmatpush1.xpose.msra.mxu0 0.0
      %3376 = vmatprep.subr.mxu0 0.0
      %3377 = vmatpush1.xpose.msra.mxu0 0.0
      %3378 = vmatprep.subr.mxu0 0.0
      %3379 = vmatpush1.xpose.msra.mxu0 0.0
      %3380 = vmatprep.subr.mxu0 0.0
      %3381 = vmatpush1.xpose.msra.mxu0 0.0
      %3382 = vmatprep.subr.mxu0 0.0
      %3383 = vmatpush1.xpose.msra.mxu0 0.0
      %3384 = vmatprep.subr.mxu0 0.0
      %3385 = vmatpush1.xpose.msra.mxu0 0.0
      %3386 = vmatprep.subr.mxu0 0.0
      %3387 = vmatpush1.xpose.msra.mxu0 0.0
      %3388 = vmatprep.subr.mxu0 0.0
      %3389 = vmatpush1.xpose.msra.mxu0 0.0
      %3390 = vmatprep.subr.mxu0 0.0
      %3391 = vmatpush1.xpose.msra.mxu0 0.0
      %3392 = vmatprep.subr.mxu0 0.0
      %3393 = vmatpush1.xpose.msra.mxu0 0.0
      %3394 = vmatprep.subr.mxu0 0.0
      %3395 = vmatpush1.xpose.msra.mxu0 0.0
      %3396 = vmatprep.subr.mxu0 0.0
      %3397 = vmatpush1.xpose.msra.mxu0 0.0
      %3398 = vmatprep.subr.mxu0 0.0
      %3399 = vmatpush1.xpose.msra.mxu0 0.0
      %3400 = vmatprep.subr.mxu0 0.0
      %3401 = vmatpush1.xpose.msra.mxu0 0.0
      %3402 = vmatprep.subr.mxu0 0.0
      %3403 = vmatpush1.xpose.msra.mxu0 0.0
      %3404 = vmatprep.subr.mxu0 0.0
      %3405 = vmatpush1.xpose.msra.mxu0 0.0
      %3406 = vmatprep.subr.mxu0 0.0
      %3407 = vmatpush1.xpose.msra.mxu0 0.0
      %3408 = vmatprep.subr.mxu0 0.0
      %3409 = vmatpush1.xpose.msra.mxu0 0.0
      %3410 = vmatprep.subr.mxu0 0.0
      %3411 = vmatpush1.xpose.msra.mxu0 0.0
      %3412 = vmatprep.subr.mxu0 0.0
      %3413 = vmatpush1.xpose.msra.mxu0 0.0
      %3414 = vmatprep.subr.mxu0 0.0
      %3415 = vmatpush1.xpose.msra.mxu0 0.0
      %3416 = vmatprep.subr.mxu0 0.0
      %3417 = vmatpush1.xpose.msra.mxu0 0.0
      %3418 = vmatprep.subr.mxu0 0.0
      %3419 = vmatpush1.xpose.msra.mxu0 0.0
      %3420 = vmatprep.subr.mxu0 0.0
      %3421 = vmatpush1.xpose.msra.mxu0 0.0
      %3422 = vmatprep.subr.mxu0 0.0
      %3423 = vmatpush1.xpose.msra.mxu0 0.0
      %3424 = vmatprep.subr.mxu0 0.0
      %3425 = vmatpush1.xpose.msra.mxu0 0.0
      %3426 = vmatprep.subr.mxu0 0.0
      %3427 = vmatpush1.xpose.msra.mxu0 0.0
      %3428 = vmatprep.subr.mxu0 0.0
      %3429 = vmatpush1.xpose.msra.mxu0 0.0
      %3430 = vmatprep.mubr.f32.mxu0 0.0
      %3431 = vmatmul.mubr.f32.gmra.mrb[0].mxu0 %v3361
      %v3432 = vpop.f32.mrb[0].mxu0
      %v3433 = vadd.f32 0.0, %v3432
      %v3434 = vpop.f32.mrb[0].mxu0
      %3435 = vdwg.mxu0
      %v3436 = vmul.f32 %v3433, 0.35355338
      %v3437 = vsel %vm469, %v3436, -inf
      %3438 = vmax.xlane.f32.xlu0 %v3437
      %v3439 = vpop.xlane.xlu0 %3438
      %v3440 = vsub.f32 %v3436, %v3439
      %v3441 = vmul.f32 %v3440, 1.442695
      %v3442 = vpow.pop %v3441
      %v3443 = vsel %vm469, %v3442, 0.0
      %3444 = vadd.xlane.f32.xlu0 %v3443
      %v3445 = vpop.xlane.xlu0 %3444
      %v3446 = vrcp.pop %v3445
      %v3447 = vmul.f32 %v3442, %v3446
      %3448 = vrot.lane.b32.xlu0 %v3357, 96
      %v3449 = vpop.permute.xlu0 %3448
      %v3451 = vsel %vm483, %v3447, 0
      %v3453 = vsel %vm487, %v3449, 0
      %3455 = vmatprep.subr.mxu0 0.0
      %3456 = vmatpush1.msra.mxu0 %v3453
      %3457 = vmatprep.subr.mxu0 0.0
      %3458 = vmatpush1.msra.mxu0 0.0
      %3459 = vmatprep.subr.mxu0 0.0
      %3460 = vmatpush1.msra.mxu0 0.0
      %3461 = vmatprep.subr.mxu0 0.0
      %3462 = vmatpush1.msra.mxu0 0.0
      %3463 = vmatprep.subr.mxu0 0.0
      %3464 = vmatpush1.msra.mxu0 0.0
      %3465 = vmatprep.subr.mxu0 0.0
      %3466 = vmatpush1.msra.mxu0 0.0
      %3467 = vmatprep.subr.mxu0 0.0
      %3468 = vmatpush1.msra.mxu0 0.0
      %3469 = vmatprep.subr.mxu0 0.0
      %3470 = vmatpush1.msra.mxu0 0.0
      %3471 = vmatprep.subr.mxu0 0.0
      %3472 = vmatpush1.msra.mxu0 0.0
      %3473 = vmatprep.subr.mxu0 0.0
      %3474 = vmatpush1.msra.mxu0 0.0
      %3475 = vmatprep.subr.mxu0 0.0
      %3476 = vmatpush1.msra.mxu0 0.0
      %3477 = vmatprep.subr.mxu0 0.0
      %3478 = vmatpush1.msra.mxu0 0.0
      %3479 = vmatprep.subr.mxu0 0.0
      %3480 = vmatpush1.msra.mxu0 0.0
      %3481 = vmatprep.subr.mxu0 0.0
      %3482 = vmatpush1.msra.mxu0 0.0
      %3483 = vmatprep.subr.mxu0 0.0
      %3484 = vmatpush1.msra.mxu0 0.0
      %3485 = vmatprep.subr.mxu0 0.0
      %3486 = vmatpush1.msra.mxu0 0.0
      %3487 = vmatprep.subr.mxu0 0.0
      %3488 = vmatpush1.msra.mxu0 0.0
      %3489 = vmatprep.subr.mxu0 0.0
      %3490 = vmatpush1.msra.mxu0 0.0
      %3491 = vmatprep.subr.mxu0 0.0
      %3492 = vmatpush1.msra.mxu0 0.0
      %3493 = vmatprep.subr.mxu0 0.0
      %3494 = vmatpush1.msra.mxu0 0.0
      %3495 = vmatprep.subr.mxu0 0.0
      %3496 = vmatpush1.msra.mxu0 0.0
      %3497 = vmatprep.subr.mxu0 0.0
      %3498 = vmatpush1.msra.mxu0 0.0
      %3499 = vmatprep.subr.mxu0 0.0
      %3500 = vmatpush1.msra.mxu0 0.0
      %3501 = vmatprep.subr.mxu0 0.0
      %3502 = vmatpush1.msra.mxu0 0.0
      %3503 = vmatprep.subr.mxu0 0.0
      %3504 = vmatpush1.msra.mxu0 0.0
      %3505 = vmatprep.subr.mxu0 0.0
      %3506 = vmatpush1.msra.mxu0 0.0
      %3507 = vmatprep.subr.mxu0 0.0
      %3508 = vmatpush1.msra.mxu0 0.0
      %3509 = vmatprep.subr.mxu0 0.0
      %3510 = vmatpush1.msra.mxu0 0.0
      %3511 = vmatprep.subr.mxu0 0.0
      %3512 = vmatpush1.msra.mxu0 0.0
      %3513 = vmatprep.subr.mxu0 0.0
      %3514 = vmatpush1.msra.mxu0 0.0
      %3515 = vmatprep.subr.mxu0 0.0
      %3516 = vmatpush1.msra.mxu0 0.0
      %3517 = vmatprep.subr.mxu0 0.0
      %3518 = vmatpush1.msra.mxu0 0.0
      %3519 = vmatprep.mubr.f32.mxu0 0.0
      %3520 = vmatmul.mubr.f32.gmra.mrb[0].mxu0 %v3451
      %v3521 = vpop.f32.mrb[0].mxu0
      %v3522 = vadd.f32 0.0, %v3521
      %v3523 = vpop.f32.mrb[0].mxu0
      %3524 = vdwg.mxu0
      %3525 = vrot.lane.b32.xlu0 %v3283, 120
      %v3526 = vpop.permute.xlu0 %3525
      %3527 = vrot.lane.b32.xlu0 %v3357, 120
      %v3528 = vpop.permute.xlu0 %3527
      %v3529 = vsel %vm388, %v3526, 0
      %v3531 = vsel %vm388, %v3528, 0
      %3533 = vmatprep.subr.mxu0 0.0
      %3534 = vmatpush1.xpose.msra.mxu0 %v3531
      %3535 = vmatprep.subr.mxu0 0.0
      %3536 = vmatpush1.xpose.msra.mxu0 0.0
      %3537 = vmatprep.subr.mxu0 0.0
      %3538 = vmatpush1.xpose.msra.mxu0 0.0
      %3539 = vmatprep.subr.mxu0 0.0
      %3540 = vmatpush1.xpose.msra.mxu0 0.0
      %3541 = vmatprep.subr.mxu0 0.0
      %3542 = vmatpush1.xpose.msra.mxu0 0.0
      %3543 = vmatprep.subr.mxu0 0.0
      %3544 = vmatpush1.xpose.msra.mxu0 0.0
      %3545 = vmatprep.subr.mxu0 0.0
      %3546 = vmatpush1.xpose.msra.mxu0 0.0
      %3547 = vmatprep.subr.mxu0 0.0
      %3548 = vmatpush1.xpose.msra.mxu0 0.0
      %3549 = vmatprep.subr.mxu0 0.0
      %3550 = vmatpush1.xpose.msra.mxu0 0.0
      %3551 = vmatprep.subr.mxu0 0.0
      %3552 = vmatpush1.xpose.msra.mxu0 0.0
      %3553 = vmatprep.subr.mxu0 0.0
      %3554 = vmatpush1.xpose.msra.mxu0 0.0
      %3555 = vmatprep.subr.mxu0 0.0
      %3556 = vmatpush1.xpose.msra.mxu0 0.0
      %3557 = vmatprep.subr.mxu0 0.0
      %3558 = vmatpush1.xpose.msra.mxu0 0.0
      %3559 = vmatprep.subr.mxu0 0.0
      %3560 = vmatpush1.xpose.msra.mxu0 0.0
      %3561 = vmatprep.subr.mxu0 0.0
      %3562 = vmatpush1.xpose.msra.mxu0 0.0
      %3563 = vmatprep.subr.mxu0 0.0
      %3564 = vmatpush1.xpose.msra.mxu0 0.0
      %3565 = vmatprep.subr.mxu0 0.0
      %3566 = vmatpush1.xpose.msra.mxu0 0.0
      %3567 = vmatprep.subr.mxu0 0.0
      %3568 = vmatpush1.xpose.msra.mxu0 0.0
      %3569 = vmatprep.subr.mxu0 0.0
      %3570 = vmatpush1.xpose.msra.mxu0 0.0
      %3571 = vmatprep.subr.mxu0 0.0
      %3572 = vmatpush1.xpose.msra.mxu0 0.0
      %3573 = vmatprep.subr.mxu0 0.0
      %3574 = vmatpush1.xpose.msra.mxu0 0.0
      %3575 = vmatprep.subr.mxu0 0.0
      %3576 = vmatpush1.xpose.msra.mxu0 0.0
      %3577 = vmatprep.subr.mxu0 0.0
      %3578 = vmatpush1.xpose.msra.mxu0 0.0
      %3579 = vmatprep.subr.mxu0 0.0
      %3580 = vmatpush1.xpose.msra.mxu0 0.0
      %3581 = vmatprep.subr.mxu0 0.0
      %3582 = vmatpush1.xpose.msra.mxu0 0.0
      %3583 = vmatprep.subr.mxu0 0.0
      %3584 = vmatpush1.xpose.msra.mxu0 0.0
      %3585 = vmatprep.subr.mxu0 0.0
      %3586 = vmatpush1.xpose.msra.mxu0 0.0
      %3587 = vmatprep.subr.mxu0 0.0
      %3588 = vmatpush1.xpose.msra.mxu0 0.0
      %3589 = vmatprep.subr.mxu0 0.0
      %3590 = vmatpush1.xpose.msra.mxu0 0.0
      %3591 = vmatprep.subr.mxu0 0.0
      %3592 = vmatpush1.xpose.msra.mxu0 0.0
      %3593 = vmatprep.subr.mxu0 0.0
      %3594 = vmatpush1.xpose.msra.mxu0 0.0
      %3595 = vmatprep.subr.mxu0 0.0
      %3596 = vmatpush1.xpose.msra.mxu0 0.0
      %3597 = vmatprep.mubr.f32.mxu0 0.0
      %3598 = vmatmul.mubr.f32.gmra.mrb[0].mxu0 %v3529
      %v3599 = vpop.f32.mrb[0].mxu0
      %v3600 = vadd.f32 0.0, %v3599
      %v3601 = vpop.f32.mrb[0].mxu0
      %3602 = vdwg.mxu0
      %v3603 = vmul.f32 %v3600, 0.35355338
      %v3604 = vsel %vm469, %v3603, -inf
      %3605 = vmax.xlane.f32.xlu0 %v3604
      %v3606 = vpop.xlane.xlu0 %3605
      %v3607 = vsub.f32 %v3603, %v3606
      %v3608 = vmul.f32 %v3607, 1.442695
      %v3609 = vpow.pop %v3608
      %v3610 = vsel %vm469, %v3609, 0.0
      %3611 = vadd.xlane.f32.xlu0 %v3610
      %v3612 = vpop.xlane.xlu0 %3611
      %v3613 = vrcp.pop %v3612
      %v3614 = vmul.f32 %v3609, %v3613
      %3615 = vrot.lane.b32.xlu0 %v3357, 88
      %v3616 = vpop.permute.xlu0 %3615
      %v3618 = vsel %vm483, %v3614, 0
      %v3620 = vsel %vm487, %v3616, 0
      %3622 = vmatprep.subr.mxu0 0.0
      %3623 = vmatpush1.msra.mxu0 %v3620
      %3624 = vmatprep.subr.mxu0 0.0
      %3625 = vmatpush1.msra.mxu0 0.0
      %3626 = vmatprep.subr.mxu0 0.0
      %3627 = vmatpush1.msra.mxu0 0.0
      %3628 = vmatprep.subr.mxu0 0.0
      %3629 = vmatpush1.msra.mxu0 0.0
      %3630 = vmatprep.subr.mxu0 0.0
      %3631 = vmatpush1.msra.mxu0 0.0
      %3632 = vmatprep.subr.mxu0 0.0
      %3633 = vmatpush1.msra.mxu0 0.0
      %3634 = vmatprep.subr.mxu0 0.0
      %3635 = vmatpush1.msra.mxu0 0.0
      %3636 = vmatprep.subr.mxu0 0.0
      %3637 = vmatpush1.msra.mxu0 0.0
      %3638 = vmatprep.subr.mxu0 0.0
      %3639 = vmatpush1.msra.mxu0 0.0
      %3640 = vmatprep.subr.mxu0 0.0
      %3641 = vmatpush1.msra.mxu0 0.0
      %3642 = vmatprep.subr.mxu0 0.0
      %3643 = vmatpush1.msra.mxu0 0.0
      %3644 = vmatprep.subr.mxu0 0.0
      %3645 = vmatpush1.msra.mxu0 0.0
      %3646 = vmatprep.subr.mxu0 0.0
      %3647 = vmatpush1.msra.mxu0 0.0
      %3648 = vmatprep.subr.mxu0 0.0
      %3649 = vmatpush1.msra.mxu0 0.0
      %3650 = vmatprep.subr.mxu0 0.0
      %3651 = vmatpush1.msra.mxu0 0.0
      %3652 = vmatprep.subr.mxu0 0.0
      %3653 = vmatpush1.msra.mxu0 0.0
      %3654 = vmatprep.subr.mxu0 0.0
      %3655 = vmatpush1.msra.mxu0 0.0
      %3656 = vmatprep.subr.mxu0 0.0
      %3657 = vmatpush1.msra.mxu0 0.0
      %3658 = vmatprep.subr.mxu0 0.0
      %3659 = vmatpush1.msra.mxu0 0.0
      %3660 = vmatprep.subr.mxu0 0.0
      %3661 = vmatpush1.msra.mxu0 0.0
      %3662 = vmatprep.subr.mxu0 0.0
      %3663 = vmatpush1.msra.mxu0 0.0
      %3664 = vmatprep.subr.mxu0 0.0
      %3665 = vmatpush1.msra.mxu0 0.0
      %3666 = vmatprep.subr.mxu0 0.0
      %3667 = vmatpush1.msra.mxu0 0.0
      %3668 = vmatprep.subr.mxu0 0.0
      %3669 = vmatpush1.msra.mxu0 0.0
      %3670 = vmatprep.subr.mxu0 0.0
      %3671 = vmatpush1.msra.mxu0 0.0
      %3672 = vmatprep.subr.mxu0 0.0
      %3673 = vmatpush1.msra.mxu0 0.0
      %3674 = vmatprep.subr.mxu0 0.0
      %3675 = vmatpush1.msra.mxu0 0.0
      %3676 = vmatprep.subr.mxu0 0.0
      %3677 = vmatpush1.msra.mxu0 0.0
      %3678 = vmatprep.subr.mxu0 0.0
      %3679 = vmatpush1.msra.mxu0 0.0
      %3680 = vmatprep.subr.mxu0 0.0
      %3681 = vmatpush1.msra.mxu0 0.0
      %3682 = vmatprep.subr.mxu0 0.0
      %3683 = vmatpush1.msra.mxu0 0.0
      %3684 = vmatprep.subr.mxu0 0.0
      %3685 = vmatpush1.msra.mxu0 0.0
      %3686 = vmatprep.mubr.f32.mxu0 0.0
      %3687 = vmatmul.mubr.f32.gmra.mrb[0].mxu0 %v3618
      %v3688 = vpop.f32.mrb[0].mxu0
      %v3689 = vadd.f32 0.0, %v3688
      %v3690 = vpop.f32.mrb[0].mxu0
      %3691 = vdwg.mxu0
      %3692 = vrot.lane.b32.xlu0 %v3283, 112
      %v3693 = vpop.permute.xlu0 %3692
      %3694 = vrot.lane.b32.xlu0 %v3357, 112
      %v3695 = vpop.permute.xlu0 %3694
      %v3696 = vsel %vm388, %v3693, 0
      %v3698 = vsel %vm388, %v3695, 0
      %3700 = vmatprep.subr.mxu0 0.0
      %3701 = vmatpush1.xpose.msra.mxu0 %v3698
      %3702 = vmatprep.subr.mxu0 0.0
      %3703 = vmatpush1.xpose.msra.mxu0 0.0
      %3704 = vmatprep.subr.mxu0 0.0
      %3705 = vmatpush1.xpose.msra.mxu0 0.0
      %3706 = vmatprep.subr.mxu0 0.0
      %3707 = vmatpush1.xpose.msra.mxu0 0.0
      %3708 = vmatprep.subr.mxu0 0.0
      %3709 = vmatpush1.xpose.msra.mxu0 0.0
      %3710 = vmatprep.subr.mxu0 0.0
      %3711 = vmatpush1.xpose.msra.mxu0 0.0
      %3712 = vmatprep.subr.mxu0 0.0
      %3713 = vmatpush1.xpose.msra.mxu0 0.0
      %3714 = vmatprep.subr.mxu0 0.0
      %3715 = vmatpush1.xpose.msra.mxu0 0.0
      %3716 = vmatprep.subr.mxu0 0.0
      %3717 = vmatpush1.xpose.msra.mxu0 0.0
      %3718 = vmatprep.subr.mxu0 0.0
      %3719 = vmatpush1.xpose.msra.mxu0 0.0
      %3720 = vmatprep.subr.mxu0 0.0
      %3721 = vmatpush1.xpose.msra.mxu0 0.0
      %3722 = vmatprep.subr.mxu0 0.0
      %3723 = vmatpush1.xpose.msra.mxu0 0.0
      %3724 = vmatprep.subr.mxu0 0.0
      %3725 = vmatpush1.xpose.msra.mxu0 0.0
      %3726 = vmatprep.subr.mxu0 0.0
      %3727 = vmatpush1.xpose.msra.mxu0 0.0
      %3728 = vmatprep.subr.mxu0 0.0
      %3729 = vmatpush1.xpose.msra.mxu0 0.0
      %3730 = vmatprep.subr.mxu0 0.0
      %3731 = vmatpush1.xpose.msra.mxu0 0.0
      %3732 = vmatprep.subr.mxu0 0.0
      %3733 = vmatpush1.xpose.msra.mxu0 0.0
      %3734 = vmatprep.subr.mxu0 0.0
      %3735 = vmatpush1.xpose.msra.mxu0 0.0
      %3736 = vmatprep.subr.mxu0 0.0
      %3737 = vmatpush1.xpose.msra.mxu0 0.0
      %3738 = vmatprep.subr.mxu0 0.0
      %3739 = vmatpush1.xpose.msra.mxu0 0.0
      %3740 = vmatprep.subr.mxu0 0.0
      %3741 = vmatpush1.xpose.msra.mxu0 0.0
      %3742 = vmatprep.subr.mxu0 0.0
      %3743 = vmatpush1.xpose.msra.mxu0 0.0
      %3744 = vmatprep.subr.mxu0 0.0
      %3745 = vmatpush1.xpose.msra.mxu0 0.0
      %3746 = vmatprep.subr.mxu0 0.0
      %3747 = vmatpush1.xpose.msra.mxu0 0.0
      %3748 = vmatprep.subr.mxu0 0.0
      %3749 = vmatpush1.xpose.msra.mxu0 0.0
      %3750 = vmatprep.subr.mxu0 0.0
      %3751 = vmatpush1.xpose.msra.mxu0 0.0
      %3752 = vmatprep.subr.mxu0 0.0
      %3753 = vmatpush1.xpose.msra.mxu0 0.0
      %3754 = vmatprep.subr.mxu0 0.0
      %3755 = vmatpush1.xpose.msra.mxu0 0.0
      %3756 = vmatprep.subr.mxu0 0.0
      %3757 = vmatpush1.xpose.msra.mxu0 0.0
      %3758 = vmatprep.subr.mxu0 0.0
      %3759 = vmatpush1.xpose.msra.mxu0 0.0
      %3760 = vmatprep.subr.mxu0 0.0
      %3761 = vmatpush1.xpose.msra.mxu0 0.0
      %3762 = vmatprep.subr.mxu0 0.0
      %3763 = vmatpush1.xpose.msra.mxu0 0.0
      %3764 = vmatprep.mubr.f32.mxu0 0.0
      %3765 = vmatmul.mubr.f32.gmra.mrb[0].mxu0 %v3696
      %v3766 = vpop.f32.mrb[0].mxu0
      %v3767 = vadd.f32 0.0, %v3766
      %v3768 = vpop.f32.mrb[0].mxu0
      %3769 = vdwg.mxu0
      %v3770 = vmul.f32 %v3767, 0.35355338
      %v3771 = vsel %vm469, %v3770, -inf
      %3772 = vmax.xlane.f32.xlu0 %v3771
      %v3773 = vpop.xlane.xlu0 %3772
      %v3774 = vsub.f32 %v3770, %v3773
      %v3775 = vmul.f32 %v3774, 1.442695
      %v3776 = vpow.pop %v3775
      %v3777 = vsel %vm469, %v3776, 0.0
      %3778 = vadd.xlane.f32.xlu0 %v3777
      %v3779 = vpop.xlane.xlu0 %3778
      %v3780 = vrcp.pop %v3779
      %v3781 = vmul.f32 %v3776, %v3780
      %3782 = vrot.lane.b32.xlu0 %v3357, 80
      %v3783 = vpop.permute.xlu0 %3782
      %v3785 = vsel %vm483, %v3781, 0
      %v3787 = vsel %vm487, %v3783, 0
      %3789 = vmatprep.subr.mxu0 0.0
      %3790 = vmatpush1.msra.mxu0 %v3787
      %3791 = vmatprep.subr.mxu0 0.0
      %3792 = vmatpush1.msra.mxu0 0.0
      %3793 = vmatprep.subr.mxu0 0.0
      %3794 = vmatpush1.msra.mxu0 0.0
      %3795 = vmatprep.subr.mxu0 0.0
      %3796 = vmatpush1.msra.mxu0 0.0
      %3797 = vmatprep.subr.mxu0 0.0
      %3798 = vmatpush1.msra.mxu0 0.0
      %3799 = vmatprep.subr.mxu0 0.0
      %3800 = vmatpush1.msra.mxu0 0.0
      %3801 = vmatprep.subr.mxu0 0.0
      %3802 = vmatpush1.msra.mxu0 0.0
      %3803 = vmatprep.subr.mxu0 0.0
      %3804 = vmatpush1.msra.mxu0 0.0
      %3805 = vmatprep.subr.mxu0 0.0
      %3806 = vmatpush1.msra.mxu0 0.0
      %3807 = vmatprep.subr.mxu0 0.0
      %3808 = vmatpush1.msra.mxu0 0.0
      %3809 = vmatprep.subr.mxu0 0.0
      %3810 = vmatpush1.msra.mxu0 0.0
      %3811 = vmatprep.subr.mxu0 0.0
      %3812 = vmatpush1.msra.mxu0 0.0
      %3813 = vmatprep.subr.mxu0 0.0
      %3814 = vmatpush1.msra.mxu0 0.0
      %3815 = vmatprep.subr.mxu0 0.0
      %3816 = vmatpush1.msra.mxu0 0.0
      %3817 = vmatprep.subr.mxu0 0.0
      %3818 = vmatpush1.msra.mxu0 0.0
      %3819 = vmatprep.subr.mxu0 0.0
      %3820 = vmatpush1.msra.mxu0 0.0
      %3821 = vmatprep.subr.mxu0 0.0
      %3822 = vmatpush1.msra.mxu0 0.0
      %3823 = vmatprep.subr.mxu0 0.0
      %3824 = vmatpush1.msra.mxu0 0.0
      %3825 = vmatprep.subr.mxu0 0.0
      %3826 = vmatpush1.msra.mxu0 0.0
      %3827 = vmatprep.subr.mxu0 0.0
      %3828 = vmatpush1.msra.mxu0 0.0
      %3829 = vmatprep.subr.mxu0 0.0
      %3830 = vmatpush1.msra.mxu0 0.0
      %3831 = vmatprep.subr.mxu0 0.0
      %3832 = vmatpush1.msra.mxu0 0.0
      %3833 = vmatprep.subr.mxu0 0.0
      %3834 = vmatpush1.msra.mxu0 0.0
      %3835 = vmatprep.subr.mxu0 0.0
      %3836 = vmatpush1.msra.mxu0 0.0
      %3837 = vmatprep.subr.mxu0 0.0
      %3838 = vmatpush1.msra.mxu0 0.0
      %3839 = vmatprep.subr.mxu0 0.0
      %3840 = vmatpush1.msra.mxu0 0.0
      %3841 = vmatprep.subr.mxu0 0.0
      %3842 = vmatpush1.msra.mxu0 0.0
      %3843 = vmatprep.subr.mxu0 0.0
      %3844 = vmatpush1.msra.mxu0 0.0
      %3845 = vmatprep.subr.mxu0 0.0
      %3846 = vmatpush1.msra.mxu0 0.0
      %3847 = vmatprep.subr.mxu0 0.0
      %3848 = vmatpush1.msra.mxu0 0.0
      %3849 = vmatprep.subr.mxu0 0.0
      %3850 = vmatpush1.msra.mxu0 0.0
      %3851 = vmatprep.subr.mxu0 0.0
      %3852 = vmatpush1.msra.mxu0 0.0
      %3853 = vmatprep.mubr.f32.mxu0 0.0
      %3854 = vmatmul.mubr.f32.gmra.mrb[0].mxu0 %v3785
      %v3855 = vpop.f32.mrb[0].mxu0
      %v3856 = vadd.f32 0.0, %v3855
      %v3857 = vpop.f32.mrb[0].mxu0
      %3858 = vdwg.mxu0
      %3859 = vrot.lane.b32.xlu0 %v3283, 104
      %v3860 = vpop.permute.xlu0 %3859
      %3861 = vrot.lane.b32.xlu0 %v3357, 104
      %v3862 = vpop.permute.xlu0 %3861
      %v3863 = vsel %vm388, %v3860, 0
      %v3865 = vsel %vm388, %v3862, 0
      %3867 = vmatprep.subr.mxu0 0.0
      %3868 = vmatpush1.xpose.msra.mxu0 %v3865
      %3869 = vmatprep.subr.mxu0 0.0
      %3870 = vmatpush1.xpose.msra.mxu0 0.0
      %3871 = vmatprep.subr.mxu0 0.0
      %3872 = vmatpush1.xpose.msra.mxu0 0.0
      %3873 = vmatprep.subr.mxu0 0.0
      %3874 = vmatpush1.xpose.msra.mxu0 0.0
      %3875 = vmatprep.subr.mxu0 0.0
      %3876 = vmatpush1.xpose.msra.mxu0 0.0
      %3877 = vmatprep.subr.mxu0 0.0
      %3878 = vmatpush1.xpose.msra.mxu0 0.0
      %3879 = vmatprep.subr.mxu0 0.0
      %3880 = vmatpush1.xpose.msra.mxu0 0.0
      %3881 = vmatprep.subr.mxu0 0.0
      %3882 = vmatpush1.xpose.msra.mxu0 0.0
      %3883 = vmatprep.subr.mxu0 0.0
      %3884 = vmatpush1.xpose.msra.mxu0 0.0
      %3885 = vmatprep.subr.mxu0 0.0
      %3886 = vmatpush1.xpose.msra.mxu0 0.0
      %3887 = vmatprep.subr.mxu0 0.0
      %3888 = vmatpush1.xpose.msra.mxu0 0.0
      %3889 = vmatprep.subr.mxu0 0.0
      %3890 = vmatpush1.xpose.msra.mxu0 0.0
      %3891 = vmatprep.subr.mxu0 0.0
      %3892 = vmatpush1.xpose.msra.mxu0 0.0
      %3893 = vmatprep.subr.mxu0 0.0
      %3894 = vmatpush1.xpose.msra.mxu0 0.0
      %3895 = vmatprep.subr.mxu0 0.0
      %3896 = vmatpush1.xpose.msra.mxu0 0.0
      %3897 = vmatprep.subr.mxu0 0.0
      %3898 = vmatpush1.xpose.msra.mxu0 0.0
      %3899 = vmatprep.subr.mxu0 0.0
      %3900 = vmatpush1.xpose.msra.mxu0 0.0
      %3901 = vmatprep.subr.mxu0 0.0
      %3902 = vmatpush1.xpose.msra.mxu0 0.0
      %3903 = vmatprep.subr.mxu0 0.0
      %3904 = vmatpush1.xpose.msra.mxu0 0.0
      %3905 = vmatprep.subr.mxu0 0.0
      %3906 = vmatpush1.xpose.msra.mxu0 0.0
      %3907 = vmatprep.subr.mxu0 0.0
      %3908 = vmatpush1.xpose.msra.mxu0 0.0
      %3909 = vmatprep.subr.mxu0 0.0
      %3910 = vmatpush1.xpose.msra.mxu0 0.0
      %3911 = vmatprep.subr.mxu0 0.0
      %3912 = vmatpush1.xpose.msra.mxu0 0.0
      %3913 = vmatprep.subr.mxu0 0.0
      %3914 = vmatpush1.xpose.msra.mxu0 0.0
      %3915 = vmatprep.subr.mxu0 0.0
      %3916 = vmatpush1.xpose.msra.mxu0 0.0
      %3917 = vmatprep.subr.mxu0 0.0
      %3918 = vmatpush1.xpose.msra.mxu0 0.0
      %3919 = vmatprep.subr.mxu0 0.0
      %3920 = vmatpush1.xpose.msra.mxu0 0.0
      %3921 = vmatprep.subr.mxu0 0.0
      %3922 = vmatpush1.xpose.msra.mxu0 0.0
      %3923 = vmatprep.subr.mxu0 0.0
      %3924 = vmatpush1.xpose.msra.mxu0 0.0
      %3925 = vmatprep.subr.mxu0 0.0
      %3926 = vmatpush1.xpose.msra.mxu0 0.0
      %3927 = vmatprep.subr.mxu0 0.0
      %3928 = vmatpush1.xpose.msra.mxu0 0.0
      %3929 = vmatprep.subr.mxu0 0.0
      %3930 = vmatpush1.xpose.msra.mxu0 0.0
      %3931 = vmatprep.mubr.f32.mxu0 0.0
      %3932 = vmatmul.mubr.f32.gmra.mrb[0].mxu0 %v3863
      %v3933 = vpop.f32.mrb[0].mxu0
      %v3934 = vadd.f32 0.0, %v3933
      %v3935 = vpop.f32.mrb[0].mxu0
      %3936 = vdwg.mxu0
      %v3937 = vmul.f32 %v3934, 0.35355338
      %v3938 = vsel %vm469, %v3937, -inf
      %3939 = vmax.xlane.f32.xlu0 %v3938
      %v3940 = vpop.xlane.xlu0 %3939
      %v3941 = vsub.f32 %v3937, %v3940
      %v3942 = vmul.f32 %v3941, 1.442695
      %v3943 = vpow.pop %v3942
      %v3944 = vsel %vm469, %v3943, 0.0
      %3945 = vadd.xlane.f32.xlu0 %v3944
      %v3946 = vpop.xlane.xlu0 %3945
      %v3947 = vrcp.pop %v3946
      %v3948 = vmul.f32 %v3943, %v3947
      %3949 = vrot.lane.b32.xlu0 %v3357, 72
      %v3950 = vpop.permute.xlu0 %3949
      %v3952 = vsel %vm483, %v3948, 0
      %v3954 = vsel %vm487, %v3950, 0
      %3956 = vmatprep.subr.mxu0 0.0
      %3957 = vmatpush1.msra.mxu0 %v3954
      %3958 = vmatprep.subr.mxu0 0.0
      %3959 = vmatpush1.msra.mxu0 0.0
      %3960 = vmatprep.subr.mxu0 0.0
      %3961 = vmatpush1.msra.mxu0 0.0
      %3962 = vmatprep.subr.mxu0 0.0
      %3963 = vmatpush1.msra.mxu0 0.0
      %3964 = vmatprep.subr.mxu0 0.0
      %3965 = vmatpush1.msra.mxu0 0.0
      %3966 = vmatprep.subr.mxu0 0.0
      %3967 = vmatpush1.msra.mxu0 0.0
      %3968 = vmatprep.subr.mxu0 0.0
      %3969 = vmatpush1.msra.mxu0 0.0
      %3970 = vmatprep.subr.mxu0 0.0
      %3971 = vmatpush1.msra.mxu0 0.0
      %3972 = vmatprep.subr.mxu0 0.0
      %3973 = vmatpush1.msra.mxu0 0.0
      %3974 = vmatprep.subr.mxu0 0.0
      %3975 = vmatpush1.msra.mxu0 0.0
      %3976 = vmatprep.subr.mxu0 0.0
      %3977 = vmatpush1.msra.mxu0 0.0
      %3978 = vmatprep.subr.mxu0 0.0
      %3979 = vmatpush1.msra.mxu0 0.0
      %3980 = vmatprep.subr.mxu0 0.0
      %3981 = vmatpush1.msra.mxu0 0.0
      %3982 = vmatprep.subr.mxu0 0.0
      %3983 = vmatpush1.msra.mxu0 0.0
      %3984 = vmatprep.subr.mxu0 0.0
      %3985 = vmatpush1.msra.mxu0 0.0
      %3986 = vmatprep.subr.mxu0 0.0
      %3987 = vmatpush1.msra.mxu0 0.0
      %3988 = vmatprep.subr.mxu0 0.0
      %3989 = vmatpush1.msra.mxu0 0.0
      %3990 = vmatprep.subr.mxu0 0.0
      %3991 = vmatpush1.msra.mxu0 0.0
      %3992 = vmatprep.subr.mxu0 0.0
      %3993 = vmatpush1.msra.mxu0 0.0
      %3994 = vmatprep.subr.mxu0 0.0
      %3995 = vmatpush1.msra.mxu0 0.0
      %3996 = vmatprep.subr.mxu0 0.0
      %3997 = vmatpush1.msra.mxu0 0.0
      %3998 = vmatprep.subr.mxu0 0.0
      %3999 = vmatpush1.msra.mxu0 0.0
      %4000 = vmatprep.subr.mxu0 0.0
      %4001 = vmatpush1.msra.mxu0 0.0
      %4002 = vmatprep.subr.mxu0 0.0
      %4003 = vmatpush1.msra.mxu0 0.0
      %4004 = vmatprep.subr.mxu0 0.0
      %4005 = vmatpush1.msra.mxu0 0.0
      %4006 = vmatprep.subr.mxu0 0.0
      %4007 = vmatpush1.msra.mxu0 0.0
      %4008 = vmatprep.subr.mxu0 0.0
      %4009 = vmatpush1.msra.mxu0 0.0
      %4010 = vmatprep.subr.mxu0 0.0
      %4011 = vmatpush1.msra.mxu0 0.0
      %4012 = vmatprep.subr.mxu0 0.0
      %4013 = vmatpush1.msra.mxu0 0.0
      %4014 = vmatprep.subr.mxu0 0.0
      %4015 = vmatpush1.msra.mxu0 0.0
      %4016 = vmatprep.subr.mxu0 0.0
      %4017 = vmatpush1.msra.mxu0 0.0
      %4018 = vmatprep.subr.mxu0 0.0
      %4019 = vmatpush1.msra.mxu0 0.0
      %4020 = vmatprep.mubr.f32.mxu0 0.0
      %4021 = vmatmul.mubr.f32.gmra.mrb[0].mxu0 %v3952
      %v4022 = vpop.f32.mrb[0].mxu0
      %v4023 = vadd.f32 0.0, %v4022
      %v4024 = vpop.f32.mrb[0].mxu0
      %4025 = vdwg.mxu0
      %4027 = vrot.lane.b32.xlu0 %v3689, 8
      %v4028 = vpop.permute.xlu0 %4027
      %4031 = vrot.lane.b32.xlu0 %v3856, 16
      %v4032 = vpop.permute.xlu0 %4031
      %4035 = vrot.lane.b32.xlu0 %v4023, 24
      %v4036 = vpop.permute.xlu0 %4035
      %v4038 = vsel %vm388, %v3522, %v4028
      %v4039 = vsel %vm1077, %v4038, %v4032
      %v4040 = vsel %vm1079, %v4039, %v4036
      %v4041 = vlaneseq
      %v4042 = vshrl.u32 %v4041, 7
      %v4043 = vsub.s32 0, %v4042
      %v4044 = vrot.slane %v2326, %v4043
      %v4046 = vsel %vm311, %v4040, 0
      %4048 = vmatprep.subr.mxu0 0.0
      %4049 = vmatpush1.msra.mxu0 %v2322
      %4050 = vmatprep.subr.mxu0 0.0
      %4051 = vmatpush1.msra.mxu0 %v2323
      %4052 = vmatprep.subr.mxu0 0.0
      %4053 = vmatpush1.msra.mxu0 %v2324
      %4054 = vmatprep.subr.mxu0 0.0
      %4055 = vmatpush1.msra.mxu0 %v2325
      %4056 = vmatprep.subr.mxu0 0.0
      %4057 = vmatpush1.msra.mxu0 0.0
      %4058 = vmatprep.subr.mxu0 0.0
      %4059 = vmatpush1.msra.mxu0 0.0
      %4060 = vmatprep.subr.mxu0 0.0
      %4061 = vmatpush1.msra.mxu0 0.0
      %4062 = vmatprep.subr.mxu0 0.0
      %4063 = vmatpush1.msra.mxu0 0.0
      %4064 = vmatprep.subr.mxu0 0.0
      %4065 = vmatpush1.msra.mxu0 0.0
      %4066 = vmatprep.subr.mxu0 0.0
      %4067 = vmatpush1.msra.mxu0 0.0
      %4068 = vmatprep.subr.mxu0 0.0
      %4069 = vmatpush1.msra.mxu0 0.0
      %4070 = vmatprep.subr.mxu0 0.0
      %4071 = vmatpush1.msra.mxu0 0.0
      %4072 = vmatprep.subr.mxu0 0.0
      %4073 = vmatpush1.msra.mxu0 0.0
      %4074 = vmatprep.subr.mxu0 0.0
      %4075 = vmatpush1.msra.mxu0 0.0
      %4076 = vmatprep.subr.mxu0 0.0
      %4077 = vmatpush1.msra.mxu0 0.0
      %4078 = vmatprep.subr.mxu0 0.0
      %4079 = vmatpush1.msra.mxu0 0.0
      %4080 = vmatprep.subr.mxu0 0.0
      %4081 = vmatpush1.msra.mxu0 0.0
      %4082 = vmatprep.subr.mxu0 0.0
      %4083 = vmatpush1.msra.mxu0 0.0
      %4084 = vmatprep.subr.mxu0 0.0
      %4085 = vmatpush1.msra.mxu0 0.0
      %4086 = vmatprep.subr.mxu0 0.0
      %4087 = vmatpush1.msra.mxu0 0.0
      %4088 = vmatprep.subr.mxu0 0.0
      %4089 = vmatpush1.msra.mxu0 0.0
      %4090 = vmatprep.subr.mxu0 0.0
      %4091 = vmatpush1.msra.mxu0 0.0
      %4092 = vmatprep.subr.mxu0 0.0
      %4093 = vmatpush1.msra.mxu0 0.0
      %4094 = vmatprep.subr.mxu0 0.0
      %4095 = vmatpush1.msra.mxu0 0.0
      %4096 = vmatprep.subr.mxu0 0.0
      %4097 = vmatpush1.msra.mxu0 0.0
      %4098 = vmatprep.subr.mxu0 0.0
      %4099 = vmatpush1.msra.mxu0 0.0
      %4100 = vmatprep.subr.mxu0 0.0
      %4101 = vmatpush1.msra.mxu0 0.0
      %4102 = vmatprep.subr.mxu0 0.0
      %4103 = vmatpush1.msra.mxu0 0.0
      %4104 = vmatprep.subr.mxu0 0.0
      %4105 = vmatpush1.msra.mxu0 0.0
      %4106 = vmatprep.subr.mxu0 0.0
      %4107 = vmatpush1.msra.mxu0 0.0
      %4108 = vmatprep.subr.mxu0 0.0
      %4109 = vmatpush1.msra.mxu0 0.0
      %4110 = vmatprep.subr.mxu0 0.0
      %4111 = vmatpush1.msra.mxu0 0.0
      %4112 = vmatprep.mubr.f32.mxu0 0.0
      %4113 = vmatmul.mubr.f32.gmra.mrb[0].mxu0 %v4046
      %v4114 = vpop.f32.mrb[0].mxu0
      %v4115 = vadd.f32 %v4044, %v4114
      %v4116 = vpop.f32.mrb[0].mxu0
      %4117 = vdwg.mxu0
      %v4118 = vadd.f32 %v3208, %v4115
      %v4119 = vsel %vm1159, %v4118, 0.0
      %4120 = vadd.xlane.f32.xlu0 %v4119
      %v4121 = vpop.xlane.xlu0 %4120
      %v4122 = vmul.f32 %v4121, %v1163
      %v4123 = vsub.f32 %v4118, %v4122
      %v4124 = vmul.f32 %v4123, %v4123
      %v4125 = vsel %vm1159, %v4124, 0.0
      %4126 = vadd.xlane.f32.xlu0 %v4125
      %v4127 = vpop.xlane.xlu0 %4126
      %v4128 = vmul.f32 %v4127, %v1163
      %v4129 = vadd.f32 %v4128, 1e-05
      %v4130 = vrsqrt.pop %v4129
      %v4131 = vmul.f32 %v4123, %v4130
      %v4132 = vlaneseq
      %v4133 = vshrl.u32 %v4132, 7
      %v4134 = vsub.s32 0, %v4133
      %v4135 = vrot.slane %v2327, %v4134
      %v4136 = vmul.f32 %v4131, %v4135
      %v4137 = vlaneseq
      %v4138 = vshrl.u32 %v4137, 7
      %v4139 = vsub.s32 0, %v4138
      %v4140 = vrot.slane %v2328, %v4139
      %v4141 = vadd.f32 %v4136, %v4140
      %v4142 = vlaneseq
      %v4143 = vshrl.u32 %v4142, 7
      %v4144 = vsub.s32 0, %v4143
      %v4145 = vrot.slane %v2333, %v4144
      %v4147 = vsel %vm311, %v4141, 0
      %4149 = vmatprep.subr.mxu0 0.0
      %4150 = vmatpush1.msra.mxu0 %v2329
      %4151 = vmatprep.subr.mxu0 0.0
      %4152 = vmatpush1.msra.mxu0 %v2330
      %4153 = vmatprep.subr.mxu0 0.0
      %4154 = vmatpush1.msra.mxu0 %v2331
      %4155 = vmatprep.subr.mxu0 0.0
      %4156 = vmatpush1.msra.mxu0 %v2332
      %4157 = vmatprep.subr.mxu0 0.0
      %4158 = vmatpush1.msra.mxu0 0.0
      %4159 = vmatprep.subr.mxu0 0.0
      %4160 = vmatpush1.msra.mxu0 0.0
      %4161 = vmatprep.subr.mxu0 0.0
      %4162 = vmatpush1.msra.mxu0 0.0
      %4163 = vmatprep.subr.mxu0 0.0
      %4164 = vmatpush1.msra.mxu0 0.0
      %4165 = vmatprep.subr.mxu0 0.0
      %4166 = vmatpush1.msra.mxu0 0.0
      %4167 = vmatprep.subr.mxu0 0.0
      %4168 = vmatpush1.msra.mxu0 0.0
      %4169 = vmatprep.subr.mxu0 0.0
      %4170 = vmatpush1.msra.mxu0 0.0
      %4171 = vmatprep.subr.mxu0 0.0
      %4172 = vmatpush1.msra.mxu0 0.0
      %4173 = vmatprep.subr.mxu0 0.0
      %4174 = vmatpush1.msra.mxu0 0.0
      %4175 = vmatprep.subr.mxu0 0.0
      %4176 = vmatpush1.msra.mxu0 0.0
      %4177 = vmatprep.subr.mxu0 0.0
      %4178 = vmatpush1.msra.mxu0 0.0
      %4179 = vmatprep.subr.mxu0 0.0
      %4180 = vmatpush1.msra.mxu0 0.0
      %4181 = vmatprep.subr.mxu0 0.0
      %4182 = vmatpush1.msra.mxu0 0.0
      %4183 = vmatprep.subr.mxu0 0.0
      %4184 = vmatpush1.msra.mxu0 0.0
      %4185 = vmatprep.subr.mxu0 0.0
      %4186 = vmatpush1.msra.mxu0 0.0
      %4187 = vmatprep.subr.mxu0 0.0
      %4188 = vmatpush1.msra.mxu0 0.0
      %4189 = vmatprep.subr.mxu0 0.0
      %4190 = vmatpush1.msra.mxu0 0.0
      %4191 = vmatprep.subr.mxu0 0.0
      %4192 = vmatpush1.msra.mxu0 0.0
      %4193 = vmatprep.subr.mxu0 0.0
      %4194 = vmatpush1.msra.mxu0 0.0
      %4195 = vmatprep.subr.mxu0 0.0
      %4196 = vmatpush1.msra.mxu0 0.0
      %4197 = vmatprep.subr.mxu0 0.0
      %4198 = vmatpush1.msra.mxu0 0.0
      %4199 = vmatprep.subr.mxu0 0.0
      %4200 = vmatpush1.msra.mxu0 0.0
      %4201 = vmatprep.subr.mxu0 0.0
      %4202 = vmatpush1.msra.mxu0 0.0
      %4203 = vmatprep.subr.mxu0 0.0
      %4204 = vmatpush1.msra.mxu0 0.0
      %4205 = vmatprep.subr.mxu0 0.0
      %4206 = vmatpush1.msra.mxu0 0.0
      %4207 = vmatprep.subr.mxu0 0.0
      %4208 = vmatpush1.msra.mxu0 0.0
      %4209 = vmatprep.subr.mxu0 0.0
      %4210 = vmatpush1.msra.mxu0 0.0
      %4211 = vmatprep.subr.mxu0 0.0
      %4212 = vmatpush1.msra.mxu0 0.0
      %4213 = vmatprep.mubr.f32.mxu0 0.0
      %4214 = vmatmul.mubr.f32.gmra.mrb[0].mxu0 %v4147
      %v4215 = vpop.f32.mrb[0].mxu0
      %v4216 = vadd.f32 %v4145, %v4215
      %v4217 = vpop.f32.mrb[0].mxu0
      %4218 = vdwg.mxu0
      %v4219 = vmax.f32 %v4216, 0.0
      %v4220 = vlaneseq
      %v4221 = vshrl.u32 %v4220, 7
      %v4222 = vsub.s32 0, %v4221
      %v4223 = vrot.slane %v2342, %v4222
      %v4225 = vsel %vm2202, %v4219, 0
      %4227 = vmatprep.subr.mxu0 0.0
      %4228 = vmatpush1.msra.mxu0 %v2334
      %4229 = vmatprep.subr.mxu0 0.0
      %4230 = vmatpush1.msra.mxu0 %v2335
      %4231 = vmatprep.subr.mxu0 0.0
      %4232 = vmatpush1.msra.mxu0 %v2336
      %4233 = vmatprep.subr.mxu0 0.0
      %4234 = vmatpush1.msra.mxu0 %v2337
      %4235 = vmatprep.subr.mxu0 0.0
      %4236 = vmatpush1.msra.mxu0 %v2338
      %4237 = vmatprep.subr.mxu0 0.0
      %4238 = vmatpush1.msra.mxu0 %v2339
      %4239 = vmatprep.subr.mxu0 0.0
      %4240 = vmatpush1.msra.mxu0 %v2340
      %4241 = vmatprep.subr.mxu0 0.0
      %4242 = vmatpush1.msra.mxu0 %v2341
      %4243 = vmatprep.subr.mxu0 0.0
      %4244 = vmatpush1.msra.mxu0 0.0
      %4245 = vmatprep.subr.mxu0 0.0
      %4246 = vmatpush1.msra.mxu0 0.0
      %4247 = vmatprep.subr.mxu0 0.0
      %4248 = vmatpush1.msra.mxu0 0.0
      %4249 = vmatprep.subr.mxu0 0.0
      %4250 = vmatpush1.msra.mxu0 0.0
      %4251 = vmatprep.subr.mxu0 0.0
      %4252 = vmatpush1.msra.mxu0 0.0
      %4253 = vmatprep.subr.mxu0 0.0
      %4254 = vmatpush1.msra.mxu0 0.0
      %4255 = vmatprep.subr.mxu0 0.0
      %4256 = vmatpush1.msra.mxu0 0.0
      %4257 = vmatprep.subr.mxu0 0.0
      %4258 = vmatpush1.msra.mxu0 0.0
      %4259 = vmatprep.subr.mxu0 0.0
      %4260 = vmatpush1.msra.mxu0 0.0
      %4261 = vmatprep.subr.mxu0 0.0
      %4262 = vmatpush1.msra.mxu0 0.0
      %4263 = vmatprep.subr.mxu0 0.0
      %4264 = vmatpush1.msra.mxu0 0.0
      %4265 = vmatprep.subr.mxu0 0.0
      %4266 = vmatpush1.msra.mxu0 0.0
      %4267 = vmatprep.subr.mxu0 0.0
      %4268 = vmatpush1.msra.mxu0 0.0
      %4269 = vmatprep.subr.mxu0 0.0
      %4270 = vmatpush1.msra.mxu0 0.0
      %4271 = vmatprep.subr.mxu0 0.0
      %4272 = vmatpush1.msra.mxu0 0.0
      %4273 = vmatprep.subr.mxu0 0.0
      %4274 = vmatpush1.msra.mxu0 0.0
      %4275 = vmatprep.subr.mxu0 0.0
      %4276 = vmatpush1.msra.mxu0 0.0
      %4277 = vmatprep.subr.mxu0 0.0
      %4278 = vmatpush1.msra.mxu0 0.0
      %4279 = vmatprep.subr.mxu0 0.0
      %4280 = vmatpush1.msra.mxu0 0.0
      %4281 = vmatprep.subr.mxu0 0.0
      %4282 = vmatpush1.msra.mxu0 0.0
      %4283 = vmatprep.subr.mxu0 0.0
      %4284 = vmatpush1.msra.mxu0 0.0
      %4285 = vmatprep.subr.mxu0 0.0
      %4286 = vmatpush1.msra.mxu0 0.0
      %4287 = vmatprep.subr.mxu0 0.0
      %4288 = vmatpush1.msra.mxu0 0.0
      %4289 = vmatprep.subr.mxu0 0.0
      %4290 = vmatpush1.msra.mxu0 0.0
      %4291 = vmatprep.mubr.f32.mxu0 0.0
      %4292 = vmatmul.mubr.f32.gmra.mrb[0].mxu0 %v4225
      %v4293 = vpop.f32.mrb[0].mxu0
      %v4294 = vadd.f32 %v4223, %v4293
      %v4295 = vpop.f32.mrb[0].mxu0
      %4296 = vdwg.mxu0
      %v4297 = vadd.f32 %v4141, %v4294
      %v4298 = vsel %vm1159, %v4297, 0.0
      %4299 = vadd.xlane.f32.xlu0 %v4298
      %v4300 = vpop.xlane.xlu0 %4299
      %v4301 = vmul.f32 %v4300, %v1163
      %v4302 = vsub.f32 %v4297, %v4301
      %v4303 = vmul.f32 %v4302, %v4302
      %v4304 = vsel %vm1159, %v4303, 0.0
      %4305 = vadd.xlane.f32.xlu0 %v4304
      %v4306 = vpop.xlane.xlu0 %4305
      %v4307 = vmul.f32 %v4306, %v1163
      %v4308 = vadd.f32 %v4307, 1e-05
      %v4309 = vrsqrt.pop %v4308
      %v4310 = vmul.f32 %v4302, %v4309
      %v4311 = vlaneseq
      %v4312 = vshrl.u32 %v4311, 7
      %v4313 = vsub.s32 0, %v4312
      %v4314 = vrot.slane %v2343, %v4313
      %v4315 = vmul.f32 %v4310, %v4314
      %v4316 = vlaneseq
      %v4317 = vshrl.u32 %v4316, 7
      %v4318 = vsub.s32 0, %v4317
      %v4319 = vrot.slane %v2344, %v4318
      %v4320 = vadd.f32 %v4315, %v4319
      %v4321 = vlaneseq
      %v4322 = vshrl.u32 %v4321, 7
      %vm4323 = vcmp.eq.s32.totalorder %v4322, %v257
      %v4324 = vsel %vm4323, 1, 0
      %vm4325 = vcmp.eq.s32.totalorder %v4324, 1
      %v4326 = vsel %vm4325, %v4320, 0.0
      %v4327 = vsel %vm1159, %v4326, 0.0
      %v4328 = vrot.slane %v4327, 4
      %v4329 = vadd.f32 %v4327, %v4328
      %v4330 = vrot.slane %v4329, 2
      %v4331 = vadd.f32 %v4329, %v4330
      %v4332 = vrot.slane %v4331, 1
      %v4333 = vadd.f32 %v4331, %v4332
      %v4335 = vsel %vm311, %v4333, 0
      %4337 = vmatprep.subr.mxu0 0.0
      %4338 = vmatpush1.msra.mxu0 %v245
      %4339 = vmatprep.subr.mxu0 0.0
      %4340 = vmatpush1.msra.mxu0 %v246
      %4341 = vmatprep.subr.mxu0 0.0
      %4342 = vmatpush1.msra.mxu0 %v247
      %4343 = vmatprep.subr.mxu0 0.0
      %4344 = vmatpush1.msra.mxu0 %v248
      %4345 = vmatprep.subr.mxu0 0.0
      %4346 = vmatpush1.msra.mxu0 0.0
      %4347 = vmatprep.subr.mxu0 0.0
      %4348 = vmatpush1.msra.mxu0 0.0
      %4349 = vmatprep.subr.mxu0 0.0
      %4350 = vmatpush1.msra.mxu0 0.0
      %4351 = vmatprep.subr.mxu0 0.0
      %4352 = vmatpush1.msra.mxu0 0.0
      %4353 = vmatprep.subr.mxu0 0.0
      %4354 = vmatpush1.msra.mxu0 0.0
      %4355 = vmatprep.subr.mxu0 0.0
      %4356 = vmatpush1.msra.mxu0 0.0
      %4357 = vmatprep.subr.mxu0 0.0
      %4358 = vmatpush1.msra.mxu0 0.0
      %4359 = vmatprep.subr.mxu0 0.0
      %4360 = vmatpush1.msra.mxu0 0.0
      %4361 = vmatprep.subr.mxu0 0.0
      %4362 = vmatpush1.msra.mxu0 0.0
      %4363 = vmatprep.subr.mxu0 0.0
      %4364 = vmatpush1.msra.mxu0 0.0
      %4365 = vmatprep.subr.mxu0 0.0
      %4366 = vmatpush1.msra.mxu0 0.0
      %4367 = vmatprep.subr.mxu0 0.0
      %4368 = vmatpush1.msra.mxu0 0.0
      %4369 = vmatprep.subr.mxu0 0.0
      %4370 = vmatpush1.msra.mxu0 0.0
      %4371 = vmatprep.subr.mxu0 0.0
      %4372 = vmatpush1.msra.mxu0 0.0
      %4373 = vmatprep.subr.mxu0 0.0
      %4374 = vmatpush1.msra.mxu0 0.0
      %4375 = vmatprep.subr.mxu0 0.0
      %4376 = vmatpush1.msra.mxu0 0.0
      %4377 = vmatprep.subr.mxu0 0.0
      %4378 = vmatpush1.msra.mxu0 0.0
      %4379 = vmatprep.subr.mxu0 0.0
      %4380 = vmatpush1.msra.mxu0 0.0
      %4381 = vmatprep.subr.mxu0 0.0
      %4382 = vmatpush1.msra.mxu0 0.0
      %4383 = vmatprep.subr.mxu0 0.0
      %4384 = vmatpush1.msra.mxu0 0.0
      %4385 = vmatprep.subr.mxu0 0.0
      %4386 = vmatpush1.msra.mxu0 0.0
      %4387 = vmatprep.subr.mxu0 0.0
      %4388 = vmatpush1.msra.mxu0 0.0
      %4389 = vmatprep.subr.mxu0 0.0
      %4390 = vmatpush1.msra.mxu0 0.0
      %4391 = vmatprep.subr.mxu0 0.0
      %4392 = vmatpush1.msra.mxu0 0.0
      %4393 = vmatprep.subr.mxu0 0.0
      %4394 = vmatpush1.msra.mxu0 0.0
      %4395 = vmatprep.subr.mxu0 0.0
      %4396 = vmatpush1.msra.mxu0 0.0
      %4397 = vmatprep.subr.mxu0 0.0
      %4398 = vmatpush1.msra.mxu0 0.0
      %4399 = vmatprep.subr.mxu0 0.0
      %4400 = vmatpush1.msra.mxu0 0.0
      %4401 = vmatprep.mubr.f32.mxu0 0.0
      %4402 = vmatmul.mubr.f32.gmra.mrb[0].mxu0 %v4335
      %v4403 = vpop.f32.mrb[0].mxu0
      %v4404 = vadd.f32 %v249, %v4403
      %v4405 = vpop.f32.mrb[0].mxu0
      %4406 = vdwg.mxu0
      %4407 = vst [vmem:[%s243] sm:$0x1] %v4404
      %p4408 = scmp.lt.s32.totalorder %s19, 1
      %s4409 = scalar_select %p4408, %s19, 1
      %p4410 = scmp.lt.s32.totalorder %s20, 4
      %s4411 = scalar_select %p4410, %s20, 4
      %s4412 = smul.addr %s4409, 5
      %s4413 = sadd.s32 %s4411, %s4412
      %s4414 = scalar_lea.vmem %s4, %s4413
      // Predicated region
      $region37: #{vit_transformer_maria_forward.3} parent=35 // pred_check
        %p4415 = pneg %p146
      $region38: #{vit_transformer_maria_forward.3} parent=35 // pred_check_branch
        %4417 = sbr.rel (%p4415) target = $region40
      $region39: #{vit_transformer_maria_forward.3} parent=35 // pred_region
        _
      $region40: #{vit_transformer_maria_forward.3} parent=35 // pred_fallthru
        _
    $region36: #{vit_transformer_maria_forward.3} parent=5 // pred_fallthru
      _
    %p4418 = scmp.le.s32.totalorder 2, %s10
    // Predicated region
    $region41: #{vit_transformer_maria_forward.3} parent=5 // pred_check
      %p4419 = pneg %p4418
    $region42: #{vit_transformer_maria_forward.3} parent=5 // pred_check_branch
      %4421 = sbr.rel (%p4419) target = $region44
    $region43: #{vit_transformer_maria_forward.3} parent=5 // pred_region
      %s4422 = ssub.s32 %s10, 2
      // Predicated region
      $region45: #{vit_transformer_maria_forward.3} parent=43 // pred_check
        %p4423 = pneg %p152
      $region46: #{vit_transformer_maria_forward.3} parent=43 // pred_check_branch
        %4425 = sbr.rel (%p4423) target = $region48
      $region47: #{vit_transformer_maria_forward.3} parent=43 // pred_region
        %p4426 = scmp.lt.s32.totalorder %s21, 1
        %s4427 = scalar_select %p4426, %s21, 1
        %p4428 = scmp.lt.s32.totalorder %s22, 4
        %s4429 = scalar_select %p4428, %s22, 4
        %s4430 = smul.addr %s4427, 5
        %s4431 = sadd.s32 %s4429, %s4430
        %s4432 = scalar_lea.vmem %s4, %s4431
      $region48: #{vit_transformer_maria_forward.3} parent=43 // pred_fallthru
        _
    $region44: #{vit_transformer_maria_forward.3} parent=5 // pred_fallthru
      _
  $region6: #{vit_transformer_maria_forward.3} parent=0 // loop_footer
    %s14 = sadd.s32 1, %s10
  $region7: #{vit_transformer_maria_forward.3} parent=0 // loop_footer_branch
    %9 = sbr.rel target = $region3
  $region8: #{vit_transformer_maria_forward.3} parent=0 // loop_exit
    _

</llo_original>
